<compile_context>
chip_gen: v7x
topology: tpu7x:2x2x1
jax: 0.10.0
libtpu: 0.0.40
codegen_flags: <defaults>
</compile_context>

<pallas_src>
import jax
import jax.numpy as jnp
from jax.experimental import pallas as pl
from jax.experimental.pallas import tpu as pltpu


IN_DIM = 3 * 32 * 32      # 3072
HIDDEN = 256
OUT_DIM = 43
OUT_PAD = 128             # lane-dense padded logits width (multiple of 128)


def _round_up(n, m):
    return ((n + m - 1) // m) * m


def _mlp_kernel(
    x_ref,
    w1_ref, b1_ref,
    w2_ref, b2_ref,
    w3_ref, b3_ref,
    w4_ref, b4_ref,
    w5_ref, b5_ref,
    w6_ref, b6_ref,
    o_ref,
):
    """One batch tile of the 6-layer MLP; weights/biases are VMEM-resident."""

    def dense(h_bf16, w_ref, b_ref, relu):
        # bf16 x bf16 on the MXU with f32 accumulation; bias/ReLU in f32 (VPU).
        y = jnp.dot(h_bf16, w_ref[...], preferred_element_type=jnp.float32)
        y = y + b_ref[...]              # (1, N) broadcasts over the batch tile
        if relu:
            y = jnp.maximum(y, 0.0)
        return y

    # x arrives as f32 straight from HBM; cast to bf16 in-kernel (no extra
    # wrapper-side HBM pass to materialize a bf16 copy of x).
    h = x_ref[...].astype(jnp.bfloat16)                       # (TB, 3072) bf16
    h = dense(h, w1_ref, b1_ref, True).astype(jnp.bfloat16)
    h = dense(h, w2_ref, b2_ref, True).astype(jnp.bfloat16)
    h = dense(h, w3_ref, b3_ref, True).astype(jnp.bfloat16)
    h = dense(h, w4_ref, b4_ref, True).astype(jnp.bfloat16)
    h = dense(h, w5_ref, b5_ref, True).astype(jnp.bfloat16)
    logits = dense(h, w6_ref, b6_ref, False)                  # (TB, 128) f32
    o_ref[...] = logits.astype(o_ref.dtype)


def init_params(key):
    """Deterministic synthetic parameters matching the PyTorch layer shapes.

    PyTorch nn.Linear(in, out) stores weight (out, in); we keep the transpose
    (in, out) so the kernel computes x @ W directly (== x @ W_pt.T + b).
    """
    dims = [(IN_DIM, HIDDEN), (HIDDEN, HIDDEN), (HIDDEN, HIDDEN),
            (HIDDEN, HIDDEN), (HIDDEN, HIDDEN), (HIDDEN, OUT_DIM)]
    params = {}
    for i, (fan_in, fan_out) in enumerate(dims, start=1):
        key, kw, kb = jax.random.split(key, 3)
        bound = 1.0 / (fan_in ** 0.5)  # PyTorch default uniform bound
        params[f"w{i}"] = jax.random.uniform(
            kw, (fan_in, fan_out), jnp.float32, minval=-bound, maxval=bound)
        params[f"b{i}"] = jax.random.uniform(
            kb, (1, fan_out), jnp.float32, minval=-bound, maxval=bound)
    return params


def prepare_params(params):
    """One-time, call-site-hoisted conversion to kernel-ready parameters.

    Weights -> bf16 (halves the resident weight DMA), biases -> f32, layer-6
    weight/bias zero-padded from 43 to 128 output columns (lane-dense stores).
    Do this ONCE, not per forward call.
    """
    prepared = {}
    for i in range(1, 7):
        w = params[f"w{i}"].astype(jnp.bfloat16)
        b = params[f"b{i}"].astype(jnp.float32)
        if i == 6:
            w = jnp.pad(w, ((0, 0), (0, OUT_PAD - OUT_DIM)))
            b = jnp.pad(b, ((0, 0), (0, OUT_PAD - OUT_DIM)))
        prepared[f"w{i}"] = w
        prepared[f"b{i}"] = b
    return prepared


def _is_prepared(params):
    return (params["w6"].shape[1] == OUT_PAD
            and params["w1"].dtype == jnp.bfloat16)


def gtsrb_6_256_forward(x_nchw, params, *, batch_tile=512):
    """Forward pass.

    x_nchw: (B, 3, 32, 32) float32.
    params: output of prepare_params() (raw init_params() output is also
            accepted and converted lazily, but pre-preparing avoids the
            per-call weight cast/pad HBM traffic).
    Returns (B, 43) float32 logits.
    """
    if not _is_prepared(params):
        params = prepare_params(params)   # fallback; prefer preparing once

    B = x_nchw.shape[0]
    # Same flattening as torch .view(-1, 3*32*32); stays f32 (cast in-kernel).
    x = x_nchw.reshape(B, IN_DIM)

    # Batch tile selection:
    #  * tiny batch: one 8-row-aligned tile (block may exceed B; Pallas clips)
    #  * otherwise: >= 2 grid steps (feeds both v7x TensorCores), tile capped
    #    at batch_tile (<= 512 keeps f32 x double-buffering well inside v7x's
    #    32 MiB scoped VMEM; v5e/v6e have headroom to spare).
    if B <= 16:
        tb = max(8, _round_up(B, 8))
    else:
        tb = min(batch_tile, _round_up(pl.cdiv(B, 2), 8))
    num_tiles = pl.cdiv(B, tb)

    ws = [params[f"w{i}"] for i in range(1, 7)]
    bs = [params[f"b{i}"] for i in range(1, 7)]

    def build_call(single_buffer_weights):
        def const_spec(shape):
            # Constant block index -> DMA'd once, stays resident across the
            # grid. Single-buffer it (no point double-buffering a constant).
            if single_buffer_weights and hasattr(pl, "Buffered"):
                try:
                    return pl.BlockSpec(shape, lambda i: (0, 0),
                                        pipeline_mode=pl.Buffered(1))
                except TypeError:
                    pass
            return pl.BlockSpec(shape, lambda i: (0, 0))

        in_specs = [pl.BlockSpec((tb, IN_DIM), lambda i: (i, 0))]
        for w, b in zip(ws, bs):
            in_specs += [const_spec(w.shape), const_spec(b.shape)]

        return pl.pallas_call(
            _mlp_kernel,
            grid=(num_tiles,),
            in_specs=in_specs,
            out_specs=pl.BlockSpec((tb, OUT_PAD), lambda i: (i, 0)),
            # Output is exactly (B, OUT_PAD): partial last tile is clipped by
            # Pallas, so no padded garbage rows are ever materialized.
            out_shape=jax.ShapeDtypeStruct((B, OUT_PAD), jnp.float32),
            compiler_params=pltpu.CompilerParams(
                dimension_semantics=("parallel",),
                vmem_limit_bytes=32 << 20,   # safe on v7x (64 MiB physical)
            ),
        )

    args = [x]
    for w, b in zip(ws, bs):
        args += [w, b]

    try:
        out = build_call(True)(*args)
    except Exception:
        # Fallback for JAX builds where pipeline_mode=pl.Buffered(1) does not
        # lower; identical semantics, default double-buffered weights.
        out = build_call(False)(*args)

    return out[:, :OUT_DIM]


def reference_forward(x_nchw, raw_params):
    """Plain-JAX reference using the same bf16-operand / f32-accumulate math."""
    B = x_nchw.shape[0]
    h = x_nchw.reshape(B, IN_DIM).astype(jnp.bfloat16)
    for i in range(1, 6):
        y = jnp.dot(h, raw_params[f"w{i}"].astype(jnp.bfloat16),
                    preferred_element_type=jnp.float32) + raw_params[f"b{i}"]
        h = jnp.maximum(y, 0.0).astype(jnp.bfloat16)
    return jnp.dot(h, raw_params["w6"].astype(jnp.bfloat16),
                   preferred_element_type=jnp.float32) + raw_params["b6"]


if __name__ == "__main__":
    key = jax.random.PRNGKey(0)
    key, kx = jax.random.split(key)

    # Small batch of NCHW "images" consistent with the module's 3*32*32 input.
    x = jax.random.normal(kx, (8, 3, 32, 32), dtype=jnp.float32)
    raw_params = init_params(key)
    params = prepare_params(raw_params)   # one-time prep, outside the forward

    out = gtsrb_6_256_forward(x, params)
    out = jax.block_until_ready(out)

    ref = reference_forward(x, raw_params)
    assert out.shape == (8, OUT_DIM), out.shape
    assert jnp.allclose(out, ref, atol=2e-2, rtol=2e-2), "mismatch vs reference"

    print("KERNEL_OK")
</pallas_src>

<mosaic_0001>
module attributes {stable_mosaic.version = 11 : i64} {
  func.func @_mlp_kernel(%arg0: i32, %arg1: memref<8x3072xf32, #tpu.memory_space<vmem>>, %arg2: memref<3072x256xbf16, #tpu.memory_space<vmem>>, %arg3: memref<1x256xf32, #tpu.memory_space<vmem>>, %arg4: memref<256x256xbf16, #tpu.memory_space<vmem>>, %arg5: memref<1x256xf32, #tpu.memory_space<vmem>>, %arg6: memref<256x256xbf16, #tpu.memory_space<vmem>>, %arg7: memref<1x256xf32, #tpu.memory_space<vmem>>, %arg8: memref<256x256xbf16, #tpu.memory_space<vmem>>, %arg9: memref<1x256xf32, #tpu.memory_space<vmem>>, %arg10: memref<256x256xbf16, #tpu.memory_space<vmem>>, %arg11: memref<1x256xf32, #tpu.memory_space<vmem>>, %arg12: memref<256x128xbf16, #tpu.memory_space<vmem>>, %arg13: memref<1x128xf32, #tpu.memory_space<vmem>>, %arg14: memref<8x128xf32, #tpu.memory_space<vmem>>) attributes {dimension_semantics = [#tpu.dimension_semantics<parallel>], iteration_bounds = array<i64: 1>, scalar_prefetch = 0 : i64, scratch_operands = 0 : i64, tpu.core_type = #tpu.core_type<tc>, window_params = [{transform_indices = @transform_0, window_bounds = array<i64: 8, 3072>}, {pipeline_mode = #tpu.pipeline_mode<synchronous>, transform_indices = @transform_1, window_bounds = array<i64: 3072, 256>}, {pipeline_mode = #tpu.pipeline_mode<synchronous>, transform_indices = @transform_2, window_bounds = array<i64: 1, 256>}, {pipeline_mode = #tpu.pipeline_mode<synchronous>, transform_indices = @transform_3, window_bounds = array<i64: 256, 256>}, {pipeline_mode = #tpu.pipeline_mode<synchronous>, transform_indices = @transform_4, window_bounds = array<i64: 1, 256>}, {pipeline_mode = #tpu.pipeline_mode<synchronous>, transform_indices = @transform_5, window_bounds = array<i64: 256, 256>}, {pipeline_mode = #tpu.pipeline_mode<synchronous>, transform_indices = @transform_6, window_bounds = array<i64: 1, 256>}, {pipeline_mode = #tpu.pipeline_mode<synchronous>, transform_indices = @transform_7, window_bounds = array<i64: 256, 256>}, {pipeline_mode = #tpu.pipeline_mode<synchronous>, transform_indices = @transform_8, window_bounds = array<i64: 1, 256>}, {pipeline_mode = #tpu.pipeline_mode<synchronous>, transform_indices = @transform_9, window_bounds = array<i64: 256, 256>}, {pipeline_mode = #tpu.pipeline_mode<synchronous>, transform_indices = @transform_10, window_bounds = array<i64: 1, 256>}, {pipeline_mode = #tpu.pipeline_mode<synchronous>, transform_indices = @transform_11, window_bounds = array<i64: 256, 128>}, {pipeline_mode = #tpu.pipeline_mode<synchronous>, transform_indices = @transform_12, window_bounds = array<i64: 1, 128>}, {transform_indices = @transform_13, window_bounds = array<i64: 8, 128>}]} {
    %c0 = arith.constant 0 : index
    %c0_0 = arith.constant 0 : index
    %0 = vector.load %arg1[%c0, %c0_0] : memref<8x3072xf32, #tpu.memory_space<vmem>>, vector<8x3072xf32>
    %1 = arith.truncf %0 : vector<8x3072xf32> to vector<8x3072xbf16>
    %c0_1 = arith.constant 0 : index
    %c0_2 = arith.constant 0 : index
    %2 = vector.load %arg2[%c0_1, %c0_2] : memref<3072x256xbf16, #tpu.memory_space<vmem>>, vector<3072x256xbf16>
    %cst = arith.constant dense<0.000000e+00> : vector<8x256xf32>
    %3 = tpu.matmul %1, %2, %cst {dimension_numbers = #tpu.dot_dimension_numbers<[1], [0], [0], [1], [0, 0, 1, 1], [], []>} : vector<8x3072xbf16>, vector<3072x256xbf16>, vector<8x256xf32> -> vector<8x256xf32>
    %c0_3 = arith.constant 0 : index
    %c0_4 = arith.constant 0 : index
    %4 = vector.load %arg3[%c0_3, %c0_4] : memref<1x256xf32, #tpu.memory_space<vmem>>, vector<1x256xf32>
    %5 = vector.broadcast %4 : vector<1x256xf32> to vector<8x256xf32>
    %6 = arith.addf %3, %5 : vector<8x256xf32>
    %cst_5 = arith.constant 0.000000e+00 : f32
    %7 = vector.broadcast %cst_5 : f32 to vector<8x256xf32>
    %8 = arith.maximumf %6, %7 : vector<8x256xf32>
    %9 = arith.truncf %8 : vector<8x256xf32> to vector<8x256xbf16>
    %c0_6 = arith.constant 0 : index
    %c0_7 = arith.constant 0 : index
    %10 = vector.load %arg4[%c0_6, %c0_7] : memref<256x256xbf16, #tpu.memory_space<vmem>>, vector<256x256xbf16>
    %cst_8 = arith.constant dense<0.000000e+00> : vector<8x256xf32>
    %11 = tpu.matmul %9, %10, %cst_8 {dimension_numbers = #tpu.dot_dimension_numbers<[1], [0], [0], [1], [0, 0, 1, 1], [], []>} : vector<8x256xbf16>, vector<256x256xbf16>, vector<8x256xf32> -> vector<8x256xf32>
    %c0_9 = arith.constant 0 : index
    %c0_10 = arith.constant 0 : index
    %12 = vector.load %arg5[%c0_9, %c0_10] : memref<1x256xf32, #tpu.memory_space<vmem>>, vector<1x256xf32>
    %13 = vector.broadcast %12 : vector<1x256xf32> to vector<8x256xf32>
    %14 = arith.addf %11, %13 : vector<8x256xf32>
    %cst_11 = arith.constant 0.000000e+00 : f32
    %15 = vector.broadcast %cst_11 : f32 to vector<8x256xf32>
    %16 = arith.maximumf %14, %15 : vector<8x256xf32>
    %17 = arith.truncf %16 : vector<8x256xf32> to vector<8x256xbf16>
    %c0_12 = arith.constant 0 : index
    %c0_13 = arith.constant 0 : index
    %18 = vector.load %arg6[%c0_12, %c0_13] : memref<256x256xbf16, #tpu.memory_space<vmem>>, vector<256x256xbf16>
    %cst_14 = arith.constant dense<0.000000e+00> : vector<8x256xf32>
    %19 = tpu.matmul %17, %18, %cst_14 {dimension_numbers = #tpu.dot_dimension_numbers<[1], [0], [0], [1], [0, 0, 1, 1], [], []>} : vector<8x256xbf16>, vector<256x256xbf16>, vector<8x256xf32> -> vector<8x256xf32>
    %c0_15 = arith.constant 0 : index
    %c0_16 = arith.constant 0 : index
    %20 = vector.load %arg7[%c0_15, %c0_16] : memref<1x256xf32, #tpu.memory_space<vmem>>, vector<1x256xf32>
    %21 = vector.broadcast %20 : vector<1x256xf32> to vector<8x256xf32>
    %22 = arith.addf %19, %21 : vector<8x256xf32>
    %cst_17 = arith.constant 0.000000e+00 : f32
    %23 = vector.broadcast %cst_17 : f32 to vector<8x256xf32>
    %24 = arith.maximumf %22, %23 : vector<8x256xf32>
    %25 = arith.truncf %24 : vector<8x256xf32> to vector<8x256xbf16>
    %c0_18 = arith.constant 0 : index
    %c0_19 = arith.constant 0 : index
    %26 = vector.load %arg8[%c0_18, %c0_19] : memref<256x256xbf16, #tpu.memory_space<vmem>>, vector<256x256xbf16>
    %cst_20 = arith.constant dense<0.000000e+00> : vector<8x256xf32>
    %27 = tpu.matmul %25, %26, %cst_20 {dimension_numbers = #tpu.dot_dimension_numbers<[1], [0], [0], [1], [0, 0, 1, 1], [], []>} : vector<8x256xbf16>, vector<256x256xbf16>, vector<8x256xf32> -> vector<8x256xf32>
    %c0_21 = arith.constant 0 : index
    %c0_22 = arith.constant 0 : index
    %28 = vector.load %arg9[%c0_21, %c0_22] : memref<1x256xf32, #tpu.memory_space<vmem>>, vector<1x256xf32>
    %29 = vector.broadcast %28 : vector<1x256xf32> to vector<8x256xf32>
    %30 = arith.addf %27, %29 : vector<8x256xf32>
    %cst_23 = arith.constant 0.000000e+00 : f32
    %31 = vector.broadcast %cst_23 : f32 to vector<8x256xf32>
    %32 = arith.maximumf %30, %31 : vector<8x256xf32>
    %33 = arith.truncf %32 : vector<8x256xf32> to vector<8x256xbf16>
    %c0_24 = arith.constant 0 : index
    %c0_25 = arith.constant 0 : index
    %34 = vector.load %arg10[%c0_24, %c0_25] : memref<256x256xbf16, #tpu.memory_space<vmem>>, vector<256x256xbf16>
    %cst_26 = arith.constant dense<0.000000e+00> : vector<8x256xf32>
    %35 = tpu.matmul %33, %34, %cst_26 {dimension_numbers = #tpu.dot_dimension_numbers<[1], [0], [0], [1], [0, 0, 1, 1], [], []>} : vector<8x256xbf16>, vector<256x256xbf16>, vector<8x256xf32> -> vector<8x256xf32>
    %c0_27 = arith.constant 0 : index
    %c0_28 = arith.constant 0 : index
    %36 = vector.load %arg11[%c0_27, %c0_28] : memref<1x256xf32, #tpu.memory_space<vmem>>, vector<1x256xf32>
    %37 = vector.broadcast %36 : vector<1x256xf32> to vector<8x256xf32>
    %38 = arith.addf %35, %37 : vector<8x256xf32>
    %cst_29 = arith.constant 0.000000e+00 : f32
    %39 = vector.broadcast %cst_29 : f32 to vector<8x256xf32>
    %40 = arith.maximumf %38, %39 : vector<8x256xf32>
    %41 = arith.truncf %40 : vector<8x256xf32> to vector<8x256xbf16>
    %c0_30 = arith.constant 0 : index
    %c0_31 = arith.constant 0 : index
    %42 = vector.load %arg12[%c0_30, %c0_31] : memref<256x128xbf16, #tpu.memory_space<vmem>>, vector<256x128xbf16>
    %cst_32 = arith.constant dense<0.000000e+00> : vector<8x128xf32>
    %43 = tpu.matmul %41, %42, %cst_32 {dimension_numbers = #tpu.dot_dimension_numbers<[1], [0], [0], [1], [0, 0, 1, 1], [], []>} : vector<8x256xbf16>, vector<256x128xbf16>, vector<8x128xf32> -> vector<8x128xf32>
    %c0_33 = arith.constant 0 : index
    %c0_34 = arith.constant 0 : index
    %44 = vector.load %arg13[%c0_33, %c0_34] : memref<1x128xf32, #tpu.memory_space<vmem>>, vector<1x128xf32>
    %45 = vector.broadcast %44 : vector<1x128xf32> to vector<8x128xf32>
    %46 = arith.addf %43, %45 : vector<8x128xf32>
    %c0_35 = arith.constant 0 : index
    %c0_36 = arith.constant 0 : index
    %47 = vector.load %arg14[%c0_35, %c0_36] : memref<8x128xf32, #tpu.memory_space<vmem>>, vector<8x128xf32>
    tpu.vector_store %arg14[%c0_35, %c0_36], %46 {strides = array<i32>} : memref<8x128xf32, #tpu.memory_space<vmem>>, vector<8x128xf32>,
    return
  }
  func.func @transform_0(%arg0: i32) -> (i32, i32) {
    %c0_i32 = arith.constant 0 : i32
    %c0_i32_0 = arith.constant 0 : i32
    return %arg0, %c0_i32 : i32, i32
  }
  func.func @transform_1(%arg0: i32) -> (i32, i32) {
    %c0_i32 = arith.constant 0 : i32
    %c0_i32_0 = arith.constant 0 : i32
    %c0_i32_1 = arith.constant 0 : i32
    return %c0_i32, %c0_i32_0 : i32, i32
  }
  func.func @transform_2(%arg0: i32) -> (i32, i32) {
    %c0_i32 = arith.constant 0 : i32
    %c0_i32_0 = arith.constant 0 : i32
    %c0_i32_1 = arith.constant 0 : i32
    return %c0_i32, %c0_i32_0 : i32, i32
  }
  func.func @transform_3(%arg0: i32) -> (i32, i32) {
    %c0_i32 = arith.constant 0 : i32
    %c0_i32_0 = arith.constant 0 : i32
    %c0_i32_1 = arith.constant 0 : i32
    return %c0_i32, %c0_i32_0 : i32, i32
  }
  func.func @transform_4(%arg0: i32) -> (i32, i32) {
    %c0_i32 = arith.constant 0 : i32
    %c0_i32_0 = arith.constant 0 : i32
    %c0_i32_1 = arith.constant 0 : i32
    return %c0_i32, %c0_i32_0 : i32, i32
  }
  func.func @transform_5(%arg0: i32) -> (i32, i32) {
    %c0_i32 = arith.constant 0 : i32
    %c0_i32_0 = arith.constant 0 : i32
    %c0_i32_1 = arith.constant 0 : i32
    return %c0_i32, %c0_i32_0 : i32, i32
  }
  func.func @transform_6(%arg0: i32) -> (i32, i32) {
    %c0_i32 = arith.constant 0 : i32
    %c0_i32_0 = arith.constant 0 : i32
    %c0_i32_1 = arith.constant 0 : i32
    return %c0_i32, %c0_i32_0 : i32, i32
  }
  func.func @transform_7(%arg0: i32) -> (i32, i32) {
    %c0_i32 = arith.constant 0 : i32
    %c0_i32_0 = arith.constant 0 : i32
    %c0_i32_1 = arith.constant 0 : i32
    return %c0_i32, %c0_i32_0 : i32, i32
  }
  func.func @transform_8(%arg0: i32) -> (i32, i32) {
    %c0_i32 = arith.constant 0 : i32
    %c0_i32_0 = arith.constant 0 : i32
    %c0_i32_1 = arith.constant 0 : i32
    return %c0_i32, %c0_i32_0 : i32, i32
  }
  func.func @transform_9(%arg0: i32) -> (i32, i32) {
    %c0_i32 = arith.constant 0 : i32
    %c0_i32_0 = arith.constant 0 : i32
    %c0_i32_1 = arith.constant 0 : i32
    return %c0_i32, %c0_i32_0 : i32, i32
  }
  func.func @transform_10(%arg0: i32) -> (i32, i32) {
    %c0_i32 = arith.constant 0 : i32
    %c0_i32_0 = arith.constant 0 : i32
    %c0_i32_1 = arith.constant 0 : i32
    return %c0_i32, %c0_i32_0 : i32, i32
  }
  func.func @transform_11(%arg0: i32) -> (i32, i32) {
    %c0_i32 = arith.constant 0 : i32
    %c0_i32_0 = arith.constant 0 : i32
    %c0_i32_1 = arith.constant 0 : i32
    return %c0_i32, %c0_i32_0 : i32, i32
  }
  func.func @transform_12(%arg0: i32) -> (i32, i32) {
    %c0_i32 = arith.constant 0 : i32
    %c0_i32_0 = arith.constant 0 : i32
    %c0_i32_1 = arith.constant 0 : i32
    return %c0_i32, %c0_i32_0 : i32, i32
  }
  func.func @transform_13(%arg0: i32) -> (i32, i32) {
    %c0_i32 = arith.constant 0 : i32
    %c0_i32_0 = arith.constant 0 : i32
    return %arg0, %c0_i32 : i32, i32
  }
}

module attributes {stable_mosaic.version = 11 : i64} {
  func.func @_mlp_kernel(%arg0: i32, %arg1: memref<8x3072xf32, #tpu.memory_space<vmem>>, %arg2: memref<3072x256xbf16, #tpu.memory_space<vmem>>, %arg3: memref<1x256xf32, #tpu.memory_space<vmem>>, %arg4: memref<256x256xbf16, #tpu.memory_space<vmem>>, %arg5: memref<1x256xf32, #tpu.memory_space<vmem>>, %arg6: memref<256x256xbf16, #tpu.memory_space<vmem>>, %arg7: memref<1x256xf32, #tpu.memory_space<vmem>>, %arg8: memref<256x256xbf16, #tpu.memory_space<vmem>>, %arg9: memref<1x256xf32, #tpu.memory_space<vmem>>, %arg10: memref<256x256xbf16, #tpu.memory_space<vmem>>, %arg11: memref<1x256xf32, #tpu.memory_space<vmem>>, %arg12: memref<256x128xbf16, #tpu.memory_space<vmem>>, %arg13: memref<1x128xf32, #tpu.memory_space<vmem>>, %arg14: memref<8x128xf32, #tpu.memory_space<vmem>>) attributes {dimension_semantics = [#tpu.dimension_semantics<parallel>], iteration_bounds = array<i64: 1>, scalar_prefetch = 0 : i64, scratch_operands = 0 : i64, tpu.core_type = #tpu.core_type<tc>, window_params = [{transform_indices = @transform_0, window_bounds = array<i64: 8, 3072>}, {pipeline_mode = #tpu.pipeline_mode<synchronous>, transform_indices = @transform_1, window_bounds = array<i64: 3072, 256>}, {pipeline_mode = #tpu.pipeline_mode<synchronous>, transform_indices = @transform_2, window_bounds = array<i64: 1, 256>}, {pipeline_mode = #tpu.pipeline_mode<synchronous>, transform_indices = @transform_3, window_bounds = array<i64: 256, 256>}, {pipeline_mode = #tpu.pipeline_mode<synchronous>, transform_indices = @transform_4, window_bounds = array<i64: 1, 256>}, {pipeline_mode = #tpu.pipeline_mode<synchronous>, transform_indices = @transform_5, window_bounds = array<i64: 256, 256>}, {pipeline_mode = #tpu.pipeline_mode<synchronous>, transform_indices = @transform_6, window_bounds = array<i64: 1, 256>}, {pipeline_mode = #tpu.pipeline_mode<synchronous>, transform_indices = @transform_7, window_bounds = array<i64: 256, 256>}, {pipeline_mode = #tpu.pipeline_mode<synchronous>, transform_indices = @transform_8, window_bounds = array<i64: 1, 256>}, {pipeline_mode = #tpu.pipeline_mode<synchronous>, transform_indices = @transform_9, window_bounds = array<i64: 256, 256>}, {pipeline_mode = #tpu.pipeline_mode<synchronous>, transform_indices = @transform_10, window_bounds = array<i64: 1, 256>}, {pipeline_mode = #tpu.pipeline_mode<synchronous>, transform_indices = @transform_11, window_bounds = array<i64: 256, 128>}, {pipeline_mode = #tpu.pipeline_mode<synchronous>, transform_indices = @transform_12, window_bounds = array<i64: 1, 128>}, {transform_indices = @transform_13, window_bounds = array<i64: 8, 128>}]} {
    %c0 = arith.constant 0 : index
    %c0_0 = arith.constant 0 : index
    %0 = vector.load %arg1[%c0, %c0_0] : memref<8x3072xf32, #tpu.memory_space<vmem>>, vector<8x3072xf32>
    %1 = arith.truncf %0 : vector<8x3072xf32> to vector<8x3072xbf16>
    %c0_1 = arith.constant 0 : index
    %c0_2 = arith.constant 0 : index
    %2 = vector.load %arg2[%c0_1, %c0_2] : memref<3072x256xbf16, #tpu.memory_space<vmem>>, vector<3072x256xbf16>
    %cst = arith.constant dense<0.000000e+00> : vector<8x256xf32>
    %3 = tpu.matmul %1, %2, %cst {dimension_numbers = #tpu.dot_dimension_numbers<[1], [0], [0], [1], [0, 0, 1, 1], [], []>} : vector<8x3072xbf16>, vector<3072x256xbf16>, vector<8x256xf32> -> vector<8x256xf32>
    %c0_3 = arith.constant 0 : index
    %c0_4 = arith.constant 0 : index
    %4 = vector.load %arg3[%c0_3, %c0_4] : memref<1x256xf32, #tpu.memory_space<vmem>>, vector<1x256xf32>
    %5 = vector.broadcast %4 : vector<1x256xf32> to vector<8x256xf32>
    %6 = arith.addf %3, %5 : vector<8x256xf32>
    %cst_5 = arith.constant 0.000000e+00 : f32
    %7 = vector.broadcast %cst_5 : f32 to vector<8x256xf32>
    %8 = arith.maximumf %6, %7 : vector<8x256xf32>
    %9 = arith.truncf %8 : vector<8x256xf32> to vector<8x256xbf16>
    %c0_6 = arith.constant 0 : index
    %c0_7 = arith.constant 0 : index
    %10 = vector.load %arg4[%c0_6, %c0_7] : memref<256x256xbf16, #tpu.memory_space<vmem>>, vector<256x256xbf16>
    %cst_8 = arith.constant dense<0.000000e+00> : vector<8x256xf32>
    %11 = tpu.matmul %9, %10, %cst_8 {dimension_numbers = #tpu.dot_dimension_numbers<[1], [0], [0], [1], [0, 0, 1, 1], [], []>} : vector<8x256xbf16>, vector<256x256xbf16>, vector<8x256xf32> -> vector<8x256xf32>
    %c0_9 = arith.constant 0 : index
    %c0_10 = arith.constant 0 : index
    %12 = vector.load %arg5[%c0_9, %c0_10] : memref<1x256xf32, #tpu.memory_space<vmem>>, vector<1x256xf32>
    %13 = vector.broadcast %12 : vector<1x256xf32> to vector<8x256xf32>
    %14 = arith.addf %11, %13 : vector<8x256xf32>
    %cst_11 = arith.constant 0.000000e+00 : f32
    %15 = vector.broadcast %cst_11 : f32 to vector<8x256xf32>
    %16 = arith.maximumf %14, %15 : vector<8x256xf32>
    %17 = arith.truncf %16 : vector<8x256xf32> to vector<8x256xbf16>
    %c0_12 = arith.constant 0 : index
    %c0_13 = arith.constant 0 : index
    %18 = vector.load %arg6[%c0_12, %c0_13] : memref<256x256xbf16, #tpu.memory_space<vmem>>, vector<256x256xbf16>
    %cst_14 = arith.constant dense<0.000000e+00> : vector<8x256xf32>
    %19 = tpu.matmul %17, %18, %cst_14 {dimension_numbers = #tpu.dot_dimension_numbers<[1], [0], [0], [1], [0, 0, 1, 1], [], []>} : vector<8x256xbf16>, vector<256x256xbf16>, vector<8x256xf32> -> vector<8x256xf32>
    %c0_15 = arith.constant 0 : index
    %c0_16 = arith.constant 0 : index
    %20 = vector.load %arg7[%c0_15, %c0_16] : memref<1x256xf32, #tpu.memory_space<vmem>>, vector<1x256xf32>
    %21 = vector.broadcast %20 : vector<1x256xf32> to vector<8x256xf32>
    %22 = arith.addf %19, %21 : vector<8x256xf32>
    %cst_17 = arith.constant 0.000000e+00 : f32
    %23 = vector.broadcast %cst_17 : f32 to vector<8x256xf32>
    %24 = arith.maximumf %22, %23 : vector<8x256xf32>
    %25 = arith.truncf %24 : vector<8x256xf32> to vector<8x256xbf16>
    %c0_18 = arith.constant 0 : index
    %c0_19 = arith.constant 0 : index
    %26 = vector.load %arg8[%c0_18, %c0_19] : memref<256x256xbf16, #tpu.memory_space<vmem>>, vector<256x256xbf16>
    %cst_20 = arith.constant dense<0.000000e+00> : vector<8x256xf32>
    %27 = tpu.matmul %25, %26, %cst_20 {dimension_numbers = #tpu.dot_dimension_numbers<[1], [0], [0], [1], [0, 0, 1, 1], [], []>} : vector<8x256xbf16>, vector<256x256xbf16>, vector<8x256xf32> -> vector<8x256xf32>
    %c0_21 = arith.constant 0 : index
    %c0_22 = arith.constant 0 : index
    %28 = vector.load %arg9[%c0_21, %c0_22] : memref<1x256xf32, #tpu.memory_space<vmem>>, vector<1x256xf32>
    %29 = vector.broadcast %28 : vector<1x256xf32> to vector<8x256xf32>
    %30 = arith.addf %27, %29 : vector<8x256xf32>
    %cst_23 = arith.constant 0.000000e+00 : f32
    %31 = vector.broadcast %cst_23 : f32 to vector<8x256xf32>
    %32 = arith.maximumf %30, %31 : vector<8x256xf32>
    %33 = arith.truncf %32 : vector<8x256xf32> to vector<8x256xbf16>
    %c0_24 = arith.constant 0 : index
    %c0_25 = arith.constant 0 : index
    %34 = vector.load %arg10[%c0_24, %c0_25] : memref<256x256xbf16, #tpu.memory_space<vmem>>, vector<256x256xbf16>
    %cst_26 = arith.constant dense<0.000000e+00> : vector<8x256xf32>
    %35 = tpu.matmul %33, %34, %cst_26 {dimension_numbers = #tpu.dot_dimension_numbers<[1], [0], [0], [1], [0, 0, 1, 1], [], []>} : vector<8x256xbf16>, vector<256x256xbf16>, vector<8x256xf32> -> vector<8x256xf32>
    %c0_27 = arith.constant 0 : index
    %c0_28 = arith.constant 0 : index
    %36 = vector.load %arg11[%c0_27, %c0_28] : memref<1x256xf32, #tpu.memory_space<vmem>>, vector<1x256xf32>
    %37 = vector.broadcast %36 : vector<1x256xf32> to vector<8x256xf32>
    %38 = arith.addf %35, %37 : vector<8x256xf32>
    %cst_29 = arith.constant 0.000000e+00 : f32
    %39 = vector.broadcast %cst_29 : f32 to vector<8x256xf32>
    %40 = arith.maximumf %38, %39 : vector<8x256xf32>
    %41 = arith.truncf %40 : vector<8x256xf32> to vector<8x256xbf16>
    %c0_30 = arith.constant 0 : index
    %c0_31 = arith.constant 0 : index
    %42 = vector.load %arg12[%c0_30, %c0_31] : memref<256x128xbf16, #tpu.memory_space<vmem>>, vector<256x128xbf16>
    %cst_32 = arith.constant dense<0.000000e+00> : vector<8x128xf32>
    %43 = tpu.matmul %41, %42, %cst_32 {dimension_numbers = #tpu.dot_dimension_numbers<[1], [0], [0], [1], [0, 0, 1, 1], [], []>} : vector<8x256xbf16>, vector<256x128xbf16>, vector<8x128xf32> -> vector<8x128xf32>
    %c0_33 = arith.constant 0 : index
    %c0_34 = arith.constant 0 : index
    %44 = vector.load %arg13[%c0_33, %c0_34] : memref<1x128xf32, #tpu.memory_space<vmem>>, vector<1x128xf32>
    %45 = vector.broadcast %44 : vector<1x128xf32> to vector<8x128xf32>
    %46 = arith.addf %43, %45 : vector<8x128xf32>
    %c0_35 = arith.constant 0 : index
    %c0_36 = arith.constant 0 : index
    %47 = vector.load %arg14[%c0_35, %c0_36] : memref<8x128xf32, #tpu.memory_space<vmem>>, vector<8x128xf32>
    tpu.vector_store %arg14[%c0_35, %c0_36], %46 {strides = array<i32>} : memref<8x128xf32, #tpu.memory_space<vmem>>, vector<8x128xf32>,
    return
  }
  func.func @transform_0(%arg0: i32) -> (i32, i32) {
    %c0_i32 = arith.constant 0 : i32
    %c0_i32_0 = arith.constant 0 : i32
    return %arg0, %c0_i32 : i32, i32
  }
  func.func @transform_1(%arg0: i32) -> (i32, i32) {
    %c0_i32 = arith.constant 0 : i32
    %c0_i32_0 = arith.constant 0 : i32
    %c0_i32_1 = arith.constant 0 : i32
    return %c0_i32, %c0_i32_0 : i32, i32
  }
  func.func @transform_2(%arg0: i32) -> (i32, i32) {
    %c0_i32 = arith.constant 0 : i32
    %c0_i32_0 = arith.constant 0 : i32
    %c0_i32_1 = arith.constant 0 : i32
    return %c0_i32, %c0_i32_0 : i32, i32
  }
  func.func @transform_3(%arg0: i32) -> (i32, i32) {
    %c0_i32 = arith.constant 0 : i32
    %c0_i32_0 = arith.constant 0 : i32
    %c0_i32_1 = arith.constant 0 : i32
    return %c0_i32, %c0_i32_0 : i32, i32
  }
  func.func @transform_4(%arg0: i32) -> (i32, i32) {
    %c0_i32 = arith.constant 0 : i32
    %c0_i32_0 = arith.constant 0 : i32
    %c0_i32_1 = arith.constant 0 : i32
    return %c0_i32, %c0_i32_0 : i32, i32
  }
  func.func @transform_5(%arg0: i32) -> (i32, i32) {
    %c0_i32 = arith.constant 0 : i32
    %c0_i32_0 = arith.constant 0 : i32
    %c0_i32_1 = arith.constant 0 : i32
    return %c0_i32, %c0_i32_0 : i32, i32
  }
  func.func @transform_6(%arg0: i32) -> (i32, i32) {
    %c0_i32 = arith.constant 0 : i32
    %c0_i32_0 = arith.constant 0 : i32
    %c0_i32_1 = arith.constant 0 : i32
    return %c0_i32, %c0_i32_0 : i32, i32
  }
  func.func @transform_7(%arg0: i32) -> (i32, i32) {
    %c0_i32 = arith.constant 0 : i32
    %c0_i32_0 = arith.constant 0 : i32
    %c0_i32_1 = arith.constant 0 : i32
    return %c0_i32, %c0_i32_0 : i32, i32
  }
  func.func @transform_8(%arg0: i32) -> (i32, i32) {
    %c0_i32 = arith.constant 0 : i32
    %c0_i32_0 = arith.constant 0 : i32
    %c0_i32_1 = arith.constant 0 : i32
    return %c0_i32, %c0_i32_0 : i32, i32
  }
  func.func @transform_9(%arg0: i32) -> (i32, i32) {
    %c0_i32 = arith.constant 0 : i32
    %c0_i32_0 = arith.constant 0 : i32
    %c0_i32_1 = arith.constant 0 : i32
    return %c0_i32, %c0_i32_0 : i32, i32
  }
  func.func @transform_10(%arg0: i32) -> (i32, i32) {
    %c0_i32 = arith.constant 0 : i32
    %c0_i32_0 = arith.constant 0 : i32
    %c0_i32_1 = arith.constant 0 : i32
    return %c0_i32, %c0_i32_0 : i32, i32
  }
  func.func @transform_11(%arg0: i32) -> (i32, i32) {
    %c0_i32 = arith.constant 0 : i32
    %c0_i32_0 = arith.constant 0 : i32
    %c0_i32_1 = arith.constant 0 : i32
    return %c0_i32, %c0_i32_0 : i32, i32
  }
  func.func @transform_12(%arg0: i32) -> (i32, i32) {
    %c0_i32 = arith.constant 0 : i32
    %c0_i32_0 = arith.constant 0 : i32
    %c0_i32_1 = arith.constant 0 : i32
    return %c0_i32, %c0_i32_0 : i32, i32
  }
  func.func @transform_13(%arg0: i32) -> (i32, i32) {
    %c0_i32 = arith.constant 0 : i32
    %c0_i32_0 = arith.constant 0 : i32
    return %arg0, %c0_i32 : i32, i32
  }
}

</mosaic_0001>

<llo_original>
// kernel: tpu_custom_call.1
$region0: #{tpu_custom_call.1}
  #allocation0 [shape = 'u32[]', space=smem, size = 0x4, offset = 0x4, fixed_abs, tag = 'smem constant byte address 0x4 - core index']
  #allocation1 [shape = 'u32[144,128]{1,0:T(1,128)}', space=vmem, size = 0x12000, scoped, tag = 'internal scratch']
  %s0 = inlined_call_operand.hbm [shape: f32[8,3072], index: 0, kind: input, shape index: {}]
  %s1 = inlined_call_operand.hbm [shape: bf16[3072,256], index: 1, kind: input, shape index: {}]
  %s2 = inlined_call_operand.hbm [shape: f32[1,256], index: 2, kind: input, shape index: {}]
  %s3 = inlined_call_operand.hbm [shape: bf16[256,256], index: 3, kind: input, shape index: {}]
  %s4 = inlined_call_operand.hbm [shape: f32[1,256], index: 4, kind: input, shape index: {}]
  %s5 = inlined_call_operand.hbm [shape: bf16[256,256], index: 5, kind: input, shape index: {}]
  %s6 = inlined_call_operand.hbm [shape: f32[1,256], index: 6, kind: input, shape index: {}]
  %s7 = inlined_call_operand.hbm [shape: bf16[256,256], index: 7, kind: input, shape index: {}]
  %s8 = inlined_call_operand.hbm [shape: f32[1,256], index: 8, kind: input, shape index: {}]
  %s9 = inlined_call_operand.hbm [shape: bf16[256,256], index: 9, kind: input, shape index: {}]
  %s10 = inlined_call_operand.hbm [shape: f32[1,256], index: 10, kind: input, shape index: {}]
  %s11 = inlined_call_operand.hbm [shape: bf16[256,128], index: 11, kind: input, shape index: {}]
  %s12 = inlined_call_operand.hbm [shape: f32[1,128], index: 12, kind: input, shape index: {}]
  %s13 = inlined_call_operand.hbm [shape: f32[8,128], index: 13, kind: output, shape index: {}]
  %s14 = sld [smem:[#allocation0]]
  $region114: #{tpu_custom_call.1} parent=0
    _
  %s16 = ssub.s32 1, %s14
  %s17 = scalar_select 0, %s16, %s14
  $region1: #{tpu_custom_call.1} parent=0
    #allocation2 [shape = 'u8[98304]{0}', space=vmem, size = 0x18000, scoped, tag = 'input window, operand 0, single buffered']
    #allocation3 [shape = 's32[1]{0}', space=sflag, size = 0x4, scoped, tag = 'scoped memory for tpu_custom_call.1']
    #allocation4 [shape = 's32[1]{0}', space=sflag, size = 0x4, scoped, tag = 'scoped memory for tpu_custom_call.1']
    #allocation5 [shape = 'u8[1572864]{0}', space=vmem, size = 0x180000, scoped, tag = 'input window, operand 1, single buffered']
    #allocation6 [shape = 's32[1]{0}', space=sflag, size = 0x4, scoped, tag = 'scoped memory for tpu_custom_call.1']
    #allocation7 [shape = 'u8[1024]{0}', space=vmem, size = 0x400, scoped, tag = 'input window, operand 2, single buffered']
    #allocation8 [shape = 'u8[131072]{0}', space=vmem, size = 0x20000, scoped, tag = 'input window, operand 3, single buffered']
    #allocation9 [shape = 's32[1]{0}', space=sflag, size = 0x4, scoped, tag = 'scoped memory for tpu_custom_call.1']
    #allocation10 [shape = 'u8[1024]{0}', space=vmem, size = 0x400, scoped, tag = 'input window, operand 4, single buffered']
    #allocation11 [shape = 'u8[131072]{0}', space=vmem, size = 0x20000, scoped, tag = 'input window, operand 5, single buffered']
    #allocation12 [shape = 's32[1]{0}', space=sflag, size = 0x4, scoped, tag = 'scoped memory for tpu_custom_call.1']
    #allocation13 [shape = 'u8[1024]{0}', space=vmem, size = 0x400, scoped, tag = 'input window, operand 6, single buffered']
    #allocation14 [shape = 'u8[131072]{0}', space=vmem, size = 0x20000, scoped, tag = 'input window, operand 7, single buffered']
    #allocation15 [shape = 's32[1]{0}', space=sflag, size = 0x4, scoped, tag = 'scoped memory for tpu_custom_call.1']
    #allocation16 [shape = 'u8[1024]{0}', space=vmem, size = 0x400, scoped, tag = 'input window, operand 8, single buffered']
    #allocation17 [shape = 'u8[131072]{0}', space=vmem, size = 0x20000, scoped, tag = 'input window, operand 9, single buffered']
    #allocation18 [shape = 's32[1]{0}', space=sflag, size = 0x4, scoped, tag = 'scoped memory for tpu_custom_call.1']
    #allocation19 [shape = 'u8[1024]{0}', space=vmem, size = 0x400, scoped, tag = 'input window, operand 10, single buffered']
    #allocation20 [shape = 'u8[65536]{0}', space=vmem, size = 0x10000, scoped, tag = 'input window, operand 11, single buffered']
    #allocation21 [shape = 's32[1]{0}', space=sflag, size = 0x4, scoped, tag = 'scoped memory for tpu_custom_call.1']
    #allocation22 [shape = 'u8[512]{0}', space=vmem, size = 0x400, scoped, tag = 'input window, operand 12, single buffered']
    #allocation23 [shape = 'u8[4096]{0}', space=vmem, size = 0x1000, scoped, tag = 'output window, operand 0, single buffered']
    %18 = vsyncpa [#allocation3], 0
    %19 = vsyncpa [#allocation6], 0
    %20 = vsyncpa [#allocation9], 0
    %21 = vsyncpa [#allocation12], 0
    %22 = vsyncpa [#allocation15], 0
    %23 = vsyncpa [#allocation18], 0
    %24 = vsyncpa [#allocation21], 0
    %25 = vsyncpa [#allocation4], 0
    // Predicated region
    $region2: #{tpu_custom_call.1} parent=1 // pred_check
      _
    $region3: #{tpu_custom_call.1} parent=1 // pred_check_branch
      %27 = sbr.rel (0) target = $region5
    $region4: #{tpu_custom_call.1} parent=1 // pred_region
      %s29 = ssub.s32 3072, 3072
      %30 = vsyncadd [#allocation3], %s29
      %s32 = sshll.u32 [#allocation2], 4
      %s33 = int_to_ptr.vmem [resolvable:$true] %s32
      %35 = dma.hbm_to_vmem [thread:$0]  %s0, 3072, %s33, [#allocation3]
    $region5: #{tpu_custom_call.1} parent=1 // pred_fallthru
      _
    // Predicated region
    $region6: #{tpu_custom_call.1} parent=1 // pred_check
      _
    $region7: #{tpu_custom_call.1} parent=1 // pred_check_branch
      %37 = sbr.rel (0) target = $region9
    $region8: #{tpu_custom_call.1} parent=1 // pred_region
      %s39 = ssub.s32 49152, 49152
      %40 = vsyncadd [#allocation6], %s39
      %s41 = sshll.u32 [#allocation5], 4
      %s42 = int_to_ptr.vmem [resolvable:$true] %s41
      %47 = dma.hbm_to_vmem [thread:$0]  %s1, 49152, %s42, [#allocation6], 128, 128, 8
    $region9: #{tpu_custom_call.1} parent=1 // pred_fallthru
      _
    // Predicated region
    $region10: #{tpu_custom_call.1} parent=1 // pred_check
      _
    $region11: #{tpu_custom_call.1} parent=1 // pred_check_branch
      %49 = sbr.rel (0) target = $region13
    $region12: #{tpu_custom_call.1} parent=1 // pred_region
      %s51 = ssub.s32 32, 32
      %52 = vsyncadd [#allocation6], %s51
      %s54 = sshll.u32 [#allocation7], 4
      %s55 = int_to_ptr.vmem [resolvable:$true] %s54
      %57 = dma.hbm_to_vmem [thread:$0]  %s2, 32, %s55, [#allocation6]
    $region13: #{tpu_custom_call.1} parent=1 // pred_fallthru
      _
    // Predicated region
    $region14: #{tpu_custom_call.1} parent=1 // pred_check
      _
    $region15: #{tpu_custom_call.1} parent=1 // pred_check_branch
      %59 = sbr.rel (0) target = $region17
    $region16: #{tpu_custom_call.1} parent=1 // pred_region
      %s61 = ssub.s32 4096, 4096
      %62 = vsyncadd [#allocation9], %s61
      %s63 = sshll.u32 [#allocation8], 4
      %s64 = int_to_ptr.vmem [resolvable:$true] %s63
      %69 = dma.hbm_to_vmem [thread:$0]  %s3, 4096, %s64, [#allocation9], 128, 128, 8
    $region17: #{tpu_custom_call.1} parent=1 // pred_fallthru
      _
    // Predicated region
    $region18: #{tpu_custom_call.1} parent=1 // pred_check
      _
    $region19: #{tpu_custom_call.1} parent=1 // pred_check_branch
      %71 = sbr.rel (0) target = $region21
    $region20: #{tpu_custom_call.1} parent=1 // pred_region
      %s73 = ssub.s32 32, 32
      %74 = vsyncadd [#allocation9], %s73
      %s76 = sshll.u32 [#allocation10], 4
      %s77 = int_to_ptr.vmem [resolvable:$true] %s76
      %79 = dma.hbm_to_vmem [thread:$0]  %s4, 32, %s77, [#allocation9]
    $region21: #{tpu_custom_call.1} parent=1 // pred_fallthru
      _
    // Predicated region
    $region22: #{tpu_custom_call.1} parent=1 // pred_check
      _
    $region23: #{tpu_custom_call.1} parent=1 // pred_check_branch
      %81 = sbr.rel (0) target = $region25
    $region24: #{tpu_custom_call.1} parent=1 // pred_region
      %s83 = ssub.s32 4096, 4096
      %84 = vsyncadd [#allocation12], %s83
      %s85 = sshll.u32 [#allocation11], 4
      %s86 = int_to_ptr.vmem [resolvable:$true] %s85
      %91 = dma.hbm_to_vmem [thread:$0]  %s5, 4096, %s86, [#allocation12], 128, 128, 8
    $region25: #{tpu_custom_call.1} parent=1 // pred_fallthru
      _
    // Predicated region
    $region26: #{tpu_custom_call.1} parent=1 // pred_check
      _
    $region27: #{tpu_custom_call.1} parent=1 // pred_check_branch
      %93 = sbr.rel (0) target = $region29
    $region28: #{tpu_custom_call.1} parent=1 // pred_region
      %s95 = ssub.s32 32, 32
      %96 = vsyncadd [#allocation12], %s95
      %s98 = sshll.u32 [#allocation13], 4
      %s99 = int_to_ptr.vmem [resolvable:$true] %s98
      %101 = dma.hbm_to_vmem [thread:$0]  %s6, 32, %s99, [#allocation12]
    $region29: #{tpu_custom_call.1} parent=1 // pred_fallthru
      _
    // Predicated region
    $region30: #{tpu_custom_call.1} parent=1 // pred_check
      _
    $region31: #{tpu_custom_call.1} parent=1 // pred_check_branch
      %103 = sbr.rel (0) target = $region33
    $region32: #{tpu_custom_call.1} parent=1 // pred_region
      %s105 = ssub.s32 4096, 4096
      %106 = vsyncadd [#allocation15], %s105
      %s107 = sshll.u32 [#allocation14], 4
      %s108 = int_to_ptr.vmem [resolvable:$true] %s107
      %113 = dma.hbm_to_vmem [thread:$0]  %s7, 4096, %s108, [#allocation15], 128, 128, 8
    $region33: #{tpu_custom_call.1} parent=1 // pred_fallthru
      _
    // Predicated region
    $region34: #{tpu_custom_call.1} parent=1 // pred_check
      _
    $region35: #{tpu_custom_call.1} parent=1 // pred_check_branch
      %115 = sbr.rel (0) target = $region37
    $region36: #{tpu_custom_call.1} parent=1 // pred_region
      %s117 = ssub.s32 32, 32
      %118 = vsyncadd [#allocation15], %s117
      %s120 = sshll.u32 [#allocation16], 4
      %s121 = int_to_ptr.vmem [resolvable:$true] %s120
      %123 = dma.hbm_to_vmem [thread:$0]  %s8, 32, %s121, [#allocation15]
    $region37: #{tpu_custom_call.1} parent=1 // pred_fallthru
      _
    // Predicated region
    $region38: #{tpu_custom_call.1} parent=1 // pred_check
      _
    $region39: #{tpu_custom_call.1} parent=1 // pred_check_branch
      %125 = sbr.rel (0) target = $region41
    $region40: #{tpu_custom_call.1} parent=1 // pred_region
      %s127 = ssub.s32 4096, 4096
      %128 = vsyncadd [#allocation18], %s127
      %s129 = sshll.u32 [#allocation17], 4
      %s130 = int_to_ptr.vmem [resolvable:$true] %s129
      %135 = dma.hbm_to_vmem [thread:$0]  %s9, 4096, %s130, [#allocation18], 128, 128, 8
    $region41: #{tpu_custom_call.1} parent=1 // pred_fallthru
      _
    // Predicated region
    $region42: #{tpu_custom_call.1} parent=1 // pred_check
      _
    $region43: #{tpu_custom_call.1} parent=1 // pred_check_branch
      %137 = sbr.rel (0) target = $region45
    $region44: #{tpu_custom_call.1} parent=1 // pred_region
      %s139 = ssub.s32 32, 32
      %140 = vsyncadd [#allocation18], %s139
      %s142 = sshll.u32 [#allocation19], 4
      %s143 = int_to_ptr.vmem [resolvable:$true] %s142
      %145 = dma.hbm_to_vmem [thread:$0]  %s10, 32, %s143, [#allocation18]
    $region45: #{tpu_custom_call.1} parent=1 // pred_fallthru
      _
    // Predicated region
    $region46: #{tpu_custom_call.1} parent=1 // pred_check
      _
    $region47: #{tpu_custom_call.1} parent=1 // pred_check_branch
      %147 = sbr.rel (0) target = $region49
    $region48: #{tpu_custom_call.1} parent=1 // pred_region
      %s149 = ssub.s32 2048, 2048
      %150 = vsyncadd [#allocation21], %s149
      %s151 = sshll.u32 [#allocation20], 4
      %s152 = int_to_ptr.vmem [resolvable:$true] %s151
      %157 = dma.hbm_to_vmem [thread:$0]  %s11, 2048, %s152, [#allocation21], 64, 64, 4
    $region49: #{tpu_custom_call.1} parent=1 // pred_fallthru
      _
    // Predicated region
    $region50: #{tpu_custom_call.1} parent=1 // pred_check
      _
    $region51: #{tpu_custom_call.1} parent=1 // pred_check_branch
      %159 = sbr.rel (0) target = $region53
    $region52: #{tpu_custom_call.1} parent=1 // pred_region
      %s161 = ssub.s32 16, 16
      %162 = vsyncadd [#allocation21], %s161
      %s164 = sshll.u32 [#allocation22], 4
      %s165 = int_to_ptr.vmem [resolvable:$true] %s164
      %167 = dma.hbm_to_vmem [thread:$0]  %s12, 16, %s165, [#allocation21]
    $region53: #{tpu_custom_call.1} parent=1 // pred_fallthru
      _
    // Predicated region
    $region54: #{tpu_custom_call.1} parent=1 // pred_check
      _
    $region55: #{tpu_custom_call.1} parent=1 // pred_check_branch
      %169 = sbr.rel (0) target = $region57
    $region56: #{tpu_custom_call.1} parent=1 // pred_region
      %170 = dma.done [#allocation3], 3072
    $region57: #{tpu_custom_call.1} parent=1 // pred_fallthru
      _
    // Predicated region
    $region58: #{tpu_custom_call.1} parent=1 // pred_check
      _
    $region59: #{tpu_custom_call.1} parent=1 // pred_check_branch
      %172 = sbr.rel (0) target = $region61
    $region60: #{tpu_custom_call.1} parent=1 // pred_region
      %173 = dma.done [#allocation6], 49152
    $region61: #{tpu_custom_call.1} parent=1 // pred_fallthru
      _
    // Predicated region
    $region62: #{tpu_custom_call.1} parent=1 // pred_check
      _
    $region63: #{tpu_custom_call.1} parent=1 // pred_check_branch
      %175 = sbr.rel (0) target = $region65
    $region64: #{tpu_custom_call.1} parent=1 // pred_region
      %176 = dma.done [#allocation6], 32
    $region65: #{tpu_custom_call.1} parent=1 // pred_fallthru
      _
    // Predicated region
    $region66: #{tpu_custom_call.1} parent=1 // pred_check
      _
    $region67: #{tpu_custom_call.1} parent=1 // pred_check_branch
      %178 = sbr.rel (0) target = $region69
    $region68: #{tpu_custom_call.1} parent=1 // pred_region
      %179 = dma.done [#allocation9], 4096
    $region69: #{tpu_custom_call.1} parent=1 // pred_fallthru
      _
    // Predicated region
    $region70: #{tpu_custom_call.1} parent=1 // pred_check
      _
    $region71: #{tpu_custom_call.1} parent=1 // pred_check_branch
      %181 = sbr.rel (0) target = $region73
    $region72: #{tpu_custom_call.1} parent=1 // pred_region
      %182 = dma.done [#allocation9], 32
    $region73: #{tpu_custom_call.1} parent=1 // pred_fallthru
      _
    // Predicated region
    $region74: #{tpu_custom_call.1} parent=1 // pred_check
      _
    $region75: #{tpu_custom_call.1} parent=1 // pred_check_branch
      %184 = sbr.rel (0) target = $region77
    $region76: #{tpu_custom_call.1} parent=1 // pred_region
      %185 = dma.done [#allocation12], 4096
    $region77: #{tpu_custom_call.1} parent=1 // pred_fallthru
      _
    // Predicated region
    $region78: #{tpu_custom_call.1} parent=1 // pred_check
      _
    $region79: #{tpu_custom_call.1} parent=1 // pred_check_branch
      %187 = sbr.rel (0) target = $region81
    $region80: #{tpu_custom_call.1} parent=1 // pred_region
      %188 = dma.done [#allocation12], 32
    $region81: #{tpu_custom_call.1} parent=1 // pred_fallthru
      _
    // Predicated region
    $region82: #{tpu_custom_call.1} parent=1 // pred_check
      _
    $region83: #{tpu_custom_call.1} parent=1 // pred_check_branch
      %190 = sbr.rel (0) target = $region85
    $region84: #{tpu_custom_call.1} parent=1 // pred_region
      %191 = dma.done [#allocation15], 4096
    $region85: #{tpu_custom_call.1} parent=1 // pred_fallthru
      _
    // Predicated region
    $region86: #{tpu_custom_call.1} parent=1 // pred_check
      _
    $region87: #{tpu_custom_call.1} parent=1 // pred_check_branch
      %193 = sbr.rel (0) target = $region89
    $region88: #{tpu_custom_call.1} parent=1 // pred_region
      %194 = dma.done [#allocation15], 32
    $region89: #{tpu_custom_call.1} parent=1 // pred_fallthru
      _
    // Predicated region
    $region90: #{tpu_custom_call.1} parent=1 // pred_check
      _
    $region91: #{tpu_custom_call.1} parent=1 // pred_check_branch
      %196 = sbr.rel (0) target = $region93
    $region92: #{tpu_custom_call.1} parent=1 // pred_region
      %197 = dma.done [#allocation18], 4096
    $region93: #{tpu_custom_call.1} parent=1 // pred_fallthru
      _
    // Predicated region
    $region94: #{tpu_custom_call.1} parent=1 // pred_check
      _
    $region95: #{tpu_custom_call.1} parent=1 // pred_check_branch
      %199 = sbr.rel (0) target = $region97
    $region96: #{tpu_custom_call.1} parent=1 // pred_region
      %200 = dma.done [#allocation18], 32
    $region97: #{tpu_custom_call.1} parent=1 // pred_fallthru
      _
    // Predicated region
    $region98: #{tpu_custom_call.1} parent=1 // pred_check
      _
    $region99: #{tpu_custom_call.1} parent=1 // pred_check_branch
      %202 = sbr.rel (0) target = $region101
    $region100: #{tpu_custom_call.1} parent=1 // pred_region
      %203 = dma.done [#allocation21], 2048
    $region101: #{tpu_custom_call.1} parent=1 // pred_fallthru
      _
    // Predicated region
    $region102: #{tpu_custom_call.1} parent=1 // pred_check
      _
    $region103: #{tpu_custom_call.1} parent=1 // pred_check_branch
      %205 = sbr.rel (0) target = $region105
    $region104: #{tpu_custom_call.1} parent=1 // pred_region
      %206 = dma.done [#allocation21], 16
    $region105: #{tpu_custom_call.1} parent=1 // pred_fallthru
      _
    %v208 = vld [vmem:[#allocation2] sm:$0xff]
    %v209 = vld [vmem:[#allocation2 + $0x8] sm:$0xff]
    %v210 = vld [vmem:[#allocation2 + $0x10] sm:$0xff]
    %v211 = vld [vmem:[#allocation2 + $0x18] sm:$0xff]
    %v212 = vld [vmem:[#allocation2 + $0x20] sm:$0xff]
    %v213 = vld [vmem:[#allocation2 + $0x28] sm:$0xff]
    %v214 = vld [vmem:[#allocation2 + $0x30] sm:$0xff]
    %v215 = vld [vmem:[#allocation2 + $0x38] sm:$0xff]
    %v216 = vld [vmem:[#allocation2 + $0x40] sm:$0xff]
    %v217 = vld [vmem:[#allocation2 + $0x48] sm:$0xff]
    %v218 = vld [vmem:[#allocation2 + $0x50] sm:$0xff]
    %v219 = vld [vmem:[#allocation2 + $0x58] sm:$0xff]
    %v220 = vld [vmem:[#allocation2 + $0x60] sm:$0xff]
    %v221 = vld [vmem:[#allocation2 + $0x68] sm:$0xff]
    %v222 = vld [vmem:[#allocation2 + $0x70] sm:$0xff]
    %v223 = vld [vmem:[#allocation2 + $0x78] sm:$0xff]
    %v224 = vld [vmem:[#allocation2 + $0x80] sm:$0xff]
    %v225 = vld [vmem:[#allocation2 + $0x88] sm:$0xff]
    %v226 = vld [vmem:[#allocation2 + $0x90] sm:$0xff]
    %v227 = vld [vmem:[#allocation2 + $0x98] sm:$0xff]
    %v228 = vld [vmem:[#allocation2 + $0xa0] sm:$0xff]
    %v229 = vld [vmem:[#allocation2 + $0xa8] sm:$0xff]
    %v230 = vld [vmem:[#allocation2 + $0xb0] sm:$0xff]
    %v231 = vld [vmem:[#allocation2 + $0xb8] sm:$0xff]
    %v232 = vpack.c.bf16 %v208, %v208
    %v233 = vpack.c.bf16 %v209, %v209
    %v234 = vpack.c.bf16 %v210, %v210
    %v235 = vpack.c.bf16 %v211, %v211
    %v236 = vpack.c.bf16 %v212, %v212
    %v237 = vpack.c.bf16 %v213, %v213
    %v238 = vpack.c.bf16 %v214, %v214
    %v239 = vpack.c.bf16 %v215, %v215
    %v240 = vpack.c.bf16 %v216, %v216
    %v241 = vpack.c.bf16 %v217, %v217
    %v242 = vpack.c.bf16 %v218, %v218
    %v243 = vpack.c.bf16 %v219, %v219
    %v244 = vpack.c.bf16 %v220, %v220
    %v245 = vpack.c.bf16 %v221, %v221
    %v246 = vpack.c.bf16 %v222, %v222
    %v247 = vpack.c.bf16 %v223, %v223
    %v248 = vpack.c.bf16 %v224, %v224
    %v249 = vpack.c.bf16 %v225, %v225
    %v250 = vpack.c.bf16 %v226, %v226
    %v251 = vpack.c.bf16 %v227, %v227
    %v252 = vpack.c.bf16 %v228, %v228
    %v253 = vpack.c.bf16 %v229, %v229
    %v254 = vpack.c.bf16 %v230, %v230
    %v255 = vpack.c.bf16 %v231, %v231
    %v256 = vld [vmem:[#allocation5] sm:$0xff]
    %v257 = vld [vmem:[#allocation5 + $0x8] sm:$0xff]
    %v258 = vld [vmem:[#allocation5 + $0x10] sm:$0xff]
    %v259 = vld [vmem:[#allocation5 + $0x18] sm:$0xff]
    %v260 = vld [vmem:[#allocation5 + $0x20] sm:$0xff]
    %v261 = vld [vmem:[#allocation5 + $0x28] sm:$0xff]
    %v262 = vld [vmem:[#allocation5 + $0x30] sm:$0xff]
    %v263 = vld [vmem:[#allocation5 + $0x38] sm:$0xff]
    %v264 = vld [vmem:[#allocation5 + $0x40] sm:$0xff]
    %v265 = vld [vmem:[#allocation5 + $0x48] sm:$0xff]
    %v266 = vld [vmem:[#allocation5 + $0x50] sm:$0xff]
    %v267 = vld [vmem:[#allocation5 + $0x58] sm:$0xff]
    %v268 = vld [vmem:[#allocation5 + $0x60] sm:$0xff]
    %v269 = vld [vmem:[#allocation5 + $0x68] sm:$0xff]
    %v270 = vld [vmem:[#allocation5 + $0x70] sm:$0xff]
    %v271 = vld [vmem:[#allocation5 + $0x78] sm:$0xff]
    %v272 = vld [vmem:[#allocation5 + $0x80] sm:$0xff]
    %v273 = vld [vmem:[#allocation5 + $0x88] sm:$0xff]
    %v274 = vld [vmem:[#allocation5 + $0x90] sm:$0xff]
    %v275 = vld [vmem:[#allocation5 + $0x98] sm:$0xff]
    %v276 = vld [vmem:[#allocation5 + $0xa0] sm:$0xff]
    %v277 = vld [vmem:[#allocation5 + $0xa8] sm:$0xff]
    %v278 = vld [vmem:[#allocation5 + $0xb0] sm:$0xff]
    %v279 = vld [vmem:[#allocation5 + $0xb8] sm:$0xff]
    %v280 = vld [vmem:[#allocation5 + $0xc0] sm:$0xff]
    %v281 = vld [vmem:[#allocation5 + $0xc8] sm:$0xff]
    %v282 = vld [vmem:[#allocation5 + $0xd0] sm:$0xff]
    %v283 = vld [vmem:[#allocation5 + $0xd8] sm:$0xff]
    %v284 = vld [vmem:[#allocation5 + $0xe0] sm:$0xff]
    %v285 = vld [vmem:[#allocation5 + $0xe8] sm:$0xff]
    %v286 = vld [vmem:[#allocation5 + $0xf0] sm:$0xff]
    %v287 = vld [vmem:[#allocation5 + $0xf8] sm:$0xff]
    %v288 = vld [vmem:[#allocation5 + $0x100] sm:$0xff]
    %v289 = vld [vmem:[#allocation5 + $0x108] sm:$0xff]
    %v290 = vld [vmem:[#allocation5 + $0x110] sm:$0xff]
    %v291 = vld [vmem:[#allocation5 + $0x118] sm:$0xff]
    %v292 = vld [vmem:[#allocation5 + $0x120] sm:$0xff]
    %v293 = vld [vmem:[#allocation5 + $0x128] sm:$0xff]
    %v294 = vld [vmem:[#allocation5 + $0x130] sm:$0xff]
    %v295 = vld [vmem:[#allocation5 + $0x138] sm:$0xff]
    %v296 = vld [vmem:[#allocation5 + $0x140] sm:$0xff]
    %v297 = vld [vmem:[#allocation5 + $0x148] sm:$0xff]
    %v298 = vld [vmem:[#allocation5 + $0x150] sm:$0xff]
    %v299 = vld [vmem:[#allocation5 + $0x158] sm:$0xff]
    %v300 = vld [vmem:[#allocation5 + $0x160] sm:$0xff]
    %v301 = vld [vmem:[#allocation5 + $0x168] sm:$0xff]
    %v302 = vld [vmem:[#allocation5 + $0x170] sm:$0xff]
    %v303 = vld [vmem:[#allocation5 + $0x178] sm:$0xff]
    %v304 = vld [vmem:[#allocation5 + $0x180] sm:$0xff]
    %v305 = vld [vmem:[#allocation5 + $0x188] sm:$0xff]
    %v306 = vld [vmem:[#allocation5 + $0x190] sm:$0xff]
    %v307 = vld [vmem:[#allocation5 + $0x198] sm:$0xff]
    %v308 = vld [vmem:[#allocation5 + $0x1a0] sm:$0xff]
    %v309 = vld [vmem:[#allocation5 + $0x1a8] sm:$0xff]
    %v310 = vld [vmem:[#allocation5 + $0x1b0] sm:$0xff]
    %v311 = vld [vmem:[#allocation5 + $0x1b8] sm:$0xff]
    %v312 = vld [vmem:[#allocation5 + $0x1c0] sm:$0xff]
    %v313 = vld [vmem:[#allocation5 + $0x1c8] sm:$0xff]
    %v314 = vld [vmem:[#allocation5 + $0x1d0] sm:$0xff]
    %v315 = vld [vmem:[#allocation5 + $0x1d8] sm:$0xff]
    %v316 = vld [vmem:[#allocation5 + $0x1e0] sm:$0xff]
    %v317 = vld [vmem:[#allocation5 + $0x1e8] sm:$0xff]
    %v318 = vld [vmem:[#allocation5 + $0x1f0] sm:$0xff]
    %v319 = vld [vmem:[#allocation5 + $0x1f8] sm:$0xff]
    %v320 = vld [vmem:[#allocation5 + $0x200] sm:$0xff]
    %v321 = vld [vmem:[#allocation5 + $0x208] sm:$0xff]
    %v322 = vld [vmem:[#allocation5 + $0x210] sm:$0xff]
    %v323 = vld [vmem:[#allocation5 + $0x218] sm:$0xff]
    %v324 = vld [vmem:[#allocation5 + $0x220] sm:$0xff]
    %v325 = vld [vmem:[#allocation5 + $0x228] sm:$0xff]
    %v326 = vld [vmem:[#allocation5 + $0x230] sm:$0xff]
    %v327 = vld [vmem:[#allocation5 + $0x238] sm:$0xff]
    %v328 = vld [vmem:[#allocation5 + $0x240] sm:$0xff]
    %v329 = vld [vmem:[#allocation5 + $0x248] sm:$0xff]
    %v330 = vld [vmem:[#allocation5 + $0x250] sm:$0xff]
    %v331 = vld [vmem:[#allocation5 + $0x258] sm:$0xff]
    %v332 = vld [vmem:[#allocation5 + $0x260] sm:$0xff]
    %v333 = vld [vmem:[#allocation5 + $0x268] sm:$0xff]
    %v334 = vld [vmem:[#allocation5 + $0x270] sm:$0xff]
    %v335 = vld [vmem:[#allocation5 + $0x278] sm:$0xff]
    %v336 = vld [vmem:[#allocation5 + $0x280] sm:$0xff]
    %v337 = vld [vmem:[#allocation5 + $0x288] sm:$0xff]
    %v338 = vld [vmem:[#allocation5 + $0x290] sm:$0xff]
    %v339 = vld [vmem:[#allocation5 + $0x298] sm:$0xff]
    %v340 = vld [vmem:[#allocation5 + $0x2a0] sm:$0xff]
    %v341 = vld [vmem:[#allocation5 + $0x2a8] sm:$0xff]
    %v342 = vld [vmem:[#allocation5 + $0x2b0] sm:$0xff]
    %v343 = vld [vmem:[#allocation5 + $0x2b8] sm:$0xff]
    %v344 = vld [vmem:[#allocation5 + $0x2c0] sm:$0xff]
    %v345 = vld [vmem:[#allocation5 + $0x2c8] sm:$0xff]
    %v346 = vld [vmem:[#allocation5 + $0x2d0] sm:$0xff]
    %v347 = vld [vmem:[#allocation5 + $0x2d8] sm:$0xff]
    %v348 = vld [vmem:[#allocation5 + $0x2e0] sm:$0xff]
    %v349 = vld [vmem:[#allocation5 + $0x2e8] sm:$0xff]
    %v350 = vld [vmem:[#allocation5 + $0x2f0] sm:$0xff]
    %v351 = vld [vmem:[#allocation5 + $0x2f8] sm:$0xff]
    %v352 = vld [vmem:[#allocation5 + $0x300] sm:$0xff]
    %v353 = vld [vmem:[#allocation5 + $0x308] sm:$0xff]
    %v354 = vld [vmem:[#allocation5 + $0x310] sm:$0xff]
    %v355 = vld [vmem:[#allocation5 + $0x318] sm:$0xff]
    %v356 = vld [vmem:[#allocation5 + $0x320] sm:$0xff]
    %v357 = vld [vmem:[#allocation5 + $0x328] sm:$0xff]
    %v358 = vld [vmem:[#allocation5 + $0x330] sm:$0xff]
    %v359 = vld [vmem:[#allocation5 + $0x338] sm:$0xff]
    %v360 = vld [vmem:[#allocation5 + $0x340] sm:$0xff]
    %v361 = vld [vmem:[#allocation5 + $0x348] sm:$0xff]
    %v362 = vld [vmem:[#allocation5 + $0x350] sm:$0xff]
    %v363 = vld [vmem:[#allocation5 + $0x358] sm:$0xff]
    %v364 = vld [vmem:[#allocation5 + $0x360] sm:$0xff]
    %v365 = vld [vmem:[#allocation5 + $0x368] sm:$0xff]
    %v366 = vld [vmem:[#allocation5 + $0x370] sm:$0xff]
    %v367 = vld [vmem:[#allocation5 + $0x378] sm:$0xff]
    %v368 = vld [vmem:[#allocation5 + $0x380] sm:$0xff]
    %v369 = vld [vmem:[#allocation5 + $0x388] sm:$0xff]
    %v370 = vld [vmem:[#allocation5 + $0x390] sm:$0xff]
    %v371 = vld [vmem:[#allocation5 + $0x398] sm:$0xff]
    %v372 = vld [vmem:[#allocation5 + $0x3a0] sm:$0xff]
    %v373 = vld [vmem:[#allocation5 + $0x3a8] sm:$0xff]
    %v374 = vld [vmem:[#allocation5 + $0x3b0] sm:$0xff]
    %v375 = vld [vmem:[#allocation5 + $0x3b8] sm:$0xff]
    %v376 = vld [vmem:[#allocation5 + $0x3c0] sm:$0xff]
    %v377 = vld [vmem:[#allocation5 + $0x3c8] sm:$0xff]
    %v378 = vld [vmem:[#allocation5 + $0x3d0] sm:$0xff]
    %v379 = vld [vmem:[#allocation5 + $0x3d8] sm:$0xff]
    %v380 = vld [vmem:[#allocation5 + $0x3e0] sm:$0xff]
    %v381 = vld [vmem:[#allocation5 + $0x3e8] sm:$0xff]
    %v382 = vld [vmem:[#allocation5 + $0x3f0] sm:$0xff]
    %v383 = vld [vmem:[#allocation5 + $0x3f8] sm:$0xff]
    %v384 = vld [vmem:[#allocation5 + $0x400] sm:$0xff]
    %v385 = vld [vmem:[#allocation5 + $0x408] sm:$0xff]
    %v386 = vld [vmem:[#allocation5 + $0x410] sm:$0xff]
    %v387 = vld [vmem:[#allocation5 + $0x418] sm:$0xff]
    %v388 = vld [vmem:[#allocation5 + $0x420] sm:$0xff]
    %v389 = vld [vmem:[#allocation5 + $0x428] sm:$0xff]
    %v390 = vld [vmem:[#allocation5 + $0x430] sm:$0xff]
    %v391 = vld [vmem:[#allocation5 + $0x438] sm:$0xff]
    %v392 = vld [vmem:[#allocation5 + $0x440] sm:$0xff]
    %v393 = vld [vmem:[#allocation5 + $0x448] sm:$0xff]
    %v394 = vld [vmem:[#allocation5 + $0x450] sm:$0xff]
    %v395 = vld [vmem:[#allocation5 + $0x458] sm:$0xff]
    %v396 = vld [vmem:[#allocation5 + $0x460] sm:$0xff]
    %v397 = vld [vmem:[#allocation5 + $0x468] sm:$0xff]
    %v398 = vld [vmem:[#allocation5 + $0x470] sm:$0xff]
    %v399 = vld [vmem:[#allocation5 + $0x478] sm:$0xff]
    %v400 = vld [vmem:[#allocation5 + $0x480] sm:$0xff]
    %v401 = vld [vmem:[#allocation5 + $0x488] sm:$0xff]
    %v402 = vld [vmem:[#allocation5 + $0x490] sm:$0xff]
    %v403 = vld [vmem:[#allocation5 + $0x498] sm:$0xff]
    %v404 = vld [vmem:[#allocation5 + $0x4a0] sm:$0xff]
    %v405 = vld [vmem:[#allocation5 + $0x4a8] sm:$0xff]
    %v406 = vld [vmem:[#allocation5 + $0x4b0] sm:$0xff]
    %v407 = vld [vmem:[#allocation5 + $0x4b8] sm:$0xff]
    %v408 = vld [vmem:[#allocation5 + $0x4c0] sm:$0xff]
    %v409 = vld [vmem:[#allocation5 + $0x4c8] sm:$0xff]
    %v410 = vld [vmem:[#allocation5 + $0x4d0] sm:$0xff]
    %v411 = vld [vmem:[#allocation5 + $0x4d8] sm:$0xff]
    %v412 = vld [vmem:[#allocation5 + $0x4e0] sm:$0xff]
    %v413 = vld [vmem:[#allocation5 + $0x4e8] sm:$0xff]
    %v414 = vld [vmem:[#allocation5 + $0x4f0] sm:$0xff]
    %v415 = vld [vmem:[#allocation5 + $0x4f8] sm:$0xff]
    %v416 = vld [vmem:[#allocation5 + $0x500] sm:$0xff]
    %v417 = vld [vmem:[#allocation5 + $0x508] sm:$0xff]
    %v418 = vld [vmem:[#allocation5 + $0x510] sm:$0xff]
    %v419 = vld [vmem:[#allocation5 + $0x518] sm:$0xff]
    %v420 = vld [vmem:[#allocation5 + $0x520] sm:$0xff]
    %v421 = vld [vmem:[#allocation5 + $0x528] sm:$0xff]
    %v422 = vld [vmem:[#allocation5 + $0x530] sm:$0xff]
    %v423 = vld [vmem:[#allocation5 + $0x538] sm:$0xff]
    %v424 = vld [vmem:[#allocation5 + $0x540] sm:$0xff]
    %v425 = vld [vmem:[#allocation5 + $0x548] sm:$0xff]
    %v426 = vld [vmem:[#allocation5 + $0x550] sm:$0xff]
    %v427 = vld [vmem:[#allocation5 + $0x558] sm:$0xff]
    %v428 = vld [vmem:[#allocation5 + $0x560] sm:$0xff]
    %v429 = vld [vmem:[#allocation5 + $0x568] sm:$0xff]
    %v430 = vld [vmem:[#allocation5 + $0x570] sm:$0xff]
    %v431 = vld [vmem:[#allocation5 + $0x578] sm:$0xff]
    %v432 = vld [vmem:[#allocation5 + $0x580] sm:$0xff]
    %v433 = vld [vmem:[#allocation5 + $0x588] sm:$0xff]
    %v434 = vld [vmem:[#allocation5 + $0x590] sm:$0xff]
    %v435 = vld [vmem:[#allocation5 + $0x598] sm:$0xff]
    %v436 = vld [vmem:[#allocation5 + $0x5a0] sm:$0xff]
    %v437 = vld [vmem:[#allocation5 + $0x5a8] sm:$0xff]
    %v438 = vld [vmem:[#allocation5 + $0x5b0] sm:$0xff]
    %v439 = vld [vmem:[#allocation5 + $0x5b8] sm:$0xff]
    %v440 = vld [vmem:[#allocation5 + $0x5c0] sm:$0xff]
    %v441 = vld [vmem:[#allocation5 + $0x5c8] sm:$0xff]
    %v442 = vld [vmem:[#allocation5 + $0x5d0] sm:$0xff]
    %v443 = vld [vmem:[#allocation5 + $0x5d8] sm:$0xff]
    %v444 = vld [vmem:[#allocation5 + $0x5e0] sm:$0xff]
    %v445 = vld [vmem:[#allocation5 + $0x5e8] sm:$0xff]
    %v446 = vld [vmem:[#allocation5 + $0x5f0] sm:$0xff]
    %v447 = vld [vmem:[#allocation5 + $0x5f8] sm:$0xff]
    %v448 = vld [vmem:[#allocation5 + $0x600] sm:$0xff]
    %v449 = vld [vmem:[#allocation5 + $0x608] sm:$0xff]
    %v450 = vld [vmem:[#allocation5 + $0x610] sm:$0xff]
    %v451 = vld [vmem:[#allocation5 + $0x618] sm:$0xff]
    %v452 = vld [vmem:[#allocation5 + $0x620] sm:$0xff]
    %v453 = vld [vmem:[#allocation5 + $0x628] sm:$0xff]
    %v454 = vld [vmem:[#allocation5 + $0x630] sm:$0xff]
    %v455 = vld [vmem:[#allocation5 + $0x638] sm:$0xff]
    %v456 = vld [vmem:[#allocation5 + $0x640] sm:$0xff]
    %v457 = vld [vmem:[#allocation5 + $0x648] sm:$0xff]
    %v458 = vld [vmem:[#allocation5 + $0x650] sm:$0xff]
    %v459 = vld [vmem:[#allocation5 + $0x658] sm:$0xff]
    %v460 = vld [vmem:[#allocation5 + $0x660] sm:$0xff]
    %v461 = vld [vmem:[#allocation5 + $0x668] sm:$0xff]
    %v462 = vld [vmem:[#allocation5 + $0x670] sm:$0xff]
    %v463 = vld [vmem:[#allocation5 + $0x678] sm:$0xff]
    %v464 = vld [vmem:[#allocation5 + $0x680] sm:$0xff]
    %v465 = vld [vmem:[#allocation5 + $0x688] sm:$0xff]
    %v466 = vld [vmem:[#allocation5 + $0x690] sm:$0xff]
    %v467 = vld [vmem:[#allocation5 + $0x698] sm:$0xff]
    %v468 = vld [vmem:[#allocation5 + $0x6a0] sm:$0xff]
    %v469 = vld [vmem:[#allocation5 + $0x6a8] sm:$0xff]
    %v470 = vld [vmem:[#allocation5 + $0x6b0] sm:$0xff]
    %v471 = vld [vmem:[#allocation5 + $0x6b8] sm:$0xff]
    %v472 = vld [vmem:[#allocation5 + $0x6c0] sm:$0xff]
    %v473 = vld [vmem:[#allocation5 + $0x6c8] sm:$0xff]
    %v474 = vld [vmem:[#allocation5 + $0x6d0] sm:$0xff]
    %v475 = vld [vmem:[#allocation5 + $0x6d8] sm:$0xff]
    %v476 = vld [vmem:[#allocation5 + $0x6e0] sm:$0xff]
    %v477 = vld [vmem:[#allocation5 + $0x6e8] sm:$0xff]
    %v478 = vld [vmem:[#allocation5 + $0x6f0] sm:$0xff]
    %v479 = vld [vmem:[#allocation5 + $0x6f8] sm:$0xff]
    %v480 = vld [vmem:[#allocation5 + $0x700] sm:$0xff]
    %v481 = vld [vmem:[#allocation5 + $0x708] sm:$0xff]
    %v482 = vld [vmem:[#allocation5 + $0x710] sm:$0xff]
    %v483 = vld [vmem:[#allocation5 + $0x718] sm:$0xff]
    %v484 = vld [vmem:[#allocation5 + $0x720] sm:$0xff]
    %v485 = vld [vmem:[#allocation5 + $0x728] sm:$0xff]
    %v486 = vld [vmem:[#allocation5 + $0x730] sm:$0xff]
    %v487 = vld [vmem:[#allocation5 + $0x738] sm:$0xff]
    %v488 = vld [vmem:[#allocation5 + $0x740] sm:$0xff]
    %v489 = vld [vmem:[#allocation5 + $0x748] sm:$0xff]
    %v490 = vld [vmem:[#allocation5 + $0x750] sm:$0xff]
    %v491 = vld [vmem:[#allocation5 + $0x758] sm:$0xff]
    %v492 = vld [vmem:[#allocation5 + $0x760] sm:$0xff]
    %v493 = vld [vmem:[#allocation5 + $0x768] sm:$0xff]
    %v494 = vld [vmem:[#allocation5 + $0x770] sm:$0xff]
    %v495 = vld [vmem:[#allocation5 + $0x778] sm:$0xff]
    %v496 = vld [vmem:[#allocation5 + $0x780] sm:$0xff]
    %v497 = vld [vmem:[#allocation5 + $0x788] sm:$0xff]
    %v498 = vld [vmem:[#allocation5 + $0x790] sm:$0xff]
    %v499 = vld [vmem:[#allocation5 + $0x798] sm:$0xff]
    %v500 = vld [vmem:[#allocation5 + $0x7a0] sm:$0xff]
    %v501 = vld [vmem:[#allocation5 + $0x7a8] sm:$0xff]
    %v502 = vld [vmem:[#allocation5 + $0x7b0] sm:$0xff]
    %v503 = vld [vmem:[#allocation5 + $0x7b8] sm:$0xff]
    %v504 = vld [vmem:[#allocation5 + $0x7c0] sm:$0xff]
    %v505 = vld [vmem:[#allocation5 + $0x7c8] sm:$0xff]
    %v506 = vld [vmem:[#allocation5 + $0x7d0] sm:$0xff]
    %v507 = vld [vmem:[#allocation5 + $0x7d8] sm:$0xff]
    %v508 = vld [vmem:[#allocation5 + $0x7e0] sm:$0xff]
    %v509 = vld [vmem:[#allocation5 + $0x7e8] sm:$0xff]
    %v510 = vld [vmem:[#allocation5 + $0x7f0] sm:$0xff]
    %v511 = vld [vmem:[#allocation5 + $0x7f8] sm:$0xff]
    %v512 = vld [vmem:[#allocation5 + $0x800] sm:$0xff]
    %v513 = vld [vmem:[#allocation5 + $0x808] sm:$0xff]
    %v514 = vld [vmem:[#allocation5 + $0x810] sm:$0xff]
    %v515 = vld [vmem:[#allocation5 + $0x818] sm:$0xff]
    %v516 = vld [vmem:[#allocation5 + $0x820] sm:$0xff]
    %v517 = vld [vmem:[#allocation5 + $0x828] sm:$0xff]
    %v518 = vld [vmem:[#allocation5 + $0x830] sm:$0xff]
    %v519 = vld [vmem:[#allocation5 + $0x838] sm:$0xff]
    %v520 = vld [vmem:[#allocation5 + $0x840] sm:$0xff]
    %v521 = vld [vmem:[#allocation5 + $0x848] sm:$0xff]
    %v522 = vld [vmem:[#allocation5 + $0x850] sm:$0xff]
    %v523 = vld [vmem:[#allocation5 + $0x858] sm:$0xff]
    %v524 = vld [vmem:[#allocation5 + $0x860] sm:$0xff]
    %v525 = vld [vmem:[#allocation5 + $0x868] sm:$0xff]
    %v526 = vld [vmem:[#allocation5 + $0x870] sm:$0xff]
    %v527 = vld [vmem:[#allocation5 + $0x878] sm:$0xff]
    %v528 = vld [vmem:[#allocation5 + $0x880] sm:$0xff]
    %v529 = vld [vmem:[#allocation5 + $0x888] sm:$0xff]
    %v530 = vld [vmem:[#allocation5 + $0x890] sm:$0xff]
    %v531 = vld [vmem:[#allocation5 + $0x898] sm:$0xff]
    %v532 = vld [vmem:[#allocation5 + $0x8a0] sm:$0xff]
    %v533 = vld [vmem:[#allocation5 + $0x8a8] sm:$0xff]
    %v534 = vld [vmem:[#allocation5 + $0x8b0] sm:$0xff]
    %v535 = vld [vmem:[#allocation5 + $0x8b8] sm:$0xff]
    %v536 = vld [vmem:[#allocation5 + $0x8c0] sm:$0xff]
    %v537 = vld [vmem:[#allocation5 + $0x8c8] sm:$0xff]
    %v538 = vld [vmem:[#allocation5 + $0x8d0] sm:$0xff]
    %v539 = vld [vmem:[#allocation5 + $0x8d8] sm:$0xff]
    %v540 = vld [vmem:[#allocation5 + $0x8e0] sm:$0xff]
    %v541 = vld [vmem:[#allocation5 + $0x8e8] sm:$0xff]
    %v542 = vld [vmem:[#allocation5 + $0x8f0] sm:$0xff]
    %v543 = vld [vmem:[#allocation5 + $0x8f8] sm:$0xff]
    %v544 = vld [vmem:[#allocation5 + $0x900] sm:$0xff]
    %v545 = vld [vmem:[#allocation5 + $0x908] sm:$0xff]
    %v546 = vld [vmem:[#allocation5 + $0x910] sm:$0xff]
    %v547 = vld [vmem:[#allocation5 + $0x918] sm:$0xff]
    %v548 = vld [vmem:[#allocation5 + $0x920] sm:$0xff]
    %v549 = vld [vmem:[#allocation5 + $0x928] sm:$0xff]
    %v550 = vld [vmem:[#allocation5 + $0x930] sm:$0xff]
    %v551 = vld [vmem:[#allocation5 + $0x938] sm:$0xff]
    %v552 = vld [vmem:[#allocation5 + $0x940] sm:$0xff]
    %v553 = vld [vmem:[#allocation5 + $0x948] sm:$0xff]
    %v554 = vld [vmem:[#allocation5 + $0x950] sm:$0xff]
    %v555 = vld [vmem:[#allocation5 + $0x958] sm:$0xff]
    %v556 = vld [vmem:[#allocation5 + $0x960] sm:$0xff]
    %v557 = vld [vmem:[#allocation5 + $0x968] sm:$0xff]
    %v558 = vld [vmem:[#allocation5 + $0x970] sm:$0xff]
    %v559 = vld [vmem:[#allocation5 + $0x978] sm:$0xff]
    %v560 = vld [vmem:[#allocation5 + $0x980] sm:$0xff]
    %v561 = vld [vmem:[#allocation5 + $0x988] sm:$0xff]
    %v562 = vld [vmem:[#allocation5 + $0x990] sm:$0xff]
    %v563 = vld [vmem:[#allocation5 + $0x998] sm:$0xff]
    %v564 = vld [vmem:[#allocation5 + $0x9a0] sm:$0xff]
    %v565 = vld [vmem:[#allocation5 + $0x9a8] sm:$0xff]
    %v566 = vld [vmem:[#allocation5 + $0x9b0] sm:$0xff]
    %v567 = vld [vmem:[#allocation5 + $0x9b8] sm:$0xff]
    %v568 = vld [vmem:[#allocation5 + $0x9c0] sm:$0xff]
    %v569 = vld [vmem:[#allocation5 + $0x9c8] sm:$0xff]
    %v570 = vld [vmem:[#allocation5 + $0x9d0] sm:$0xff]
    %v571 = vld [vmem:[#allocation5 + $0x9d8] sm:$0xff]
    %v572 = vld [vmem:[#allocation5 + $0x9e0] sm:$0xff]
    %v573 = vld [vmem:[#allocation5 + $0x9e8] sm:$0xff]
    %v574 = vld [vmem:[#allocation5 + $0x9f0] sm:$0xff]
    %v575 = vld [vmem:[#allocation5 + $0x9f8] sm:$0xff]
    %v576 = vld [vmem:[#allocation5 + $0xa00] sm:$0xff]
    %v577 = vld [vmem:[#allocation5 + $0xa08] sm:$0xff]
    %v578 = vld [vmem:[#allocation5 + $0xa10] sm:$0xff]
    %v579 = vld [vmem:[#allocation5 + $0xa18] sm:$0xff]
    %v580 = vld [vmem:[#allocation5 + $0xa20] sm:$0xff]
    %v581 = vld [vmem:[#allocation5 + $0xa28] sm:$0xff]
    %v582 = vld [vmem:[#allocation5 + $0xa30] sm:$0xff]
    %v583 = vld [vmem:[#allocation5 + $0xa38] sm:$0xff]
    %v584 = vld [vmem:[#allocation5 + $0xa40] sm:$0xff]
    %v585 = vld [vmem:[#allocation5 + $0xa48] sm:$0xff]
    %v586 = vld [vmem:[#allocation5 + $0xa50] sm:$0xff]
    %v587 = vld [vmem:[#allocation5 + $0xa58] sm:$0xff]
    %v588 = vld [vmem:[#allocation5 + $0xa60] sm:$0xff]
    %v589 = vld [vmem:[#allocation5 + $0xa68] sm:$0xff]
    %v590 = vld [vmem:[#allocation5 + $0xa70] sm:$0xff]
    %v591 = vld [vmem:[#allocation5 + $0xa78] sm:$0xff]
    %v592 = vld [vmem:[#allocation5 + $0xa80] sm:$0xff]
    %v593 = vld [vmem:[#allocation5 + $0xa88] sm:$0xff]
    %v594 = vld [vmem:[#allocation5 + $0xa90] sm:$0xff]
    %v595 = vld [vmem:[#allocation5 + $0xa98] sm:$0xff]
    %v596 = vld [vmem:[#allocation5 + $0xaa0] sm:$0xff]
    %v597 = vld [vmem:[#allocation5 + $0xaa8] sm:$0xff]
    %v598 = vld [vmem:[#allocation5 + $0xab0] sm:$0xff]
    %v599 = vld [vmem:[#allocation5 + $0xab8] sm:$0xff]
    %v600 = vld [vmem:[#allocation5 + $0xac0] sm:$0xff]
    %v601 = vld [vmem:[#allocation5 + $0xac8] sm:$0xff]
    %v602 = vld [vmem:[#allocation5 + $0xad0] sm:$0xff]
    %v603 = vld [vmem:[#allocation5 + $0xad8] sm:$0xff]
    %v604 = vld [vmem:[#allocation5 + $0xae0] sm:$0xff]
    %v605 = vld [vmem:[#allocation5 + $0xae8] sm:$0xff]
    %v606 = vld [vmem:[#allocation5 + $0xaf0] sm:$0xff]
    %v607 = vld [vmem:[#allocation5 + $0xaf8] sm:$0xff]
    %v608 = vld [vmem:[#allocation5 + $0xb00] sm:$0xff]
    %v609 = vld [vmem:[#allocation5 + $0xb08] sm:$0xff]
    %v610 = vld [vmem:[#allocation5 + $0xb10] sm:$0xff]
    %v611 = vld [vmem:[#allocation5 + $0xb18] sm:$0xff]
    %v612 = vld [vmem:[#allocation5 + $0xb20] sm:$0xff]
    %v613 = vld [vmem:[#allocation5 + $0xb28] sm:$0xff]
    %v614 = vld [vmem:[#allocation5 + $0xb30] sm:$0xff]
    %v615 = vld [vmem:[#allocation5 + $0xb38] sm:$0xff]
    %v616 = vld [vmem:[#allocation5 + $0xb40] sm:$0xff]
    %v617 = vld [vmem:[#allocation5 + $0xb48] sm:$0xff]
    %v618 = vld [vmem:[#allocation5 + $0xb50] sm:$0xff]
    %v619 = vld [vmem:[#allocation5 + $0xb58] sm:$0xff]
    %v620 = vld [vmem:[#allocation5 + $0xb60] sm:$0xff]
    %v621 = vld [vmem:[#allocation5 + $0xb68] sm:$0xff]
    %v622 = vld [vmem:[#allocation5 + $0xb70] sm:$0xff]
    %v623 = vld [vmem:[#allocation5 + $0xb78] sm:$0xff]
    %v624 = vld [vmem:[#allocation5 + $0xb80] sm:$0xff]
    %v625 = vld [vmem:[#allocation5 + $0xb88] sm:$0xff]
    %v626 = vld [vmem:[#allocation5 + $0xb90] sm:$0xff]
    %v627 = vld [vmem:[#allocation5 + $0xb98] sm:$0xff]
    %v628 = vld [vmem:[#allocation5 + $0xba0] sm:$0xff]
    %v629 = vld [vmem:[#allocation5 + $0xba8] sm:$0xff]
    %v630 = vld [vmem:[#allocation5 + $0xbb0] sm:$0xff]
    %v631 = vld [vmem:[#allocation5 + $0xbb8] sm:$0xff]
    %v632 = vld [vmem:[#allocation5 + $0xbc0] sm:$0xff]
    %v633 = vld [vmem:[#allocation5 + $0xbc8] sm:$0xff]
    %v634 = vld [vmem:[#allocation5 + $0xbd0] sm:$0xff]
    %v635 = vld [vmem:[#allocation5 + $0xbd8] sm:$0xff]
    %v636 = vld [vmem:[#allocation5 + $0xbe0] sm:$0xff]
    %v637 = vld [vmem:[#allocation5 + $0xbe8] sm:$0xff]
    %v638 = vld [vmem:[#allocation5 + $0xbf0] sm:$0xff]
    %v639 = vld [vmem:[#allocation5 + $0xbf8] sm:$0xff]
    %v640 = vld [vmem:[#allocation7] sm:$0x3]
    %v642 = vlaneseq
    %v643 = vshrl.u32 %v642, 7
    %v644 = vsub.s32 0, %v643
    %v645 = vrot.slane %v640, %v644
    %v646 = vlaneseq
    %v647 = vshrl.u32 %v646, 7
    %v648 = vsub.s32 1, %v647
    %v649 = vrot.slane %v640, %v648
    %v1036 = vunpack.c.l.b16 %v256
    %v1037 = vunpack.c.h.b16 %v256
    %v1038 = vunpack.c.l.b16 %v257
    %v1039 = vunpack.c.h.b16 %v257
    %v1040 = vunpack.c.l.b16 %v258
    %v1041 = vunpack.c.h.b16 %v258
    %v1042 = vunpack.c.l.b16 %v259
    %v1043 = vunpack.c.h.b16 %v259
    %v1044 = vunpack.c.l.b16 %v260
    %v1045 = vunpack.c.h.b16 %v260
    %v1046 = vunpack.c.l.b16 %v261
    %v1047 = vunpack.c.h.b16 %v261
    %v1048 = vunpack.c.l.b16 %v262
    %v1049 = vunpack.c.h.b16 %v262
    %v1050 = vunpack.c.l.b16 %v263
    %v1051 = vunpack.c.h.b16 %v263
    %v1052 = vunpack.c.l.b16 %v264
    %v1053 = vunpack.c.h.b16 %v264
    %v1054 = vunpack.c.l.b16 %v265
    %v1055 = vunpack.c.h.b16 %v265
    %v1056 = vunpack.c.l.b16 %v266
    %v1057 = vunpack.c.h.b16 %v266
    %v1058 = vunpack.c.l.b16 %v267
    %v1059 = vunpack.c.h.b16 %v267
    %v1060 = vunpack.c.l.b16 %v268
    %v1061 = vunpack.c.h.b16 %v268
    %v1062 = vunpack.c.l.b16 %v269
    %v1063 = vunpack.c.h.b16 %v269
    %v1064 = vunpack.c.l.b16 %v270
    %v1065 = vunpack.c.h.b16 %v270
    %v1066 = vunpack.c.l.b16 %v271
    %v1067 = vunpack.c.h.b16 %v271
    %v1068 = vunpack.c.l.b16 %v272
    %v1069 = vunpack.c.h.b16 %v272
    %v1070 = vunpack.c.l.b16 %v273
    %v1071 = vunpack.c.h.b16 %v273
    %v1072 = vunpack.c.l.b16 %v274
    %v1073 = vunpack.c.h.b16 %v274
    %v1074 = vunpack.c.l.b16 %v275
    %v1075 = vunpack.c.h.b16 %v275
    %v1076 = vunpack.c.l.b16 %v276
    %v1077 = vunpack.c.h.b16 %v276
    %v1078 = vunpack.c.l.b16 %v277
    %v1079 = vunpack.c.h.b16 %v277
    %v1080 = vunpack.c.l.b16 %v278
    %v1081 = vunpack.c.h.b16 %v278
    %v1082 = vunpack.c.l.b16 %v279
    %v1083 = vunpack.c.h.b16 %v279
    %v1084 = vunpack.c.l.b16 %v280
    %v1085 = vunpack.c.h.b16 %v280
    %v1086 = vunpack.c.l.b16 %v281
    %v1087 = vunpack.c.h.b16 %v281
    %v1088 = vunpack.c.l.b16 %v282
    %v1089 = vunpack.c.h.b16 %v282
    %v1090 = vunpack.c.l.b16 %v283
    %v1091 = vunpack.c.h.b16 %v283
    %v1092 = vunpack.c.l.b16 %v284
    %v1093 = vunpack.c.h.b16 %v284
    %v1094 = vunpack.c.l.b16 %v285
    %v1095 = vunpack.c.h.b16 %v285
    %v1096 = vunpack.c.l.b16 %v286
    %v1097 = vunpack.c.h.b16 %v286
    %v1098 = vunpack.c.l.b16 %v287
    %v1099 = vunpack.c.h.b16 %v287
    %v1100 = vunpack.c.l.b16 %v288
    %v1101 = vunpack.c.h.b16 %v288
    %v1102 = vunpack.c.l.b16 %v289
    %v1103 = vunpack.c.h.b16 %v289
    %v1104 = vunpack.c.l.b16 %v290
    %v1105 = vunpack.c.h.b16 %v290
    %v1106 = vunpack.c.l.b16 %v291
    %v1107 = vunpack.c.h.b16 %v291
    %v1108 = vunpack.c.l.b16 %v292
    %v1109 = vunpack.c.h.b16 %v292
    %v1110 = vunpack.c.l.b16 %v293
    %v1111 = vunpack.c.h.b16 %v293
    %v1112 = vunpack.c.l.b16 %v294
    %v1113 = vunpack.c.h.b16 %v294
    %v1114 = vunpack.c.l.b16 %v295
    %v1115 = vunpack.c.h.b16 %v295
    %v1116 = vunpack.c.l.b16 %v296
    %v1117 = vunpack.c.h.b16 %v296
    %v1118 = vunpack.c.l.b16 %v297
    %v1119 = vunpack.c.h.b16 %v297
    %v1120 = vunpack.c.l.b16 %v298
    %v1121 = vunpack.c.h.b16 %v298
    %v1122 = vunpack.c.l.b16 %v299
    %v1123 = vunpack.c.h.b16 %v299
    %v1124 = vunpack.c.l.b16 %v300
    %v1125 = vunpack.c.h.b16 %v300
    %v1126 = vunpack.c.l.b16 %v301
    %v1127 = vunpack.c.h.b16 %v301
    %v1128 = vunpack.c.l.b16 %v302
    %v1129 = vunpack.c.h.b16 %v302
    %v1130 = vunpack.c.l.b16 %v303
    %v1131 = vunpack.c.h.b16 %v303
    %v1132 = vunpack.c.l.b16 %v304
    %v1133 = vunpack.c.h.b16 %v304
    %v1134 = vunpack.c.l.b16 %v305
    %v1135 = vunpack.c.h.b16 %v305
    %v1136 = vunpack.c.l.b16 %v306
    %v1137 = vunpack.c.h.b16 %v306
    %v1138 = vunpack.c.l.b16 %v307
    %v1139 = vunpack.c.h.b16 %v307
    %v1140 = vunpack.c.l.b16 %v308
    %v1141 = vunpack.c.h.b16 %v308
    %v1142 = vunpack.c.l.b16 %v309
    %v1143 = vunpack.c.h.b16 %v309
    %v1144 = vunpack.c.l.b16 %v310
    %v1145 = vunpack.c.h.b16 %v310
    %v1146 = vunpack.c.l.b16 %v311
    %v1147 = vunpack.c.h.b16 %v311
    %v1148 = vunpack.c.l.b16 %v312
    %v1149 = vunpack.c.h.b16 %v312
    %v1150 = vunpack.c.l.b16 %v313
    %v1151 = vunpack.c.h.b16 %v313
    %v1152 = vunpack.c.l.b16 %v314
    %v1153 = vunpack.c.h.b16 %v314
    %v1154 = vunpack.c.l.b16 %v315
    %v1155 = vunpack.c.h.b16 %v315
    %v1156 = vunpack.c.l.b16 %v316
    %v1157 = vunpack.c.h.b16 %v316
    %v1158 = vunpack.c.l.b16 %v317
    %v1159 = vunpack.c.h.b16 %v317
    %v1160 = vunpack.c.l.b16 %v318
    %v1161 = vunpack.c.h.b16 %v318
    %v1162 = vunpack.c.l.b16 %v319
    %v1163 = vunpack.c.h.b16 %v319
    %v1164 = vunpack.c.l.b16 %v320
    %v1165 = vunpack.c.h.b16 %v320
    %v1166 = vunpack.c.l.b16 %v321
    %v1167 = vunpack.c.h.b16 %v321
    %v1168 = vunpack.c.l.b16 %v322
    %v1169 = vunpack.c.h.b16 %v322
    %v1170 = vunpack.c.l.b16 %v323
    %v1171 = vunpack.c.h.b16 %v323
    %v1172 = vunpack.c.l.b16 %v324
    %v1173 = vunpack.c.h.b16 %v324
    %v1174 = vunpack.c.l.b16 %v325
    %v1175 = vunpack.c.h.b16 %v325
    %v1176 = vunpack.c.l.b16 %v326
    %v1177 = vunpack.c.h.b16 %v326
    %v1178 = vunpack.c.l.b16 %v327
    %v1179 = vunpack.c.h.b16 %v327
    %v1180 = vunpack.c.l.b16 %v328
    %v1181 = vunpack.c.h.b16 %v328
    %v1182 = vunpack.c.l.b16 %v329
    %v1183 = vunpack.c.h.b16 %v329
    %v1184 = vunpack.c.l.b16 %v330
    %v1185 = vunpack.c.h.b16 %v330
    %v1186 = vunpack.c.l.b16 %v331
    %v1187 = vunpack.c.h.b16 %v331
    %v1188 = vunpack.c.l.b16 %v332
    %v1189 = vunpack.c.h.b16 %v332
    %v1190 = vunpack.c.l.b16 %v333
    %v1191 = vunpack.c.h.b16 %v333
    %v1192 = vunpack.c.l.b16 %v334
    %v1193 = vunpack.c.h.b16 %v334
    %v1194 = vunpack.c.l.b16 %v335
    %v1195 = vunpack.c.h.b16 %v335
    %v1196 = vunpack.c.l.b16 %v336
    %v1197 = vunpack.c.h.b16 %v336
    %v1198 = vunpack.c.l.b16 %v337
    %v1199 = vunpack.c.h.b16 %v337
    %v1200 = vunpack.c.l.b16 %v338
    %v1201 = vunpack.c.h.b16 %v338
    %v1202 = vunpack.c.l.b16 %v339
    %v1203 = vunpack.c.h.b16 %v339
    %v1204 = vunpack.c.l.b16 %v340
    %v1205 = vunpack.c.h.b16 %v340
    %v1206 = vunpack.c.l.b16 %v341
    %v1207 = vunpack.c.h.b16 %v341
    %v1208 = vunpack.c.l.b16 %v342
    %v1209 = vunpack.c.h.b16 %v342
    %v1210 = vunpack.c.l.b16 %v343
    %v1211 = vunpack.c.h.b16 %v343
    %v1212 = vunpack.c.l.b16 %v344
    %v1213 = vunpack.c.h.b16 %v344
    %v1214 = vunpack.c.l.b16 %v345
    %v1215 = vunpack.c.h.b16 %v345
    %v1216 = vunpack.c.l.b16 %v346
    %v1217 = vunpack.c.h.b16 %v346
    %v1218 = vunpack.c.l.b16 %v347
    %v1219 = vunpack.c.h.b16 %v347
    %v1220 = vunpack.c.l.b16 %v348
    %v1221 = vunpack.c.h.b16 %v348
    %v1222 = vunpack.c.l.b16 %v349
    %v1223 = vunpack.c.h.b16 %v349
    %v1224 = vunpack.c.l.b16 %v350
    %v1225 = vunpack.c.h.b16 %v350
    %v1226 = vunpack.c.l.b16 %v351
    %v1227 = vunpack.c.h.b16 %v351
    %v1228 = vunpack.c.l.b16 %v352
    %v1229 = vunpack.c.h.b16 %v352
    %v1230 = vunpack.c.l.b16 %v353
    %v1231 = vunpack.c.h.b16 %v353
    %v1232 = vunpack.c.l.b16 %v354
    %v1233 = vunpack.c.h.b16 %v354
    %v1234 = vunpack.c.l.b16 %v355
    %v1235 = vunpack.c.h.b16 %v355
    %v1236 = vunpack.c.l.b16 %v356
    %v1237 = vunpack.c.h.b16 %v356
    %v1238 = vunpack.c.l.b16 %v357
    %v1239 = vunpack.c.h.b16 %v357
    %v1240 = vunpack.c.l.b16 %v358
    %v1241 = vunpack.c.h.b16 %v358
    %v1242 = vunpack.c.l.b16 %v359
    %v1243 = vunpack.c.h.b16 %v359
    %v1244 = vunpack.c.l.b16 %v360
    %v1245 = vunpack.c.h.b16 %v360
    %v1246 = vunpack.c.l.b16 %v361
    %v1247 = vunpack.c.h.b16 %v361
    %v1248 = vunpack.c.l.b16 %v362
    %v1249 = vunpack.c.h.b16 %v362
    %v1250 = vunpack.c.l.b16 %v363
    %v1251 = vunpack.c.h.b16 %v363
    %v1252 = vunpack.c.l.b16 %v364
    %v1253 = vunpack.c.h.b16 %v364
    %v1254 = vunpack.c.l.b16 %v365
    %v1255 = vunpack.c.h.b16 %v365
    %v1256 = vunpack.c.l.b16 %v366
    %v1257 = vunpack.c.h.b16 %v366
    %v1258 = vunpack.c.l.b16 %v367
    %v1259 = vunpack.c.h.b16 %v367
    %v1260 = vunpack.c.l.b16 %v368
    %v1261 = vunpack.c.h.b16 %v368
    %v1262 = vunpack.c.l.b16 %v369
    %v1263 = vunpack.c.h.b16 %v369
    %v1264 = vunpack.c.l.b16 %v370
    %v1265 = vunpack.c.h.b16 %v370
    %v1266 = vunpack.c.l.b16 %v371
    %v1267 = vunpack.c.h.b16 %v371
    %v1268 = vunpack.c.l.b16 %v372
    %v1269 = vunpack.c.h.b16 %v372
    %v1270 = vunpack.c.l.b16 %v373
    %v1271 = vunpack.c.h.b16 %v373
    %v1272 = vunpack.c.l.b16 %v374
    %v1273 = vunpack.c.h.b16 %v374
    %v1274 = vunpack.c.l.b16 %v375
    %v1275 = vunpack.c.h.b16 %v375
    %v1276 = vunpack.c.l.b16 %v376
    %v1277 = vunpack.c.h.b16 %v376
    %v1278 = vunpack.c.l.b16 %v377
    %v1279 = vunpack.c.h.b16 %v377
    %v1280 = vunpack.c.l.b16 %v378
    %v1281 = vunpack.c.h.b16 %v378
    %v1282 = vunpack.c.l.b16 %v379
    %v1283 = vunpack.c.h.b16 %v379
    %v1284 = vunpack.c.l.b16 %v380
    %v1285 = vunpack.c.h.b16 %v380
    %v1286 = vunpack.c.l.b16 %v381
    %v1287 = vunpack.c.h.b16 %v381
    %v1288 = vunpack.c.l.b16 %v382
    %v1289 = vunpack.c.h.b16 %v382
    %v1290 = vunpack.c.l.b16 %v383
    %v1291 = vunpack.c.h.b16 %v383
    %v1292 = vunpack.c.l.b16 %v384
    %v1293 = vunpack.c.h.b16 %v384
    %v1294 = vunpack.c.l.b16 %v385
    %v1295 = vunpack.c.h.b16 %v385
    %v1296 = vunpack.c.l.b16 %v386
    %v1297 = vunpack.c.h.b16 %v386
    %v1298 = vunpack.c.l.b16 %v387
    %v1299 = vunpack.c.h.b16 %v387
    %v1300 = vunpack.c.l.b16 %v388
    %v1301 = vunpack.c.h.b16 %v388
    %v1302 = vunpack.c.l.b16 %v389
    %v1303 = vunpack.c.h.b16 %v389
    %v1304 = vunpack.c.l.b16 %v390
    %v1305 = vunpack.c.h.b16 %v390
    %v1306 = vunpack.c.l.b16 %v391
    %v1307 = vunpack.c.h.b16 %v391
    %v1308 = vunpack.c.l.b16 %v392
    %v1309 = vunpack.c.h.b16 %v392
    %v1310 = vunpack.c.l.b16 %v393
    %v1311 = vunpack.c.h.b16 %v393
    %v1312 = vunpack.c.l.b16 %v394
    %v1313 = vunpack.c.h.b16 %v394
    %v1314 = vunpack.c.l.b16 %v395
    %v1315 = vunpack.c.h.b16 %v395
    %v1316 = vunpack.c.l.b16 %v396
    %v1317 = vunpack.c.h.b16 %v396
    %v1318 = vunpack.c.l.b16 %v397
    %v1319 = vunpack.c.h.b16 %v397
    %v1320 = vunpack.c.l.b16 %v398
    %v1321 = vunpack.c.h.b16 %v398
    %v1322 = vunpack.c.l.b16 %v399
    %v1323 = vunpack.c.h.b16 %v399
    %v1324 = vunpack.c.l.b16 %v400
    %v1325 = vunpack.c.h.b16 %v400
    %v1326 = vunpack.c.l.b16 %v401
    %v1327 = vunpack.c.h.b16 %v401
    %v1328 = vunpack.c.l.b16 %v402
    %v1329 = vunpack.c.h.b16 %v402
    %v1330 = vunpack.c.l.b16 %v403
    %v1331 = vunpack.c.h.b16 %v403
    %v1332 = vunpack.c.l.b16 %v404
    %v1333 = vunpack.c.h.b16 %v404
    %v1334 = vunpack.c.l.b16 %v405
    %v1335 = vunpack.c.h.b16 %v405
    %v1336 = vunpack.c.l.b16 %v406
    %v1337 = vunpack.c.h.b16 %v406
    %v1338 = vunpack.c.l.b16 %v407
    %v1339 = vunpack.c.h.b16 %v407
    %v1340 = vunpack.c.l.b16 %v408
    %v1341 = vunpack.c.h.b16 %v408
    %v1342 = vunpack.c.l.b16 %v409
    %v1343 = vunpack.c.h.b16 %v409
    %v1344 = vunpack.c.l.b16 %v410
    %v1345 = vunpack.c.h.b16 %v410
    %v1346 = vunpack.c.l.b16 %v411
    %v1347 = vunpack.c.h.b16 %v411
    %v1348 = vunpack.c.l.b16 %v412
    %v1349 = vunpack.c.h.b16 %v412
    %v1350 = vunpack.c.l.b16 %v413
    %v1351 = vunpack.c.h.b16 %v413
    %v1352 = vunpack.c.l.b16 %v414
    %v1353 = vunpack.c.h.b16 %v414
    %v1354 = vunpack.c.l.b16 %v415
    %v1355 = vunpack.c.h.b16 %v415
    %v1356 = vunpack.c.l.b16 %v416
    %v1357 = vunpack.c.h.b16 %v416
    %v1358 = vunpack.c.l.b16 %v417
    %v1359 = vunpack.c.h.b16 %v417
    %v1360 = vunpack.c.l.b16 %v418
    %v1361 = vunpack.c.h.b16 %v418
    %v1362 = vunpack.c.l.b16 %v419
    %v1363 = vunpack.c.h.b16 %v419
    %v1364 = vunpack.c.l.b16 %v420
    %v1365 = vunpack.c.h.b16 %v420
    %v1366 = vunpack.c.l.b16 %v421
    %v1367 = vunpack.c.h.b16 %v421
    %v1368 = vunpack.c.l.b16 %v422
    %v1369 = vunpack.c.h.b16 %v422
    %v1370 = vunpack.c.l.b16 %v423
    %v1371 = vunpack.c.h.b16 %v423
    %v1372 = vunpack.c.l.b16 %v424
    %v1373 = vunpack.c.h.b16 %v424
    %v1374 = vunpack.c.l.b16 %v425
    %v1375 = vunpack.c.h.b16 %v425
    %v1376 = vunpack.c.l.b16 %v426
    %v1377 = vunpack.c.h.b16 %v426
    %v1378 = vunpack.c.l.b16 %v427
    %v1379 = vunpack.c.h.b16 %v427
    %v1380 = vunpack.c.l.b16 %v428
    %v1381 = vunpack.c.h.b16 %v428
    %v1382 = vunpack.c.l.b16 %v429
    %v1383 = vunpack.c.h.b16 %v429
    %v1384 = vunpack.c.l.b16 %v430
    %v1385 = vunpack.c.h.b16 %v430
    %v1386 = vunpack.c.l.b16 %v431
    %v1387 = vunpack.c.h.b16 %v431
    %v1388 = vunpack.c.l.b16 %v432
    %v1389 = vunpack.c.h.b16 %v432
    %v1390 = vunpack.c.l.b16 %v433
    %v1391 = vunpack.c.h.b16 %v433
    %v1392 = vunpack.c.l.b16 %v434
    %v1393 = vunpack.c.h.b16 %v434
    %v1394 = vunpack.c.l.b16 %v435
    %v1395 = vunpack.c.h.b16 %v435
    %v1396 = vunpack.c.l.b16 %v436
    %v1397 = vunpack.c.h.b16 %v436
    %v1398 = vunpack.c.l.b16 %v437
    %v1399 = vunpack.c.h.b16 %v437
    %v1400 = vunpack.c.l.b16 %v438
    %v1401 = vunpack.c.h.b16 %v438
    %v1402 = vunpack.c.l.b16 %v439
    %v1403 = vunpack.c.h.b16 %v439
    %v1404 = vunpack.c.l.b16 %v440
    %v1405 = vunpack.c.h.b16 %v440
    %v1406 = vunpack.c.l.b16 %v441
    %v1407 = vunpack.c.h.b16 %v441
    %v1408 = vunpack.c.l.b16 %v442
    %v1409 = vunpack.c.h.b16 %v442
    %v1410 = vunpack.c.l.b16 %v443
    %v1411 = vunpack.c.h.b16 %v443
    %v1412 = vunpack.c.l.b16 %v444
    %v1413 = vunpack.c.h.b16 %v444
    %v1414 = vunpack.c.l.b16 %v445
    %v1415 = vunpack.c.h.b16 %v445
    %v1416 = vunpack.c.l.b16 %v446
    %v1417 = vunpack.c.h.b16 %v446
    %v1418 = vunpack.c.l.b16 %v447
    %v1419 = vunpack.c.h.b16 %v447
    %v1420 = vunpack.c.l.b16 %v448
    %v1421 = vunpack.c.h.b16 %v448
    %v1422 = vunpack.c.l.b16 %v449
    %v1423 = vunpack.c.h.b16 %v449
    %v1424 = vunpack.c.l.b16 %v450
    %v1425 = vunpack.c.h.b16 %v450
    %v1426 = vunpack.c.l.b16 %v451
    %v1427 = vunpack.c.h.b16 %v451
    %v1428 = vunpack.c.l.b16 %v452
    %v1429 = vunpack.c.h.b16 %v452
    %v1430 = vunpack.c.l.b16 %v453
    %v1431 = vunpack.c.h.b16 %v453
    %v1432 = vunpack.c.l.b16 %v454
    %v1433 = vunpack.c.h.b16 %v454
    %v1434 = vunpack.c.l.b16 %v455
    %v1435 = vunpack.c.h.b16 %v455
    %v1436 = vunpack.c.l.b16 %v456
    %v1437 = vunpack.c.h.b16 %v456
    %v1438 = vunpack.c.l.b16 %v457
    %v1439 = vunpack.c.h.b16 %v457
    %v1440 = vunpack.c.l.b16 %v458
    %v1441 = vunpack.c.h.b16 %v458
    %v1442 = vunpack.c.l.b16 %v459
    %v1443 = vunpack.c.h.b16 %v459
    %v1444 = vunpack.c.l.b16 %v460
    %v1445 = vunpack.c.h.b16 %v460
    %v1446 = vunpack.c.l.b16 %v461
    %v1447 = vunpack.c.h.b16 %v461
    %v1448 = vunpack.c.l.b16 %v462
    %v1449 = vunpack.c.h.b16 %v462
    %v1450 = vunpack.c.l.b16 %v463
    %v1451 = vunpack.c.h.b16 %v463
    %v1452 = vunpack.c.l.b16 %v464
    %v1453 = vunpack.c.h.b16 %v464
    %v1454 = vunpack.c.l.b16 %v465
    %v1455 = vunpack.c.h.b16 %v465
    %v1456 = vunpack.c.l.b16 %v466
    %v1457 = vunpack.c.h.b16 %v466
    %v1458 = vunpack.c.l.b16 %v467
    %v1459 = vunpack.c.h.b16 %v467
    %v1460 = vunpack.c.l.b16 %v468
    %v1461 = vunpack.c.h.b16 %v468
    %v1462 = vunpack.c.l.b16 %v469
    %v1463 = vunpack.c.h.b16 %v469
    %v1464 = vunpack.c.l.b16 %v470
    %v1465 = vunpack.c.h.b16 %v470
    %v1466 = vunpack.c.l.b16 %v471
    %v1467 = vunpack.c.h.b16 %v471
    %v1468 = vunpack.c.l.b16 %v472
    %v1469 = vunpack.c.h.b16 %v472
    %v1470 = vunpack.c.l.b16 %v473
    %v1471 = vunpack.c.h.b16 %v473
    %v1472 = vunpack.c.l.b16 %v474
    %v1473 = vunpack.c.h.b16 %v474
    %v1474 = vunpack.c.l.b16 %v475
    %v1475 = vunpack.c.h.b16 %v475
    %v1476 = vunpack.c.l.b16 %v476
    %v1477 = vunpack.c.h.b16 %v476
    %v1478 = vunpack.c.l.b16 %v477
    %v1479 = vunpack.c.h.b16 %v477
    %v1480 = vunpack.c.l.b16 %v478
    %v1481 = vunpack.c.h.b16 %v478
    %v1482 = vunpack.c.l.b16 %v479
    %v1483 = vunpack.c.h.b16 %v479
    %v1484 = vunpack.c.l.b16 %v480
    %v1485 = vunpack.c.h.b16 %v480
    %v1486 = vunpack.c.l.b16 %v481
    %v1487 = vunpack.c.h.b16 %v481
    %v1488 = vunpack.c.l.b16 %v482
    %v1489 = vunpack.c.h.b16 %v482
    %v1490 = vunpack.c.l.b16 %v483
    %v1491 = vunpack.c.h.b16 %v483
    %v1492 = vunpack.c.l.b16 %v484
    %v1493 = vunpack.c.h.b16 %v484
    %v1494 = vunpack.c.l.b16 %v485
    %v1495 = vunpack.c.h.b16 %v485
    %v1496 = vunpack.c.l.b16 %v486
    %v1497 = vunpack.c.h.b16 %v486
    %v1498 = vunpack.c.l.b16 %v487
    %v1499 = vunpack.c.h.b16 %v487
    %v1500 = vunpack.c.l.b16 %v488
    %v1501 = vunpack.c.h.b16 %v488
    %v1502 = vunpack.c.l.b16 %v489
    %v1503 = vunpack.c.h.b16 %v489
    %v1504 = vunpack.c.l.b16 %v490
    %v1505 = vunpack.c.h.b16 %v490
    %v1506 = vunpack.c.l.b16 %v491
    %v1507 = vunpack.c.h.b16 %v491
    %v1508 = vunpack.c.l.b16 %v492
    %v1509 = vunpack.c.h.b16 %v492
    %v1510 = vunpack.c.l.b16 %v493
    %v1511 = vunpack.c.h.b16 %v493
    %v1512 = vunpack.c.l.b16 %v494
    %v1513 = vunpack.c.h.b16 %v494
    %v1514 = vunpack.c.l.b16 %v495
    %v1515 = vunpack.c.h.b16 %v495
    %v1516 = vunpack.c.l.b16 %v496
    %v1517 = vunpack.c.h.b16 %v496
    %v1518 = vunpack.c.l.b16 %v497
    %v1519 = vunpack.c.h.b16 %v497
    %v1520 = vunpack.c.l.b16 %v498
    %v1521 = vunpack.c.h.b16 %v498
    %v1522 = vunpack.c.l.b16 %v499
    %v1523 = vunpack.c.h.b16 %v499
    %v1524 = vunpack.c.l.b16 %v500
    %v1525 = vunpack.c.h.b16 %v500
    %v1526 = vunpack.c.l.b16 %v501
    %v1527 = vunpack.c.h.b16 %v501
    %v1528 = vunpack.c.l.b16 %v502
    %v1529 = vunpack.c.h.b16 %v502
    %v1530 = vunpack.c.l.b16 %v503
    %v1531 = vunpack.c.h.b16 %v503
    %v1532 = vunpack.c.l.b16 %v504
    %v1533 = vunpack.c.h.b16 %v504
    %v1534 = vunpack.c.l.b16 %v505
    %v1535 = vunpack.c.h.b16 %v505
    %v1536 = vunpack.c.l.b16 %v506
    %v1537 = vunpack.c.h.b16 %v506
    %v1538 = vunpack.c.l.b16 %v507
    %v1539 = vunpack.c.h.b16 %v507
    %v1540 = vunpack.c.l.b16 %v508
    %v1541 = vunpack.c.h.b16 %v508
    %v1542 = vunpack.c.l.b16 %v509
    %v1543 = vunpack.c.h.b16 %v509
    %v1544 = vunpack.c.l.b16 %v510
    %v1545 = vunpack.c.h.b16 %v510
    %v1546 = vunpack.c.l.b16 %v511
    %v1547 = vunpack.c.h.b16 %v511
    %v1548 = vunpack.c.l.b16 %v512
    %v1549 = vunpack.c.h.b16 %v512
    %v1550 = vunpack.c.l.b16 %v513
    %v1551 = vunpack.c.h.b16 %v513
    %v1552 = vunpack.c.l.b16 %v514
    %v1553 = vunpack.c.h.b16 %v514
    %v1554 = vunpack.c.l.b16 %v515
    %v1555 = vunpack.c.h.b16 %v515
    %v1556 = vunpack.c.l.b16 %v516
    %v1557 = vunpack.c.h.b16 %v516
    %v1558 = vunpack.c.l.b16 %v517
    %v1559 = vunpack.c.h.b16 %v517
    %v1560 = vunpack.c.l.b16 %v518
    %v1561 = vunpack.c.h.b16 %v518
    %v1562 = vunpack.c.l.b16 %v519
    %v1563 = vunpack.c.h.b16 %v519
    %v1564 = vunpack.c.l.b16 %v520
    %v1565 = vunpack.c.h.b16 %v520
    %v1566 = vunpack.c.l.b16 %v521
    %v1567 = vunpack.c.h.b16 %v521
    %v1568 = vunpack.c.l.b16 %v522
    %v1569 = vunpack.c.h.b16 %v522
    %v1570 = vunpack.c.l.b16 %v523
    %v1571 = vunpack.c.h.b16 %v523
    %v1572 = vunpack.c.l.b16 %v524
    %v1573 = vunpack.c.h.b16 %v524
    %v1574 = vunpack.c.l.b16 %v525
    %v1575 = vunpack.c.h.b16 %v525
    %v1576 = vunpack.c.l.b16 %v526
    %v1577 = vunpack.c.h.b16 %v526
    %v1578 = vunpack.c.l.b16 %v527
    %v1579 = vunpack.c.h.b16 %v527
    %v1580 = vunpack.c.l.b16 %v528
    %v1581 = vunpack.c.h.b16 %v528
    %v1582 = vunpack.c.l.b16 %v529
    %v1583 = vunpack.c.h.b16 %v529
    %v1584 = vunpack.c.l.b16 %v530
    %v1585 = vunpack.c.h.b16 %v530
    %v1586 = vunpack.c.l.b16 %v531
    %v1587 = vunpack.c.h.b16 %v531
    %v1588 = vunpack.c.l.b16 %v532
    %v1589 = vunpack.c.h.b16 %v532
    %v1590 = vunpack.c.l.b16 %v533
    %v1591 = vunpack.c.h.b16 %v533
    %v1592 = vunpack.c.l.b16 %v534
    %v1593 = vunpack.c.h.b16 %v534
    %v1594 = vunpack.c.l.b16 %v535
    %v1595 = vunpack.c.h.b16 %v535
    %v1596 = vunpack.c.l.b16 %v536
    %v1597 = vunpack.c.h.b16 %v536
    %v1598 = vunpack.c.l.b16 %v537
    %v1599 = vunpack.c.h.b16 %v537
    %v1600 = vunpack.c.l.b16 %v538
    %v1601 = vunpack.c.h.b16 %v538
    %v1602 = vunpack.c.l.b16 %v539
    %v1603 = vunpack.c.h.b16 %v539
    %v1604 = vunpack.c.l.b16 %v540
    %v1605 = vunpack.c.h.b16 %v540
    %v1606 = vunpack.c.l.b16 %v541
    %v1607 = vunpack.c.h.b16 %v541
    %v1608 = vunpack.c.l.b16 %v542
    %v1609 = vunpack.c.h.b16 %v542
    %v1610 = vunpack.c.l.b16 %v543
    %v1611 = vunpack.c.h.b16 %v543
    %v1612 = vunpack.c.l.b16 %v544
    %v1613 = vunpack.c.h.b16 %v544
    %v1614 = vunpack.c.l.b16 %v545
    %v1615 = vunpack.c.h.b16 %v545
    %v1616 = vunpack.c.l.b16 %v546
    %v1617 = vunpack.c.h.b16 %v546
    %v1618 = vunpack.c.l.b16 %v547
    %v1619 = vunpack.c.h.b16 %v547
    %v1620 = vunpack.c.l.b16 %v548
    %v1621 = vunpack.c.h.b16 %v548
    %v1622 = vunpack.c.l.b16 %v549
    %v1623 = vunpack.c.h.b16 %v549
    %v1624 = vunpack.c.l.b16 %v550
    %v1625 = vunpack.c.h.b16 %v550
    %v1626 = vunpack.c.l.b16 %v551
    %v1627 = vunpack.c.h.b16 %v551
    %v1628 = vunpack.c.l.b16 %v552
    %v1629 = vunpack.c.h.b16 %v552
    %v1630 = vunpack.c.l.b16 %v553
    %v1631 = vunpack.c.h.b16 %v553
    %v1632 = vunpack.c.l.b16 %v554
    %v1633 = vunpack.c.h.b16 %v554
    %v1634 = vunpack.c.l.b16 %v555
    %v1635 = vunpack.c.h.b16 %v555
    %v1636 = vunpack.c.l.b16 %v556
    %v1637 = vunpack.c.h.b16 %v556
    %v1638 = vunpack.c.l.b16 %v557
    %v1639 = vunpack.c.h.b16 %v557
    %v1640 = vunpack.c.l.b16 %v558
    %v1641 = vunpack.c.h.b16 %v558
    %v1642 = vunpack.c.l.b16 %v559
    %v1643 = vunpack.c.h.b16 %v559
    %v1644 = vunpack.c.l.b16 %v560
    %v1645 = vunpack.c.h.b16 %v560
    %v1646 = vunpack.c.l.b16 %v561
    %v1647 = vunpack.c.h.b16 %v561
    %v1648 = vunpack.c.l.b16 %v562
    %v1649 = vunpack.c.h.b16 %v562
    %v1650 = vunpack.c.l.b16 %v563
    %v1651 = vunpack.c.h.b16 %v563
    %v1652 = vunpack.c.l.b16 %v564
    %v1653 = vunpack.c.h.b16 %v564
    %v1654 = vunpack.c.l.b16 %v565
    %v1655 = vunpack.c.h.b16 %v565
    %v1656 = vunpack.c.l.b16 %v566
    %v1657 = vunpack.c.h.b16 %v566
    %v1658 = vunpack.c.l.b16 %v567
    %v1659 = vunpack.c.h.b16 %v567
    %v1660 = vunpack.c.l.b16 %v568
    %v1661 = vunpack.c.h.b16 %v568
    %v1662 = vunpack.c.l.b16 %v569
    %v1663 = vunpack.c.h.b16 %v569
    %v1664 = vunpack.c.l.b16 %v570
    %v1665 = vunpack.c.h.b16 %v570
    %v1666 = vunpack.c.l.b16 %v571
    %v1667 = vunpack.c.h.b16 %v571
    %v1668 = vunpack.c.l.b16 %v572
    %v1669 = vunpack.c.h.b16 %v572
    %v1670 = vunpack.c.l.b16 %v573
    %v1671 = vunpack.c.h.b16 %v573
    %v1672 = vunpack.c.l.b16 %v574
    %v1673 = vunpack.c.h.b16 %v574
    %v1674 = vunpack.c.l.b16 %v575
    %v1675 = vunpack.c.h.b16 %v575
    %v1676 = vunpack.c.l.b16 %v576
    %v1677 = vunpack.c.h.b16 %v576
    %v1678 = vunpack.c.l.b16 %v577
    %v1679 = vunpack.c.h.b16 %v577
    %v1680 = vunpack.c.l.b16 %v578
    %v1681 = vunpack.c.h.b16 %v578
    %v1682 = vunpack.c.l.b16 %v579
    %v1683 = vunpack.c.h.b16 %v579
    %v1684 = vunpack.c.l.b16 %v580
    %v1685 = vunpack.c.h.b16 %v580
    %v1686 = vunpack.c.l.b16 %v581
    %v1687 = vunpack.c.h.b16 %v581
    %v1688 = vunpack.c.l.b16 %v582
    %v1689 = vunpack.c.h.b16 %v582
    %v1690 = vunpack.c.l.b16 %v583
    %v1691 = vunpack.c.h.b16 %v583
    %v1692 = vunpack.c.l.b16 %v584
    %v1693 = vunpack.c.h.b16 %v584
    %v1694 = vunpack.c.l.b16 %v585
    %v1695 = vunpack.c.h.b16 %v585
    %v1696 = vunpack.c.l.b16 %v586
    %v1697 = vunpack.c.h.b16 %v586
    %v1698 = vunpack.c.l.b16 %v587
    %v1699 = vunpack.c.h.b16 %v587
    %v1700 = vunpack.c.l.b16 %v588
    %v1701 = vunpack.c.h.b16 %v588
    %v1702 = vunpack.c.l.b16 %v589
    %v1703 = vunpack.c.h.b16 %v589
    %v1704 = vunpack.c.l.b16 %v590
    %v1705 = vunpack.c.h.b16 %v590
    %v1706 = vunpack.c.l.b16 %v591
    %v1707 = vunpack.c.h.b16 %v591
    %v1708 = vunpack.c.l.b16 %v592
    %v1709 = vunpack.c.h.b16 %v592
    %v1710 = vunpack.c.l.b16 %v593
    %v1711 = vunpack.c.h.b16 %v593
    %v1712 = vunpack.c.l.b16 %v594
    %v1713 = vunpack.c.h.b16 %v594
    %v1714 = vunpack.c.l.b16 %v595
    %v1715 = vunpack.c.h.b16 %v595
    %v1716 = vunpack.c.l.b16 %v596
    %v1717 = vunpack.c.h.b16 %v596
    %v1718 = vunpack.c.l.b16 %v597
    %v1719 = vunpack.c.h.b16 %v597
    %v1720 = vunpack.c.l.b16 %v598
    %v1721 = vunpack.c.h.b16 %v598
    %v1722 = vunpack.c.l.b16 %v599
    %v1723 = vunpack.c.h.b16 %v599
    %v1724 = vunpack.c.l.b16 %v600
    %v1725 = vunpack.c.h.b16 %v600
    %v1726 = vunpack.c.l.b16 %v601
    %v1727 = vunpack.c.h.b16 %v601
    %v1728 = vunpack.c.l.b16 %v602
    %v1729 = vunpack.c.h.b16 %v602
    %v1730 = vunpack.c.l.b16 %v603
    %v1731 = vunpack.c.h.b16 %v603
    %v1732 = vunpack.c.l.b16 %v604
    %v1733 = vunpack.c.h.b16 %v604
    %v1734 = vunpack.c.l.b16 %v605
    %v1735 = vunpack.c.h.b16 %v605
    %v1736 = vunpack.c.l.b16 %v606
    %v1737 = vunpack.c.h.b16 %v606
    %v1738 = vunpack.c.l.b16 %v607
    %v1739 = vunpack.c.h.b16 %v607
    %v1740 = vunpack.c.l.b16 %v608
    %v1741 = vunpack.c.h.b16 %v608
    %v1742 = vunpack.c.l.b16 %v609
    %v1743 = vunpack.c.h.b16 %v609
    %v1744 = vunpack.c.l.b16 %v610
    %v1745 = vunpack.c.h.b16 %v610
    %v1746 = vunpack.c.l.b16 %v611
    %v1747 = vunpack.c.h.b16 %v611
    %v1748 = vunpack.c.l.b16 %v612
    %v1749 = vunpack.c.h.b16 %v612
    %v1750 = vunpack.c.l.b16 %v613
    %v1751 = vunpack.c.h.b16 %v613
    %v1752 = vunpack.c.l.b16 %v614
    %v1753 = vunpack.c.h.b16 %v614
    %v1754 = vunpack.c.l.b16 %v615
    %v1755 = vunpack.c.h.b16 %v615
    %v1756 = vunpack.c.l.b16 %v616
    %v1757 = vunpack.c.h.b16 %v616
    %v1758 = vunpack.c.l.b16 %v617
    %v1759 = vunpack.c.h.b16 %v617
    %v1760 = vunpack.c.l.b16 %v618
    %v1761 = vunpack.c.h.b16 %v618
    %v1762 = vunpack.c.l.b16 %v619
    %v1763 = vunpack.c.h.b16 %v619
    %v1764 = vunpack.c.l.b16 %v620
    %v1765 = vunpack.c.h.b16 %v620
    %v1766 = vunpack.c.l.b16 %v621
    %v1767 = vunpack.c.h.b16 %v621
    %v1768 = vunpack.c.l.b16 %v622
    %v1769 = vunpack.c.h.b16 %v622
    %v1770 = vunpack.c.l.b16 %v623
    %v1771 = vunpack.c.h.b16 %v623
    %v1772 = vunpack.c.l.b16 %v624
    %v1773 = vunpack.c.h.b16 %v624
    %v1774 = vunpack.c.l.b16 %v625
    %v1775 = vunpack.c.h.b16 %v625
    %v1776 = vunpack.c.l.b16 %v626
    %v1777 = vunpack.c.h.b16 %v626
    %v1778 = vunpack.c.l.b16 %v627
    %v1779 = vunpack.c.h.b16 %v627
    %v1780 = vunpack.c.l.b16 %v628
    %v1781 = vunpack.c.h.b16 %v628
    %v1782 = vunpack.c.l.b16 %v629
    %v1783 = vunpack.c.h.b16 %v629
    %v1784 = vunpack.c.l.b16 %v630
    %v1785 = vunpack.c.h.b16 %v630
    %v1786 = vunpack.c.l.b16 %v631
    %v1787 = vunpack.c.h.b16 %v631
    %v1788 = vunpack.c.l.b16 %v632
    %v1789 = vunpack.c.h.b16 %v632
    %v1790 = vunpack.c.l.b16 %v633
    %v1791 = vunpack.c.h.b16 %v633
    %v1792 = vunpack.c.l.b16 %v634
    %v1793 = vunpack.c.h.b16 %v634
    %v1794 = vunpack.c.l.b16 %v635
    %v1795 = vunpack.c.h.b16 %v635
    %v1796 = vunpack.c.l.b16 %v636
    %v1797 = vunpack.c.h.b16 %v636
    %v1798 = vunpack.c.l.b16 %v637
    %v1799 = vunpack.c.h.b16 %v637
    %v1800 = vunpack.c.l.b16 %v638
    %v1801 = vunpack.c.h.b16 %v638
    %v1802 = vunpack.c.l.b16 %v639
    %v1803 = vunpack.c.h.b16 %v639
    %v1804 = vpack.c.b16 %v1038, %v1036
    %v1805 = vpack.c.b16 %v1039, %v1037
    %v1806 = vpack.c.b16 %v1042, %v1040
    %v1807 = vpack.c.b16 %v1043, %v1041
    %v1808 = vpack.c.b16 %v1046, %v1044
    %v1809 = vpack.c.b16 %v1047, %v1045
    %v1810 = vpack.c.b16 %v1050, %v1048
    %v1811 = vpack.c.b16 %v1051, %v1049
    %v1812 = vpack.c.b16 %v1054, %v1052
    %v1813 = vpack.c.b16 %v1055, %v1053
    %v1814 = vpack.c.b16 %v1058, %v1056
    %v1815 = vpack.c.b16 %v1059, %v1057
    %v1816 = vpack.c.b16 %v1062, %v1060
    %v1817 = vpack.c.b16 %v1063, %v1061
    %v1818 = vpack.c.b16 %v1066, %v1064
    %v1819 = vpack.c.b16 %v1067, %v1065
    %v1820 = vpack.c.b16 %v1070, %v1068
    %v1821 = vpack.c.b16 %v1071, %v1069
    %v1822 = vpack.c.b16 %v1074, %v1072
    %v1823 = vpack.c.b16 %v1075, %v1073
    %v1824 = vpack.c.b16 %v1078, %v1076
    %v1825 = vpack.c.b16 %v1079, %v1077
    %v1826 = vpack.c.b16 %v1082, %v1080
    %v1827 = vpack.c.b16 %v1083, %v1081
    %v1828 = vpack.c.b16 %v1086, %v1084
    %v1829 = vpack.c.b16 %v1087, %v1085
    %v1830 = vpack.c.b16 %v1090, %v1088
    %v1831 = vpack.c.b16 %v1091, %v1089
    %v1832 = vpack.c.b16 %v1094, %v1092
    %v1833 = vpack.c.b16 %v1095, %v1093
    %v1834 = vpack.c.b16 %v1098, %v1096
    %v1835 = vpack.c.b16 %v1099, %v1097
    %v1836 = vpack.c.b16 %v1102, %v1100
    %v1837 = vpack.c.b16 %v1103, %v1101
    %v1838 = vpack.c.b16 %v1106, %v1104
    %v1839 = vpack.c.b16 %v1107, %v1105
    %v1840 = vpack.c.b16 %v1110, %v1108
    %v1841 = vpack.c.b16 %v1111, %v1109
    %v1842 = vpack.c.b16 %v1114, %v1112
    %v1843 = vpack.c.b16 %v1115, %v1113
    %v1844 = vpack.c.b16 %v1118, %v1116
    %v1845 = vpack.c.b16 %v1119, %v1117
    %v1846 = vpack.c.b16 %v1122, %v1120
    %v1847 = vpack.c.b16 %v1123, %v1121
    %v1848 = vpack.c.b16 %v1126, %v1124
    %v1849 = vpack.c.b16 %v1127, %v1125
    %v1850 = vpack.c.b16 %v1130, %v1128
    %v1851 = vpack.c.b16 %v1131, %v1129
    %v1852 = vpack.c.b16 %v1134, %v1132
    %v1853 = vpack.c.b16 %v1135, %v1133
    %v1854 = vpack.c.b16 %v1138, %v1136
    %v1855 = vpack.c.b16 %v1139, %v1137
    %v1856 = vpack.c.b16 %v1142, %v1140
    %v1857 = vpack.c.b16 %v1143, %v1141
    %v1858 = vpack.c.b16 %v1146, %v1144
    %v1859 = vpack.c.b16 %v1147, %v1145
    %v1860 = vpack.c.b16 %v1150, %v1148
    %v1861 = vpack.c.b16 %v1151, %v1149
    %v1862 = vpack.c.b16 %v1154, %v1152
    %v1863 = vpack.c.b16 %v1155, %v1153
    %v1864 = vpack.c.b16 %v1158, %v1156
    %v1865 = vpack.c.b16 %v1159, %v1157
    %v1866 = vpack.c.b16 %v1162, %v1160
    %v1867 = vpack.c.b16 %v1163, %v1161
    %v1868 = vpack.c.b16 %v1166, %v1164
    %v1869 = vpack.c.b16 %v1167, %v1165
    %v1870 = vpack.c.b16 %v1170, %v1168
    %v1871 = vpack.c.b16 %v1171, %v1169
    %v1872 = vpack.c.b16 %v1174, %v1172
    %v1873 = vpack.c.b16 %v1175, %v1173
    %v1874 = vpack.c.b16 %v1178, %v1176
    %v1875 = vpack.c.b16 %v1179, %v1177
    %v1876 = vpack.c.b16 %v1182, %v1180
    %v1877 = vpack.c.b16 %v1183, %v1181
    %v1878 = vpack.c.b16 %v1186, %v1184
    %v1879 = vpack.c.b16 %v1187, %v1185
    %v1880 = vpack.c.b16 %v1190, %v1188
    %v1881 = vpack.c.b16 %v1191, %v1189
    %v1882 = vpack.c.b16 %v1194, %v1192
    %v1883 = vpack.c.b16 %v1195, %v1193
    %v1884 = vpack.c.b16 %v1198, %v1196
    %v1885 = vpack.c.b16 %v1199, %v1197
    %v1886 = vpack.c.b16 %v1202, %v1200
    %v1887 = vpack.c.b16 %v1203, %v1201
    %v1888 = vpack.c.b16 %v1206, %v1204
    %v1889 = vpack.c.b16 %v1207, %v1205
    %v1890 = vpack.c.b16 %v1210, %v1208
    %v1891 = vpack.c.b16 %v1211, %v1209
    %v1892 = vpack.c.b16 %v1214, %v1212
    %v1893 = vpack.c.b16 %v1215, %v1213
    %v1894 = vpack.c.b16 %v1218, %v1216
    %v1895 = vpack.c.b16 %v1219, %v1217
    %v1896 = vpack.c.b16 %v1222, %v1220
    %v1897 = vpack.c.b16 %v1223, %v1221
    %v1898 = vpack.c.b16 %v1226, %v1224
    %v1899 = vpack.c.b16 %v1227, %v1225
    %v1900 = vpack.c.b16 %v1230, %v1228
    %v1901 = vpack.c.b16 %v1231, %v1229
    %v1902 = vpack.c.b16 %v1234, %v1232
    %v1903 = vpack.c.b16 %v1235, %v1233
    %v1904 = vpack.c.b16 %v1238, %v1236
    %v1905 = vpack.c.b16 %v1239, %v1237
    %v1906 = vpack.c.b16 %v1242, %v1240
    %v1907 = vpack.c.b16 %v1243, %v1241
    %v1908 = vpack.c.b16 %v1246, %v1244
    %v1909 = vpack.c.b16 %v1247, %v1245
    %v1910 = vpack.c.b16 %v1250, %v1248
    %v1911 = vpack.c.b16 %v1251, %v1249
    %v1912 = vpack.c.b16 %v1254, %v1252
    %v1913 = vpack.c.b16 %v1255, %v1253
    %v1914 = vpack.c.b16 %v1258, %v1256
    %v1915 = vpack.c.b16 %v1259, %v1257
    %v1916 = vpack.c.b16 %v1262, %v1260
    %v1917 = vpack.c.b16 %v1263, %v1261
    %v1918 = vpack.c.b16 %v1266, %v1264
    %v1919 = vpack.c.b16 %v1267, %v1265
    %v1920 = vpack.c.b16 %v1270, %v1268
    %v1921 = vpack.c.b16 %v1271, %v1269
    %v1922 = vpack.c.b16 %v1274, %v1272
    %v1923 = vpack.c.b16 %v1275, %v1273
    %v1924 = vpack.c.b16 %v1278, %v1276
    %v1925 = vpack.c.b16 %v1279, %v1277
    %v1926 = vpack.c.b16 %v1282, %v1280
    %v1927 = vpack.c.b16 %v1283, %v1281
    %v1928 = vpack.c.b16 %v1286, %v1284
    %v1929 = vpack.c.b16 %v1287, %v1285
    %v1930 = vpack.c.b16 %v1290, %v1288
    %v1931 = vpack.c.b16 %v1291, %v1289
    %v1932 = vpack.c.b16 %v1294, %v1292
    %v1933 = vpack.c.b16 %v1295, %v1293
    %v1934 = vpack.c.b16 %v1298, %v1296
    %v1935 = vpack.c.b16 %v1299, %v1297
    %v1936 = vpack.c.b16 %v1302, %v1300
    %v1937 = vpack.c.b16 %v1303, %v1301
    %v1938 = vpack.c.b16 %v1306, %v1304
    %v1939 = vpack.c.b16 %v1307, %v1305
    %v1940 = vpack.c.b16 %v1310, %v1308
    %v1941 = vpack.c.b16 %v1311, %v1309
    %v1942 = vpack.c.b16 %v1314, %v1312
    %v1943 = vpack.c.b16 %v1315, %v1313
    %v1944 = vpack.c.b16 %v1318, %v1316
    %v1945 = vpack.c.b16 %v1319, %v1317
    %v1946 = vpack.c.b16 %v1322, %v1320
    %v1947 = vpack.c.b16 %v1323, %v1321
    %v1948 = vpack.c.b16 %v1326, %v1324
    %v1949 = vpack.c.b16 %v1327, %v1325
    %v1950 = vpack.c.b16 %v1330, %v1328
    %v1951 = vpack.c.b16 %v1331, %v1329
    %v1952 = vpack.c.b16 %v1334, %v1332
    %v1953 = vpack.c.b16 %v1335, %v1333
    %v1954 = vpack.c.b16 %v1338, %v1336
    %v1955 = vpack.c.b16 %v1339, %v1337
    %v1956 = vpack.c.b16 %v1342, %v1340
    %v1957 = vpack.c.b16 %v1343, %v1341
    %v1958 = vpack.c.b16 %v1346, %v1344
    %v1959 = vpack.c.b16 %v1347, %v1345
    %v1960 = vpack.c.b16 %v1350, %v1348
    %v1961 = vpack.c.b16 %v1351, %v1349
    %v1962 = vpack.c.b16 %v1354, %v1352
    %v1963 = vpack.c.b16 %v1355, %v1353
    %v1964 = vpack.c.b16 %v1358, %v1356
    %v1965 = vpack.c.b16 %v1359, %v1357
    %v1966 = vpack.c.b16 %v1362, %v1360
    %v1967 = vpack.c.b16 %v1363, %v1361
    %v1968 = vpack.c.b16 %v1366, %v1364
    %v1969 = vpack.c.b16 %v1367, %v1365
    %v1970 = vpack.c.b16 %v1370, %v1368
    %v1971 = vpack.c.b16 %v1371, %v1369
    %v1972 = vpack.c.b16 %v1374, %v1372
    %v1973 = vpack.c.b16 %v1375, %v1373
    %v1974 = vpack.c.b16 %v1378, %v1376
    %v1975 = vpack.c.b16 %v1379, %v1377
    %v1976 = vpack.c.b16 %v1382, %v1380
    %v1977 = vpack.c.b16 %v1383, %v1381
    %v1978 = vpack.c.b16 %v1386, %v1384
    %v1979 = vpack.c.b16 %v1387, %v1385
    %v1980 = vpack.c.b16 %v1390, %v1388
    %v1981 = vpack.c.b16 %v1391, %v1389
    %v1982 = vpack.c.b16 %v1394, %v1392
    %v1983 = vpack.c.b16 %v1395, %v1393
    %v1984 = vpack.c.b16 %v1398, %v1396
    %v1985 = vpack.c.b16 %v1399, %v1397
    %v1986 = vpack.c.b16 %v1402, %v1400
    %v1987 = vpack.c.b16 %v1403, %v1401
    %v1988 = vpack.c.b16 %v1406, %v1404
    %v1989 = vpack.c.b16 %v1407, %v1405
    %v1990 = vpack.c.b16 %v1410, %v1408
    %v1991 = vpack.c.b16 %v1411, %v1409
    %v1992 = vpack.c.b16 %v1414, %v1412
    %v1993 = vpack.c.b16 %v1415, %v1413
    %v1994 = vpack.c.b16 %v1418, %v1416
    %v1995 = vpack.c.b16 %v1419, %v1417
    %v1996 = vpack.c.b16 %v1422, %v1420
    %v1997 = vpack.c.b16 %v1423, %v1421
    %v1998 = vpack.c.b16 %v1426, %v1424
    %v1999 = vpack.c.b16 %v1427, %v1425
    %v2000 = vpack.c.b16 %v1430, %v1428
    %v2001 = vpack.c.b16 %v1431, %v1429
    %v2002 = vpack.c.b16 %v1434, %v1432
    %v2003 = vpack.c.b16 %v1435, %v1433
    %v2004 = vpack.c.b16 %v1438, %v1436
    %v2005 = vpack.c.b16 %v1439, %v1437
    %v2006 = vpack.c.b16 %v1442, %v1440
    %v2007 = vpack.c.b16 %v1443, %v1441
    %v2008 = vpack.c.b16 %v1446, %v1444
    %v2009 = vpack.c.b16 %v1447, %v1445
    %v2010 = vpack.c.b16 %v1450, %v1448
    %v2011 = vpack.c.b16 %v1451, %v1449
    %v2012 = vpack.c.b16 %v1454, %v1452
    %v2013 = vpack.c.b16 %v1455, %v1453
    %v2014 = vpack.c.b16 %v1458, %v1456
    %v2015 = vpack.c.b16 %v1459, %v1457
    %v2016 = vpack.c.b16 %v1462, %v1460
    %v2017 = vpack.c.b16 %v1463, %v1461
    %v2018 = vpack.c.b16 %v1466, %v1464
    %v2019 = vpack.c.b16 %v1467, %v1465
    %v2020 = vpack.c.b16 %v1470, %v1468
    %v2021 = vpack.c.b16 %v1471, %v1469
    %v2022 = vpack.c.b16 %v1474, %v1472
    %v2023 = vpack.c.b16 %v1475, %v1473
    %v2024 = vpack.c.b16 %v1478, %v1476
    %v2025 = vpack.c.b16 %v1479, %v1477
    %v2026 = vpack.c.b16 %v1482, %v1480
    %v2027 = vpack.c.b16 %v1483, %v1481
    %v2028 = vpack.c.b16 %v1486, %v1484
    %v2029 = vpack.c.b16 %v1487, %v1485
    %v2030 = vpack.c.b16 %v1490, %v1488
    %v2031 = vpack.c.b16 %v1491, %v1489
    %v2032 = vpack.c.b16 %v1494, %v1492
    %v2033 = vpack.c.b16 %v1495, %v1493
    %v2034 = vpack.c.b16 %v1498, %v1496
    %v2035 = vpack.c.b16 %v1499, %v1497
    %v2036 = vpack.c.b16 %v1502, %v1500
    %v2037 = vpack.c.b16 %v1503, %v1501
    %v2038 = vpack.c.b16 %v1506, %v1504
    %v2039 = vpack.c.b16 %v1507, %v1505
    %v2040 = vpack.c.b16 %v1510, %v1508
    %v2041 = vpack.c.b16 %v1511, %v1509
    %v2042 = vpack.c.b16 %v1514, %v1512
    %v2043 = vpack.c.b16 %v1515, %v1513
    %v2044 = vpack.c.b16 %v1518, %v1516
    %v2045 = vpack.c.b16 %v1519, %v1517
    %v2046 = vpack.c.b16 %v1522, %v1520
    %v2047 = vpack.c.b16 %v1523, %v1521
    %v2048 = vpack.c.b16 %v1526, %v1524
    %v2049 = vpack.c.b16 %v1527, %v1525
    %v2050 = vpack.c.b16 %v1530, %v1528
    %v2051 = vpack.c.b16 %v1531, %v1529
    %v2052 = vpack.c.b16 %v1534, %v1532
    %v2053 = vpack.c.b16 %v1535, %v1533
    %v2054 = vpack.c.b16 %v1538, %v1536
    %v2055 = vpack.c.b16 %v1539, %v1537
    %v2056 = vpack.c.b16 %v1542, %v1540
    %v2057 = vpack.c.b16 %v1543, %v1541
    %v2058 = vpack.c.b16 %v1546, %v1544
    %v2059 = vpack.c.b16 %v1547, %v1545
    %v2060 = vpack.c.b16 %v1550, %v1548
    %v2061 = vpack.c.b16 %v1551, %v1549
    %v2062 = vpack.c.b16 %v1554, %v1552
    %v2063 = vpack.c.b16 %v1555, %v1553
    %v2064 = vpack.c.b16 %v1558, %v1556
    %v2065 = vpack.c.b16 %v1559, %v1557
    %v2066 = vpack.c.b16 %v1562, %v1560
    %v2067 = vpack.c.b16 %v1563, %v1561
    %v2068 = vpack.c.b16 %v1566, %v1564
    %v2069 = vpack.c.b16 %v1567, %v1565
    %v2070 = vpack.c.b16 %v1570, %v1568
    %v2071 = vpack.c.b16 %v1571, %v1569
    %v2072 = vpack.c.b16 %v1574, %v1572
    %v2073 = vpack.c.b16 %v1575, %v1573
    %v2074 = vpack.c.b16 %v1578, %v1576
    %v2075 = vpack.c.b16 %v1579, %v1577
    %v2076 = vpack.c.b16 %v1582, %v1580
    %v2077 = vpack.c.b16 %v1583, %v1581
    %v2078 = vpack.c.b16 %v1586, %v1584
    %v2079 = vpack.c.b16 %v1587, %v1585
    %v2080 = vpack.c.b16 %v1590, %v1588
    %v2081 = vpack.c.b16 %v1591, %v1589
    %v2082 = vpack.c.b16 %v1594, %v1592
    %v2083 = vpack.c.b16 %v1595, %v1593
    %v2084 = vpack.c.b16 %v1598, %v1596
    %v2085 = vpack.c.b16 %v1599, %v1597
    %v2086 = vpack.c.b16 %v1602, %v1600
    %v2087 = vpack.c.b16 %v1603, %v1601
    %v2088 = vpack.c.b16 %v1606, %v1604
    %v2089 = vpack.c.b16 %v1607, %v1605
    %v2090 = vpack.c.b16 %v1610, %v1608
    %v2091 = vpack.c.b16 %v1611, %v1609
    %v2092 = vpack.c.b16 %v1614, %v1612
    %v2093 = vpack.c.b16 %v1615, %v1613
    %v2094 = vpack.c.b16 %v1618, %v1616
    %v2095 = vpack.c.b16 %v1619, %v1617
    %v2096 = vpack.c.b16 %v1622, %v1620
    %v2097 = vpack.c.b16 %v1623, %v1621
    %v2098 = vpack.c.b16 %v1626, %v1624
    %v2099 = vpack.c.b16 %v1627, %v1625
    %v2100 = vpack.c.b16 %v1630, %v1628
    %v2101 = vpack.c.b16 %v1631, %v1629
    %v2102 = vpack.c.b16 %v1634, %v1632
    %v2103 = vpack.c.b16 %v1635, %v1633
    %v2104 = vpack.c.b16 %v1638, %v1636
    %v2105 = vpack.c.b16 %v1639, %v1637
    %v2106 = vpack.c.b16 %v1642, %v1640
    %v2107 = vpack.c.b16 %v1643, %v1641
    %v2108 = vpack.c.b16 %v1646, %v1644
    %v2109 = vpack.c.b16 %v1647, %v1645
    %v2110 = vpack.c.b16 %v1650, %v1648
    %v2111 = vpack.c.b16 %v1651, %v1649
    %v2112 = vpack.c.b16 %v1654, %v1652
    %v2113 = vpack.c.b16 %v1655, %v1653
    %v2114 = vpack.c.b16 %v1658, %v1656
    %v2115 = vpack.c.b16 %v1659, %v1657
    %v2116 = vpack.c.b16 %v1662, %v1660
    %v2117 = vpack.c.b16 %v1663, %v1661
    %v2118 = vpack.c.b16 %v1666, %v1664
    %v2119 = vpack.c.b16 %v1667, %v1665
    %v2120 = vpack.c.b16 %v1670, %v1668
    %v2121 = vpack.c.b16 %v1671, %v1669
    %v2122 = vpack.c.b16 %v1674, %v1672
    %v2123 = vpack.c.b16 %v1675, %v1673
    %v2124 = vpack.c.b16 %v1678, %v1676
    %v2125 = vpack.c.b16 %v1679, %v1677
    %v2126 = vpack.c.b16 %v1682, %v1680
    %v2127 = vpack.c.b16 %v1683, %v1681
    %v2128 = vpack.c.b16 %v1686, %v1684
    %v2129 = vpack.c.b16 %v1687, %v1685
    %v2130 = vpack.c.b16 %v1690, %v1688
    %v2131 = vpack.c.b16 %v1691, %v1689
    %v2132 = vpack.c.b16 %v1694, %v1692
    %v2133 = vpack.c.b16 %v1695, %v1693
    %v2134 = vpack.c.b16 %v1698, %v1696
    %v2135 = vpack.c.b16 %v1699, %v1697
    %v2136 = vpack.c.b16 %v1702, %v1700
    %v2137 = vpack.c.b16 %v1703, %v1701
    %v2138 = vpack.c.b16 %v1706, %v1704
    %v2139 = vpack.c.b16 %v1707, %v1705
    %v2140 = vpack.c.b16 %v1710, %v1708
    %v2141 = vpack.c.b16 %v1711, %v1709
    %v2142 = vpack.c.b16 %v1714, %v1712
    %v2143 = vpack.c.b16 %v1715, %v1713
    %v2144 = vpack.c.b16 %v1718, %v1716
    %v2145 = vpack.c.b16 %v1719, %v1717
    %v2146 = vpack.c.b16 %v1722, %v1720
    %v2147 = vpack.c.b16 %v1723, %v1721
    %v2148 = vpack.c.b16 %v1726, %v1724
    %v2149 = vpack.c.b16 %v1727, %v1725
    %v2150 = vpack.c.b16 %v1730, %v1728
    %v2151 = vpack.c.b16 %v1731, %v1729
    %v2152 = vpack.c.b16 %v1734, %v1732
    %v2153 = vpack.c.b16 %v1735, %v1733
    %v2154 = vpack.c.b16 %v1738, %v1736
    %v2155 = vpack.c.b16 %v1739, %v1737
    %v2156 = vpack.c.b16 %v1742, %v1740
    %v2157 = vpack.c.b16 %v1743, %v1741
    %v2158 = vpack.c.b16 %v1746, %v1744
    %v2159 = vpack.c.b16 %v1747, %v1745
    %v2160 = vpack.c.b16 %v1750, %v1748
    %v2161 = vpack.c.b16 %v1751, %v1749
    %v2162 = vpack.c.b16 %v1754, %v1752
    %v2163 = vpack.c.b16 %v1755, %v1753
    %v2164 = vpack.c.b16 %v1758, %v1756
    %v2165 = vpack.c.b16 %v1759, %v1757
    %v2166 = vpack.c.b16 %v1762, %v1760
    %v2167 = vpack.c.b16 %v1763, %v1761
    %v2168 = vpack.c.b16 %v1766, %v1764
    %v2169 = vpack.c.b16 %v1767, %v1765
    %v2170 = vpack.c.b16 %v1770, %v1768
    %v2171 = vpack.c.b16 %v1771, %v1769
    %v2172 = vpack.c.b16 %v1774, %v1772
    %v2173 = vpack.c.b16 %v1775, %v1773
    %v2174 = vpack.c.b16 %v1778, %v1776
    %v2175 = vpack.c.b16 %v1779, %v1777
    %v2176 = vpack.c.b16 %v1782, %v1780
    %v2177 = vpack.c.b16 %v1783, %v1781
    %v2178 = vpack.c.b16 %v1786, %v1784
    %v2179 = vpack.c.b16 %v1787, %v1785
    %v2180 = vpack.c.b16 %v1790, %v1788
    %v2181 = vpack.c.b16 %v1791, %v1789
    %v2182 = vpack.c.b16 %v1794, %v1792
    %v2183 = vpack.c.b16 %v1795, %v1793
    %v2184 = vpack.c.b16 %v1798, %v1796
    %v2185 = vpack.c.b16 %v1799, %v1797
    %v2186 = vpack.c.b16 %v1802, %v1800
    %v2187 = vpack.c.b16 %v1803, %v1801
    %2572 = vmatprep.subr.bf16.mxu0 %v1805
    %2573 = vmatpush1.bf16.msra.mxu0 %v1804
    %2574 = vmatprep.subr.bf16.mxu0 %v1807
    %2575 = vmatpush1.bf16.msra.mxu0 %v1806
    %2576 = vmatprep.subr.bf16.mxu0 %v1809
    %2577 = vmatpush1.bf16.msra.mxu0 %v1808
    %2578 = vmatprep.subr.bf16.mxu0 %v1811
    %2579 = vmatpush1.bf16.msra.mxu0 %v1810
    %2580 = vmatprep.subr.bf16.mxu0 %v1813
    %2581 = vmatpush1.bf16.msra.mxu0 %v1812
    %2582 = vmatprep.subr.bf16.mxu0 %v1815
    %2583 = vmatpush1.bf16.msra.mxu0 %v1814
    %2584 = vmatprep.subr.bf16.mxu0 %v1817
    %2585 = vmatpush1.bf16.msra.mxu0 %v1816
    %2586 = vmatprep.subr.bf16.mxu0 %v1819
    %2587 = vmatpush1.bf16.msra.mxu0 %v1818
    %2588 = vmatprep.subr.bf16.mxu0 %v1821
    %2589 = vmatpush1.bf16.msra.mxu0 %v1820
    %2590 = vmatprep.subr.bf16.mxu0 %v1823
    %2591 = vmatpush1.bf16.msra.mxu0 %v1822
    %2592 = vmatprep.subr.bf16.mxu0 %v1825
    %2593 = vmatpush1.bf16.msra.mxu0 %v1824
    %2594 = vmatprep.subr.bf16.mxu0 %v1827
    %2595 = vmatpush1.bf16.msra.mxu0 %v1826
    %2596 = vmatprep.subr.bf16.mxu0 %v1829
    %2597 = vmatpush1.bf16.msra.mxu0 %v1828
    %2598 = vmatprep.subr.bf16.mxu0 %v1831
    %2599 = vmatpush1.bf16.msra.mxu0 %v1830
    %2600 = vmatprep.subr.bf16.mxu0 %v1833
    %2601 = vmatpush1.bf16.msra.mxu0 %v1832
    %2602 = vmatprep.subr.bf16.mxu0 %v1835
    %2603 = vmatpush1.bf16.msra.mxu0 %v1834
    %2604 = vmatprep.mubr.bf16.mxu0 %v233
    %2605 = vmatmul.mubr.bf16.gmra.mrb[0].mxu0 %v232
    %v2606 = vpop.f32.mrb[0].mxu0
    %v2607 = vadd.f32 %v645, %v2606
    %v2608 = vpop.f32.mrb[0].mxu0
    %v2609 = vadd.f32 %v649, %v2608
    %v2610 = vpop.f32.mrb[0].mxu0
    %v2611 = vpop.f32.mrb[0].mxu0
    %2612 = vdwg.mxu0
    %2613 = vmatprep.subr.bf16.mxu0 %v1837
    %2614 = vmatpush1.bf16.msra.mxu0 %v1836
    %2615 = vmatprep.subr.bf16.mxu0 %v1839
    %2616 = vmatpush1.bf16.msra.mxu0 %v1838
    %2617 = vmatprep.subr.bf16.mxu0 %v1841
    %2618 = vmatpush1.bf16.msra.mxu0 %v1840
    %2619 = vmatprep.subr.bf16.mxu0 %v1843
    %2620 = vmatpush1.bf16.msra.mxu0 %v1842
    %2621 = vmatprep.subr.bf16.mxu0 %v1845
    %2622 = vmatpush1.bf16.msra.mxu0 %v1844
    %2623 = vmatprep.subr.bf16.mxu0 %v1847
    %2624 = vmatpush1.bf16.msra.mxu0 %v1846
    %2625 = vmatprep.subr.bf16.mxu0 %v1849
    %2626 = vmatpush1.bf16.msra.mxu0 %v1848
    %2627 = vmatprep.subr.bf16.mxu0 %v1851
    %2628 = vmatpush1.bf16.msra.mxu0 %v1850
    %2629 = vmatprep.subr.bf16.mxu0 %v1853
    %2630 = vmatpush1.bf16.msra.mxu0 %v1852
    %2631 = vmatprep.subr.bf16.mxu0 %v1855
    %2632 = vmatpush1.bf16.msra.mxu0 %v1854
    %2633 = vmatprep.subr.bf16.mxu0 %v1857
    %2634 = vmatpush1.bf16.msra.mxu0 %v1856
    %2635 = vmatprep.subr.bf16.mxu0 %v1859
    %2636 = vmatpush1.bf16.msra.mxu0 %v1858
    %2637 = vmatprep.subr.bf16.mxu0 %v1861
    %2638 = vmatpush1.bf16.msra.mxu0 %v1860
    %2639 = vmatprep.subr.bf16.mxu0 %v1863
    %2640 = vmatpush1.bf16.msra.mxu0 %v1862
    %2641 = vmatprep.subr.bf16.mxu0 %v1865
    %2642 = vmatpush1.bf16.msra.mxu0 %v1864
    %2643 = vmatprep.subr.bf16.mxu0 %v1867
    %2644 = vmatpush1.bf16.msra.mxu0 %v1866
    %2645 = vmatprep.mubr.bf16.mxu0 %v235
    %2646 = vmatmul.mubr.bf16.gmra.mrb[0].mxu0 %v234
    %v2647 = vpop.f32.mrb[0].mxu0
    %v2648 = vadd.f32 %v2607, %v2647
    %v2649 = vpop.f32.mrb[0].mxu0
    %v2650 = vadd.f32 %v2609, %v2649
    %v2651 = vpop.f32.mrb[0].mxu0
    %v2652 = vpop.f32.mrb[0].mxu0
    %2653 = vdwg.mxu0
    %2654 = vmatprep.subr.bf16.mxu0 %v1869
    %2655 = vmatpush1.bf16.msra.mxu0 %v1868
    %2656 = vmatprep.subr.bf16.mxu0 %v1871
    %2657 = vmatpush1.bf16.msra.mxu0 %v1870
    %2658 = vmatprep.subr.bf16.mxu0 %v1873
    %2659 = vmatpush1.bf16.msra.mxu0 %v1872
    %2660 = vmatprep.subr.bf16.mxu0 %v1875
    %2661 = vmatpush1.bf16.msra.mxu0 %v1874
    %2662 = vmatprep.subr.bf16.mxu0 %v1877
    %2663 = vmatpush1.bf16.msra.mxu0 %v1876
    %2664 = vmatprep.subr.bf16.mxu0 %v1879
    %2665 = vmatpush1.bf16.msra.mxu0 %v1878
    %2666 = vmatprep.subr.bf16.mxu0 %v1881
    %2667 = vmatpush1.bf16.msra.mxu0 %v1880
    %2668 = vmatprep.subr.bf16.mxu0 %v1883
    %2669 = vmatpush1.bf16.msra.mxu0 %v1882
    %2670 = vmatprep.subr.bf16.mxu0 %v1885
    %2671 = vmatpush1.bf16.msra.mxu0 %v1884
    %2672 = vmatprep.subr.bf16.mxu0 %v1887
    %2673 = vmatpush1.bf16.msra.mxu0 %v1886
    %2674 = vmatprep.subr.bf16.mxu0 %v1889
    %2675 = vmatpush1.bf16.msra.mxu0 %v1888
    %2676 = vmatprep.subr.bf16.mxu0 %v1891
    %2677 = vmatpush1.bf16.msra.mxu0 %v1890
    %2678 = vmatprep.subr.bf16.mxu0 %v1893
    %2679 = vmatpush1.bf16.msra.mxu0 %v1892
    %2680 = vmatprep.subr.bf16.mxu0 %v1895
    %2681 = vmatpush1.bf16.msra.mxu0 %v1894
    %2682 = vmatprep.subr.bf16.mxu0 %v1897
    %2683 = vmatpush1.bf16.msra.mxu0 %v1896
    %2684 = vmatprep.subr.bf16.mxu0 %v1899
    %2685 = vmatpush1.bf16.msra.mxu0 %v1898
    %2686 = vmatprep.mubr.bf16.mxu0 %v237
    %2687 = vmatmul.mubr.bf16.gmra.mrb[0].mxu0 %v236
    %v2688 = vpop.f32.mrb[0].mxu0
    %v2689 = vadd.f32 %v2648, %v2688
    %v2690 = vpop.f32.mrb[0].mxu0
    %v2691 = vadd.f32 %v2650, %v2690
    %v2692 = vpop.f32.mrb[0].mxu0
    %v2693 = vpop.f32.mrb[0].mxu0
    %2694 = vdwg.mxu0
    %2695 = vmatprep.subr.bf16.mxu0 %v1901
    %2696 = vmatpush1.bf16.msra.mxu0 %v1900
    %2697 = vmatprep.subr.bf16.mxu0 %v1903
    %2698 = vmatpush1.bf16.msra.mxu0 %v1902
    %2699 = vmatprep.subr.bf16.mxu0 %v1905
    %2700 = vmatpush1.bf16.msra.mxu0 %v1904
    %2701 = vmatprep.subr.bf16.mxu0 %v1907
    %2702 = vmatpush1.bf16.msra.mxu0 %v1906
    %2703 = vmatprep.subr.bf16.mxu0 %v1909
    %2704 = vmatpush1.bf16.msra.mxu0 %v1908
    %2705 = vmatprep.subr.bf16.mxu0 %v1911
    %2706 = vmatpush1.bf16.msra.mxu0 %v1910
    %2707 = vmatprep.subr.bf16.mxu0 %v1913
    %2708 = vmatpush1.bf16.msra.mxu0 %v1912
    %2709 = vmatprep.subr.bf16.mxu0 %v1915
    %2710 = vmatpush1.bf16.msra.mxu0 %v1914
    %2711 = vmatprep.subr.bf16.mxu0 %v1917
    %2712 = vmatpush1.bf16.msra.mxu0 %v1916
    %2713 = vmatprep.subr.bf16.mxu0 %v1919
    %2714 = vmatpush1.bf16.msra.mxu0 %v1918
    %2715 = vmatprep.subr.bf16.mxu0 %v1921
    %2716 = vmatpush1.bf16.msra.mxu0 %v1920
    %2717 = vmatprep.subr.bf16.mxu0 %v1923
    %2718 = vmatpush1.bf16.msra.mxu0 %v1922
    %2719 = vmatprep.subr.bf16.mxu0 %v1925
    %2720 = vmatpush1.bf16.msra.mxu0 %v1924
    %2721 = vmatprep.subr.bf16.mxu0 %v1927
    %2722 = vmatpush1.bf16.msra.mxu0 %v1926
    %2723 = vmatprep.subr.bf16.mxu0 %v1929
    %2724 = vmatpush1.bf16.msra.mxu0 %v1928
    %2725 = vmatprep.subr.bf16.mxu0 %v1931
    %2726 = vmatpush1.bf16.msra.mxu0 %v1930
    %2727 = vmatprep.mubr.bf16.mxu0 %v239
    %2728 = vmatmul.mubr.bf16.gmra.mrb[0].mxu0 %v238
    %v2729 = vpop.f32.mrb[0].mxu0
    %v2730 = vadd.f32 %v2689, %v2729
    %v2731 = vpop.f32.mrb[0].mxu0
    %v2732 = vadd.f32 %v2691, %v2731
    %v2733 = vpop.f32.mrb[0].mxu0
    %v2734 = vpop.f32.mrb[0].mxu0
    %2735 = vdwg.mxu0
    %2736 = vmatprep.subr.bf16.mxu0 %v1933
    %2737 = vmatpush1.bf16.msra.mxu0 %v1932
    %2738 = vmatprep.subr.bf16.mxu0 %v1935
    %2739 = vmatpush1.bf16.msra.mxu0 %v1934
    %2740 = vmatprep.subr.bf16.mxu0 %v1937
    %2741 = vmatpush1.bf16.msra.mxu0 %v1936
    %2742 = vmatprep.subr.bf16.mxu0 %v1939
    %2743 = vmatpush1.bf16.msra.mxu0 %v1938
    %2744 = vmatprep.subr.bf16.mxu0 %v1941
    %2745 = vmatpush1.bf16.msra.mxu0 %v1940
    %2746 = vmatprep.subr.bf16.mxu0 %v1943
    %2747 = vmatpush1.bf16.msra.mxu0 %v1942
    %2748 = vmatprep.subr.bf16.mxu0 %v1945
    %2749 = vmatpush1.bf16.msra.mxu0 %v1944
    %2750 = vmatprep.subr.bf16.mxu0 %v1947
    %2751 = vmatpush1.bf16.msra.mxu0 %v1946
    %2752 = vmatprep.subr.bf16.mxu0 %v1949
    %2753 = vmatpush1.bf16.msra.mxu0 %v1948
    %2754 = vmatprep.subr.bf16.mxu0 %v1951
    %2755 = vmatpush1.bf16.msra.mxu0 %v1950
    %2756 = vmatprep.subr.bf16.mxu0 %v1953
    %2757 = vmatpush1.bf16.msra.mxu0 %v1952
    %2758 = vmatprep.subr.bf16.mxu0 %v1955
    %2759 = vmatpush1.bf16.msra.mxu0 %v1954
    %2760 = vmatprep.subr.bf16.mxu0 %v1957
    %2761 = vmatpush1.bf16.msra.mxu0 %v1956
    %2762 = vmatprep.subr.bf16.mxu0 %v1959
    %2763 = vmatpush1.bf16.msra.mxu0 %v1958
    %2764 = vmatprep.subr.bf16.mxu0 %v1961
    %2765 = vmatpush1.bf16.msra.mxu0 %v1960
    %2766 = vmatprep.subr.bf16.mxu0 %v1963
    %2767 = vmatpush1.bf16.msra.mxu0 %v1962
    %2768 = vmatprep.mubr.bf16.mxu0 %v241
    %2769 = vmatmul.mubr.bf16.gmra.mrb[0].mxu0 %v240
    %v2770 = vpop.f32.mrb[0].mxu0
    %v2771 = vadd.f32 %v2730, %v2770
    %v2772 = vpop.f32.mrb[0].mxu0
    %v2773 = vadd.f32 %v2732, %v2772
    %v2774 = vpop.f32.mrb[0].mxu0
    %v2775 = vpop.f32.mrb[0].mxu0
    %2776 = vdwg.mxu0
    %2777 = vmatprep.subr.bf16.mxu0 %v1965
    %2778 = vmatpush1.bf16.msra.mxu0 %v1964
    %2779 = vmatprep.subr.bf16.mxu0 %v1967
    %2780 = vmatpush1.bf16.msra.mxu0 %v1966
    %2781 = vmatprep.subr.bf16.mxu0 %v1969
    %2782 = vmatpush1.bf16.msra.mxu0 %v1968
    %2783 = vmatprep.subr.bf16.mxu0 %v1971
    %2784 = vmatpush1.bf16.msra.mxu0 %v1970
    %2785 = vmatprep.subr.bf16.mxu0 %v1973
    %2786 = vmatpush1.bf16.msra.mxu0 %v1972
    %2787 = vmatprep.subr.bf16.mxu0 %v1975
    %2788 = vmatpush1.bf16.msra.mxu0 %v1974
    %2789 = vmatprep.subr.bf16.mxu0 %v1977
    %2790 = vmatpush1.bf16.msra.mxu0 %v1976
    %2791 = vmatprep.subr.bf16.mxu0 %v1979
    %2792 = vmatpush1.bf16.msra.mxu0 %v1978
    %2793 = vmatprep.subr.bf16.mxu0 %v1981
    %2794 = vmatpush1.bf16.msra.mxu0 %v1980
    %2795 = vmatprep.subr.bf16.mxu0 %v1983
    %2796 = vmatpush1.bf16.msra.mxu0 %v1982
    %2797 = vmatprep.subr.bf16.mxu0 %v1985
    %2798 = vmatpush1.bf16.msra.mxu0 %v1984
    %2799 = vmatprep.subr.bf16.mxu0 %v1987
    %2800 = vmatpush1.bf16.msra.mxu0 %v1986
    %2801 = vmatprep.subr.bf16.mxu0 %v1989
    %2802 = vmatpush1.bf16.msra.mxu0 %v1988
    %2803 = vmatprep.subr.bf16.mxu0 %v1991
    %2804 = vmatpush1.bf16.msra.mxu0 %v1990
    %2805 = vmatprep.subr.bf16.mxu0 %v1993
    %2806 = vmatpush1.bf16.msra.mxu0 %v1992
    %2807 = vmatprep.subr.bf16.mxu0 %v1995
    %2808 = vmatpush1.bf16.msra.mxu0 %v1994
    %2809 = vmatprep.mubr.bf16.mxu0 %v243
    %2810 = vmatmul.mubr.bf16.gmra.mrb[0].mxu0 %v242
    %v2811 = vpop.f32.mrb[0].mxu0
    %v2812 = vadd.f32 %v2771, %v2811
    %v2813 = vpop.f32.mrb[0].mxu0
    %v2814 = vadd.f32 %v2773, %v2813
    %v2815 = vpop.f32.mrb[0].mxu0
    %v2816 = vpop.f32.mrb[0].mxu0
    %2817 = vdwg.mxu0
    %2818 = vmatprep.subr.bf16.mxu0 %v1997
    %2819 = vmatpush1.bf16.msra.mxu0 %v1996
    %2820 = vmatprep.subr.bf16.mxu0 %v1999
    %2821 = vmatpush1.bf16.msra.mxu0 %v1998
    %2822 = vmatprep.subr.bf16.mxu0 %v2001
    %2823 = vmatpush1.bf16.msra.mxu0 %v2000
    %2824 = vmatprep.subr.bf16.mxu0 %v2003
    %2825 = vmatpush1.bf16.msra.mxu0 %v2002
    %2826 = vmatprep.subr.bf16.mxu0 %v2005
    %2827 = vmatpush1.bf16.msra.mxu0 %v2004
    %2828 = vmatprep.subr.bf16.mxu0 %v2007
    %2829 = vmatpush1.bf16.msra.mxu0 %v2006
    %2830 = vmatprep.subr.bf16.mxu0 %v2009
    %2831 = vmatpush1.bf16.msra.mxu0 %v2008
    %2832 = vmatprep.subr.bf16.mxu0 %v2011
    %2833 = vmatpush1.bf16.msra.mxu0 %v2010
    %2834 = vmatprep.subr.bf16.mxu0 %v2013
    %2835 = vmatpush1.bf16.msra.mxu0 %v2012
    %2836 = vmatprep.subr.bf16.mxu0 %v2015
    %2837 = vmatpush1.bf16.msra.mxu0 %v2014
    %2838 = vmatprep.subr.bf16.mxu0 %v2017
    %2839 = vmatpush1.bf16.msra.mxu0 %v2016
    %2840 = vmatprep.subr.bf16.mxu0 %v2019
    %2841 = vmatpush1.bf16.msra.mxu0 %v2018
    %2842 = vmatprep.subr.bf16.mxu0 %v2021
    %2843 = vmatpush1.bf16.msra.mxu0 %v2020
    %2844 = vmatprep.subr.bf16.mxu0 %v2023
    %2845 = vmatpush1.bf16.msra.mxu0 %v2022
    %2846 = vmatprep.subr.bf16.mxu0 %v2025
    %2847 = vmatpush1.bf16.msra.mxu0 %v2024
    %2848 = vmatprep.subr.bf16.mxu0 %v2027
    %2849 = vmatpush1.bf16.msra.mxu0 %v2026
    %2850 = vmatprep.mubr.bf16.mxu0 %v245
    %2851 = vmatmul.mubr.bf16.gmra.mrb[0].mxu0 %v244
    %v2852 = vpop.f32.mrb[0].mxu0
    %v2853 = vadd.f32 %v2812, %v2852
    %v2854 = vpop.f32.mrb[0].mxu0
    %v2855 = vadd.f32 %v2814, %v2854
    %v2856 = vpop.f32.mrb[0].mxu0
    %v2857 = vpop.f32.mrb[0].mxu0
    %2858 = vdwg.mxu0
    %2859 = vmatprep.subr.bf16.mxu0 %v2029
    %2860 = vmatpush1.bf16.msra.mxu0 %v2028
    %2861 = vmatprep.subr.bf16.mxu0 %v2031
    %2862 = vmatpush1.bf16.msra.mxu0 %v2030
    %2863 = vmatprep.subr.bf16.mxu0 %v2033
    %2864 = vmatpush1.bf16.msra.mxu0 %v2032
    %2865 = vmatprep.subr.bf16.mxu0 %v2035
    %2866 = vmatpush1.bf16.msra.mxu0 %v2034
    %2867 = vmatprep.subr.bf16.mxu0 %v2037
    %2868 = vmatpush1.bf16.msra.mxu0 %v2036
    %2869 = vmatprep.subr.bf16.mxu0 %v2039
    %2870 = vmatpush1.bf16.msra.mxu0 %v2038
    %2871 = vmatprep.subr.bf16.mxu0 %v2041
    %2872 = vmatpush1.bf16.msra.mxu0 %v2040
    %2873 = vmatprep.subr.bf16.mxu0 %v2043
    %2874 = vmatpush1.bf16.msra.mxu0 %v2042
    %2875 = vmatprep.subr.bf16.mxu0 %v2045
    %2876 = vmatpush1.bf16.msra.mxu0 %v2044
    %2877 = vmatprep.subr.bf16.mxu0 %v2047
    %2878 = vmatpush1.bf16.msra.mxu0 %v2046
    %2879 = vmatprep.subr.bf16.mxu0 %v2049
    %2880 = vmatpush1.bf16.msra.mxu0 %v2048
    %2881 = vmatprep.subr.bf16.mxu0 %v2051
    %2882 = vmatpush1.bf16.msra.mxu0 %v2050
    %2883 = vmatprep.subr.bf16.mxu0 %v2053
    %2884 = vmatpush1.bf16.msra.mxu0 %v2052
    %2885 = vmatprep.subr.bf16.mxu0 %v2055
    %2886 = vmatpush1.bf16.msra.mxu0 %v2054
    %2887 = vmatprep.subr.bf16.mxu0 %v2057
    %2888 = vmatpush1.bf16.msra.mxu0 %v2056
    %2889 = vmatprep.subr.bf16.mxu0 %v2059
    %2890 = vmatpush1.bf16.msra.mxu0 %v2058
    %2891 = vmatprep.mubr.bf16.mxu0 %v247
    %2892 = vmatmul.mubr.bf16.gmra.mrb[0].mxu0 %v246
    %v2893 = vpop.f32.mrb[0].mxu0
    %v2894 = vadd.f32 %v2853, %v2893
    %v2895 = vpop.f32.mrb[0].mxu0
    %v2896 = vadd.f32 %v2855, %v2895
    %v2897 = vpop.f32.mrb[0].mxu0
    %v2898 = vpop.f32.mrb[0].mxu0
    %2899 = vdwg.mxu0
    %2900 = vmatprep.subr.bf16.mxu0 %v2061
    %2901 = vmatpush1.bf16.msra.mxu0 %v2060
    %2902 = vmatprep.subr.bf16.mxu0 %v2063
    %2903 = vmatpush1.bf16.msra.mxu0 %v2062
    %2904 = vmatprep.subr.bf16.mxu0 %v2065
    %2905 = vmatpush1.bf16.msra.mxu0 %v2064
    %2906 = vmatprep.subr.bf16.mxu0 %v2067
    %2907 = vmatpush1.bf16.msra.mxu0 %v2066
    %2908 = vmatprep.subr.bf16.mxu0 %v2069
    %2909 = vmatpush1.bf16.msra.mxu0 %v2068
    %2910 = vmatprep.subr.bf16.mxu0 %v2071
    %2911 = vmatpush1.bf16.msra.mxu0 %v2070
    %2912 = vmatprep.subr.bf16.mxu0 %v2073
    %2913 = vmatpush1.bf16.msra.mxu0 %v2072
    %2914 = vmatprep.subr.bf16.mxu0 %v2075
    %2915 = vmatpush1.bf16.msra.mxu0 %v2074
    %2916 = vmatprep.subr.bf16.mxu0 %v2077
    %2917 = vmatpush1.bf16.msra.mxu0 %v2076
    %2918 = vmatprep.subr.bf16.mxu0 %v2079
    %2919 = vmatpush1.bf16.msra.mxu0 %v2078
    %2920 = vmatprep.subr.bf16.mxu0 %v2081
    %2921 = vmatpush1.bf16.msra.mxu0 %v2080
    %2922 = vmatprep.subr.bf16.mxu0 %v2083
    %2923 = vmatpush1.bf16.msra.mxu0 %v2082
    %2924 = vmatprep.subr.bf16.mxu0 %v2085
    %2925 = vmatpush1.bf16.msra.mxu0 %v2084
    %2926 = vmatprep.subr.bf16.mxu0 %v2087
    %2927 = vmatpush1.bf16.msra.mxu0 %v2086
    %2928 = vmatprep.subr.bf16.mxu0 %v2089
    %2929 = vmatpush1.bf16.msra.mxu0 %v2088
    %2930 = vmatprep.subr.bf16.mxu0 %v2091
    %2931 = vmatpush1.bf16.msra.mxu0 %v2090
    %2932 = vmatprep.mubr.bf16.mxu0 %v249
    %2933 = vmatmul.mubr.bf16.gmra.mrb[0].mxu0 %v248
    %v2934 = vpop.f32.mrb[0].mxu0
    %v2935 = vadd.f32 %v2894, %v2934
    %v2936 = vpop.f32.mrb[0].mxu0
    %v2937 = vadd.f32 %v2896, %v2936
    %v2938 = vpop.f32.mrb[0].mxu0
    %v2939 = vpop.f32.mrb[0].mxu0
    %2940 = vdwg.mxu0
    %2941 = vmatprep.subr.bf16.mxu0 %v2093
    %2942 = vmatpush1.bf16.msra.mxu0 %v2092
    %2943 = vmatprep.subr.bf16.mxu0 %v2095
    %2944 = vmatpush1.bf16.msra.mxu0 %v2094
    %2945 = vmatprep.subr.bf16.mxu0 %v2097
    %2946 = vmatpush1.bf16.msra.mxu0 %v2096
    %2947 = vmatprep.subr.bf16.mxu0 %v2099
    %2948 = vmatpush1.bf16.msra.mxu0 %v2098
    %2949 = vmatprep.subr.bf16.mxu0 %v2101
    %2950 = vmatpush1.bf16.msra.mxu0 %v2100
    %2951 = vmatprep.subr.bf16.mxu0 %v2103
    %2952 = vmatpush1.bf16.msra.mxu0 %v2102
    %2953 = vmatprep.subr.bf16.mxu0 %v2105
    %2954 = vmatpush1.bf16.msra.mxu0 %v2104
    %2955 = vmatprep.subr.bf16.mxu0 %v2107
    %2956 = vmatpush1.bf16.msra.mxu0 %v2106
    %2957 = vmatprep.subr.bf16.mxu0 %v2109
    %2958 = vmatpush1.bf16.msra.mxu0 %v2108
    %2959 = vmatprep.subr.bf16.mxu0 %v2111
    %2960 = vmatpush1.bf16.msra.mxu0 %v2110
    %2961 = vmatprep.subr.bf16.mxu0 %v2113
    %2962 = vmatpush1.bf16.msra.mxu0 %v2112
    %2963 = vmatprep.subr.bf16.mxu0 %v2115
    %2964 = vmatpush1.bf16.msra.mxu0 %v2114
    %2965 = vmatprep.subr.bf16.mxu0 %v2117
    %2966 = vmatpush1.bf16.msra.mxu0 %v2116
    %2967 = vmatprep.subr.bf16.mxu0 %v2119
    %2968 = vmatpush1.bf16.msra.mxu0 %v2118
    %2969 = vmatprep.subr.bf16.mxu0 %v2121
    %2970 = vmatpush1.bf16.msra.mxu0 %v2120
    %2971 = vmatprep.subr.bf16.mxu0 %v2123
    %2972 = vmatpush1.bf16.msra.mxu0 %v2122
    %2973 = vmatprep.mubr.bf16.mxu0 %v251
    %2974 = vmatmul.mubr.bf16.gmra.mrb[0].mxu0 %v250
    %v2975 = vpop.f32.mrb[0].mxu0
    %v2976 = vadd.f32 %v2935, %v2975
    %v2977 = vpop.f32.mrb[0].mxu0
    %v2978 = vadd.f32 %v2937, %v2977
    %v2979 = vpop.f32.mrb[0].mxu0
    %v2980 = vpop.f32.mrb[0].mxu0
    %2981 = vdwg.mxu0
    %2982 = vmatprep.subr.bf16.mxu0 %v2125
    %2983 = vmatpush1.bf16.msra.mxu0 %v2124
    %2984 = vmatprep.subr.bf16.mxu0 %v2127
    %2985 = vmatpush1.bf16.msra.mxu0 %v2126
    %2986 = vmatprep.subr.bf16.mxu0 %v2129
    %2987 = vmatpush1.bf16.msra.mxu0 %v2128
    %2988 = vmatprep.subr.bf16.mxu0 %v2131
    %2989 = vmatpush1.bf16.msra.mxu0 %v2130
    %2990 = vmatprep.subr.bf16.mxu0 %v2133
    %2991 = vmatpush1.bf16.msra.mxu0 %v2132
    %2992 = vmatprep.subr.bf16.mxu0 %v2135
    %2993 = vmatpush1.bf16.msra.mxu0 %v2134
    %2994 = vmatprep.subr.bf16.mxu0 %v2137
    %2995 = vmatpush1.bf16.msra.mxu0 %v2136
    %2996 = vmatprep.subr.bf16.mxu0 %v2139
    %2997 = vmatpush1.bf16.msra.mxu0 %v2138
    %2998 = vmatprep.subr.bf16.mxu0 %v2141
    %2999 = vmatpush1.bf16.msra.mxu0 %v2140
    %3000 = vmatprep.subr.bf16.mxu0 %v2143
    %3001 = vmatpush1.bf16.msra.mxu0 %v2142
    %3002 = vmatprep.subr.bf16.mxu0 %v2145
    %3003 = vmatpush1.bf16.msra.mxu0 %v2144
    %3004 = vmatprep.subr.bf16.mxu0 %v2147
    %3005 = vmatpush1.bf16.msra.mxu0 %v2146
    %3006 = vmatprep.subr.bf16.mxu0 %v2149
    %3007 = vmatpush1.bf16.msra.mxu0 %v2148
    %3008 = vmatprep.subr.bf16.mxu0 %v2151
    %3009 = vmatpush1.bf16.msra.mxu0 %v2150
    %3010 = vmatprep.subr.bf16.mxu0 %v2153
    %3011 = vmatpush1.bf16.msra.mxu0 %v2152
    %3012 = vmatprep.subr.bf16.mxu0 %v2155
    %3013 = vmatpush1.bf16.msra.mxu0 %v2154
    %3014 = vmatprep.mubr.bf16.mxu0 %v253
    %3015 = vmatmul.mubr.bf16.gmra.mrb[0].mxu0 %v252
    %v3016 = vpop.f32.mrb[0].mxu0
    %v3017 = vadd.f32 %v2976, %v3016
    %v3018 = vpop.f32.mrb[0].mxu0
    %v3019 = vadd.f32 %v2978, %v3018
    %v3020 = vpop.f32.mrb[0].mxu0
    %v3021 = vpop.f32.mrb[0].mxu0
    %3022 = vdwg.mxu0
    %3023 = vmatprep.subr.bf16.mxu0 %v2157
    %3024 = vmatpush1.bf16.msra.mxu0 %v2156
    %3025 = vmatprep.subr.bf16.mxu0 %v2159
    %3026 = vmatpush1.bf16.msra.mxu0 %v2158
    %3027 = vmatprep.subr.bf16.mxu0 %v2161
    %3028 = vmatpush1.bf16.msra.mxu0 %v2160
    %3029 = vmatprep.subr.bf16.mxu0 %v2163
    %3030 = vmatpush1.bf16.msra.mxu0 %v2162
    %3031 = vmatprep.subr.bf16.mxu0 %v2165
    %3032 = vmatpush1.bf16.msra.mxu0 %v2164
    %3033 = vmatprep.subr.bf16.mxu0 %v2167
    %3034 = vmatpush1.bf16.msra.mxu0 %v2166
    %3035 = vmatprep.subr.bf16.mxu0 %v2169
    %3036 = vmatpush1.bf16.msra.mxu0 %v2168
    %3037 = vmatprep.subr.bf16.mxu0 %v2171
    %3038 = vmatpush1.bf16.msra.mxu0 %v2170
    %3039 = vmatprep.subr.bf16.mxu0 %v2173
    %3040 = vmatpush1.bf16.msra.mxu0 %v2172
    %3041 = vmatprep.subr.bf16.mxu0 %v2175
    %3042 = vmatpush1.bf16.msra.mxu0 %v2174
    %3043 = vmatprep.subr.bf16.mxu0 %v2177
    %3044 = vmatpush1.bf16.msra.mxu0 %v2176
    %3045 = vmatprep.subr.bf16.mxu0 %v2179
    %3046 = vmatpush1.bf16.msra.mxu0 %v2178
    %3047 = vmatprep.subr.bf16.mxu0 %v2181
    %3048 = vmatpush1.bf16.msra.mxu0 %v2180
    %3049 = vmatprep.subr.bf16.mxu0 %v2183
    %3050 = vmatpush1.bf16.msra.mxu0 %v2182
    %3051 = vmatprep.subr.bf16.mxu0 %v2185
    %3052 = vmatpush1.bf16.msra.mxu0 %v2184
    %3053 = vmatprep.subr.bf16.mxu0 %v2187
    %3054 = vmatpush1.bf16.msra.mxu0 %v2186
    %3055 = vmatprep.mubr.bf16.mxu0 %v255
    %3056 = vmatmul.mubr.bf16.gmra.mrb[0].mxu0 %v254
    %v3057 = vpop.f32.mrb[0].mxu0
    %v3058 = vadd.f32 %v3017, %v3057
    %v3059 = vpop.f32.mrb[0].mxu0
    %v3060 = vadd.f32 %v3019, %v3059
    %v3061 = vpop.f32.mrb[0].mxu0
    %v3062 = vpop.f32.mrb[0].mxu0
    %3063 = vdwg.mxu0
    %v3064 = vmax.f32 %v3058, 0.0
    %v3065 = vmax.f32 %v3060, 0.0
    %v3066 = vpack.c.bf16 %v3064, %v3064
    %v3067 = vpack.c.bf16 %v3065, %v3065
    %v3068 = vld [vmem:[#allocation8] sm:$0xff]
    %v3069 = vld [vmem:[#allocation8 + $0x8] sm:$0xff]
    %v3070 = vld [vmem:[#allocation8 + $0x10] sm:$0xff]
    %v3071 = vld [vmem:[#allocation8 + $0x18] sm:$0xff]
    %v3072 = vld [vmem:[#allocation8 + $0x20] sm:$0xff]
    %v3073 = vld [vmem:[#allocation8 + $0x28] sm:$0xff]
    %v3074 = vld [vmem:[#allocation8 + $0x30] sm:$0xff]
    %v3075 = vld [vmem:[#allocation8 + $0x38] sm:$0xff]
    %v3076 = vld [vmem:[#allocation8 + $0x40] sm:$0xff]
    %v3077 = vld [vmem:[#allocation8 + $0x48] sm:$0xff]
    %v3078 = vld [vmem:[#allocation8 + $0x50] sm:$0xff]
    %v3079 = vld [vmem:[#allocation8 + $0x58] sm:$0xff]
    %v3080 = vld [vmem:[#allocation8 + $0x60] sm:$0xff]
    %v3081 = vld [vmem:[#allocation8 + $0x68] sm:$0xff]
    %v3082 = vld [vmem:[#allocation8 + $0x70] sm:$0xff]
    %v3083 = vld [vmem:[#allocation8 + $0x78] sm:$0xff]
    %v3084 = vld [vmem:[#allocation8 + $0x80] sm:$0xff]
    %v3085 = vld [vmem:[#allocation8 + $0x88] sm:$0xff]
    %v3086 = vld [vmem:[#allocation8 + $0x90] sm:$0xff]
    %v3087 = vld [vmem:[#allocation8 + $0x98] sm:$0xff]
    %v3088 = vld [vmem:[#allocation8 + $0xa0] sm:$0xff]
    %v3089 = vld [vmem:[#allocation8 + $0xa8] sm:$0xff]
    %v3090 = vld [vmem:[#allocation8 + $0xb0] sm:$0xff]
    %v3091 = vld [vmem:[#allocation8 + $0xb8] sm:$0xff]
    %v3092 = vld [vmem:[#allocation8 + $0xc0] sm:$0xff]
    %v3093 = vld [vmem:[#allocation8 + $0xc8] sm:$0xff]
    %v3094 = vld [vmem:[#allocation8 + $0xd0] sm:$0xff]
    %v3095 = vld [vmem:[#allocation8 + $0xd8] sm:$0xff]
    %v3096 = vld [vmem:[#allocation8 + $0xe0] sm:$0xff]
    %v3097 = vld [vmem:[#allocation8 + $0xe8] sm:$0xff]
    %v3098 = vld [vmem:[#allocation8 + $0xf0] sm:$0xff]
    %v3099 = vld [vmem:[#allocation8 + $0xf8] sm:$0xff]
    %v3100 = vld [vmem:[#allocation10] sm:$0x3]
    %v3102 = vlaneseq
    %v3103 = vshrl.u32 %v3102, 7
    %v3104 = vsub.s32 0, %v3103
    %v3105 = vrot.slane %v3100, %v3104
    %v3106 = vlaneseq
    %v3107 = vshrl.u32 %v3106, 7
    %v3108 = vsub.s32 1, %v3107
    %v3109 = vrot.slane %v3100, %v3108
    %v3144 = vunpack.c.l.b16 %v3068
    %v3145 = vunpack.c.h.b16 %v3068
    %v3146 = vunpack.c.l.b16 %v3069
    %v3147 = vunpack.c.h.b16 %v3069
    %v3148 = vunpack.c.l.b16 %v3070
    %v3149 = vunpack.c.h.b16 %v3070
    %v3150 = vunpack.c.l.b16 %v3071
    %v3151 = vunpack.c.h.b16 %v3071
    %v3152 = vunpack.c.l.b16 %v3072
    %v3153 = vunpack.c.h.b16 %v3072
    %v3154 = vunpack.c.l.b16 %v3073
    %v3155 = vunpack.c.h.b16 %v3073
    %v3156 = vunpack.c.l.b16 %v3074
    %v3157 = vunpack.c.h.b16 %v3074
    %v3158 = vunpack.c.l.b16 %v3075
    %v3159 = vunpack.c.h.b16 %v3075
    %v3160 = vunpack.c.l.b16 %v3076
    %v3161 = vunpack.c.h.b16 %v3076
    %v3162 = vunpack.c.l.b16 %v3077
    %v3163 = vunpack.c.h.b16 %v3077
    %v3164 = vunpack.c.l.b16 %v3078
    %v3165 = vunpack.c.h.b16 %v3078
    %v3166 = vunpack.c.l.b16 %v3079
    %v3167 = vunpack.c.h.b16 %v3079
    %v3168 = vunpack.c.l.b16 %v3080
    %v3169 = vunpack.c.h.b16 %v3080
    %v3170 = vunpack.c.l.b16 %v3081
    %v3171 = vunpack.c.h.b16 %v3081
    %v3172 = vunpack.c.l.b16 %v3082
    %v3173 = vunpack.c.h.b16 %v3082
    %v3174 = vunpack.c.l.b16 %v3083
    %v3175 = vunpack.c.h.b16 %v3083
    %v3176 = vunpack.c.l.b16 %v3084
    %v3177 = vunpack.c.h.b16 %v3084
    %v3178 = vunpack.c.l.b16 %v3085
    %v3179 = vunpack.c.h.b16 %v3085
    %v3180 = vunpack.c.l.b16 %v3086
    %v3181 = vunpack.c.h.b16 %v3086
    %v3182 = vunpack.c.l.b16 %v3087
    %v3183 = vunpack.c.h.b16 %v3087
    %v3184 = vunpack.c.l.b16 %v3088
    %v3185 = vunpack.c.h.b16 %v3088
    %v3186 = vunpack.c.l.b16 %v3089
    %v3187 = vunpack.c.h.b16 %v3089
    %v3188 = vunpack.c.l.b16 %v3090
    %v3189 = vunpack.c.h.b16 %v3090
    %v3190 = vunpack.c.l.b16 %v3091
    %v3191 = vunpack.c.h.b16 %v3091
    %v3192 = vunpack.c.l.b16 %v3092
    %v3193 = vunpack.c.h.b16 %v3092
    %v3194 = vunpack.c.l.b16 %v3093
    %v3195 = vunpack.c.h.b16 %v3093
    %v3196 = vunpack.c.l.b16 %v3094
    %v3197 = vunpack.c.h.b16 %v3094
    %v3198 = vunpack.c.l.b16 %v3095
    %v3199 = vunpack.c.h.b16 %v3095
    %v3200 = vunpack.c.l.b16 %v3096
    %v3201 = vunpack.c.h.b16 %v3096
    %v3202 = vunpack.c.l.b16 %v3097
    %v3203 = vunpack.c.h.b16 %v3097
    %v3204 = vunpack.c.l.b16 %v3098
    %v3205 = vunpack.c.h.b16 %v3098
    %v3206 = vunpack.c.l.b16 %v3099
    %v3207 = vunpack.c.h.b16 %v3099
    %v3208 = vpack.c.b16 %v3146, %v3144
    %v3209 = vpack.c.b16 %v3147, %v3145
    %v3210 = vpack.c.b16 %v3150, %v3148
    %v3211 = vpack.c.b16 %v3151, %v3149
    %v3212 = vpack.c.b16 %v3154, %v3152
    %v3213 = vpack.c.b16 %v3155, %v3153
    %v3214 = vpack.c.b16 %v3158, %v3156
    %v3215 = vpack.c.b16 %v3159, %v3157
    %v3216 = vpack.c.b16 %v3162, %v3160
    %v3217 = vpack.c.b16 %v3163, %v3161
    %v3218 = vpack.c.b16 %v3166, %v3164
    %v3219 = vpack.c.b16 %v3167, %v3165
    %v3220 = vpack.c.b16 %v3170, %v3168
    %v3221 = vpack.c.b16 %v3171, %v3169
    %v3222 = vpack.c.b16 %v3174, %v3172
    %v3223 = vpack.c.b16 %v3175, %v3173
    %v3224 = vpack.c.b16 %v3178, %v3176
    %v3225 = vpack.c.b16 %v3179, %v3177
    %v3226 = vpack.c.b16 %v3182, %v3180
    %v3227 = vpack.c.b16 %v3183, %v3181
    %v3228 = vpack.c.b16 %v3186, %v3184
    %v3229 = vpack.c.b16 %v3187, %v3185
    %v3230 = vpack.c.b16 %v3190, %v3188
    %v3231 = vpack.c.b16 %v3191, %v3189
    %v3232 = vpack.c.b16 %v3194, %v3192
    %v3233 = vpack.c.b16 %v3195, %v3193
    %v3234 = vpack.c.b16 %v3198, %v3196
    %v3235 = vpack.c.b16 %v3199, %v3197
    %v3236 = vpack.c.b16 %v3202, %v3200
    %v3237 = vpack.c.b16 %v3203, %v3201
    %v3238 = vpack.c.b16 %v3206, %v3204
    %v3239 = vpack.c.b16 %v3207, %v3205
    %3272 = vmatprep.subr.bf16.mxu0 %v3209
    %3273 = vmatpush1.bf16.msra.mxu0 %v3208
    %3274 = vmatprep.subr.bf16.mxu0 %v3211
    %3275 = vmatpush1.bf16.msra.mxu0 %v3210
    %3276 = vmatprep.subr.bf16.mxu0 %v3213
    %3277 = vmatpush1.bf16.msra.mxu0 %v3212
    %3278 = vmatprep.subr.bf16.mxu0 %v3215
    %3279 = vmatpush1.bf16.msra.mxu0 %v3214
    %3280 = vmatprep.subr.bf16.mxu0 %v3217
    %3281 = vmatpush1.bf16.msra.mxu0 %v3216
    %3282 = vmatprep.subr.bf16.mxu0 %v3219
    %3283 = vmatpush1.bf16.msra.mxu0 %v3218
    %3284 = vmatprep.subr.bf16.mxu0 %v3221
    %3285 = vmatpush1.bf16.msra.mxu0 %v3220
    %3286 = vmatprep.subr.bf16.mxu0 %v3223
    %3287 = vmatpush1.bf16.msra.mxu0 %v3222
    %3288 = vmatprep.subr.bf16.mxu0 %v3225
    %3289 = vmatpush1.bf16.msra.mxu0 %v3224
    %3290 = vmatprep.subr.bf16.mxu0 %v3227
    %3291 = vmatpush1.bf16.msra.mxu0 %v3226
    %3292 = vmatprep.subr.bf16.mxu0 %v3229
    %3293 = vmatpush1.bf16.msra.mxu0 %v3228
    %3294 = vmatprep.subr.bf16.mxu0 %v3231
    %3295 = vmatpush1.bf16.msra.mxu0 %v3230
    %3296 = vmatprep.subr.bf16.mxu0 %v3233
    %3297 = vmatpush1.bf16.msra.mxu0 %v3232
    %3298 = vmatprep.subr.bf16.mxu0 %v3235
    %3299 = vmatpush1.bf16.msra.mxu0 %v3234
    %3300 = vmatprep.subr.bf16.mxu0 %v3237
    %3301 = vmatpush1.bf16.msra.mxu0 %v3236
    %3302 = vmatprep.subr.bf16.mxu0 %v3239
    %3303 = vmatpush1.bf16.msra.mxu0 %v3238
    %3304 = vmatprep.mubr.bf16.mxu0 %v3067
    %3305 = vmatmul.mubr.bf16.gmra.mrb[0].mxu0 %v3066
    %v3306 = vpop.f32.mrb[0].mxu0
    %v3307 = vadd.f32 %v3105, %v3306
    %v3308 = vpop.f32.mrb[0].mxu0
    %v3309 = vadd.f32 %v3109, %v3308
    %v3310 = vpop.f32.mrb[0].mxu0
    %v3311 = vpop.f32.mrb[0].mxu0
    %3312 = vdwg.mxu0
    %v3313 = vmax.f32 %v3307, 0.0
    %v3314 = vmax.f32 %v3309, 0.0
    %v3315 = vpack.c.bf16 %v3313, %v3313
    %v3316 = vpack.c.bf16 %v3314, %v3314
    %v3317 = vld [vmem:[#allocation11] sm:$0xff]
    %v3318 = vld [vmem:[#allocation11 + $0x8] sm:$0xff]
    %v3319 = vld [vmem:[#allocation11 + $0x10] sm:$0xff]
    %v3320 = vld [vmem:[#allocation11 + $0x18] sm:$0xff]
    %v3321 = vld [vmem:[#allocation11 + $0x20] sm:$0xff]
    %v3322 = vld [vmem:[#allocation11 + $0x28] sm:$0xff]
    %v3323 = vld [vmem:[#allocation11 + $0x30] sm:$0xff]
    %v3324 = vld [vmem:[#allocation11 + $0x38] sm:$0xff]
    %v3325 = vld [vmem:[#allocation11 + $0x40] sm:$0xff]
    %v3326 = vld [vmem:[#allocation11 + $0x48] sm:$0xff]
    %v3327 = vld [vmem:[#allocation11 + $0x50] sm:$0xff]
    %v3328 = vld [vmem:[#allocation11 + $0x58] sm:$0xff]
    %v3329 = vld [vmem:[#allocation11 + $0x60] sm:$0xff]
    %v3330 = vld [vmem:[#allocation11 + $0x68] sm:$0xff]
    %v3331 = vld [vmem:[#allocation11 + $0x70] sm:$0xff]
    %v3332 = vld [vmem:[#allocation11 + $0x78] sm:$0xff]
    %v3333 = vld [vmem:[#allocation11 + $0x80] sm:$0xff]
    %v3334 = vld [vmem:[#allocation11 + $0x88] sm:$0xff]
    %v3335 = vld [vmem:[#allocation11 + $0x90] sm:$0xff]
    %v3336 = vld [vmem:[#allocation11 + $0x98] sm:$0xff]
    %v3337 = vld [vmem:[#allocation11 + $0xa0] sm:$0xff]
    %v3338 = vld [vmem:[#allocation11 + $0xa8] sm:$0xff]
    %v3339 = vld [vmem:[#allocation11 + $0xb0] sm:$0xff]
    %v3340 = vld [vmem:[#allocation11 + $0xb8] sm:$0xff]
    %v3341 = vld [vmem:[#allocation11 + $0xc0] sm:$0xff]
    %v3342 = vld [vmem:[#allocation11 + $0xc8] sm:$0xff]
    %v3343 = vld [vmem:[#allocation11 + $0xd0] sm:$0xff]
    %v3344 = vld [vmem:[#allocation11 + $0xd8] sm:$0xff]
    %v3345 = vld [vmem:[#allocation11 + $0xe0] sm:$0xff]
    %v3346 = vld [vmem:[#allocation11 + $0xe8] sm:$0xff]
    %v3347 = vld [vmem:[#allocation11 + $0xf0] sm:$0xff]
    %v3348 = vld [vmem:[#allocation11 + $0xf8] sm:$0xff]
    %v3349 = vld [vmem:[#allocation13] sm:$0x3]
    %v3351 = vlaneseq
    %v3352 = vshrl.u32 %v3351, 7
    %v3353 = vsub.s32 0, %v3352
    %v3354 = vrot.slane %v3349, %v3353
    %v3355 = vlaneseq
    %v3356 = vshrl.u32 %v3355, 7
    %v3357 = vsub.s32 1, %v3356
    %v3358 = vrot.slane %v3349, %v3357
    %v3393 = vunpack.c.l.b16 %v3317
    %v3394 = vunpack.c.h.b16 %v3317
    %v3395 = vunpack.c.l.b16 %v3318
    %v3396 = vunpack.c.h.b16 %v3318
    %v3397 = vunpack.c.l.b16 %v3319
    %v3398 = vunpack.c.h.b16 %v3319
    %v3399 = vunpack.c.l.b16 %v3320
    %v3400 = vunpack.c.h.b16 %v3320
    %v3401 = vunpack.c.l.b16 %v3321
    %v3402 = vunpack.c.h.b16 %v3321
    %v3403 = vunpack.c.l.b16 %v3322
    %v3404 = vunpack.c.h.b16 %v3322
    %v3405 = vunpack.c.l.b16 %v3323
    %v3406 = vunpack.c.h.b16 %v3323
    %v3407 = vunpack.c.l.b16 %v3324
    %v3408 = vunpack.c.h.b16 %v3324
    %v3409 = vunpack.c.l.b16 %v3325
    %v3410 = vunpack.c.h.b16 %v3325
    %v3411 = vunpack.c.l.b16 %v3326
    %v3412 = vunpack.c.h.b16 %v3326
    %v3413 = vunpack.c.l.b16 %v3327
    %v3414 = vunpack.c.h.b16 %v3327
    %v3415 = vunpack.c.l.b16 %v3328
    %v3416 = vunpack.c.h.b16 %v3328
    %v3417 = vunpack.c.l.b16 %v3329
    %v3418 = vunpack.c.h.b16 %v3329
    %v3419 = vunpack.c.l.b16 %v3330
    %v3420 = vunpack.c.h.b16 %v3330
    %v3421 = vunpack.c.l.b16 %v3331
    %v3422 = vunpack.c.h.b16 %v3331
    %v3423 = vunpack.c.l.b16 %v3332
    %v3424 = vunpack.c.h.b16 %v3332
    %v3425 = vunpack.c.l.b16 %v3333
    %v3426 = vunpack.c.h.b16 %v3333
    %v3427 = vunpack.c.l.b16 %v3334
    %v3428 = vunpack.c.h.b16 %v3334
    %v3429 = vunpack.c.l.b16 %v3335
    %v3430 = vunpack.c.h.b16 %v3335
    %v3431 = vunpack.c.l.b16 %v3336
    %v3432 = vunpack.c.h.b16 %v3336
    %v3433 = vunpack.c.l.b16 %v3337
    %v3434 = vunpack.c.h.b16 %v3337
    %v3435 = vunpack.c.l.b16 %v3338
    %v3436 = vunpack.c.h.b16 %v3338
    %v3437 = vunpack.c.l.b16 %v3339
    %v3438 = vunpack.c.h.b16 %v3339
    %v3439 = vunpack.c.l.b16 %v3340
    %v3440 = vunpack.c.h.b16 %v3340
    %v3441 = vunpack.c.l.b16 %v3341
    %v3442 = vunpack.c.h.b16 %v3341
    %v3443 = vunpack.c.l.b16 %v3342
    %v3444 = vunpack.c.h.b16 %v3342
    %v3445 = vunpack.c.l.b16 %v3343
    %v3446 = vunpack.c.h.b16 %v3343
    %v3447 = vunpack.c.l.b16 %v3344
    %v3448 = vunpack.c.h.b16 %v3344
    %v3449 = vunpack.c.l.b16 %v3345
    %v3450 = vunpack.c.h.b16 %v3345
    %v3451 = vunpack.c.l.b16 %v3346
    %v3452 = vunpack.c.h.b16 %v3346
    %v3453 = vunpack.c.l.b16 %v3347
    %v3454 = vunpack.c.h.b16 %v3347
    %v3455 = vunpack.c.l.b16 %v3348
    %v3456 = vunpack.c.h.b16 %v3348
    %v3457 = vpack.c.b16 %v3395, %v3393
    %v3458 = vpack.c.b16 %v3396, %v3394
    %v3459 = vpack.c.b16 %v3399, %v3397
    %v3460 = vpack.c.b16 %v3400, %v3398
    %v3461 = vpack.c.b16 %v3403, %v3401
    %v3462 = vpack.c.b16 %v3404, %v3402
    %v3463 = vpack.c.b16 %v3407, %v3405
    %v3464 = vpack.c.b16 %v3408, %v3406
    %v3465 = vpack.c.b16 %v3411, %v3409
    %v3466 = vpack.c.b16 %v3412, %v3410
    %v3467 = vpack.c.b16 %v3415, %v3413
    %v3468 = vpack.c.b16 %v3416, %v3414
    %v3469 = vpack.c.b16 %v3419, %v3417
    %v3470 = vpack.c.b16 %v3420, %v3418
    %v3471 = vpack.c.b16 %v3423, %v3421
    %v3472 = vpack.c.b16 %v3424, %v3422
    %v3473 = vpack.c.b16 %v3427, %v3425
    %v3474 = vpack.c.b16 %v3428, %v3426
    %v3475 = vpack.c.b16 %v3431, %v3429
    %v3476 = vpack.c.b16 %v3432, %v3430
    %v3477 = vpack.c.b16 %v3435, %v3433
    %v3478 = vpack.c.b16 %v3436, %v3434
    %v3479 = vpack.c.b16 %v3439, %v3437
    %v3480 = vpack.c.b16 %v3440, %v3438
    %v3481 = vpack.c.b16 %v3443, %v3441
    %v3482 = vpack.c.b16 %v3444, %v3442
    %v3483 = vpack.c.b16 %v3447, %v3445
    %v3484 = vpack.c.b16 %v3448, %v3446
    %v3485 = vpack.c.b16 %v3451, %v3449
    %v3486 = vpack.c.b16 %v3452, %v3450
    %v3487 = vpack.c.b16 %v3455, %v3453
    %v3488 = vpack.c.b16 %v3456, %v3454
    %3521 = vmatprep.subr.bf16.mxu0 %v3458
    %3522 = vmatpush1.bf16.msra.mxu0 %v3457
    %3523 = vmatprep.subr.bf16.mxu0 %v3460
    %3524 = vmatpush1.bf16.msra.mxu0 %v3459
    %3525 = vmatprep.subr.bf16.mxu0 %v3462
    %3526 = vmatpush1.bf16.msra.mxu0 %v3461
    %3527 = vmatprep.subr.bf16.mxu0 %v3464
    %3528 = vmatpush1.bf16.msra.mxu0 %v3463
    %3529 = vmatprep.subr.bf16.mxu0 %v3466
    %3530 = vmatpush1.bf16.msra.mxu0 %v3465
    %3531 = vmatprep.subr.bf16.mxu0 %v3468
    %3532 = vmatpush1.bf16.msra.mxu0 %v3467
    %3533 = vmatprep.subr.bf16.mxu0 %v3470
    %3534 = vmatpush1.bf16.msra.mxu0 %v3469
    %3535 = vmatprep.subr.bf16.mxu0 %v3472
    %3536 = vmatpush1.bf16.msra.mxu0 %v3471
    %3537 = vmatprep.subr.bf16.mxu0 %v3474
    %3538 = vmatpush1.bf16.msra.mxu0 %v3473
    %3539 = vmatprep.subr.bf16.mxu0 %v3476
    %3540 = vmatpush1.bf16.msra.mxu0 %v3475
    %3541 = vmatprep.subr.bf16.mxu0 %v3478
    %3542 = vmatpush1.bf16.msra.mxu0 %v3477
    %3543 = vmatprep.subr.bf16.mxu0 %v3480
    %3544 = vmatpush1.bf16.msra.mxu0 %v3479
    %3545 = vmatprep.subr.bf16.mxu0 %v3482
    %3546 = vmatpush1.bf16.msra.mxu0 %v3481
    %3547 = vmatprep.subr.bf16.mxu0 %v3484
    %3548 = vmatpush1.bf16.msra.mxu0 %v3483
    %3549 = vmatprep.subr.bf16.mxu0 %v3486
    %3550 = vmatpush1.bf16.msra.mxu0 %v3485
    %3551 = vmatprep.subr.bf16.mxu0 %v3488
    %3552 = vmatpush1.bf16.msra.mxu0 %v3487
    %3553 = vmatprep.mubr.bf16.mxu0 %v3316
    %3554 = vmatmul.mubr.bf16.gmra.mrb[0].mxu0 %v3315
    %v3555 = vpop.f32.mrb[0].mxu0
    %v3556 = vadd.f32 %v3354, %v3555
    %v3557 = vpop.f32.mrb[0].mxu0
    %v3558 = vadd.f32 %v3358, %v3557
    %v3559 = vpop.f32.mrb[0].mxu0
    %v3560 = vpop.f32.mrb[0].mxu0
    %3561 = vdwg.mxu0
    %v3562 = vmax.f32 %v3556, 0.0
    %v3563 = vmax.f32 %v3558, 0.0
    %v3564 = vpack.c.bf16 %v3562, %v3562
    %v3565 = vpack.c.bf16 %v3563, %v3563
    %v3566 = vld [vmem:[#allocation14] sm:$0xff]
    %v3567 = vld [vmem:[#allocation14 + $0x8] sm:$0xff]
    %v3568 = vld [vmem:[#allocation14 + $0x10] sm:$0xff]
    %v3569 = vld [vmem:[#allocation14 + $0x18] sm:$0xff]
    %v3570 = vld [vmem:[#allocation14 + $0x20] sm:$0xff]
    %v3571 = vld [vmem:[#allocation14 + $0x28] sm:$0xff]
    %v3572 = vld [vmem:[#allocation14 + $0x30] sm:$0xff]
    %v3573 = vld [vmem:[#allocation14 + $0x38] sm:$0xff]
    %v3574 = vld [vmem:[#allocation14 + $0x40] sm:$0xff]
    %v3575 = vld [vmem:[#allocation14 + $0x48] sm:$0xff]
    %v3576 = vld [vmem:[#allocation14 + $0x50] sm:$0xff]
    %v3577 = vld [vmem:[#allocation14 + $0x58] sm:$0xff]
    %v3578 = vld [vmem:[#allocation14 + $0x60] sm:$0xff]
    %v3579 = vld [vmem:[#allocation14 + $0x68] sm:$0xff]
    %v3580 = vld [vmem:[#allocation14 + $0x70] sm:$0xff]
    %v3581 = vld [vmem:[#allocation14 + $0x78] sm:$0xff]
    %v3582 = vld [vmem:[#allocation14 + $0x80] sm:$0xff]
    %v3583 = vld [vmem:[#allocation14 + $0x88] sm:$0xff]
    %v3584 = vld [vmem:[#allocation14 + $0x90] sm:$0xff]
    %v3585 = vld [vmem:[#allocation14 + $0x98] sm:$0xff]
    %v3586 = vld [vmem:[#allocation14 + $0xa0] sm:$0xff]
    %v3587 = vld [vmem:[#allocation14 + $0xa8] sm:$0xff]
    %v3588 = vld [vmem:[#allocation14 + $0xb0] sm:$0xff]
    %v3589 = vld [vmem:[#allocation14 + $0xb8] sm:$0xff]
    %v3590 = vld [vmem:[#allocation14 + $0xc0] sm:$0xff]
    %v3591 = vld [vmem:[#allocation14 + $0xc8] sm:$0xff]
    %v3592 = vld [vmem:[#allocation14 + $0xd0] sm:$0xff]
    %v3593 = vld [vmem:[#allocation14 + $0xd8] sm:$0xff]
    %v3594 = vld [vmem:[#allocation14 + $0xe0] sm:$0xff]
    %v3595 = vld [vmem:[#allocation14 + $0xe8] sm:$0xff]
    %v3596 = vld [vmem:[#allocation14 + $0xf0] sm:$0xff]
    %v3597 = vld [vmem:[#allocation14 + $0xf8] sm:$0xff]
    %v3598 = vld [vmem:[#allocation16] sm:$0x3]
    %v3600 = vlaneseq
    %v3601 = vshrl.u32 %v3600, 7
    %v3602 = vsub.s32 0, %v3601
    %v3603 = vrot.slane %v3598, %v3602
    %v3604 = vlaneseq
    %v3605 = vshrl.u32 %v3604, 7
    %v3606 = vsub.s32 1, %v3605
    %v3607 = vrot.slane %v3598, %v3606
    %v3642 = vunpack.c.l.b16 %v3566
    %v3643 = vunpack.c.h.b16 %v3566
    %v3644 = vunpack.c.l.b16 %v3567
    %v3645 = vunpack.c.h.b16 %v3567
    %v3646 = vunpack.c.l.b16 %v3568
    %v3647 = vunpack.c.h.b16 %v3568
    %v3648 = vunpack.c.l.b16 %v3569
    %v3649 = vunpack.c.h.b16 %v3569
    %v3650 = vunpack.c.l.b16 %v3570
    %v3651 = vunpack.c.h.b16 %v3570
    %v3652 = vunpack.c.l.b16 %v3571
    %v3653 = vunpack.c.h.b16 %v3571
    %v3654 = vunpack.c.l.b16 %v3572
    %v3655 = vunpack.c.h.b16 %v3572
    %v3656 = vunpack.c.l.b16 %v3573
    %v3657 = vunpack.c.h.b16 %v3573
    %v3658 = vunpack.c.l.b16 %v3574
    %v3659 = vunpack.c.h.b16 %v3574
    %v3660 = vunpack.c.l.b16 %v3575
    %v3661 = vunpack.c.h.b16 %v3575
    %v3662 = vunpack.c.l.b16 %v3576
    %v3663 = vunpack.c.h.b16 %v3576
    %v3664 = vunpack.c.l.b16 %v3577
    %v3665 = vunpack.c.h.b16 %v3577
    %v3666 = vunpack.c.l.b16 %v3578
    %v3667 = vunpack.c.h.b16 %v3578
    %v3668 = vunpack.c.l.b16 %v3579
    %v3669 = vunpack.c.h.b16 %v3579
    %v3670 = vunpack.c.l.b16 %v3580
    %v3671 = vunpack.c.h.b16 %v3580
    %v3672 = vunpack.c.l.b16 %v3581
    %v3673 = vunpack.c.h.b16 %v3581
    %v3674 = vunpack.c.l.b16 %v3582
    %v3675 = vunpack.c.h.b16 %v3582
    %v3676 = vunpack.c.l.b16 %v3583
    %v3677 = vunpack.c.h.b16 %v3583
    %v3678 = vunpack.c.l.b16 %v3584
    %v3679 = vunpack.c.h.b16 %v3584
    %v3680 = vunpack.c.l.b16 %v3585
    %v3681 = vunpack.c.h.b16 %v3585
    %v3682 = vunpack.c.l.b16 %v3586
    %v3683 = vunpack.c.h.b16 %v3586
    %v3684 = vunpack.c.l.b16 %v3587
    %v3685 = vunpack.c.h.b16 %v3587
    %v3686 = vunpack.c.l.b16 %v3588
    %v3687 = vunpack.c.h.b16 %v3588
    %v3688 = vunpack.c.l.b16 %v3589
    %v3689 = vunpack.c.h.b16 %v3589
    %v3690 = vunpack.c.l.b16 %v3590
    %v3691 = vunpack.c.h.b16 %v3590
    %v3692 = vunpack.c.l.b16 %v3591
    %v3693 = vunpack.c.h.b16 %v3591
    %v3694 = vunpack.c.l.b16 %v3592
    %v3695 = vunpack.c.h.b16 %v3592
    %v3696 = vunpack.c.l.b16 %v3593
    %v3697 = vunpack.c.h.b16 %v3593
    %v3698 = vunpack.c.l.b16 %v3594
    %v3699 = vunpack.c.h.b16 %v3594
    %v3700 = vunpack.c.l.b16 %v3595
    %v3701 = vunpack.c.h.b16 %v3595
    %v3702 = vunpack.c.l.b16 %v3596
    %v3703 = vunpack.c.h.b16 %v3596
    %v3704 = vunpack.c.l.b16 %v3597
    %v3705 = vunpack.c.h.b16 %v3597
    %v3706 = vpack.c.b16 %v3644, %v3642
    %v3707 = vpack.c.b16 %v3645, %v3643
    %v3708 = vpack.c.b16 %v3648, %v3646
    %v3709 = vpack.c.b16 %v3649, %v3647
    %v3710 = vpack.c.b16 %v3652, %v3650
    %v3711 = vpack.c.b16 %v3653, %v3651
    %v3712 = vpack.c.b16 %v3656, %v3654
    %v3713 = vpack.c.b16 %v3657, %v3655
    %v3714 = vpack.c.b16 %v3660, %v3658
    %v3715 = vpack.c.b16 %v3661, %v3659
    %v3716 = vpack.c.b16 %v3664, %v3662
    %v3717 = vpack.c.b16 %v3665, %v3663
    %v3718 = vpack.c.b16 %v3668, %v3666
    %v3719 = vpack.c.b16 %v3669, %v3667
    %v3720 = vpack.c.b16 %v3672, %v3670
    %v3721 = vpack.c.b16 %v3673, %v3671
    %v3722 = vpack.c.b16 %v3676, %v3674
    %v3723 = vpack.c.b16 %v3677, %v3675
    %v3724 = vpack.c.b16 %v3680, %v3678
    %v3725 = vpack.c.b16 %v3681, %v3679
    %v3726 = vpack.c.b16 %v3684, %v3682
    %v3727 = vpack.c.b16 %v3685, %v3683
    %v3728 = vpack.c.b16 %v3688, %v3686
    %v3729 = vpack.c.b16 %v3689, %v3687
    %v3730 = vpack.c.b16 %v3692, %v3690
    %v3731 = vpack.c.b16 %v3693, %v3691
    %v3732 = vpack.c.b16 %v3696, %v3694
    %v3733 = vpack.c.b16 %v3697, %v3695
    %v3734 = vpack.c.b16 %v3700, %v3698
    %v3735 = vpack.c.b16 %v3701, %v3699
    %v3736 = vpack.c.b16 %v3704, %v3702
    %v3737 = vpack.c.b16 %v3705, %v3703
    %3770 = vmatprep.subr.bf16.mxu0 %v3707
    %3771 = vmatpush1.bf16.msra.mxu0 %v3706
    %3772 = vmatprep.subr.bf16.mxu0 %v3709
    %3773 = vmatpush1.bf16.msra.mxu0 %v3708
    %3774 = vmatprep.subr.bf16.mxu0 %v3711
    %3775 = vmatpush1.bf16.msra.mxu0 %v3710
    %3776 = vmatprep.subr.bf16.mxu0 %v3713
    %3777 = vmatpush1.bf16.msra.mxu0 %v3712
    %3778 = vmatprep.subr.bf16.mxu0 %v3715
    %3779 = vmatpush1.bf16.msra.mxu0 %v3714
    %3780 = vmatprep.subr.bf16.mxu0 %v3717
    %3781 = vmatpush1.bf16.msra.mxu0 %v3716
    %3782 = vmatprep.subr.bf16.mxu0 %v3719
    %3783 = vmatpush1.bf16.msra.mxu0 %v3718
    %3784 = vmatprep.subr.bf16.mxu0 %v3721
    %3785 = vmatpush1.bf16.msra.mxu0 %v3720
    %3786 = vmatprep.subr.bf16.mxu0 %v3723
    %3787 = vmatpush1.bf16.msra.mxu0 %v3722
    %3788 = vmatprep.subr.bf16.mxu0 %v3725
    %3789 = vmatpush1.bf16.msra.mxu0 %v3724
    %3790 = vmatprep.subr.bf16.mxu0 %v3727
    %3791 = vmatpush1.bf16.msra.mxu0 %v3726
    %3792 = vmatprep.subr.bf16.mxu0 %v3729
    %3793 = vmatpush1.bf16.msra.mxu0 %v3728
    %3794 = vmatprep.subr.bf16.mxu0 %v3731
    %3795 = vmatpush1.bf16.msra.mxu0 %v3730
    %3796 = vmatprep.subr.bf16.mxu0 %v3733
    %3797 = vmatpush1.bf16.msra.mxu0 %v3732
    %3798 = vmatprep.subr.bf16.mxu0 %v3735
    %3799 = vmatpush1.bf16.msra.mxu0 %v3734
    %3800 = vmatprep.subr.bf16.mxu0 %v3737
    %3801 = vmatpush1.bf16.msra.mxu0 %v3736
    %3802 = vmatprep.mubr.bf16.mxu0 %v3565
    %3803 = vmatmul.mubr.bf16.gmra.mrb[0].mxu0 %v3564
    %v3804 = vpop.f32.mrb[0].mxu0
    %v3805 = vadd.f32 %v3603, %v3804
    %v3806 = vpop.f32.mrb[0].mxu0
    %v3807 = vadd.f32 %v3607, %v3806
    %v3808 = vpop.f32.mrb[0].mxu0
    %v3809 = vpop.f32.mrb[0].mxu0
    %3810 = vdwg.mxu0
    %v3811 = vmax.f32 %v3805, 0.0
    %v3812 = vmax.f32 %v3807, 0.0
    %v3813 = vpack.c.bf16 %v3811, %v3811
    %v3814 = vpack.c.bf16 %v3812, %v3812
    %v3815 = vld [vmem:[#allocation17] sm:$0xff]
    %v3816 = vld [vmem:[#allocation17 + $0x8] sm:$0xff]
    %v3817 = vld [vmem:[#allocation17 + $0x10] sm:$0xff]
    %v3818 = vld [vmem:[#allocation17 + $0x18] sm:$0xff]
    %v3819 = vld [vmem:[#allocation17 + $0x20] sm:$0xff]
    %v3820 = vld [vmem:[#allocation17 + $0x28] sm:$0xff]
    %v3821 = vld [vmem:[#allocation17 + $0x30] sm:$0xff]
    %v3822 = vld [vmem:[#allocation17 + $0x38] sm:$0xff]
    %v3823 = vld [vmem:[#allocation17 + $0x40] sm:$0xff]
    %v3824 = vld [vmem:[#allocation17 + $0x48] sm:$0xff]
    %v3825 = vld [vmem:[#allocation17 + $0x50] sm:$0xff]
    %v3826 = vld [vmem:[#allocation17 + $0x58] sm:$0xff]
    %v3827 = vld [vmem:[#allocation17 + $0x60] sm:$0xff]
    %v3828 = vld [vmem:[#allocation17 + $0x68] sm:$0xff]
    %v3829 = vld [vmem:[#allocation17 + $0x70] sm:$0xff]
    %v3830 = vld [vmem:[#allocation17 + $0x78] sm:$0xff]
    %v3831 = vld [vmem:[#allocation17 + $0x80] sm:$0xff]
    %v3832 = vld [vmem:[#allocation17 + $0x88] sm:$0xff]
    %v3833 = vld [vmem:[#allocation17 + $0x90] sm:$0xff]
    %v3834 = vld [vmem:[#allocation17 + $0x98] sm:$0xff]
    %v3835 = vld [vmem:[#allocation17 + $0xa0] sm:$0xff]
    %v3836 = vld [vmem:[#allocation17 + $0xa8] sm:$0xff]
    %v3837 = vld [vmem:[#allocation17 + $0xb0] sm:$0xff]
    %v3838 = vld [vmem:[#allocation17 + $0xb8] sm:$0xff]
    %v3839 = vld [vmem:[#allocation17 + $0xc0] sm:$0xff]
    %v3840 = vld [vmem:[#allocation17 + $0xc8] sm:$0xff]
    %v3841 = vld [vmem:[#allocation17 + $0xd0] sm:$0xff]
    %v3842 = vld [vmem:[#allocation17 + $0xd8] sm:$0xff]
    %v3843 = vld [vmem:[#allocation17 + $0xe0] sm:$0xff]
    %v3844 = vld [vmem:[#allocation17 + $0xe8] sm:$0xff]
    %v3845 = vld [vmem:[#allocation17 + $0xf0] sm:$0xff]
    %v3846 = vld [vmem:[#allocation17 + $0xf8] sm:$0xff]
    %v3847 = vld [vmem:[#allocation19] sm:$0x3]
    %v3849 = vlaneseq
    %v3850 = vshrl.u32 %v3849, 7
    %v3851 = vsub.s32 0, %v3850
    %v3852 = vrot.slane %v3847, %v3851
    %v3853 = vlaneseq
    %v3854 = vshrl.u32 %v3853, 7
    %v3855 = vsub.s32 1, %v3854
    %v3856 = vrot.slane %v3847, %v3855
    %v3891 = vunpack.c.l.b16 %v3815
    %v3892 = vunpack.c.h.b16 %v3815
    %v3893 = vunpack.c.l.b16 %v3816
    %v3894 = vunpack.c.h.b16 %v3816
    %v3895 = vunpack.c.l.b16 %v3817
    %v3896 = vunpack.c.h.b16 %v3817
    %v3897 = vunpack.c.l.b16 %v3818
    %v3898 = vunpack.c.h.b16 %v3818
    %v3899 = vunpack.c.l.b16 %v3819
    %v3900 = vunpack.c.h.b16 %v3819
    %v3901 = vunpack.c.l.b16 %v3820
    %v3902 = vunpack.c.h.b16 %v3820
    %v3903 = vunpack.c.l.b16 %v3821
    %v3904 = vunpack.c.h.b16 %v3821
    %v3905 = vunpack.c.l.b16 %v3822
    %v3906 = vunpack.c.h.b16 %v3822
    %v3907 = vunpack.c.l.b16 %v3823
    %v3908 = vunpack.c.h.b16 %v3823
    %v3909 = vunpack.c.l.b16 %v3824
    %v3910 = vunpack.c.h.b16 %v3824
    %v3911 = vunpack.c.l.b16 %v3825
    %v3912 = vunpack.c.h.b16 %v3825
    %v3913 = vunpack.c.l.b16 %v3826
    %v3914 = vunpack.c.h.b16 %v3826
    %v3915 = vunpack.c.l.b16 %v3827
    %v3916 = vunpack.c.h.b16 %v3827
    %v3917 = vunpack.c.l.b16 %v3828
    %v3918 = vunpack.c.h.b16 %v3828
    %v3919 = vunpack.c.l.b16 %v3829
    %v3920 = vunpack.c.h.b16 %v3829
    %v3921 = vunpack.c.l.b16 %v3830
    %v3922 = vunpack.c.h.b16 %v3830
    %v3923 = vunpack.c.l.b16 %v3831
    %v3924 = vunpack.c.h.b16 %v3831
    %v3925 = vunpack.c.l.b16 %v3832
    %v3926 = vunpack.c.h.b16 %v3832
    %v3927 = vunpack.c.l.b16 %v3833
    %v3928 = vunpack.c.h.b16 %v3833
    %v3929 = vunpack.c.l.b16 %v3834
    %v3930 = vunpack.c.h.b16 %v3834
    %v3931 = vunpack.c.l.b16 %v3835
    %v3932 = vunpack.c.h.b16 %v3835
    %v3933 = vunpack.c.l.b16 %v3836
    %v3934 = vunpack.c.h.b16 %v3836
    %v3935 = vunpack.c.l.b16 %v3837
    %v3936 = vunpack.c.h.b16 %v3837
    %v3937 = vunpack.c.l.b16 %v3838
    %v3938 = vunpack.c.h.b16 %v3838
    %v3939 = vunpack.c.l.b16 %v3839
    %v3940 = vunpack.c.h.b16 %v3839
    %v3941 = vunpack.c.l.b16 %v3840
    %v3942 = vunpack.c.h.b16 %v3840
    %v3943 = vunpack.c.l.b16 %v3841
    %v3944 = vunpack.c.h.b16 %v3841
    %v3945 = vunpack.c.l.b16 %v3842
    %v3946 = vunpack.c.h.b16 %v3842
    %v3947 = vunpack.c.l.b16 %v3843
    %v3948 = vunpack.c.h.b16 %v3843
    %v3949 = vunpack.c.l.b16 %v3844
    %v3950 = vunpack.c.h.b16 %v3844
    %v3951 = vunpack.c.l.b16 %v3845
    %v3952 = vunpack.c.h.b16 %v3845
    %v3953 = vunpack.c.l.b16 %v3846
    %v3954 = vunpack.c.h.b16 %v3846
    %v3955 = vpack.c.b16 %v3893, %v3891
    %v3956 = vpack.c.b16 %v3894, %v3892
    %v3957 = vpack.c.b16 %v3897, %v3895
    %v3958 = vpack.c.b16 %v3898, %v3896
    %v3959 = vpack.c.b16 %v3901, %v3899
    %v3960 = vpack.c.b16 %v3902, %v3900
    %v3961 = vpack.c.b16 %v3905, %v3903
    %v3962 = vpack.c.b16 %v3906, %v3904
    %v3963 = vpack.c.b16 %v3909, %v3907
    %v3964 = vpack.c.b16 %v3910, %v3908
    %v3965 = vpack.c.b16 %v3913, %v3911
    %v3966 = vpack.c.b16 %v3914, %v3912
    %v3967 = vpack.c.b16 %v3917, %v3915
    %v3968 = vpack.c.b16 %v3918, %v3916
    %v3969 = vpack.c.b16 %v3921, %v3919
    %v3970 = vpack.c.b16 %v3922, %v3920
    %v3971 = vpack.c.b16 %v3925, %v3923
    %v3972 = vpack.c.b16 %v3926, %v3924
    %v3973 = vpack.c.b16 %v3929, %v3927
    %v3974 = vpack.c.b16 %v3930, %v3928
    %v3975 = vpack.c.b16 %v3933, %v3931
    %v3976 = vpack.c.b16 %v3934, %v3932
    %v3977 = vpack.c.b16 %v3937, %v3935
    %v3978 = vpack.c.b16 %v3938, %v3936
    %v3979 = vpack.c.b16 %v3941, %v3939
    %v3980 = vpack.c.b16 %v3942, %v3940
    %v3981 = vpack.c.b16 %v3945, %v3943
    %v3982 = vpack.c.b16 %v3946, %v3944
    %v3983 = vpack.c.b16 %v3949, %v3947
    %v3984 = vpack.c.b16 %v3950, %v3948
    %v3985 = vpack.c.b16 %v3953, %v3951
    %v3986 = vpack.c.b16 %v3954, %v3952
    %4019 = vmatprep.subr.bf16.mxu0 %v3956
    %4020 = vmatpush1.bf16.msra.mxu0 %v3955
    %4021 = vmatprep.subr.bf16.mxu0 %v3958
    %4022 = vmatpush1.bf16.msra.mxu0 %v3957
    %4023 = vmatprep.subr.bf16.mxu0 %v3960
    %4024 = vmatpush1.bf16.msra.mxu0 %v3959
    %4025 = vmatprep.subr.bf16.mxu0 %v3962
    %4026 = vmatpush1.bf16.msra.mxu0 %v3961
    %4027 = vmatprep.subr.bf16.mxu0 %v3964
    %4028 = vmatpush1.bf16.msra.mxu0 %v3963
    %4029 = vmatprep.subr.bf16.mxu0 %v3966
    %4030 = vmatpush1.bf16.msra.mxu0 %v3965
    %4031 = vmatprep.subr.bf16.mxu0 %v3968
    %4032 = vmatpush1.bf16.msra.mxu0 %v3967
    %4033 = vmatprep.subr.bf16.mxu0 %v3970
    %4034 = vmatpush1.bf16.msra.mxu0 %v3969
    %4035 = vmatprep.subr.bf16.mxu0 %v3972
    %4036 = vmatpush1.bf16.msra.mxu0 %v3971
    %4037 = vmatprep.subr.bf16.mxu0 %v3974
    %4038 = vmatpush1.bf16.msra.mxu0 %v3973
    %4039 = vmatprep.subr.bf16.mxu0 %v3976
    %4040 = vmatpush1.bf16.msra.mxu0 %v3975
    %4041 = vmatprep.subr.bf16.mxu0 %v3978
    %4042 = vmatpush1.bf16.msra.mxu0 %v3977
    %4043 = vmatprep.subr.bf16.mxu0 %v3980
    %4044 = vmatpush1.bf16.msra.mxu0 %v3979
    %4045 = vmatprep.subr.bf16.mxu0 %v3982
    %4046 = vmatpush1.bf16.msra.mxu0 %v3981
    %4047 = vmatprep.subr.bf16.mxu0 %v3984
    %4048 = vmatpush1.bf16.msra.mxu0 %v3983
    %4049 = vmatprep.subr.bf16.mxu0 %v3986
    %4050 = vmatpush1.bf16.msra.mxu0 %v3985
    %4051 = vmatprep.mubr.bf16.mxu0 %v3814
    %4052 = vmatmul.mubr.bf16.gmra.mrb[0].mxu0 %v3813
    %v4053 = vpop.f32.mrb[0].mxu0
    %v4054 = vadd.f32 %v3852, %v4053
    %v4055 = vpop.f32.mrb[0].mxu0
    %v4056 = vadd.f32 %v3856, %v4055
    %v4057 = vpop.f32.mrb[0].mxu0
    %v4058 = vpop.f32.mrb[0].mxu0
    %4059 = vdwg.mxu0
    %v4060 = vmax.f32 %v4054, 0.0
    %v4061 = vmax.f32 %v4056, 0.0
    %v4062 = vpack.c.bf16 %v4060, %v4060
    %v4063 = vpack.c.bf16 %v4061, %v4061
    %v4064 = vld [vmem:[#allocation20] sm:$0xf]
    %v4065 = vld [vmem:[#allocation20 + $0x4] sm:$0xf]
    %v4066 = vld [vmem:[#allocation20 + $0x8] sm:$0xf]
    %v4067 = vld [vmem:[#allocation20 + $0xc] sm:$0xf]
    %v4068 = vld [vmem:[#allocation20 + $0x10] sm:$0xf]
    %v4069 = vld [vmem:[#allocation20 + $0x14] sm:$0xf]
    %v4070 = vld [vmem:[#allocation20 + $0x18] sm:$0xf]
    %v4071 = vld [vmem:[#allocation20 + $0x1c] sm:$0xf]
    %v4072 = vld [vmem:[#allocation20 + $0x20] sm:$0xf]
    %v4073 = vld [vmem:[#allocation20 + $0x24] sm:$0xf]
    %v4074 = vld [vmem:[#allocation20 + $0x28] sm:$0xf]
    %v4075 = vld [vmem:[#allocation20 + $0x2c] sm:$0xf]
    %v4076 = vld [vmem:[#allocation20 + $0x30] sm:$0xf]
    %v4077 = vld [vmem:[#allocation20 + $0x34] sm:$0xf]
    %v4078 = vld [vmem:[#allocation20 + $0x38] sm:$0xf]
    %v4079 = vld [vmem:[#allocation20 + $0x3c] sm:$0xf]
    %v4080 = vld [vmem:[#allocation20 + $0x40] sm:$0xf]
    %v4081 = vld [vmem:[#allocation20 + $0x44] sm:$0xf]
    %v4082 = vld [vmem:[#allocation20 + $0x48] sm:$0xf]
    %v4083 = vld [vmem:[#allocation20 + $0x4c] sm:$0xf]
    %v4084 = vld [vmem:[#allocation20 + $0x50] sm:$0xf]
    %v4085 = vld [vmem:[#allocation20 + $0x54] sm:$0xf]
    %v4086 = vld [vmem:[#allocation20 + $0x58] sm:$0xf]
    %v4087 = vld [vmem:[#allocation20 + $0x5c] sm:$0xf]
    %v4088 = vld [vmem:[#allocation20 + $0x60] sm:$0xf]
    %v4089 = vld [vmem:[#allocation20 + $0x64] sm:$0xf]
    %v4090 = vld [vmem:[#allocation20 + $0x68] sm:$0xf]
    %v4091 = vld [vmem:[#allocation20 + $0x6c] sm:$0xf]
    %v4092 = vld [vmem:[#allocation20 + $0x70] sm:$0xf]
    %v4093 = vld [vmem:[#allocation20 + $0x74] sm:$0xf]
    %v4094 = vld [vmem:[#allocation20 + $0x78] sm:$0xf]
    %v4095 = vld [vmem:[#allocation20 + $0x7c] sm:$0xf]
    %v4096 = vld [vmem:[#allocation22] sm:$0x1]
    %v4098 = vlaneseq
    %v4099 = vshrl.u32 %v4098, 7
    %v4100 = vsub.s32 0, %v4099
    %v4101 = vrot.slane %v4096, %v4100
    %v4135 = vunpack.c.l.b16 %v4064
    %v4136 = vunpack.c.l.b16 %v4065
    %v4137 = vunpack.c.l.b16 %v4066
    %v4138 = vunpack.c.l.b16 %v4067
    %v4139 = vunpack.c.l.b16 %v4068
    %v4140 = vunpack.c.l.b16 %v4069
    %v4141 = vunpack.c.l.b16 %v4070
    %v4142 = vunpack.c.l.b16 %v4071
    %v4143 = vunpack.c.l.b16 %v4072
    %v4144 = vunpack.c.l.b16 %v4073
    %v4145 = vunpack.c.l.b16 %v4074
    %v4146 = vunpack.c.l.b16 %v4075
    %v4147 = vunpack.c.l.b16 %v4076
    %v4148 = vunpack.c.l.b16 %v4077
    %v4149 = vunpack.c.l.b16 %v4078
    %v4150 = vunpack.c.l.b16 %v4079
    %v4151 = vunpack.c.l.b16 %v4080
    %v4152 = vunpack.c.l.b16 %v4081
    %v4153 = vunpack.c.l.b16 %v4082
    %v4154 = vunpack.c.l.b16 %v4083
    %v4155 = vunpack.c.l.b16 %v4084
    %v4156 = vunpack.c.l.b16 %v4085
    %v4157 = vunpack.c.l.b16 %v4086
    %v4158 = vunpack.c.l.b16 %v4087
    %v4159 = vunpack.c.l.b16 %v4088
    %v4160 = vunpack.c.l.b16 %v4089
    %v4161 = vunpack.c.l.b16 %v4090
    %v4162 = vunpack.c.l.b16 %v4091
    %v4163 = vunpack.c.l.b16 %v4092
    %v4164 = vunpack.c.l.b16 %v4093
    %v4165 = vunpack.c.l.b16 %v4094
    %v4166 = vunpack.c.l.b16 %v4095
    %v4167 = vpack.c.b16 %v4136, %v4135
    %v4168 = vpack.c.b16 %v4138, %v4137
    %v4169 = vpack.c.b16 %v4140, %v4139
    %v4170 = vpack.c.b16 %v4142, %v4141
    %v4171 = vpack.c.b16 %v4144, %v4143
    %v4172 = vpack.c.b16 %v4146, %v4145
    %v4173 = vpack.c.b16 %v4148, %v4147
    %v4174 = vpack.c.b16 %v4150, %v4149
    %v4175 = vpack.c.b16 %v4152, %v4151
    %v4176 = vpack.c.b16 %v4154, %v4153
    %v4177 = vpack.c.b16 %v4156, %v4155
    %v4178 = vpack.c.b16 %v4158, %v4157
    %v4179 = vpack.c.b16 %v4160, %v4159
    %v4180 = vpack.c.b16 %v4162, %v4161
    %v4181 = vpack.c.b16 %v4164, %v4163
    %v4182 = vpack.c.b16 %v4166, %v4165
    %4199 = vmatprep.subr.bf16.mxu0 0
    %4200 = vmatpush1.bf16.msra.mxu0 %v4167
    %4201 = vmatprep.subr.bf16.mxu0 0
    %4202 = vmatpush1.bf16.msra.mxu0 %v4168
    %4203 = vmatprep.subr.bf16.mxu0 0
    %4204 = vmatpush1.bf16.msra.mxu0 %v4169
    %4205 = vmatprep.subr.bf16.mxu0 0
    %4206 = vmatpush1.bf16.msra.mxu0 %v4170
    %4207 = vmatprep.subr.bf16.mxu0 0
    %4208 = vmatpush1.bf16.msra.mxu0 %v4171
    %4209 = vmatprep.subr.bf16.mxu0 0
    %4210 = vmatpush1.bf16.msra.mxu0 %v4172
    %4211 = vmatprep.subr.bf16.mxu0 0
    %4212 = vmatpush1.bf16.msra.mxu0 %v4173
    %4213 = vmatprep.subr.bf16.mxu0 0
    %4214 = vmatpush1.bf16.msra.mxu0 %v4174
    %4215 = vmatprep.subr.bf16.mxu0 0
    %4216 = vmatpush1.bf16.msra.mxu0 %v4175
    %4217 = vmatprep.subr.bf16.mxu0 0
    %4218 = vmatpush1.bf16.msra.mxu0 %v4176
    %4219 = vmatprep.subr.bf16.mxu0 0
    %4220 = vmatpush1.bf16.msra.mxu0 %v4177
    %4221 = vmatprep.subr.bf16.mxu0 0
    %4222 = vmatpush1.bf16.msra.mxu0 %v4178
    %4223 = vmatprep.subr.bf16.mxu0 0
    %4224 = vmatpush1.bf16.msra.mxu0 %v4179
    %4225 = vmatprep.subr.bf16.mxu0 0
    %4226 = vmatpush1.bf16.msra.mxu0 %v4180
    %4227 = vmatprep.subr.bf16.mxu0 0
    %4228 = vmatpush1.bf16.msra.mxu0 %v4181
    %4229 = vmatprep.subr.bf16.mxu0 0
    %4230 = vmatpush1.bf16.msra.mxu0 %v4182
    %4231 = vmatprep.mubr.bf16.mxu0 %v4063
    %4232 = vmatmul.mubr.bf16.gmra.mrb[0].mxu0 %v4062
    %v4233 = vpop.f32.mrb[0].mxu0
    %v4234 = vadd.f32 %v4101, %v4233
    %v4235 = vpop.f32.mrb[0].mxu0
    %v4236 = vpop.f32.mrb[0].mxu0
    %v4237 = vpop.f32.mrb[0].mxu0
    %4238 = vdwg.mxu0
    %4239 = vst [vmem:[#allocation23] sm:$0xff] %v4234
    // Predicated region
    $region106: #{tpu_custom_call.1} parent=1 // pred_check
      _
    $region107: #{tpu_custom_call.1} parent=1 // pred_check_branch
      %4241 = sbr.rel (0) target = $region109
    $region108: #{tpu_custom_call.1} parent=1 // pred_region
      %s4243 = ssub.s32 128, 128
      %4244 = vsyncadd [#allocation4], %s4243
      %s4246 = sshll.u32 [#allocation23], 4
      %s4247 = int_to_ptr.vmem [resolvable:$true] %s4246
      %4249 = dma.vmem_to_hbm [thread:$0]  %s4247, 128, %s13, [#allocation4]
    $region109: #{tpu_custom_call.1} parent=1 // pred_fallthru
      _
    // Predicated region
    $region110: #{tpu_custom_call.1} parent=1 // pred_check
      _
    $region111: #{tpu_custom_call.1} parent=1 // pred_check_branch
      %4251 = sbr.rel (0) target = $region113
    $region112: #{tpu_custom_call.1} parent=1 // pred_region
      %4252 = dma.done [#allocation4], 128
    $region113: #{tpu_custom_call.1} parent=1 // pred_fallthru
      _
    %4253 = vsyncpa [#allocation3], 1
    %4254 = vsyncpa [#allocation6], 1
    %4255 = vsyncpa [#allocation9], 1
    %4256 = vsyncpa [#allocation12], 1
    %4257 = vsyncpa [#allocation15], 1
    %4258 = vsyncpa [#allocation18], 1
    %4259 = vsyncpa [#allocation21], 1
    %4260 = vsyncpa [#allocation4], 1

// kernel: tpu_custom_call.1
$region0: #{tpu_custom_call.1}
  #allocation0 [shape = 'u32[]', space=smem, size = 0x4, offset = 0x4, fixed_abs, tag = 'smem constant byte address 0x4 - core index']
  #allocation1 [shape = 'u32[144,128]{1,0:T(1,128)}', space=vmem, size = 0x12000, scoped, tag = 'internal scratch']
  %s0 = inlined_call_operand.hbm [shape: f32[8,3072], index: 0, kind: input, shape index: {}]
  %s1 = inlined_call_operand.hbm [shape: bf16[3072,256], index: 1, kind: input, shape index: {}]
  %s2 = inlined_call_operand.hbm [shape: f32[1,256], index: 2, kind: input, shape index: {}]
  %s3 = inlined_call_operand.hbm [shape: bf16[256,256], index: 3, kind: input, shape index: {}]
  %s4 = inlined_call_operand.hbm [shape: f32[1,256], index: 4, kind: input, shape index: {}]
  %s5 = inlined_call_operand.hbm [shape: bf16[256,256], index: 5, kind: input, shape index: {}]
  %s6 = inlined_call_operand.hbm [shape: f32[1,256], index: 6, kind: input, shape index: {}]
  %s7 = inlined_call_operand.hbm [shape: bf16[256,256], index: 7, kind: input, shape index: {}]
  %s8 = inlined_call_operand.hbm [shape: f32[1,256], index: 8, kind: input, shape index: {}]
  %s9 = inlined_call_operand.hbm [shape: bf16[256,256], index: 9, kind: input, shape index: {}]
  %s10 = inlined_call_operand.hbm [shape: f32[1,256], index: 10, kind: input, shape index: {}]
  %s11 = inlined_call_operand.hbm [shape: bf16[256,128], index: 11, kind: input, shape index: {}]
  %s12 = inlined_call_operand.hbm [shape: f32[1,128], index: 12, kind: input, shape index: {}]
  %s13 = inlined_call_operand.hbm [shape: f32[8,128], index: 13, kind: output, shape index: {}]
  %s14 = sld [smem:[#allocation0]]
  $region114: #{tpu_custom_call.1} parent=0
    _
  %s16 = ssub.s32 1, %s14
  %s17 = scalar_select 0, %s16, %s14
  $region1: #{tpu_custom_call.1} parent=0
    #allocation2 [shape = 'u8[98304]{0}', space=vmem, size = 0x18000, scoped, tag = 'input window, operand 0, single buffered']
    #allocation3 [shape = 's32[1]{0}', space=sflag, size = 0x4, scoped, tag = 'scoped memory for tpu_custom_call.1']
    #allocation4 [shape = 's32[1]{0}', space=sflag, size = 0x4, scoped, tag = 'scoped memory for tpu_custom_call.1']
    #allocation5 [shape = 'u8[1572864]{0}', space=vmem, size = 0x180000, scoped, tag = 'input window, operand 1, single buffered']
    #allocation6 [shape = 's32[1]{0}', space=sflag, size = 0x4, scoped, tag = 'scoped memory for tpu_custom_call.1']
    #allocation7 [shape = 'u8[1024]{0}', space=vmem, size = 0x400, scoped, tag = 'input window, operand 2, single buffered']
    #allocation8 [shape = 'u8[131072]{0}', space=vmem, size = 0x20000, scoped, tag = 'input window, operand 3, single buffered']
    #allocation9 [shape = 's32[1]{0}', space=sflag, size = 0x4, scoped, tag = 'scoped memory for tpu_custom_call.1']
    #allocation10 [shape = 'u8[1024]{0}', space=vmem, size = 0x400, scoped, tag = 'input window, operand 4, single buffered']
    #allocation11 [shape = 'u8[131072]{0}', space=vmem, size = 0x20000, scoped, tag = 'input window, operand 5, single buffered']
    #allocation12 [shape = 's32[1]{0}', space=sflag, size = 0x4, scoped, tag = 'scoped memory for tpu_custom_call.1']
    #allocation13 [shape = 'u8[1024]{0}', space=vmem, size = 0x400, scoped, tag = 'input window, operand 6, single buffered']
    #allocation14 [shape = 'u8[131072]{0}', space=vmem, size = 0x20000, scoped, tag = 'input window, operand 7, single buffered']
    #allocation15 [shape = 's32[1]{0}', space=sflag, size = 0x4, scoped, tag = 'scoped memory for tpu_custom_call.1']
    #allocation16 [shape = 'u8[1024]{0}', space=vmem, size = 0x400, scoped, tag = 'input window, operand 8, single buffered']
    #allocation17 [shape = 'u8[131072]{0}', space=vmem, size = 0x20000, scoped, tag = 'input window, operand 9, single buffered']
    #allocation18 [shape = 's32[1]{0}', space=sflag, size = 0x4, scoped, tag = 'scoped memory for tpu_custom_call.1']
    #allocation19 [shape = 'u8[1024]{0}', space=vmem, size = 0x400, scoped, tag = 'input window, operand 10, single buffered']
    #allocation20 [shape = 'u8[65536]{0}', space=vmem, size = 0x10000, scoped, tag = 'input window, operand 11, single buffered']
    #allocation21 [shape = 's32[1]{0}', space=sflag, size = 0x4, scoped, tag = 'scoped memory for tpu_custom_call.1']
    #allocation22 [shape = 'u8[512]{0}', space=vmem, size = 0x400, scoped, tag = 'input window, operand 12, single buffered']
    #allocation23 [shape = 'u8[4096]{0}', space=vmem, size = 0x1000, scoped, tag = 'output window, operand 0, single buffered']
    %18 = vsyncpa [#allocation3], 0
    %19 = vsyncpa [#allocation6], 0
    %20 = vsyncpa [#allocation9], 0
    %21 = vsyncpa [#allocation12], 0
    %22 = vsyncpa [#allocation15], 0
    %23 = vsyncpa [#allocation18], 0
    %24 = vsyncpa [#allocation21], 0
    %25 = vsyncpa [#allocation4], 0
    // Predicated region
    $region2: #{tpu_custom_call.1} parent=1 // pred_check
      _
    $region3: #{tpu_custom_call.1} parent=1 // pred_check_branch
      %27 = sbr.rel (0) target = $region5
    $region4: #{tpu_custom_call.1} parent=1 // pred_region
      %s29 = ssub.s32 3072, 3072
      %30 = vsyncadd [#allocation3], %s29
      %s32 = sshll.u32 [#allocation2], 4
      %s33 = int_to_ptr.vmem [resolvable:$true] %s32
      %35 = dma.hbm_to_vmem [thread:$0]  %s0, 3072, %s33, [#allocation3]
    $region5: #{tpu_custom_call.1} parent=1 // pred_fallthru
      _
    // Predicated region
    $region6: #{tpu_custom_call.1} parent=1 // pred_check
      _
    $region7: #{tpu_custom_call.1} parent=1 // pred_check_branch
      %37 = sbr.rel (0) target = $region9
    $region8: #{tpu_custom_call.1} parent=1 // pred_region
      %s39 = ssub.s32 49152, 49152
      %40 = vsyncadd [#allocation6], %s39
      %s41 = sshll.u32 [#allocation5], 4
      %s42 = int_to_ptr.vmem [resolvable:$true] %s41
      %47 = dma.hbm_to_vmem [thread:$0]  %s1, 49152, %s42, [#allocation6], 128, 128, 8
    $region9: #{tpu_custom_call.1} parent=1 // pred_fallthru
      _
    // Predicated region
    $region10: #{tpu_custom_call.1} parent=1 // pred_check
      _
    $region11: #{tpu_custom_call.1} parent=1 // pred_check_branch
      %49 = sbr.rel (0) target = $region13
    $region12: #{tpu_custom_call.1} parent=1 // pred_region
      %s51 = ssub.s32 32, 32
      %52 = vsyncadd [#allocation6], %s51
      %s54 = sshll.u32 [#allocation7], 4
      %s55 = int_to_ptr.vmem [resolvable:$true] %s54
      %57 = dma.hbm_to_vmem [thread:$0]  %s2, 32, %s55, [#allocation6]
    $region13: #{tpu_custom_call.1} parent=1 // pred_fallthru
      _
    // Predicated region
    $region14: #{tpu_custom_call.1} parent=1 // pred_check
      _
    $region15: #{tpu_custom_call.1} parent=1 // pred_check_branch
      %59 = sbr.rel (0) target = $region17
    $region16: #{tpu_custom_call.1} parent=1 // pred_region
      %s61 = ssub.s32 4096, 4096
      %62 = vsyncadd [#allocation9], %s61
      %s63 = sshll.u32 [#allocation8], 4
      %s64 = int_to_ptr.vmem [resolvable:$true] %s63
      %69 = dma.hbm_to_vmem [thread:$0]  %s3, 4096, %s64, [#allocation9], 128, 128, 8
    $region17: #{tpu_custom_call.1} parent=1 // pred_fallthru
      _
    // Predicated region
    $region18: #{tpu_custom_call.1} parent=1 // pred_check
      _
    $region19: #{tpu_custom_call.1} parent=1 // pred_check_branch
      %71 = sbr.rel (0) target = $region21
    $region20: #{tpu_custom_call.1} parent=1 // pred_region
      %s73 = ssub.s32 32, 32
      %74 = vsyncadd [#allocation9], %s73
      %s76 = sshll.u32 [#allocation10], 4
      %s77 = int_to_ptr.vmem [resolvable:$true] %s76
      %79 = dma.hbm_to_vmem [thread:$0]  %s4, 32, %s77, [#allocation9]
    $region21: #{tpu_custom_call.1} parent=1 // pred_fallthru
      _
    // Predicated region
    $region22: #{tpu_custom_call.1} parent=1 // pred_check
      _
    $region23: #{tpu_custom_call.1} parent=1 // pred_check_branch
      %81 = sbr.rel (0) target = $region25
    $region24: #{tpu_custom_call.1} parent=1 // pred_region
      %s83 = ssub.s32 4096, 4096
      %84 = vsyncadd [#allocation12], %s83
      %s85 = sshll.u32 [#allocation11], 4
      %s86 = int_to_ptr.vmem [resolvable:$true] %s85
      %91 = dma.hbm_to_vmem [thread:$0]  %s5, 4096, %s86, [#allocation12], 128, 128, 8
    $region25: #{tpu_custom_call.1} parent=1 // pred_fallthru
      _
    // Predicated region
    $region26: #{tpu_custom_call.1} parent=1 // pred_check
      _
    $region27: #{tpu_custom_call.1} parent=1 // pred_check_branch
      %93 = sbr.rel (0) target = $region29
    $region28: #{tpu_custom_call.1} parent=1 // pred_region
      %s95 = ssub.s32 32, 32
      %96 = vsyncadd [#allocation12], %s95
      %s98 = sshll.u32 [#allocation13], 4
      %s99 = int_to_ptr.vmem [resolvable:$true] %s98
      %101 = dma.hbm_to_vmem [thread:$0]  %s6, 32, %s99, [#allocation12]
    $region29: #{tpu_custom_call.1} parent=1 // pred_fallthru
      _
    // Predicated region
    $region30: #{tpu_custom_call.1} parent=1 // pred_check
      _
    $region31: #{tpu_custom_call.1} parent=1 // pred_check_branch
      %103 = sbr.rel (0) target = $region33
    $region32: #{tpu_custom_call.1} parent=1 // pred_region
      %s105 = ssub.s32 4096, 4096
      %106 = vsyncadd [#allocation15], %s105
      %s107 = sshll.u32 [#allocation14], 4
      %s108 = int_to_ptr.vmem [resolvable:$true] %s107
      %113 = dma.hbm_to_vmem [thread:$0]  %s7, 4096, %s108, [#allocation15], 128, 128, 8
    $region33: #{tpu_custom_call.1} parent=1 // pred_fallthru
      _
    // Predicated region
    $region34: #{tpu_custom_call.1} parent=1 // pred_check
      _
    $region35: #{tpu_custom_call.1} parent=1 // pred_check_branch
      %115 = sbr.rel (0) target = $region37
    $region36: #{tpu_custom_call.1} parent=1 // pred_region
      %s117 = ssub.s32 32, 32
      %118 = vsyncadd [#allocation15], %s117
      %s120 = sshll.u32 [#allocation16], 4
      %s121 = int_to_ptr.vmem [resolvable:$true] %s120
      %123 = dma.hbm_to_vmem [thread:$0]  %s8, 32, %s121, [#allocation15]
    $region37: #{tpu_custom_call.1} parent=1 // pred_fallthru
      _
    // Predicated region
    $region38: #{tpu_custom_call.1} parent=1 // pred_check
      _
    $region39: #{tpu_custom_call.1} parent=1 // pred_check_branch
      %125 = sbr.rel (0) target = $region41
    $region40: #{tpu_custom_call.1} parent=1 // pred_region
      %s127 = ssub.s32 4096, 4096
      %128 = vsyncadd [#allocation18], %s127
      %s129 = sshll.u32 [#allocation17], 4
      %s130 = int_to_ptr.vmem [resolvable:$true] %s129
      %135 = dma.hbm_to_vmem [thread:$0]  %s9, 4096, %s130, [#allocation18], 128, 128, 8
    $region41: #{tpu_custom_call.1} parent=1 // pred_fallthru
      _
    // Predicated region
    $region42: #{tpu_custom_call.1} parent=1 // pred_check
      _
    $region43: #{tpu_custom_call.1} parent=1 // pred_check_branch
      %137 = sbr.rel (0) target = $region45
    $region44: #{tpu_custom_call.1} parent=1 // pred_region
      %s139 = ssub.s32 32, 32
      %140 = vsyncadd [#allocation18], %s139
      %s142 = sshll.u32 [#allocation19], 4
      %s143 = int_to_ptr.vmem [resolvable:$true] %s142
      %145 = dma.hbm_to_vmem [thread:$0]  %s10, 32, %s143, [#allocation18]
    $region45: #{tpu_custom_call.1} parent=1 // pred_fallthru
      _
    // Predicated region
    $region46: #{tpu_custom_call.1} parent=1 // pred_check
      _
    $region47: #{tpu_custom_call.1} parent=1 // pred_check_branch
      %147 = sbr.rel (0) target = $region49
    $region48: #{tpu_custom_call.1} parent=1 // pred_region
      %s149 = ssub.s32 2048, 2048
      %150 = vsyncadd [#allocation21], %s149
      %s151 = sshll.u32 [#allocation20], 4
      %s152 = int_to_ptr.vmem [resolvable:$true] %s151
      %157 = dma.hbm_to_vmem [thread:$0]  %s11, 2048, %s152, [#allocation21], 64, 64, 4
    $region49: #{tpu_custom_call.1} parent=1 // pred_fallthru
      _
    // Predicated region
    $region50: #{tpu_custom_call.1} parent=1 // pred_check
      _
    $region51: #{tpu_custom_call.1} parent=1 // pred_check_branch
      %159 = sbr.rel (0) target = $region53
    $region52: #{tpu_custom_call.1} parent=1 // pred_region
      %s161 = ssub.s32 16, 16
      %162 = vsyncadd [#allocation21], %s161
      %s164 = sshll.u32 [#allocation22], 4
      %s165 = int_to_ptr.vmem [resolvable:$true] %s164
      %167 = dma.hbm_to_vmem [thread:$0]  %s12, 16, %s165, [#allocation21]
    $region53: #{tpu_custom_call.1} parent=1 // pred_fallthru
      _
    // Predicated region
    $region54: #{tpu_custom_call.1} parent=1 // pred_check
      _
    $region55: #{tpu_custom_call.1} parent=1 // pred_check_branch
      %169 = sbr.rel (0) target = $region57
    $region56: #{tpu_custom_call.1} parent=1 // pred_region
      %170 = dma.done [#allocation3], 3072
    $region57: #{tpu_custom_call.1} parent=1 // pred_fallthru
      _
    // Predicated region
    $region58: #{tpu_custom_call.1} parent=1 // pred_check
      _
    $region59: #{tpu_custom_call.1} parent=1 // pred_check_branch
      %172 = sbr.rel (0) target = $region61
    $region60: #{tpu_custom_call.1} parent=1 // pred_region
      %173 = dma.done [#allocation6], 49152
    $region61: #{tpu_custom_call.1} parent=1 // pred_fallthru
      _
    // Predicated region
    $region62: #{tpu_custom_call.1} parent=1 // pred_check
      _
    $region63: #{tpu_custom_call.1} parent=1 // pred_check_branch
      %175 = sbr.rel (0) target = $region65
    $region64: #{tpu_custom_call.1} parent=1 // pred_region
      %176 = dma.done [#allocation6], 32
    $region65: #{tpu_custom_call.1} parent=1 // pred_fallthru
      _
    // Predicated region
    $region66: #{tpu_custom_call.1} parent=1 // pred_check
      _
    $region67: #{tpu_custom_call.1} parent=1 // pred_check_branch
      %178 = sbr.rel (0) target = $region69
    $region68: #{tpu_custom_call.1} parent=1 // pred_region
      %179 = dma.done [#allocation9], 4096
    $region69: #{tpu_custom_call.1} parent=1 // pred_fallthru
      _
    // Predicated region
    $region70: #{tpu_custom_call.1} parent=1 // pred_check
      _
    $region71: #{tpu_custom_call.1} parent=1 // pred_check_branch
      %181 = sbr.rel (0) target = $region73
    $region72: #{tpu_custom_call.1} parent=1 // pred_region
      %182 = dma.done [#allocation9], 32
    $region73: #{tpu_custom_call.1} parent=1 // pred_fallthru
      _
    // Predicated region
    $region74: #{tpu_custom_call.1} parent=1 // pred_check
      _
    $region75: #{tpu_custom_call.1} parent=1 // pred_check_branch
      %184 = sbr.rel (0) target = $region77
    $region76: #{tpu_custom_call.1} parent=1 // pred_region
      %185 = dma.done [#allocation12], 4096
    $region77: #{tpu_custom_call.1} parent=1 // pred_fallthru
      _
    // Predicated region
    $region78: #{tpu_custom_call.1} parent=1 // pred_check
      _
    $region79: #{tpu_custom_call.1} parent=1 // pred_check_branch
      %187 = sbr.rel (0) target = $region81
    $region80: #{tpu_custom_call.1} parent=1 // pred_region
      %188 = dma.done [#allocation12], 32
    $region81: #{tpu_custom_call.1} parent=1 // pred_fallthru
      _
    // Predicated region
    $region82: #{tpu_custom_call.1} parent=1 // pred_check
      _
    $region83: #{tpu_custom_call.1} parent=1 // pred_check_branch
      %190 = sbr.rel (0) target = $region85
    $region84: #{tpu_custom_call.1} parent=1 // pred_region
      %191 = dma.done [#allocation15], 4096
    $region85: #{tpu_custom_call.1} parent=1 // pred_fallthru
      _
    // Predicated region
    $region86: #{tpu_custom_call.1} parent=1 // pred_check
      _
    $region87: #{tpu_custom_call.1} parent=1 // pred_check_branch
      %193 = sbr.rel (0) target = $region89
    $region88: #{tpu_custom_call.1} parent=1 // pred_region
      %194 = dma.done [#allocation15], 32
    $region89: #{tpu_custom_call.1} parent=1 // pred_fallthru
      _
    // Predicated region
    $region90: #{tpu_custom_call.1} parent=1 // pred_check
      _
    $region91: #{tpu_custom_call.1} parent=1 // pred_check_branch
      %196 = sbr.rel (0) target = $region93
    $region92: #{tpu_custom_call.1} parent=1 // pred_region
      %197 = dma.done [#allocation18], 4096
    $region93: #{tpu_custom_call.1} parent=1 // pred_fallthru
      _
    // Predicated region
    $region94: #{tpu_custom_call.1} parent=1 // pred_check
      _
    $region95: #{tpu_custom_call.1} parent=1 // pred_check_branch
      %199 = sbr.rel (0) target = $region97
    $region96: #{tpu_custom_call.1} parent=1 // pred_region
      %200 = dma.done [#allocation18], 32
    $region97: #{tpu_custom_call.1} parent=1 // pred_fallthru
      _
    // Predicated region
    $region98: #{tpu_custom_call.1} parent=1 // pred_check
      _
    $region99: #{tpu_custom_call.1} parent=1 // pred_check_branch
      %202 = sbr.rel (0) target = $region101
    $region100: #{tpu_custom_call.1} parent=1 // pred_region
      %203 = dma.done [#allocation21], 2048
    $region101: #{tpu_custom_call.1} parent=1 // pred_fallthru
      _
    // Predicated region
    $region102: #{tpu_custom_call.1} parent=1 // pred_check
      _
    $region103: #{tpu_custom_call.1} parent=1 // pred_check_branch
      %205 = sbr.rel (0) target = $region105
    $region104: #{tpu_custom_call.1} parent=1 // pred_region
      %206 = dma.done [#allocation21], 16
    $region105: #{tpu_custom_call.1} parent=1 // pred_fallthru
      _
    %v208 = vld [vmem:[#allocation2] sm:$0xff]
    %v209 = vld [vmem:[#allocation2 + $0x8] sm:$0xff]
    %v210 = vld [vmem:[#allocation2 + $0x10] sm:$0xff]
    %v211 = vld [vmem:[#allocation2 + $0x18] sm:$0xff]
    %v212 = vld [vmem:[#allocation2 + $0x20] sm:$0xff]
    %v213 = vld [vmem:[#allocation2 + $0x28] sm:$0xff]
    %v214 = vld [vmem:[#allocation2 + $0x30] sm:$0xff]
    %v215 = vld [vmem:[#allocation2 + $0x38] sm:$0xff]
    %v216 = vld [vmem:[#allocation2 + $0x40] sm:$0xff]
    %v217 = vld [vmem:[#allocation2 + $0x48] sm:$0xff]
    %v218 = vld [vmem:[#allocation2 + $0x50] sm:$0xff]
    %v219 = vld [vmem:[#allocation2 + $0x58] sm:$0xff]
    %v220 = vld [vmem:[#allocation2 + $0x60] sm:$0xff]
    %v221 = vld [vmem:[#allocation2 + $0x68] sm:$0xff]
    %v222 = vld [vmem:[#allocation2 + $0x70] sm:$0xff]
    %v223 = vld [vmem:[#allocation2 + $0x78] sm:$0xff]
    %v224 = vld [vmem:[#allocation2 + $0x80] sm:$0xff]
    %v225 = vld [vmem:[#allocation2 + $0x88] sm:$0xff]
    %v226 = vld [vmem:[#allocation2 + $0x90] sm:$0xff]
    %v227 = vld [vmem:[#allocation2 + $0x98] sm:$0xff]
    %v228 = vld [vmem:[#allocation2 + $0xa0] sm:$0xff]
    %v229 = vld [vmem:[#allocation2 + $0xa8] sm:$0xff]
    %v230 = vld [vmem:[#allocation2 + $0xb0] sm:$0xff]
    %v231 = vld [vmem:[#allocation2 + $0xb8] sm:$0xff]
    %v232 = vpack.c.bf16 %v208, %v208
    %v233 = vpack.c.bf16 %v209, %v209
    %v234 = vpack.c.bf16 %v210, %v210
    %v235 = vpack.c.bf16 %v211, %v211
    %v236 = vpack.c.bf16 %v212, %v212
    %v237 = vpack.c.bf16 %v213, %v213
    %v238 = vpack.c.bf16 %v214, %v214
    %v239 = vpack.c.bf16 %v215, %v215
    %v240 = vpack.c.bf16 %v216, %v216
    %v241 = vpack.c.bf16 %v217, %v217
    %v242 = vpack.c.bf16 %v218, %v218
    %v243 = vpack.c.bf16 %v219, %v219
    %v244 = vpack.c.bf16 %v220, %v220
    %v245 = vpack.c.bf16 %v221, %v221
    %v246 = vpack.c.bf16 %v222, %v222
    %v247 = vpack.c.bf16 %v223, %v223
    %v248 = vpack.c.bf16 %v224, %v224
    %v249 = vpack.c.bf16 %v225, %v225
    %v250 = vpack.c.bf16 %v226, %v226
    %v251 = vpack.c.bf16 %v227, %v227
    %v252 = vpack.c.bf16 %v228, %v228
    %v253 = vpack.c.bf16 %v229, %v229
    %v254 = vpack.c.bf16 %v230, %v230
    %v255 = vpack.c.bf16 %v231, %v231
    %v256 = vld [vmem:[#allocation5] sm:$0xff]
    %v257 = vld [vmem:[#allocation5 + $0x8] sm:$0xff]
    %v258 = vld [vmem:[#allocation5 + $0x10] sm:$0xff]
    %v259 = vld [vmem:[#allocation5 + $0x18] sm:$0xff]
    %v260 = vld [vmem:[#allocation5 + $0x20] sm:$0xff]
    %v261 = vld [vmem:[#allocation5 + $0x28] sm:$0xff]
    %v262 = vld [vmem:[#allocation5 + $0x30] sm:$0xff]
    %v263 = vld [vmem:[#allocation5 + $0x38] sm:$0xff]
    %v264 = vld [vmem:[#allocation5 + $0x40] sm:$0xff]
    %v265 = vld [vmem:[#allocation5 + $0x48] sm:$0xff]
    %v266 = vld [vmem:[#allocation5 + $0x50] sm:$0xff]
    %v267 = vld [vmem:[#allocation5 + $0x58] sm:$0xff]
    %v268 = vld [vmem:[#allocation5 + $0x60] sm:$0xff]
    %v269 = vld [vmem:[#allocation5 + $0x68] sm:$0xff]
    %v270 = vld [vmem:[#allocation5 + $0x70] sm:$0xff]
    %v271 = vld [vmem:[#allocation5 + $0x78] sm:$0xff]
    %v272 = vld [vmem:[#allocation5 + $0x80] sm:$0xff]
    %v273 = vld [vmem:[#allocation5 + $0x88] sm:$0xff]
    %v274 = vld [vmem:[#allocation5 + $0x90] sm:$0xff]
    %v275 = vld [vmem:[#allocation5 + $0x98] sm:$0xff]
    %v276 = vld [vmem:[#allocation5 + $0xa0] sm:$0xff]
    %v277 = vld [vmem:[#allocation5 + $0xa8] sm:$0xff]
    %v278 = vld [vmem:[#allocation5 + $0xb0] sm:$0xff]
    %v279 = vld [vmem:[#allocation5 + $0xb8] sm:$0xff]
    %v280 = vld [vmem:[#allocation5 + $0xc0] sm:$0xff]
    %v281 = vld [vmem:[#allocation5 + $0xc8] sm:$0xff]
    %v282 = vld [vmem:[#allocation5 + $0xd0] sm:$0xff]
    %v283 = vld [vmem:[#allocation5 + $0xd8] sm:$0xff]
    %v284 = vld [vmem:[#allocation5 + $0xe0] sm:$0xff]
    %v285 = vld [vmem:[#allocation5 + $0xe8] sm:$0xff]
    %v286 = vld [vmem:[#allocation5 + $0xf0] sm:$0xff]
    %v287 = vld [vmem:[#allocation5 + $0xf8] sm:$0xff]
    %v288 = vld [vmem:[#allocation5 + $0x100] sm:$0xff]
    %v289 = vld [vmem:[#allocation5 + $0x108] sm:$0xff]
    %v290 = vld [vmem:[#allocation5 + $0x110] sm:$0xff]
    %v291 = vld [vmem:[#allocation5 + $0x118] sm:$0xff]
    %v292 = vld [vmem:[#allocation5 + $0x120] sm:$0xff]
    %v293 = vld [vmem:[#allocation5 + $0x128] sm:$0xff]
    %v294 = vld [vmem:[#allocation5 + $0x130] sm:$0xff]
    %v295 = vld [vmem:[#allocation5 + $0x138] sm:$0xff]
    %v296 = vld [vmem:[#allocation5 + $0x140] sm:$0xff]
    %v297 = vld [vmem:[#allocation5 + $0x148] sm:$0xff]
    %v298 = vld [vmem:[#allocation5 + $0x150] sm:$0xff]
    %v299 = vld [vmem:[#allocation5 + $0x158] sm:$0xff]
    %v300 = vld [vmem:[#allocation5 + $0x160] sm:$0xff]
    %v301 = vld [vmem:[#allocation5 + $0x168] sm:$0xff]
    %v302 = vld [vmem:[#allocation5 + $0x170] sm:$0xff]
    %v303 = vld [vmem:[#allocation5 + $0x178] sm:$0xff]
    %v304 = vld [vmem:[#allocation5 + $0x180] sm:$0xff]
    %v305 = vld [vmem:[#allocation5 + $0x188] sm:$0xff]
    %v306 = vld [vmem:[#allocation5 + $0x190] sm:$0xff]
    %v307 = vld [vmem:[#allocation5 + $0x198] sm:$0xff]
    %v308 = vld [vmem:[#allocation5 + $0x1a0] sm:$0xff]
    %v309 = vld [vmem:[#allocation5 + $0x1a8] sm:$0xff]
    %v310 = vld [vmem:[#allocation5 + $0x1b0] sm:$0xff]
    %v311 = vld [vmem:[#allocation5 + $0x1b8] sm:$0xff]
    %v312 = vld [vmem:[#allocation5 + $0x1c0] sm:$0xff]
    %v313 = vld [vmem:[#allocation5 + $0x1c8] sm:$0xff]
    %v314 = vld [vmem:[#allocation5 + $0x1d0] sm:$0xff]
    %v315 = vld [vmem:[#allocation5 + $0x1d8] sm:$0xff]
    %v316 = vld [vmem:[#allocation5 + $0x1e0] sm:$0xff]
    %v317 = vld [vmem:[#allocation5 + $0x1e8] sm:$0xff]
    %v318 = vld [vmem:[#allocation5 + $0x1f0] sm:$0xff]
    %v319 = vld [vmem:[#allocation5 + $0x1f8] sm:$0xff]
    %v320 = vld [vmem:[#allocation5 + $0x200] sm:$0xff]
    %v321 = vld [vmem:[#allocation5 + $0x208] sm:$0xff]
    %v322 = vld [vmem:[#allocation5 + $0x210] sm:$0xff]
    %v323 = vld [vmem:[#allocation5 + $0x218] sm:$0xff]
    %v324 = vld [vmem:[#allocation5 + $0x220] sm:$0xff]
    %v325 = vld [vmem:[#allocation5 + $0x228] sm:$0xff]
    %v326 = vld [vmem:[#allocation5 + $0x230] sm:$0xff]
    %v327 = vld [vmem:[#allocation5 + $0x238] sm:$0xff]
    %v328 = vld [vmem:[#allocation5 + $0x240] sm:$0xff]
    %v329 = vld [vmem:[#allocation5 + $0x248] sm:$0xff]
    %v330 = vld [vmem:[#allocation5 + $0x250] sm:$0xff]
    %v331 = vld [vmem:[#allocation5 + $0x258] sm:$0xff]
    %v332 = vld [vmem:[#allocation5 + $0x260] sm:$0xff]
    %v333 = vld [vmem:[#allocation5 + $0x268] sm:$0xff]
    %v334 = vld [vmem:[#allocation5 + $0x270] sm:$0xff]
    %v335 = vld [vmem:[#allocation5 + $0x278] sm:$0xff]
    %v336 = vld [vmem:[#allocation5 + $0x280] sm:$0xff]
    %v337 = vld [vmem:[#allocation5 + $0x288] sm:$0xff]
    %v338 = vld [vmem:[#allocation5 + $0x290] sm:$0xff]
    %v339 = vld [vmem:[#allocation5 + $0x298] sm:$0xff]
    %v340 = vld [vmem:[#allocation5 + $0x2a0] sm:$0xff]
    %v341 = vld [vmem:[#allocation5 + $0x2a8] sm:$0xff]
    %v342 = vld [vmem:[#allocation5 + $0x2b0] sm:$0xff]
    %v343 = vld [vmem:[#allocation5 + $0x2b8] sm:$0xff]
    %v344 = vld [vmem:[#allocation5 + $0x2c0] sm:$0xff]
    %v345 = vld [vmem:[#allocation5 + $0x2c8] sm:$0xff]
    %v346 = vld [vmem:[#allocation5 + $0x2d0] sm:$0xff]
    %v347 = vld [vmem:[#allocation5 + $0x2d8] sm:$0xff]
    %v348 = vld [vmem:[#allocation5 + $0x2e0] sm:$0xff]
    %v349 = vld [vmem:[#allocation5 + $0x2e8] sm:$0xff]
    %v350 = vld [vmem:[#allocation5 + $0x2f0] sm:$0xff]
    %v351 = vld [vmem:[#allocation5 + $0x2f8] sm:$0xff]
    %v352 = vld [vmem:[#allocation5 + $0x300] sm:$0xff]
    %v353 = vld [vmem:[#allocation5 + $0x308] sm:$0xff]
    %v354 = vld [vmem:[#allocation5 + $0x310] sm:$0xff]
    %v355 = vld [vmem:[#allocation5 + $0x318] sm:$0xff]
    %v356 = vld [vmem:[#allocation5 + $0x320] sm:$0xff]
    %v357 = vld [vmem:[#allocation5 + $0x328] sm:$0xff]
    %v358 = vld [vmem:[#allocation5 + $0x330] sm:$0xff]
    %v359 = vld [vmem:[#allocation5 + $0x338] sm:$0xff]
    %v360 = vld [vmem:[#allocation5 + $0x340] sm:$0xff]
    %v361 = vld [vmem:[#allocation5 + $0x348] sm:$0xff]
    %v362 = vld [vmem:[#allocation5 + $0x350] sm:$0xff]
    %v363 = vld [vmem:[#allocation5 + $0x358] sm:$0xff]
    %v364 = vld [vmem:[#allocation5 + $0x360] sm:$0xff]
    %v365 = vld [vmem:[#allocation5 + $0x368] sm:$0xff]
    %v366 = vld [vmem:[#allocation5 + $0x370] sm:$0xff]
    %v367 = vld [vmem:[#allocation5 + $0x378] sm:$0xff]
    %v368 = vld [vmem:[#allocation5 + $0x380] sm:$0xff]
    %v369 = vld [vmem:[#allocation5 + $0x388] sm:$0xff]
    %v370 = vld [vmem:[#allocation5 + $0x390] sm:$0xff]
    %v371 = vld [vmem:[#allocation5 + $0x398] sm:$0xff]
    %v372 = vld [vmem:[#allocation5 + $0x3a0] sm:$0xff]
    %v373 = vld [vmem:[#allocation5 + $0x3a8] sm:$0xff]
    %v374 = vld [vmem:[#allocation5 + $0x3b0] sm:$0xff]
    %v375 = vld [vmem:[#allocation5 + $0x3b8] sm:$0xff]
    %v376 = vld [vmem:[#allocation5 + $0x3c0] sm:$0xff]
    %v377 = vld [vmem:[#allocation5 + $0x3c8] sm:$0xff]
    %v378 = vld [vmem:[#allocation5 + $0x3d0] sm:$0xff]
    %v379 = vld [vmem:[#allocation5 + $0x3d8] sm:$0xff]
    %v380 = vld [vmem:[#allocation5 + $0x3e0] sm:$0xff]
    %v381 = vld [vmem:[#allocation5 + $0x3e8] sm:$0xff]
    %v382 = vld [vmem:[#allocation5 + $0x3f0] sm:$0xff]
    %v383 = vld [vmem:[#allocation5 + $0x3f8] sm:$0xff]
    %v384 = vld [vmem:[#allocation5 + $0x400] sm:$0xff]
    %v385 = vld [vmem:[#allocation5 + $0x408] sm:$0xff]
    %v386 = vld [vmem:[#allocation5 + $0x410] sm:$0xff]
    %v387 = vld [vmem:[#allocation5 + $0x418] sm:$0xff]
    %v388 = vld [vmem:[#allocation5 + $0x420] sm:$0xff]
    %v389 = vld [vmem:[#allocation5 + $0x428] sm:$0xff]
    %v390 = vld [vmem:[#allocation5 + $0x430] sm:$0xff]
    %v391 = vld [vmem:[#allocation5 + $0x438] sm:$0xff]
    %v392 = vld [vmem:[#allocation5 + $0x440] sm:$0xff]
    %v393 = vld [vmem:[#allocation5 + $0x448] sm:$0xff]
    %v394 = vld [vmem:[#allocation5 + $0x450] sm:$0xff]
    %v395 = vld [vmem:[#allocation5 + $0x458] sm:$0xff]
    %v396 = vld [vmem:[#allocation5 + $0x460] sm:$0xff]
    %v397 = vld [vmem:[#allocation5 + $0x468] sm:$0xff]
    %v398 = vld [vmem:[#allocation5 + $0x470] sm:$0xff]
    %v399 = vld [vmem:[#allocation5 + $0x478] sm:$0xff]
    %v400 = vld [vmem:[#allocation5 + $0x480] sm:$0xff]
    %v401 = vld [vmem:[#allocation5 + $0x488] sm:$0xff]
    %v402 = vld [vmem:[#allocation5 + $0x490] sm:$0xff]
    %v403 = vld [vmem:[#allocation5 + $0x498] sm:$0xff]
    %v404 = vld [vmem:[#allocation5 + $0x4a0] sm:$0xff]
    %v405 = vld [vmem:[#allocation5 + $0x4a8] sm:$0xff]
    %v406 = vld [vmem:[#allocation5 + $0x4b0] sm:$0xff]
    %v407 = vld [vmem:[#allocation5 + $0x4b8] sm:$0xff]
    %v408 = vld [vmem:[#allocation5 + $0x4c0] sm:$0xff]
    %v409 = vld [vmem:[#allocation5 + $0x4c8] sm:$0xff]
    %v410 = vld [vmem:[#allocation5 + $0x4d0] sm:$0xff]
    %v411 = vld [vmem:[#allocation5 + $0x4d8] sm:$0xff]
    %v412 = vld [vmem:[#allocation5 + $0x4e0] sm:$0xff]
    %v413 = vld [vmem:[#allocation5 + $0x4e8] sm:$0xff]
    %v414 = vld [vmem:[#allocation5 + $0x4f0] sm:$0xff]
    %v415 = vld [vmem:[#allocation5 + $0x4f8] sm:$0xff]
    %v416 = vld [vmem:[#allocation5 + $0x500] sm:$0xff]
    %v417 = vld [vmem:[#allocation5 + $0x508] sm:$0xff]
    %v418 = vld [vmem:[#allocation5 + $0x510] sm:$0xff]
    %v419 = vld [vmem:[#allocation5 + $0x518] sm:$0xff]
    %v420 = vld [vmem:[#allocation5 + $0x520] sm:$0xff]
    %v421 = vld [vmem:[#allocation5 + $0x528] sm:$0xff]
    %v422 = vld [vmem:[#allocation5 + $0x530] sm:$0xff]
    %v423 = vld [vmem:[#allocation5 + $0x538] sm:$0xff]
    %v424 = vld [vmem:[#allocation5 + $0x540] sm:$0xff]
    %v425 = vld [vmem:[#allocation5 + $0x548] sm:$0xff]
    %v426 = vld [vmem:[#allocation5 + $0x550] sm:$0xff]
    %v427 = vld [vmem:[#allocation5 + $0x558] sm:$0xff]
    %v428 = vld [vmem:[#allocation5 + $0x560] sm:$0xff]
    %v429 = vld [vmem:[#allocation5 + $0x568] sm:$0xff]
    %v430 = vld [vmem:[#allocation5 + $0x570] sm:$0xff]
    %v431 = vld [vmem:[#allocation5 + $0x578] sm:$0xff]
    %v432 = vld [vmem:[#allocation5 + $0x580] sm:$0xff]
    %v433 = vld [vmem:[#allocation5 + $0x588] sm:$0xff]
    %v434 = vld [vmem:[#allocation5 + $0x590] sm:$0xff]
    %v435 = vld [vmem:[#allocation5 + $0x598] sm:$0xff]
    %v436 = vld [vmem:[#allocation5 + $0x5a0] sm:$0xff]
    %v437 = vld [vmem:[#allocation5 + $0x5a8] sm:$0xff]
    %v438 = vld [vmem:[#allocation5 + $0x5b0] sm:$0xff]
    %v439 = vld [vmem:[#allocation5 + $0x5b8] sm:$0xff]
    %v440 = vld [vmem:[#allocation5 + $0x5c0] sm:$0xff]
    %v441 = vld [vmem:[#allocation5 + $0x5c8] sm:$0xff]
    %v442 = vld [vmem:[#allocation5 + $0x5d0] sm:$0xff]
    %v443 = vld [vmem:[#allocation5 + $0x5d8] sm:$0xff]
    %v444 = vld [vmem:[#allocation5 + $0x5e0] sm:$0xff]
    %v445 = vld [vmem:[#allocation5 + $0x5e8] sm:$0xff]
    %v446 = vld [vmem:[#allocation5 + $0x5f0] sm:$0xff]
    %v447 = vld [vmem:[#allocation5 + $0x5f8] sm:$0xff]
    %v448 = vld [vmem:[#allocation5 + $0x600] sm:$0xff]
    %v449 = vld [vmem:[#allocation5 + $0x608] sm:$0xff]
    %v450 = vld [vmem:[#allocation5 + $0x610] sm:$0xff]
    %v451 = vld [vmem:[#allocation5 + $0x618] sm:$0xff]
    %v452 = vld [vmem:[#allocation5 + $0x620] sm:$0xff]
    %v453 = vld [vmem:[#allocation5 + $0x628] sm:$0xff]
    %v454 = vld [vmem:[#allocation5 + $0x630] sm:$0xff]
    %v455 = vld [vmem:[#allocation5 + $0x638] sm:$0xff]
    %v456 = vld [vmem:[#allocation5 + $0x640] sm:$0xff]
    %v457 = vld [vmem:[#allocation5 + $0x648] sm:$0xff]
    %v458 = vld [vmem:[#allocation5 + $0x650] sm:$0xff]
    %v459 = vld [vmem:[#allocation5 + $0x658] sm:$0xff]
    %v460 = vld [vmem:[#allocation5 + $0x660] sm:$0xff]
    %v461 = vld [vmem:[#allocation5 + $0x668] sm:$0xff]
    %v462 = vld [vmem:[#allocation5 + $0x670] sm:$0xff]
    %v463 = vld [vmem:[#allocation5 + $0x678] sm:$0xff]
    %v464 = vld [vmem:[#allocation5 + $0x680] sm:$0xff]
    %v465 = vld [vmem:[#allocation5 + $0x688] sm:$0xff]
    %v466 = vld [vmem:[#allocation5 + $0x690] sm:$0xff]
    %v467 = vld [vmem:[#allocation5 + $0x698] sm:$0xff]
    %v468 = vld [vmem:[#allocation5 + $0x6a0] sm:$0xff]
    %v469 = vld [vmem:[#allocation5 + $0x6a8] sm:$0xff]
    %v470 = vld [vmem:[#allocation5 + $0x6b0] sm:$0xff]
    %v471 = vld [vmem:[#allocation5 + $0x6b8] sm:$0xff]
    %v472 = vld [vmem:[#allocation5 + $0x6c0] sm:$0xff]
    %v473 = vld [vmem:[#allocation5 + $0x6c8] sm:$0xff]
    %v474 = vld [vmem:[#allocation5 + $0x6d0] sm:$0xff]
    %v475 = vld [vmem:[#allocation5 + $0x6d8] sm:$0xff]
    %v476 = vld [vmem:[#allocation5 + $0x6e0] sm:$0xff]
    %v477 = vld [vmem:[#allocation5 + $0x6e8] sm:$0xff]
    %v478 = vld [vmem:[#allocation5 + $0x6f0] sm:$0xff]
    %v479 = vld [vmem:[#allocation5 + $0x6f8] sm:$0xff]
    %v480 = vld [vmem:[#allocation5 + $0x700] sm:$0xff]
    %v481 = vld [vmem:[#allocation5 + $0x708] sm:$0xff]
    %v482 = vld [vmem:[#allocation5 + $0x710] sm:$0xff]
    %v483 = vld [vmem:[#allocation5 + $0x718] sm:$0xff]
    %v484 = vld [vmem:[#allocation5 + $0x720] sm:$0xff]
    %v485 = vld [vmem:[#allocation5 + $0x728] sm:$0xff]
    %v486 = vld [vmem:[#allocation5 + $0x730] sm:$0xff]
    %v487 = vld [vmem:[#allocation5 + $0x738] sm:$0xff]
    %v488 = vld [vmem:[#allocation5 + $0x740] sm:$0xff]
    %v489 = vld [vmem:[#allocation5 + $0x748] sm:$0xff]
    %v490 = vld [vmem:[#allocation5 + $0x750] sm:$0xff]
    %v491 = vld [vmem:[#allocation5 + $0x758] sm:$0xff]
    %v492 = vld [vmem:[#allocation5 + $0x760] sm:$0xff]
    %v493 = vld [vmem:[#allocation5 + $0x768] sm:$0xff]
    %v494 = vld [vmem:[#allocation5 + $0x770] sm:$0xff]
    %v495 = vld [vmem:[#allocation5 + $0x778] sm:$0xff]
    %v496 = vld [vmem:[#allocation5 + $0x780] sm:$0xff]
    %v497 = vld [vmem:[#allocation5 + $0x788] sm:$0xff]
    %v498 = vld [vmem:[#allocation5 + $0x790] sm:$0xff]
    %v499 = vld [vmem:[#allocation5 + $0x798] sm:$0xff]
    %v500 = vld [vmem:[#allocation5 + $0x7a0] sm:$0xff]
    %v501 = vld [vmem:[#allocation5 + $0x7a8] sm:$0xff]
    %v502 = vld [vmem:[#allocation5 + $0x7b0] sm:$0xff]
    %v503 = vld [vmem:[#allocation5 + $0x7b8] sm:$0xff]
    %v504 = vld [vmem:[#allocation5 + $0x7c0] sm:$0xff]
    %v505 = vld [vmem:[#allocation5 + $0x7c8] sm:$0xff]
    %v506 = vld [vmem:[#allocation5 + $0x7d0] sm:$0xff]
    %v507 = vld [vmem:[#allocation5 + $0x7d8] sm:$0xff]
    %v508 = vld [vmem:[#allocation5 + $0x7e0] sm:$0xff]
    %v509 = vld [vmem:[#allocation5 + $0x7e8] sm:$0xff]
    %v510 = vld [vmem:[#allocation5 + $0x7f0] sm:$0xff]
    %v511 = vld [vmem:[#allocation5 + $0x7f8] sm:$0xff]
    %v512 = vld [vmem:[#allocation5 + $0x800] sm:$0xff]
    %v513 = vld [vmem:[#allocation5 + $0x808] sm:$0xff]
    %v514 = vld [vmem:[#allocation5 + $0x810] sm:$0xff]
    %v515 = vld [vmem:[#allocation5 + $0x818] sm:$0xff]
    %v516 = vld [vmem:[#allocation5 + $0x820] sm:$0xff]
    %v517 = vld [vmem:[#allocation5 + $0x828] sm:$0xff]
    %v518 = vld [vmem:[#allocation5 + $0x830] sm:$0xff]
    %v519 = vld [vmem:[#allocation5 + $0x838] sm:$0xff]
    %v520 = vld [vmem:[#allocation5 + $0x840] sm:$0xff]
    %v521 = vld [vmem:[#allocation5 + $0x848] sm:$0xff]
    %v522 = vld [vmem:[#allocation5 + $0x850] sm:$0xff]
    %v523 = vld [vmem:[#allocation5 + $0x858] sm:$0xff]
    %v524 = vld [vmem:[#allocation5 + $0x860] sm:$0xff]
    %v525 = vld [vmem:[#allocation5 + $0x868] sm:$0xff]
    %v526 = vld [vmem:[#allocation5 + $0x870] sm:$0xff]
    %v527 = vld [vmem:[#allocation5 + $0x878] sm:$0xff]
    %v528 = vld [vmem:[#allocation5 + $0x880] sm:$0xff]
    %v529 = vld [vmem:[#allocation5 + $0x888] sm:$0xff]
    %v530 = vld [vmem:[#allocation5 + $0x890] sm:$0xff]
    %v531 = vld [vmem:[#allocation5 + $0x898] sm:$0xff]
    %v532 = vld [vmem:[#allocation5 + $0x8a0] sm:$0xff]
    %v533 = vld [vmem:[#allocation5 + $0x8a8] sm:$0xff]
    %v534 = vld [vmem:[#allocation5 + $0x8b0] sm:$0xff]
    %v535 = vld [vmem:[#allocation5 + $0x8b8] sm:$0xff]
    %v536 = vld [vmem:[#allocation5 + $0x8c0] sm:$0xff]
    %v537 = vld [vmem:[#allocation5 + $0x8c8] sm:$0xff]
    %v538 = vld [vmem:[#allocation5 + $0x8d0] sm:$0xff]
    %v539 = vld [vmem:[#allocation5 + $0x8d8] sm:$0xff]
    %v540 = vld [vmem:[#allocation5 + $0x8e0] sm:$0xff]
    %v541 = vld [vmem:[#allocation5 + $0x8e8] sm:$0xff]
    %v542 = vld [vmem:[#allocation5 + $0x8f0] sm:$0xff]
    %v543 = vld [vmem:[#allocation5 + $0x8f8] sm:$0xff]
    %v544 = vld [vmem:[#allocation5 + $0x900] sm:$0xff]
    %v545 = vld [vmem:[#allocation5 + $0x908] sm:$0xff]
    %v546 = vld [vmem:[#allocation5 + $0x910] sm:$0xff]
    %v547 = vld [vmem:[#allocation5 + $0x918] sm:$0xff]
    %v548 = vld [vmem:[#allocation5 + $0x920] sm:$0xff]
    %v549 = vld [vmem:[#allocation5 + $0x928] sm:$0xff]
    %v550 = vld [vmem:[#allocation5 + $0x930] sm:$0xff]
    %v551 = vld [vmem:[#allocation5 + $0x938] sm:$0xff]
    %v552 = vld [vmem:[#allocation5 + $0x940] sm:$0xff]
    %v553 = vld [vmem:[#allocation5 + $0x948] sm:$0xff]
    %v554 = vld [vmem:[#allocation5 + $0x950] sm:$0xff]
    %v555 = vld [vmem:[#allocation5 + $0x958] sm:$0xff]
    %v556 = vld [vmem:[#allocation5 + $0x960] sm:$0xff]
    %v557 = vld [vmem:[#allocation5 + $0x968] sm:$0xff]
    %v558 = vld [vmem:[#allocation5 + $0x970] sm:$0xff]
    %v559 = vld [vmem:[#allocation5 + $0x978] sm:$0xff]
    %v560 = vld [vmem:[#allocation5 + $0x980] sm:$0xff]
    %v561 = vld [vmem:[#allocation5 + $0x988] sm:$0xff]
    %v562 = vld [vmem:[#allocation5 + $0x990] sm:$0xff]
    %v563 = vld [vmem:[#allocation5 + $0x998] sm:$0xff]
    %v564 = vld [vmem:[#allocation5 + $0x9a0] sm:$0xff]
    %v565 = vld [vmem:[#allocation5 + $0x9a8] sm:$0xff]
    %v566 = vld [vmem:[#allocation5 + $0x9b0] sm:$0xff]
    %v567 = vld [vmem:[#allocation5 + $0x9b8] sm:$0xff]
    %v568 = vld [vmem:[#allocation5 + $0x9c0] sm:$0xff]
    %v569 = vld [vmem:[#allocation5 + $0x9c8] sm:$0xff]
    %v570 = vld [vmem:[#allocation5 + $0x9d0] sm:$0xff]
    %v571 = vld [vmem:[#allocation5 + $0x9d8] sm:$0xff]
    %v572 = vld [vmem:[#allocation5 + $0x9e0] sm:$0xff]
    %v573 = vld [vmem:[#allocation5 + $0x9e8] sm:$0xff]
    %v574 = vld [vmem:[#allocation5 + $0x9f0] sm:$0xff]
    %v575 = vld [vmem:[#allocation5 + $0x9f8] sm:$0xff]
    %v576 = vld [vmem:[#allocation5 + $0xa00] sm:$0xff]
    %v577 = vld [vmem:[#allocation5 + $0xa08] sm:$0xff]
    %v578 = vld [vmem:[#allocation5 + $0xa10] sm:$0xff]
    %v579 = vld [vmem:[#allocation5 + $0xa18] sm:$0xff]
    %v580 = vld [vmem:[#allocation5 + $0xa20] sm:$0xff]
    %v581 = vld [vmem:[#allocation5 + $0xa28] sm:$0xff]
    %v582 = vld [vmem:[#allocation5 + $0xa30] sm:$0xff]
    %v583 = vld [vmem:[#allocation5 + $0xa38] sm:$0xff]
    %v584 = vld [vmem:[#allocation5 + $0xa40] sm:$0xff]
    %v585 = vld [vmem:[#allocation5 + $0xa48] sm:$0xff]
    %v586 = vld [vmem:[#allocation5 + $0xa50] sm:$0xff]
    %v587 = vld [vmem:[#allocation5 + $0xa58] sm:$0xff]
    %v588 = vld [vmem:[#allocation5 + $0xa60] sm:$0xff]
    %v589 = vld [vmem:[#allocation5 + $0xa68] sm:$0xff]
    %v590 = vld [vmem:[#allocation5 + $0xa70] sm:$0xff]
    %v591 = vld [vmem:[#allocation5 + $0xa78] sm:$0xff]
    %v592 = vld [vmem:[#allocation5 + $0xa80] sm:$0xff]
    %v593 = vld [vmem:[#allocation5 + $0xa88] sm:$0xff]
    %v594 = vld [vmem:[#allocation5 + $0xa90] sm:$0xff]
    %v595 = vld [vmem:[#allocation5 + $0xa98] sm:$0xff]
    %v596 = vld [vmem:[#allocation5 + $0xaa0] sm:$0xff]
    %v597 = vld [vmem:[#allocation5 + $0xaa8] sm:$0xff]
    %v598 = vld [vmem:[#allocation5 + $0xab0] sm:$0xff]
    %v599 = vld [vmem:[#allocation5 + $0xab8] sm:$0xff]
    %v600 = vld [vmem:[#allocation5 + $0xac0] sm:$0xff]
    %v601 = vld [vmem:[#allocation5 + $0xac8] sm:$0xff]
    %v602 = vld [vmem:[#allocation5 + $0xad0] sm:$0xff]
    %v603 = vld [vmem:[#allocation5 + $0xad8] sm:$0xff]
    %v604 = vld [vmem:[#allocation5 + $0xae0] sm:$0xff]
    %v605 = vld [vmem:[#allocation5 + $0xae8] sm:$0xff]
    %v606 = vld [vmem:[#allocation5 + $0xaf0] sm:$0xff]
    %v607 = vld [vmem:[#allocation5 + $0xaf8] sm:$0xff]
    %v608 = vld [vmem:[#allocation5 + $0xb00] sm:$0xff]
    %v609 = vld [vmem:[#allocation5 + $0xb08] sm:$0xff]
    %v610 = vld [vmem:[#allocation5 + $0xb10] sm:$0xff]
    %v611 = vld [vmem:[#allocation5 + $0xb18] sm:$0xff]
    %v612 = vld [vmem:[#allocation5 + $0xb20] sm:$0xff]
    %v613 = vld [vmem:[#allocation5 + $0xb28] sm:$0xff]
    %v614 = vld [vmem:[#allocation5 + $0xb30] sm:$0xff]
    %v615 = vld [vmem:[#allocation5 + $0xb38] sm:$0xff]
    %v616 = vld [vmem:[#allocation5 + $0xb40] sm:$0xff]
    %v617 = vld [vmem:[#allocation5 + $0xb48] sm:$0xff]
    %v618 = vld [vmem:[#allocation5 + $0xb50] sm:$0xff]
    %v619 = vld [vmem:[#allocation5 + $0xb58] sm:$0xff]
    %v620 = vld [vmem:[#allocation5 + $0xb60] sm:$0xff]
    %v621 = vld [vmem:[#allocation5 + $0xb68] sm:$0xff]
    %v622 = vld [vmem:[#allocation5 + $0xb70] sm:$0xff]
    %v623 = vld [vmem:[#allocation5 + $0xb78] sm:$0xff]
    %v624 = vld [vmem:[#allocation5 + $0xb80] sm:$0xff]
    %v625 = vld [vmem:[#allocation5 + $0xb88] sm:$0xff]
    %v626 = vld [vmem:[#allocation5 + $0xb90] sm:$0xff]
    %v627 = vld [vmem:[#allocation5 + $0xb98] sm:$0xff]
    %v628 = vld [vmem:[#allocation5 + $0xba0] sm:$0xff]
    %v629 = vld [vmem:[#allocation5 + $0xba8] sm:$0xff]
    %v630 = vld [vmem:[#allocation5 + $0xbb0] sm:$0xff]
    %v631 = vld [vmem:[#allocation5 + $0xbb8] sm:$0xff]
    %v632 = vld [vmem:[#allocation5 + $0xbc0] sm:$0xff]
    %v633 = vld [vmem:[#allocation5 + $0xbc8] sm:$0xff]
    %v634 = vld [vmem:[#allocation5 + $0xbd0] sm:$0xff]
    %v635 = vld [vmem:[#allocation5 + $0xbd8] sm:$0xff]
    %v636 = vld [vmem:[#allocation5 + $0xbe0] sm:$0xff]
    %v637 = vld [vmem:[#allocation5 + $0xbe8] sm:$0xff]
    %v638 = vld [vmem:[#allocation5 + $0xbf0] sm:$0xff]
    %v639 = vld [vmem:[#allocation5 + $0xbf8] sm:$0xff]
    %v640 = vld [vmem:[#allocation7] sm:$0x3]
    %v642 = vlaneseq
    %v643 = vshrl.u32 %v642, 7
    %v644 = vsub.s32 0, %v643
    %v645 = vrot.slane %v640, %v644
    %v646 = vlaneseq
    %v647 = vshrl.u32 %v646, 7
    %v648 = vsub.s32 1, %v647
    %v649 = vrot.slane %v640, %v648
    %v1036 = vunpack.c.l.b16 %v256
    %v1037 = vunpack.c.h.b16 %v256
    %v1038 = vunpack.c.l.b16 %v257
    %v1039 = vunpack.c.h.b16 %v257
    %v1040 = vunpack.c.l.b16 %v258
    %v1041 = vunpack.c.h.b16 %v258
    %v1042 = vunpack.c.l.b16 %v259
    %v1043 = vunpack.c.h.b16 %v259
    %v1044 = vunpack.c.l.b16 %v260
    %v1045 = vunpack.c.h.b16 %v260
    %v1046 = vunpack.c.l.b16 %v261
    %v1047 = vunpack.c.h.b16 %v261
    %v1048 = vunpack.c.l.b16 %v262
    %v1049 = vunpack.c.h.b16 %v262
    %v1050 = vunpack.c.l.b16 %v263
    %v1051 = vunpack.c.h.b16 %v263
    %v1052 = vunpack.c.l.b16 %v264
    %v1053 = vunpack.c.h.b16 %v264
    %v1054 = vunpack.c.l.b16 %v265
    %v1055 = vunpack.c.h.b16 %v265
    %v1056 = vunpack.c.l.b16 %v266
    %v1057 = vunpack.c.h.b16 %v266
    %v1058 = vunpack.c.l.b16 %v267
    %v1059 = vunpack.c.h.b16 %v267
    %v1060 = vunpack.c.l.b16 %v268
    %v1061 = vunpack.c.h.b16 %v268
    %v1062 = vunpack.c.l.b16 %v269
    %v1063 = vunpack.c.h.b16 %v269
    %v1064 = vunpack.c.l.b16 %v270
    %v1065 = vunpack.c.h.b16 %v270
    %v1066 = vunpack.c.l.b16 %v271
    %v1067 = vunpack.c.h.b16 %v271
    %v1068 = vunpack.c.l.b16 %v272
    %v1069 = vunpack.c.h.b16 %v272
    %v1070 = vunpack.c.l.b16 %v273
    %v1071 = vunpack.c.h.b16 %v273
    %v1072 = vunpack.c.l.b16 %v274
    %v1073 = vunpack.c.h.b16 %v274
    %v1074 = vunpack.c.l.b16 %v275
    %v1075 = vunpack.c.h.b16 %v275
    %v1076 = vunpack.c.l.b16 %v276
    %v1077 = vunpack.c.h.b16 %v276
    %v1078 = vunpack.c.l.b16 %v277
    %v1079 = vunpack.c.h.b16 %v277
    %v1080 = vunpack.c.l.b16 %v278
    %v1081 = vunpack.c.h.b16 %v278
    %v1082 = vunpack.c.l.b16 %v279
    %v1083 = vunpack.c.h.b16 %v279
    %v1084 = vunpack.c.l.b16 %v280
    %v1085 = vunpack.c.h.b16 %v280
    %v1086 = vunpack.c.l.b16 %v281
    %v1087 = vunpack.c.h.b16 %v281
    %v1088 = vunpack.c.l.b16 %v282
    %v1089 = vunpack.c.h.b16 %v282
    %v1090 = vunpack.c.l.b16 %v283
    %v1091 = vunpack.c.h.b16 %v283
    %v1092 = vunpack.c.l.b16 %v284
    %v1093 = vunpack.c.h.b16 %v284
    %v1094 = vunpack.c.l.b16 %v285
    %v1095 = vunpack.c.h.b16 %v285
    %v1096 = vunpack.c.l.b16 %v286
    %v1097 = vunpack.c.h.b16 %v286
    %v1098 = vunpack.c.l.b16 %v287
    %v1099 = vunpack.c.h.b16 %v287
    %v1100 = vunpack.c.l.b16 %v288
    %v1101 = vunpack.c.h.b16 %v288
    %v1102 = vunpack.c.l.b16 %v289
    %v1103 = vunpack.c.h.b16 %v289
    %v1104 = vunpack.c.l.b16 %v290
    %v1105 = vunpack.c.h.b16 %v290
    %v1106 = vunpack.c.l.b16 %v291
    %v1107 = vunpack.c.h.b16 %v291
    %v1108 = vunpack.c.l.b16 %v292
    %v1109 = vunpack.c.h.b16 %v292
    %v1110 = vunpack.c.l.b16 %v293
    %v1111 = vunpack.c.h.b16 %v293
    %v1112 = vunpack.c.l.b16 %v294
    %v1113 = vunpack.c.h.b16 %v294
    %v1114 = vunpack.c.l.b16 %v295
    %v1115 = vunpack.c.h.b16 %v295
    %v1116 = vunpack.c.l.b16 %v296
    %v1117 = vunpack.c.h.b16 %v296
    %v1118 = vunpack.c.l.b16 %v297
    %v1119 = vunpack.c.h.b16 %v297
    %v1120 = vunpack.c.l.b16 %v298
    %v1121 = vunpack.c.h.b16 %v298
    %v1122 = vunpack.c.l.b16 %v299
    %v1123 = vunpack.c.h.b16 %v299
    %v1124 = vunpack.c.l.b16 %v300
    %v1125 = vunpack.c.h.b16 %v300
    %v1126 = vunpack.c.l.b16 %v301
    %v1127 = vunpack.c.h.b16 %v301
    %v1128 = vunpack.c.l.b16 %v302
    %v1129 = vunpack.c.h.b16 %v302
    %v1130 = vunpack.c.l.b16 %v303
    %v1131 = vunpack.c.h.b16 %v303
    %v1132 = vunpack.c.l.b16 %v304
    %v1133 = vunpack.c.h.b16 %v304
    %v1134 = vunpack.c.l.b16 %v305
    %v1135 = vunpack.c.h.b16 %v305
    %v1136 = vunpack.c.l.b16 %v306
    %v1137 = vunpack.c.h.b16 %v306
    %v1138 = vunpack.c.l.b16 %v307
    %v1139 = vunpack.c.h.b16 %v307
    %v1140 = vunpack.c.l.b16 %v308
    %v1141 = vunpack.c.h.b16 %v308
    %v1142 = vunpack.c.l.b16 %v309
    %v1143 = vunpack.c.h.b16 %v309
    %v1144 = vunpack.c.l.b16 %v310
    %v1145 = vunpack.c.h.b16 %v310
    %v1146 = vunpack.c.l.b16 %v311
    %v1147 = vunpack.c.h.b16 %v311
    %v1148 = vunpack.c.l.b16 %v312
    %v1149 = vunpack.c.h.b16 %v312
    %v1150 = vunpack.c.l.b16 %v313
    %v1151 = vunpack.c.h.b16 %v313
    %v1152 = vunpack.c.l.b16 %v314
    %v1153 = vunpack.c.h.b16 %v314
    %v1154 = vunpack.c.l.b16 %v315
    %v1155 = vunpack.c.h.b16 %v315
    %v1156 = vunpack.c.l.b16 %v316
    %v1157 = vunpack.c.h.b16 %v316
    %v1158 = vunpack.c.l.b16 %v317
    %v1159 = vunpack.c.h.b16 %v317
    %v1160 = vunpack.c.l.b16 %v318
    %v1161 = vunpack.c.h.b16 %v318
    %v1162 = vunpack.c.l.b16 %v319
    %v1163 = vunpack.c.h.b16 %v319
    %v1164 = vunpack.c.l.b16 %v320
    %v1165 = vunpack.c.h.b16 %v320
    %v1166 = vunpack.c.l.b16 %v321
    %v1167 = vunpack.c.h.b16 %v321
    %v1168 = vunpack.c.l.b16 %v322
    %v1169 = vunpack.c.h.b16 %v322
    %v1170 = vunpack.c.l.b16 %v323
    %v1171 = vunpack.c.h.b16 %v323
    %v1172 = vunpack.c.l.b16 %v324
    %v1173 = vunpack.c.h.b16 %v324
    %v1174 = vunpack.c.l.b16 %v325
    %v1175 = vunpack.c.h.b16 %v325
    %v1176 = vunpack.c.l.b16 %v326
    %v1177 = vunpack.c.h.b16 %v326
    %v1178 = vunpack.c.l.b16 %v327
    %v1179 = vunpack.c.h.b16 %v327
    %v1180 = vunpack.c.l.b16 %v328
    %v1181 = vunpack.c.h.b16 %v328
    %v1182 = vunpack.c.l.b16 %v329
    %v1183 = vunpack.c.h.b16 %v329
    %v1184 = vunpack.c.l.b16 %v330
    %v1185 = vunpack.c.h.b16 %v330
    %v1186 = vunpack.c.l.b16 %v331
    %v1187 = vunpack.c.h.b16 %v331
    %v1188 = vunpack.c.l.b16 %v332
    %v1189 = vunpack.c.h.b16 %v332
    %v1190 = vunpack.c.l.b16 %v333
    %v1191 = vunpack.c.h.b16 %v333
    %v1192 = vunpack.c.l.b16 %v334
    %v1193 = vunpack.c.h.b16 %v334
    %v1194 = vunpack.c.l.b16 %v335
    %v1195 = vunpack.c.h.b16 %v335
    %v1196 = vunpack.c.l.b16 %v336
    %v1197 = vunpack.c.h.b16 %v336
    %v1198 = vunpack.c.l.b16 %v337
    %v1199 = vunpack.c.h.b16 %v337
    %v1200 = vunpack.c.l.b16 %v338
    %v1201 = vunpack.c.h.b16 %v338
    %v1202 = vunpack.c.l.b16 %v339
    %v1203 = vunpack.c.h.b16 %v339
    %v1204 = vunpack.c.l.b16 %v340
    %v1205 = vunpack.c.h.b16 %v340
    %v1206 = vunpack.c.l.b16 %v341
    %v1207 = vunpack.c.h.b16 %v341
    %v1208 = vunpack.c.l.b16 %v342
    %v1209 = vunpack.c.h.b16 %v342
    %v1210 = vunpack.c.l.b16 %v343
    %v1211 = vunpack.c.h.b16 %v343
    %v1212 = vunpack.c.l.b16 %v344
    %v1213 = vunpack.c.h.b16 %v344
    %v1214 = vunpack.c.l.b16 %v345
    %v1215 = vunpack.c.h.b16 %v345
    %v1216 = vunpack.c.l.b16 %v346
    %v1217 = vunpack.c.h.b16 %v346
    %v1218 = vunpack.c.l.b16 %v347
    %v1219 = vunpack.c.h.b16 %v347
    %v1220 = vunpack.c.l.b16 %v348
    %v1221 = vunpack.c.h.b16 %v348
    %v1222 = vunpack.c.l.b16 %v349
    %v1223 = vunpack.c.h.b16 %v349
    %v1224 = vunpack.c.l.b16 %v350
    %v1225 = vunpack.c.h.b16 %v350
    %v1226 = vunpack.c.l.b16 %v351
    %v1227 = vunpack.c.h.b16 %v351
    %v1228 = vunpack.c.l.b16 %v352
    %v1229 = vunpack.c.h.b16 %v352
    %v1230 = vunpack.c.l.b16 %v353
    %v1231 = vunpack.c.h.b16 %v353
    %v1232 = vunpack.c.l.b16 %v354
    %v1233 = vunpack.c.h.b16 %v354
    %v1234 = vunpack.c.l.b16 %v355
    %v1235 = vunpack.c.h.b16 %v355
    %v1236 = vunpack.c.l.b16 %v356
    %v1237 = vunpack.c.h.b16 %v356
    %v1238 = vunpack.c.l.b16 %v357
    %v1239 = vunpack.c.h.b16 %v357
    %v1240 = vunpack.c.l.b16 %v358
    %v1241 = vunpack.c.h.b16 %v358
    %v1242 = vunpack.c.l.b16 %v359
    %v1243 = vunpack.c.h.b16 %v359
    %v1244 = vunpack.c.l.b16 %v360
    %v1245 = vunpack.c.h.b16 %v360
    %v1246 = vunpack.c.l.b16 %v361
    %v1247 = vunpack.c.h.b16 %v361
    %v1248 = vunpack.c.l.b16 %v362
    %v1249 = vunpack.c.h.b16 %v362
    %v1250 = vunpack.c.l.b16 %v363
    %v1251 = vunpack.c.h.b16 %v363
    %v1252 = vunpack.c.l.b16 %v364
    %v1253 = vunpack.c.h.b16 %v364
    %v1254 = vunpack.c.l.b16 %v365
    %v1255 = vunpack.c.h.b16 %v365
    %v1256 = vunpack.c.l.b16 %v366
    %v1257 = vunpack.c.h.b16 %v366
    %v1258 = vunpack.c.l.b16 %v367
    %v1259 = vunpack.c.h.b16 %v367
    %v1260 = vunpack.c.l.b16 %v368
    %v1261 = vunpack.c.h.b16 %v368
    %v1262 = vunpack.c.l.b16 %v369
    %v1263 = vunpack.c.h.b16 %v369
    %v1264 = vunpack.c.l.b16 %v370
    %v1265 = vunpack.c.h.b16 %v370
    %v1266 = vunpack.c.l.b16 %v371
    %v1267 = vunpack.c.h.b16 %v371
    %v1268 = vunpack.c.l.b16 %v372
    %v1269 = vunpack.c.h.b16 %v372
    %v1270 = vunpack.c.l.b16 %v373
    %v1271 = vunpack.c.h.b16 %v373
    %v1272 = vunpack.c.l.b16 %v374
    %v1273 = vunpack.c.h.b16 %v374
    %v1274 = vunpack.c.l.b16 %v375
    %v1275 = vunpack.c.h.b16 %v375
    %v1276 = vunpack.c.l.b16 %v376
    %v1277 = vunpack.c.h.b16 %v376
    %v1278 = vunpack.c.l.b16 %v377
    %v1279 = vunpack.c.h.b16 %v377
    %v1280 = vunpack.c.l.b16 %v378
    %v1281 = vunpack.c.h.b16 %v378
    %v1282 = vunpack.c.l.b16 %v379
    %v1283 = vunpack.c.h.b16 %v379
    %v1284 = vunpack.c.l.b16 %v380
    %v1285 = vunpack.c.h.b16 %v380
    %v1286 = vunpack.c.l.b16 %v381
    %v1287 = vunpack.c.h.b16 %v381
    %v1288 = vunpack.c.l.b16 %v382
    %v1289 = vunpack.c.h.b16 %v382
    %v1290 = vunpack.c.l.b16 %v383
    %v1291 = vunpack.c.h.b16 %v383
    %v1292 = vunpack.c.l.b16 %v384
    %v1293 = vunpack.c.h.b16 %v384
    %v1294 = vunpack.c.l.b16 %v385
    %v1295 = vunpack.c.h.b16 %v385
    %v1296 = vunpack.c.l.b16 %v386
    %v1297 = vunpack.c.h.b16 %v386
    %v1298 = vunpack.c.l.b16 %v387
    %v1299 = vunpack.c.h.b16 %v387
    %v1300 = vunpack.c.l.b16 %v388
    %v1301 = vunpack.c.h.b16 %v388
    %v1302 = vunpack.c.l.b16 %v389
    %v1303 = vunpack.c.h.b16 %v389
    %v1304 = vunpack.c.l.b16 %v390
    %v1305 = vunpack.c.h.b16 %v390
    %v1306 = vunpack.c.l.b16 %v391
    %v1307 = vunpack.c.h.b16 %v391
    %v1308 = vunpack.c.l.b16 %v392
    %v1309 = vunpack.c.h.b16 %v392
    %v1310 = vunpack.c.l.b16 %v393
    %v1311 = vunpack.c.h.b16 %v393
    %v1312 = vunpack.c.l.b16 %v394
    %v1313 = vunpack.c.h.b16 %v394
    %v1314 = vunpack.c.l.b16 %v395
    %v1315 = vunpack.c.h.b16 %v395
    %v1316 = vunpack.c.l.b16 %v396
    %v1317 = vunpack.c.h.b16 %v396
    %v1318 = vunpack.c.l.b16 %v397
    %v1319 = vunpack.c.h.b16 %v397
    %v1320 = vunpack.c.l.b16 %v398
    %v1321 = vunpack.c.h.b16 %v398
    %v1322 = vunpack.c.l.b16 %v399
    %v1323 = vunpack.c.h.b16 %v399
    %v1324 = vunpack.c.l.b16 %v400
    %v1325 = vunpack.c.h.b16 %v400
    %v1326 = vunpack.c.l.b16 %v401
    %v1327 = vunpack.c.h.b16 %v401
    %v1328 = vunpack.c.l.b16 %v402
    %v1329 = vunpack.c.h.b16 %v402
    %v1330 = vunpack.c.l.b16 %v403
    %v1331 = vunpack.c.h.b16 %v403
    %v1332 = vunpack.c.l.b16 %v404
    %v1333 = vunpack.c.h.b16 %v404
    %v1334 = vunpack.c.l.b16 %v405
    %v1335 = vunpack.c.h.b16 %v405
    %v1336 = vunpack.c.l.b16 %v406
    %v1337 = vunpack.c.h.b16 %v406
    %v1338 = vunpack.c.l.b16 %v407
    %v1339 = vunpack.c.h.b16 %v407
    %v1340 = vunpack.c.l.b16 %v408
    %v1341 = vunpack.c.h.b16 %v408
    %v1342 = vunpack.c.l.b16 %v409
    %v1343 = vunpack.c.h.b16 %v409
    %v1344 = vunpack.c.l.b16 %v410
    %v1345 = vunpack.c.h.b16 %v410
    %v1346 = vunpack.c.l.b16 %v411
    %v1347 = vunpack.c.h.b16 %v411
    %v1348 = vunpack.c.l.b16 %v412
    %v1349 = vunpack.c.h.b16 %v412
    %v1350 = vunpack.c.l.b16 %v413
    %v1351 = vunpack.c.h.b16 %v413
    %v1352 = vunpack.c.l.b16 %v414
    %v1353 = vunpack.c.h.b16 %v414
    %v1354 = vunpack.c.l.b16 %v415
    %v1355 = vunpack.c.h.b16 %v415
    %v1356 = vunpack.c.l.b16 %v416
    %v1357 = vunpack.c.h.b16 %v416
    %v1358 = vunpack.c.l.b16 %v417
    %v1359 = vunpack.c.h.b16 %v417
    %v1360 = vunpack.c.l.b16 %v418
    %v1361 = vunpack.c.h.b16 %v418
    %v1362 = vunpack.c.l.b16 %v419
    %v1363 = vunpack.c.h.b16 %v419
    %v1364 = vunpack.c.l.b16 %v420
    %v1365 = vunpack.c.h.b16 %v420
    %v1366 = vunpack.c.l.b16 %v421
    %v1367 = vunpack.c.h.b16 %v421
    %v1368 = vunpack.c.l.b16 %v422
    %v1369 = vunpack.c.h.b16 %v422
    %v1370 = vunpack.c.l.b16 %v423
    %v1371 = vunpack.c.h.b16 %v423
    %v1372 = vunpack.c.l.b16 %v424
    %v1373 = vunpack.c.h.b16 %v424
    %v1374 = vunpack.c.l.b16 %v425
    %v1375 = vunpack.c.h.b16 %v425
    %v1376 = vunpack.c.l.b16 %v426
    %v1377 = vunpack.c.h.b16 %v426
    %v1378 = vunpack.c.l.b16 %v427
    %v1379 = vunpack.c.h.b16 %v427
    %v1380 = vunpack.c.l.b16 %v428
    %v1381 = vunpack.c.h.b16 %v428
    %v1382 = vunpack.c.l.b16 %v429
    %v1383 = vunpack.c.h.b16 %v429
    %v1384 = vunpack.c.l.b16 %v430
    %v1385 = vunpack.c.h.b16 %v430
    %v1386 = vunpack.c.l.b16 %v431
    %v1387 = vunpack.c.h.b16 %v431
    %v1388 = vunpack.c.l.b16 %v432
    %v1389 = vunpack.c.h.b16 %v432
    %v1390 = vunpack.c.l.b16 %v433
    %v1391 = vunpack.c.h.b16 %v433
    %v1392 = vunpack.c.l.b16 %v434
    %v1393 = vunpack.c.h.b16 %v434
    %v1394 = vunpack.c.l.b16 %v435
    %v1395 = vunpack.c.h.b16 %v435
    %v1396 = vunpack.c.l.b16 %v436
    %v1397 = vunpack.c.h.b16 %v436
    %v1398 = vunpack.c.l.b16 %v437
    %v1399 = vunpack.c.h.b16 %v437
    %v1400 = vunpack.c.l.b16 %v438
    %v1401 = vunpack.c.h.b16 %v438
    %v1402 = vunpack.c.l.b16 %v439
    %v1403 = vunpack.c.h.b16 %v439
    %v1404 = vunpack.c.l.b16 %v440
    %v1405 = vunpack.c.h.b16 %v440
    %v1406 = vunpack.c.l.b16 %v441
    %v1407 = vunpack.c.h.b16 %v441
    %v1408 = vunpack.c.l.b16 %v442
    %v1409 = vunpack.c.h.b16 %v442
    %v1410 = vunpack.c.l.b16 %v443
    %v1411 = vunpack.c.h.b16 %v443
    %v1412 = vunpack.c.l.b16 %v444
    %v1413 = vunpack.c.h.b16 %v444
    %v1414 = vunpack.c.l.b16 %v445
    %v1415 = vunpack.c.h.b16 %v445
    %v1416 = vunpack.c.l.b16 %v446
    %v1417 = vunpack.c.h.b16 %v446
    %v1418 = vunpack.c.l.b16 %v447
    %v1419 = vunpack.c.h.b16 %v447
    %v1420 = vunpack.c.l.b16 %v448
    %v1421 = vunpack.c.h.b16 %v448
    %v1422 = vunpack.c.l.b16 %v449
    %v1423 = vunpack.c.h.b16 %v449
    %v1424 = vunpack.c.l.b16 %v450
    %v1425 = vunpack.c.h.b16 %v450
    %v1426 = vunpack.c.l.b16 %v451
    %v1427 = vunpack.c.h.b16 %v451
    %v1428 = vunpack.c.l.b16 %v452
    %v1429 = vunpack.c.h.b16 %v452
    %v1430 = vunpack.c.l.b16 %v453
    %v1431 = vunpack.c.h.b16 %v453
    %v1432 = vunpack.c.l.b16 %v454
    %v1433 = vunpack.c.h.b16 %v454
    %v1434 = vunpack.c.l.b16 %v455
    %v1435 = vunpack.c.h.b16 %v455
    %v1436 = vunpack.c.l.b16 %v456
    %v1437 = vunpack.c.h.b16 %v456
    %v1438 = vunpack.c.l.b16 %v457
    %v1439 = vunpack.c.h.b16 %v457
    %v1440 = vunpack.c.l.b16 %v458
    %v1441 = vunpack.c.h.b16 %v458
    %v1442 = vunpack.c.l.b16 %v459
    %v1443 = vunpack.c.h.b16 %v459
    %v1444 = vunpack.c.l.b16 %v460
    %v1445 = vunpack.c.h.b16 %v460
    %v1446 = vunpack.c.l.b16 %v461
    %v1447 = vunpack.c.h.b16 %v461
    %v1448 = vunpack.c.l.b16 %v462
    %v1449 = vunpack.c.h.b16 %v462
    %v1450 = vunpack.c.l.b16 %v463
    %v1451 = vunpack.c.h.b16 %v463
    %v1452 = vunpack.c.l.b16 %v464
    %v1453 = vunpack.c.h.b16 %v464
    %v1454 = vunpack.c.l.b16 %v465
    %v1455 = vunpack.c.h.b16 %v465
    %v1456 = vunpack.c.l.b16 %v466
    %v1457 = vunpack.c.h.b16 %v466
    %v1458 = vunpack.c.l.b16 %v467
    %v1459 = vunpack.c.h.b16 %v467
    %v1460 = vunpack.c.l.b16 %v468
    %v1461 = vunpack.c.h.b16 %v468
    %v1462 = vunpack.c.l.b16 %v469
    %v1463 = vunpack.c.h.b16 %v469
    %v1464 = vunpack.c.l.b16 %v470
    %v1465 = vunpack.c.h.b16 %v470
    %v1466 = vunpack.c.l.b16 %v471
    %v1467 = vunpack.c.h.b16 %v471
    %v1468 = vunpack.c.l.b16 %v472
    %v1469 = vunpack.c.h.b16 %v472
    %v1470 = vunpack.c.l.b16 %v473
    %v1471 = vunpack.c.h.b16 %v473
    %v1472 = vunpack.c.l.b16 %v474
    %v1473 = vunpack.c.h.b16 %v474
    %v1474 = vunpack.c.l.b16 %v475
    %v1475 = vunpack.c.h.b16 %v475
    %v1476 = vunpack.c.l.b16 %v476
    %v1477 = vunpack.c.h.b16 %v476
    %v1478 = vunpack.c.l.b16 %v477
    %v1479 = vunpack.c.h.b16 %v477
    %v1480 = vunpack.c.l.b16 %v478
    %v1481 = vunpack.c.h.b16 %v478
    %v1482 = vunpack.c.l.b16 %v479
    %v1483 = vunpack.c.h.b16 %v479
    %v1484 = vunpack.c.l.b16 %v480
    %v1485 = vunpack.c.h.b16 %v480
    %v1486 = vunpack.c.l.b16 %v481
    %v1487 = vunpack.c.h.b16 %v481
    %v1488 = vunpack.c.l.b16 %v482
    %v1489 = vunpack.c.h.b16 %v482
    %v1490 = vunpack.c.l.b16 %v483
    %v1491 = vunpack.c.h.b16 %v483
    %v1492 = vunpack.c.l.b16 %v484
    %v1493 = vunpack.c.h.b16 %v484
    %v1494 = vunpack.c.l.b16 %v485
    %v1495 = vunpack.c.h.b16 %v485
    %v1496 = vunpack.c.l.b16 %v486
    %v1497 = vunpack.c.h.b16 %v486
    %v1498 = vunpack.c.l.b16 %v487
    %v1499 = vunpack.c.h.b16 %v487
    %v1500 = vunpack.c.l.b16 %v488
    %v1501 = vunpack.c.h.b16 %v488
    %v1502 = vunpack.c.l.b16 %v489
    %v1503 = vunpack.c.h.b16 %v489
    %v1504 = vunpack.c.l.b16 %v490
    %v1505 = vunpack.c.h.b16 %v490
    %v1506 = vunpack.c.l.b16 %v491
    %v1507 = vunpack.c.h.b16 %v491
    %v1508 = vunpack.c.l.b16 %v492
    %v1509 = vunpack.c.h.b16 %v492
    %v1510 = vunpack.c.l.b16 %v493
    %v1511 = vunpack.c.h.b16 %v493
    %v1512 = vunpack.c.l.b16 %v494
    %v1513 = vunpack.c.h.b16 %v494
    %v1514 = vunpack.c.l.b16 %v495
    %v1515 = vunpack.c.h.b16 %v495
    %v1516 = vunpack.c.l.b16 %v496
    %v1517 = vunpack.c.h.b16 %v496
    %v1518 = vunpack.c.l.b16 %v497
    %v1519 = vunpack.c.h.b16 %v497
    %v1520 = vunpack.c.l.b16 %v498
    %v1521 = vunpack.c.h.b16 %v498
    %v1522 = vunpack.c.l.b16 %v499
    %v1523 = vunpack.c.h.b16 %v499
    %v1524 = vunpack.c.l.b16 %v500
    %v1525 = vunpack.c.h.b16 %v500
    %v1526 = vunpack.c.l.b16 %v501
    %v1527 = vunpack.c.h.b16 %v501
    %v1528 = vunpack.c.l.b16 %v502
    %v1529 = vunpack.c.h.b16 %v502
    %v1530 = vunpack.c.l.b16 %v503
    %v1531 = vunpack.c.h.b16 %v503
    %v1532 = vunpack.c.l.b16 %v504
    %v1533 = vunpack.c.h.b16 %v504
    %v1534 = vunpack.c.l.b16 %v505
    %v1535 = vunpack.c.h.b16 %v505
    %v1536 = vunpack.c.l.b16 %v506
    %v1537 = vunpack.c.h.b16 %v506
    %v1538 = vunpack.c.l.b16 %v507
    %v1539 = vunpack.c.h.b16 %v507
    %v1540 = vunpack.c.l.b16 %v508
    %v1541 = vunpack.c.h.b16 %v508
    %v1542 = vunpack.c.l.b16 %v509
    %v1543 = vunpack.c.h.b16 %v509
    %v1544 = vunpack.c.l.b16 %v510
    %v1545 = vunpack.c.h.b16 %v510
    %v1546 = vunpack.c.l.b16 %v511
    %v1547 = vunpack.c.h.b16 %v511
    %v1548 = vunpack.c.l.b16 %v512
    %v1549 = vunpack.c.h.b16 %v512
    %v1550 = vunpack.c.l.b16 %v513
    %v1551 = vunpack.c.h.b16 %v513
    %v1552 = vunpack.c.l.b16 %v514
    %v1553 = vunpack.c.h.b16 %v514
    %v1554 = vunpack.c.l.b16 %v515
    %v1555 = vunpack.c.h.b16 %v515
    %v1556 = vunpack.c.l.b16 %v516
    %v1557 = vunpack.c.h.b16 %v516
    %v1558 = vunpack.c.l.b16 %v517
    %v1559 = vunpack.c.h.b16 %v517
    %v1560 = vunpack.c.l.b16 %v518
    %v1561 = vunpack.c.h.b16 %v518
    %v1562 = vunpack.c.l.b16 %v519
    %v1563 = vunpack.c.h.b16 %v519
    %v1564 = vunpack.c.l.b16 %v520
    %v1565 = vunpack.c.h.b16 %v520
    %v1566 = vunpack.c.l.b16 %v521
    %v1567 = vunpack.c.h.b16 %v521
    %v1568 = vunpack.c.l.b16 %v522
    %v1569 = vunpack.c.h.b16 %v522
    %v1570 = vunpack.c.l.b16 %v523
    %v1571 = vunpack.c.h.b16 %v523
    %v1572 = vunpack.c.l.b16 %v524
    %v1573 = vunpack.c.h.b16 %v524
    %v1574 = vunpack.c.l.b16 %v525
    %v1575 = vunpack.c.h.b16 %v525
    %v1576 = vunpack.c.l.b16 %v526
    %v1577 = vunpack.c.h.b16 %v526
    %v1578 = vunpack.c.l.b16 %v527
    %v1579 = vunpack.c.h.b16 %v527
    %v1580 = vunpack.c.l.b16 %v528
    %v1581 = vunpack.c.h.b16 %v528
    %v1582 = vunpack.c.l.b16 %v529
    %v1583 = vunpack.c.h.b16 %v529
    %v1584 = vunpack.c.l.b16 %v530
    %v1585 = vunpack.c.h.b16 %v530
    %v1586 = vunpack.c.l.b16 %v531
    %v1587 = vunpack.c.h.b16 %v531
    %v1588 = vunpack.c.l.b16 %v532
    %v1589 = vunpack.c.h.b16 %v532
    %v1590 = vunpack.c.l.b16 %v533
    %v1591 = vunpack.c.h.b16 %v533
    %v1592 = vunpack.c.l.b16 %v534
    %v1593 = vunpack.c.h.b16 %v534
    %v1594 = vunpack.c.l.b16 %v535
    %v1595 = vunpack.c.h.b16 %v535
    %v1596 = vunpack.c.l.b16 %v536
    %v1597 = vunpack.c.h.b16 %v536
    %v1598 = vunpack.c.l.b16 %v537
    %v1599 = vunpack.c.h.b16 %v537
    %v1600 = vunpack.c.l.b16 %v538
    %v1601 = vunpack.c.h.b16 %v538
    %v1602 = vunpack.c.l.b16 %v539
    %v1603 = vunpack.c.h.b16 %v539
    %v1604 = vunpack.c.l.b16 %v540
    %v1605 = vunpack.c.h.b16 %v540
    %v1606 = vunpack.c.l.b16 %v541
    %v1607 = vunpack.c.h.b16 %v541
    %v1608 = vunpack.c.l.b16 %v542
    %v1609 = vunpack.c.h.b16 %v542
    %v1610 = vunpack.c.l.b16 %v543
    %v1611 = vunpack.c.h.b16 %v543
    %v1612 = vunpack.c.l.b16 %v544
    %v1613 = vunpack.c.h.b16 %v544
    %v1614 = vunpack.c.l.b16 %v545
    %v1615 = vunpack.c.h.b16 %v545
    %v1616 = vunpack.c.l.b16 %v546
    %v1617 = vunpack.c.h.b16 %v546
    %v1618 = vunpack.c.l.b16 %v547
    %v1619 = vunpack.c.h.b16 %v547
    %v1620 = vunpack.c.l.b16 %v548
    %v1621 = vunpack.c.h.b16 %v548
    %v1622 = vunpack.c.l.b16 %v549
    %v1623 = vunpack.c.h.b16 %v549
    %v1624 = vunpack.c.l.b16 %v550
    %v1625 = vunpack.c.h.b16 %v550
    %v1626 = vunpack.c.l.b16 %v551
    %v1627 = vunpack.c.h.b16 %v551
    %v1628 = vunpack.c.l.b16 %v552
    %v1629 = vunpack.c.h.b16 %v552
    %v1630 = vunpack.c.l.b16 %v553
    %v1631 = vunpack.c.h.b16 %v553
    %v1632 = vunpack.c.l.b16 %v554
    %v1633 = vunpack.c.h.b16 %v554
    %v1634 = vunpack.c.l.b16 %v555
    %v1635 = vunpack.c.h.b16 %v555
    %v1636 = vunpack.c.l.b16 %v556
    %v1637 = vunpack.c.h.b16 %v556
    %v1638 = vunpack.c.l.b16 %v557
    %v1639 = vunpack.c.h.b16 %v557
    %v1640 = vunpack.c.l.b16 %v558
    %v1641 = vunpack.c.h.b16 %v558
    %v1642 = vunpack.c.l.b16 %v559
    %v1643 = vunpack.c.h.b16 %v559
    %v1644 = vunpack.c.l.b16 %v560
    %v1645 = vunpack.c.h.b16 %v560
    %v1646 = vunpack.c.l.b16 %v561
    %v1647 = vunpack.c.h.b16 %v561
    %v1648 = vunpack.c.l.b16 %v562
    %v1649 = vunpack.c.h.b16 %v562
    %v1650 = vunpack.c.l.b16 %v563
    %v1651 = vunpack.c.h.b16 %v563
    %v1652 = vunpack.c.l.b16 %v564
    %v1653 = vunpack.c.h.b16 %v564
    %v1654 = vunpack.c.l.b16 %v565
    %v1655 = vunpack.c.h.b16 %v565
    %v1656 = vunpack.c.l.b16 %v566
    %v1657 = vunpack.c.h.b16 %v566
    %v1658 = vunpack.c.l.b16 %v567
    %v1659 = vunpack.c.h.b16 %v567
    %v1660 = vunpack.c.l.b16 %v568
    %v1661 = vunpack.c.h.b16 %v568
    %v1662 = vunpack.c.l.b16 %v569
    %v1663 = vunpack.c.h.b16 %v569
    %v1664 = vunpack.c.l.b16 %v570
    %v1665 = vunpack.c.h.b16 %v570
    %v1666 = vunpack.c.l.b16 %v571
    %v1667 = vunpack.c.h.b16 %v571
    %v1668 = vunpack.c.l.b16 %v572
    %v1669 = vunpack.c.h.b16 %v572
    %v1670 = vunpack.c.l.b16 %v573
    %v1671 = vunpack.c.h.b16 %v573
    %v1672 = vunpack.c.l.b16 %v574
    %v1673 = vunpack.c.h.b16 %v574
    %v1674 = vunpack.c.l.b16 %v575
    %v1675 = vunpack.c.h.b16 %v575
    %v1676 = vunpack.c.l.b16 %v576
    %v1677 = vunpack.c.h.b16 %v576
    %v1678 = vunpack.c.l.b16 %v577
    %v1679 = vunpack.c.h.b16 %v577
    %v1680 = vunpack.c.l.b16 %v578
    %v1681 = vunpack.c.h.b16 %v578
    %v1682 = vunpack.c.l.b16 %v579
    %v1683 = vunpack.c.h.b16 %v579
    %v1684 = vunpack.c.l.b16 %v580
    %v1685 = vunpack.c.h.b16 %v580
    %v1686 = vunpack.c.l.b16 %v581
    %v1687 = vunpack.c.h.b16 %v581
    %v1688 = vunpack.c.l.b16 %v582
    %v1689 = vunpack.c.h.b16 %v582
    %v1690 = vunpack.c.l.b16 %v583
    %v1691 = vunpack.c.h.b16 %v583
    %v1692 = vunpack.c.l.b16 %v584
    %v1693 = vunpack.c.h.b16 %v584
    %v1694 = vunpack.c.l.b16 %v585
    %v1695 = vunpack.c.h.b16 %v585
    %v1696 = vunpack.c.l.b16 %v586
    %v1697 = vunpack.c.h.b16 %v586
    %v1698 = vunpack.c.l.b16 %v587
    %v1699 = vunpack.c.h.b16 %v587
    %v1700 = vunpack.c.l.b16 %v588
    %v1701 = vunpack.c.h.b16 %v588
    %v1702 = vunpack.c.l.b16 %v589
    %v1703 = vunpack.c.h.b16 %v589
    %v1704 = vunpack.c.l.b16 %v590
    %v1705 = vunpack.c.h.b16 %v590
    %v1706 = vunpack.c.l.b16 %v591
    %v1707 = vunpack.c.h.b16 %v591
    %v1708 = vunpack.c.l.b16 %v592
    %v1709 = vunpack.c.h.b16 %v592
    %v1710 = vunpack.c.l.b16 %v593
    %v1711 = vunpack.c.h.b16 %v593
    %v1712 = vunpack.c.l.b16 %v594
    %v1713 = vunpack.c.h.b16 %v594
    %v1714 = vunpack.c.l.b16 %v595
    %v1715 = vunpack.c.h.b16 %v595
    %v1716 = vunpack.c.l.b16 %v596
    %v1717 = vunpack.c.h.b16 %v596
    %v1718 = vunpack.c.l.b16 %v597
    %v1719 = vunpack.c.h.b16 %v597
    %v1720 = vunpack.c.l.b16 %v598
    %v1721 = vunpack.c.h.b16 %v598
    %v1722 = vunpack.c.l.b16 %v599
    %v1723 = vunpack.c.h.b16 %v599
    %v1724 = vunpack.c.l.b16 %v600
    %v1725 = vunpack.c.h.b16 %v600
    %v1726 = vunpack.c.l.b16 %v601
    %v1727 = vunpack.c.h.b16 %v601
    %v1728 = vunpack.c.l.b16 %v602
    %v1729 = vunpack.c.h.b16 %v602
    %v1730 = vunpack.c.l.b16 %v603
    %v1731 = vunpack.c.h.b16 %v603
    %v1732 = vunpack.c.l.b16 %v604
    %v1733 = vunpack.c.h.b16 %v604
    %v1734 = vunpack.c.l.b16 %v605
    %v1735 = vunpack.c.h.b16 %v605
    %v1736 = vunpack.c.l.b16 %v606
    %v1737 = vunpack.c.h.b16 %v606
    %v1738 = vunpack.c.l.b16 %v607
    %v1739 = vunpack.c.h.b16 %v607
    %v1740 = vunpack.c.l.b16 %v608
    %v1741 = vunpack.c.h.b16 %v608
    %v1742 = vunpack.c.l.b16 %v609
    %v1743 = vunpack.c.h.b16 %v609
    %v1744 = vunpack.c.l.b16 %v610
    %v1745 = vunpack.c.h.b16 %v610
    %v1746 = vunpack.c.l.b16 %v611
    %v1747 = vunpack.c.h.b16 %v611
    %v1748 = vunpack.c.l.b16 %v612
    %v1749 = vunpack.c.h.b16 %v612
    %v1750 = vunpack.c.l.b16 %v613
    %v1751 = vunpack.c.h.b16 %v613
    %v1752 = vunpack.c.l.b16 %v614
    %v1753 = vunpack.c.h.b16 %v614
    %v1754 = vunpack.c.l.b16 %v615
    %v1755 = vunpack.c.h.b16 %v615
    %v1756 = vunpack.c.l.b16 %v616
    %v1757 = vunpack.c.h.b16 %v616
    %v1758 = vunpack.c.l.b16 %v617
    %v1759 = vunpack.c.h.b16 %v617
    %v1760 = vunpack.c.l.b16 %v618
    %v1761 = vunpack.c.h.b16 %v618
    %v1762 = vunpack.c.l.b16 %v619
    %v1763 = vunpack.c.h.b16 %v619
    %v1764 = vunpack.c.l.b16 %v620
    %v1765 = vunpack.c.h.b16 %v620
    %v1766 = vunpack.c.l.b16 %v621
    %v1767 = vunpack.c.h.b16 %v621
    %v1768 = vunpack.c.l.b16 %v622
    %v1769 = vunpack.c.h.b16 %v622
    %v1770 = vunpack.c.l.b16 %v623
    %v1771 = vunpack.c.h.b16 %v623
    %v1772 = vunpack.c.l.b16 %v624
    %v1773 = vunpack.c.h.b16 %v624
    %v1774 = vunpack.c.l.b16 %v625
    %v1775 = vunpack.c.h.b16 %v625
    %v1776 = vunpack.c.l.b16 %v626
    %v1777 = vunpack.c.h.b16 %v626
    %v1778 = vunpack.c.l.b16 %v627
    %v1779 = vunpack.c.h.b16 %v627
    %v1780 = vunpack.c.l.b16 %v628
    %v1781 = vunpack.c.h.b16 %v628
    %v1782 = vunpack.c.l.b16 %v629
    %v1783 = vunpack.c.h.b16 %v629
    %v1784 = vunpack.c.l.b16 %v630
    %v1785 = vunpack.c.h.b16 %v630
    %v1786 = vunpack.c.l.b16 %v631
    %v1787 = vunpack.c.h.b16 %v631
    %v1788 = vunpack.c.l.b16 %v632
    %v1789 = vunpack.c.h.b16 %v632
    %v1790 = vunpack.c.l.b16 %v633
    %v1791 = vunpack.c.h.b16 %v633
    %v1792 = vunpack.c.l.b16 %v634
    %v1793 = vunpack.c.h.b16 %v634
    %v1794 = vunpack.c.l.b16 %v635
    %v1795 = vunpack.c.h.b16 %v635
    %v1796 = vunpack.c.l.b16 %v636
    %v1797 = vunpack.c.h.b16 %v636
    %v1798 = vunpack.c.l.b16 %v637
    %v1799 = vunpack.c.h.b16 %v637
    %v1800 = vunpack.c.l.b16 %v638
    %v1801 = vunpack.c.h.b16 %v638
    %v1802 = vunpack.c.l.b16 %v639
    %v1803 = vunpack.c.h.b16 %v639
    %v1804 = vpack.c.b16 %v1038, %v1036
    %v1805 = vpack.c.b16 %v1039, %v1037
    %v1806 = vpack.c.b16 %v1042, %v1040
    %v1807 = vpack.c.b16 %v1043, %v1041
    %v1808 = vpack.c.b16 %v1046, %v1044
    %v1809 = vpack.c.b16 %v1047, %v1045
    %v1810 = vpack.c.b16 %v1050, %v1048
    %v1811 = vpack.c.b16 %v1051, %v1049
    %v1812 = vpack.c.b16 %v1054, %v1052
    %v1813 = vpack.c.b16 %v1055, %v1053
    %v1814 = vpack.c.b16 %v1058, %v1056
    %v1815 = vpack.c.b16 %v1059, %v1057
    %v1816 = vpack.c.b16 %v1062, %v1060
    %v1817 = vpack.c.b16 %v1063, %v1061
    %v1818 = vpack.c.b16 %v1066, %v1064
    %v1819 = vpack.c.b16 %v1067, %v1065
    %v1820 = vpack.c.b16 %v1070, %v1068
    %v1821 = vpack.c.b16 %v1071, %v1069
    %v1822 = vpack.c.b16 %v1074, %v1072
    %v1823 = vpack.c.b16 %v1075, %v1073
    %v1824 = vpack.c.b16 %v1078, %v1076
    %v1825 = vpack.c.b16 %v1079, %v1077
    %v1826 = vpack.c.b16 %v1082, %v1080
    %v1827 = vpack.c.b16 %v1083, %v1081
    %v1828 = vpack.c.b16 %v1086, %v1084
    %v1829 = vpack.c.b16 %v1087, %v1085
    %v1830 = vpack.c.b16 %v1090, %v1088
    %v1831 = vpack.c.b16 %v1091, %v1089
    %v1832 = vpack.c.b16 %v1094, %v1092
    %v1833 = vpack.c.b16 %v1095, %v1093
    %v1834 = vpack.c.b16 %v1098, %v1096
    %v1835 = vpack.c.b16 %v1099, %v1097
    %v1836 = vpack.c.b16 %v1102, %v1100
    %v1837 = vpack.c.b16 %v1103, %v1101
    %v1838 = vpack.c.b16 %v1106, %v1104
    %v1839 = vpack.c.b16 %v1107, %v1105
    %v1840 = vpack.c.b16 %v1110, %v1108
    %v1841 = vpack.c.b16 %v1111, %v1109
    %v1842 = vpack.c.b16 %v1114, %v1112
    %v1843 = vpack.c.b16 %v1115, %v1113
    %v1844 = vpack.c.b16 %v1118, %v1116
    %v1845 = vpack.c.b16 %v1119, %v1117
    %v1846 = vpack.c.b16 %v1122, %v1120
    %v1847 = vpack.c.b16 %v1123, %v1121
    %v1848 = vpack.c.b16 %v1126, %v1124
    %v1849 = vpack.c.b16 %v1127, %v1125
    %v1850 = vpack.c.b16 %v1130, %v1128
    %v1851 = vpack.c.b16 %v1131, %v1129
    %v1852 = vpack.c.b16 %v1134, %v1132
    %v1853 = vpack.c.b16 %v1135, %v1133
    %v1854 = vpack.c.b16 %v1138, %v1136
    %v1855 = vpack.c.b16 %v1139, %v1137
    %v1856 = vpack.c.b16 %v1142, %v1140
    %v1857 = vpack.c.b16 %v1143, %v1141
    %v1858 = vpack.c.b16 %v1146, %v1144
    %v1859 = vpack.c.b16 %v1147, %v1145
    %v1860 = vpack.c.b16 %v1150, %v1148
    %v1861 = vpack.c.b16 %v1151, %v1149
    %v1862 = vpack.c.b16 %v1154, %v1152
    %v1863 = vpack.c.b16 %v1155, %v1153
    %v1864 = vpack.c.b16 %v1158, %v1156
    %v1865 = vpack.c.b16 %v1159, %v1157
    %v1866 = vpack.c.b16 %v1162, %v1160
    %v1867 = vpack.c.b16 %v1163, %v1161
    %v1868 = vpack.c.b16 %v1166, %v1164
    %v1869 = vpack.c.b16 %v1167, %v1165
    %v1870 = vpack.c.b16 %v1170, %v1168
    %v1871 = vpack.c.b16 %v1171, %v1169
    %v1872 = vpack.c.b16 %v1174, %v1172
    %v1873 = vpack.c.b16 %v1175, %v1173
    %v1874 = vpack.c.b16 %v1178, %v1176
    %v1875 = vpack.c.b16 %v1179, %v1177
    %v1876 = vpack.c.b16 %v1182, %v1180
    %v1877 = vpack.c.b16 %v1183, %v1181
    %v1878 = vpack.c.b16 %v1186, %v1184
    %v1879 = vpack.c.b16 %v1187, %v1185
    %v1880 = vpack.c.b16 %v1190, %v1188
    %v1881 = vpack.c.b16 %v1191, %v1189
    %v1882 = vpack.c.b16 %v1194, %v1192
    %v1883 = vpack.c.b16 %v1195, %v1193
    %v1884 = vpack.c.b16 %v1198, %v1196
    %v1885 = vpack.c.b16 %v1199, %v1197
    %v1886 = vpack.c.b16 %v1202, %v1200
    %v1887 = vpack.c.b16 %v1203, %v1201
    %v1888 = vpack.c.b16 %v1206, %v1204
    %v1889 = vpack.c.b16 %v1207, %v1205
    %v1890 = vpack.c.b16 %v1210, %v1208
    %v1891 = vpack.c.b16 %v1211, %v1209
    %v1892 = vpack.c.b16 %v1214, %v1212
    %v1893 = vpack.c.b16 %v1215, %v1213
    %v1894 = vpack.c.b16 %v1218, %v1216
    %v1895 = vpack.c.b16 %v1219, %v1217
    %v1896 = vpack.c.b16 %v1222, %v1220
    %v1897 = vpack.c.b16 %v1223, %v1221
    %v1898 = vpack.c.b16 %v1226, %v1224
    %v1899 = vpack.c.b16 %v1227, %v1225
    %v1900 = vpack.c.b16 %v1230, %v1228
    %v1901 = vpack.c.b16 %v1231, %v1229
    %v1902 = vpack.c.b16 %v1234, %v1232
    %v1903 = vpack.c.b16 %v1235, %v1233
    %v1904 = vpack.c.b16 %v1238, %v1236
    %v1905 = vpack.c.b16 %v1239, %v1237
    %v1906 = vpack.c.b16 %v1242, %v1240
    %v1907 = vpack.c.b16 %v1243, %v1241
    %v1908 = vpack.c.b16 %v1246, %v1244
    %v1909 = vpack.c.b16 %v1247, %v1245
    %v1910 = vpack.c.b16 %v1250, %v1248
    %v1911 = vpack.c.b16 %v1251, %v1249
    %v1912 = vpack.c.b16 %v1254, %v1252
    %v1913 = vpack.c.b16 %v1255, %v1253
    %v1914 = vpack.c.b16 %v1258, %v1256
    %v1915 = vpack.c.b16 %v1259, %v1257
    %v1916 = vpack.c.b16 %v1262, %v1260
    %v1917 = vpack.c.b16 %v1263, %v1261
    %v1918 = vpack.c.b16 %v1266, %v1264
    %v1919 = vpack.c.b16 %v1267, %v1265
    %v1920 = vpack.c.b16 %v1270, %v1268
    %v1921 = vpack.c.b16 %v1271, %v1269
    %v1922 = vpack.c.b16 %v1274, %v1272
    %v1923 = vpack.c.b16 %v1275, %v1273
    %v1924 = vpack.c.b16 %v1278, %v1276
    %v1925 = vpack.c.b16 %v1279, %v1277
    %v1926 = vpack.c.b16 %v1282, %v1280
    %v1927 = vpack.c.b16 %v1283, %v1281
    %v1928 = vpack.c.b16 %v1286, %v1284
    %v1929 = vpack.c.b16 %v1287, %v1285
    %v1930 = vpack.c.b16 %v1290, %v1288
    %v1931 = vpack.c.b16 %v1291, %v1289
    %v1932 = vpack.c.b16 %v1294, %v1292
    %v1933 = vpack.c.b16 %v1295, %v1293
    %v1934 = vpack.c.b16 %v1298, %v1296
    %v1935 = vpack.c.b16 %v1299, %v1297
    %v1936 = vpack.c.b16 %v1302, %v1300
    %v1937 = vpack.c.b16 %v1303, %v1301
    %v1938 = vpack.c.b16 %v1306, %v1304
    %v1939 = vpack.c.b16 %v1307, %v1305
    %v1940 = vpack.c.b16 %v1310, %v1308
    %v1941 = vpack.c.b16 %v1311, %v1309
    %v1942 = vpack.c.b16 %v1314, %v1312
    %v1943 = vpack.c.b16 %v1315, %v1313
    %v1944 = vpack.c.b16 %v1318, %v1316
    %v1945 = vpack.c.b16 %v1319, %v1317
    %v1946 = vpack.c.b16 %v1322, %v1320
    %v1947 = vpack.c.b16 %v1323, %v1321
    %v1948 = vpack.c.b16 %v1326, %v1324
    %v1949 = vpack.c.b16 %v1327, %v1325
    %v1950 = vpack.c.b16 %v1330, %v1328
    %v1951 = vpack.c.b16 %v1331, %v1329
    %v1952 = vpack.c.b16 %v1334, %v1332
    %v1953 = vpack.c.b16 %v1335, %v1333
    %v1954 = vpack.c.b16 %v1338, %v1336
    %v1955 = vpack.c.b16 %v1339, %v1337
    %v1956 = vpack.c.b16 %v1342, %v1340
    %v1957 = vpack.c.b16 %v1343, %v1341
    %v1958 = vpack.c.b16 %v1346, %v1344
    %v1959 = vpack.c.b16 %v1347, %v1345
    %v1960 = vpack.c.b16 %v1350, %v1348
    %v1961 = vpack.c.b16 %v1351, %v1349
    %v1962 = vpack.c.b16 %v1354, %v1352
    %v1963 = vpack.c.b16 %v1355, %v1353
    %v1964 = vpack.c.b16 %v1358, %v1356
    %v1965 = vpack.c.b16 %v1359, %v1357
    %v1966 = vpack.c.b16 %v1362, %v1360
    %v1967 = vpack.c.b16 %v1363, %v1361
    %v1968 = vpack.c.b16 %v1366, %v1364
    %v1969 = vpack.c.b16 %v1367, %v1365
    %v1970 = vpack.c.b16 %v1370, %v1368
    %v1971 = vpack.c.b16 %v1371, %v1369
    %v1972 = vpack.c.b16 %v1374, %v1372
    %v1973 = vpack.c.b16 %v1375, %v1373
    %v1974 = vpack.c.b16 %v1378, %v1376
    %v1975 = vpack.c.b16 %v1379, %v1377
    %v1976 = vpack.c.b16 %v1382, %v1380
    %v1977 = vpack.c.b16 %v1383, %v1381
    %v1978 = vpack.c.b16 %v1386, %v1384
    %v1979 = vpack.c.b16 %v1387, %v1385
    %v1980 = vpack.c.b16 %v1390, %v1388
    %v1981 = vpack.c.b16 %v1391, %v1389
    %v1982 = vpack.c.b16 %v1394, %v1392
    %v1983 = vpack.c.b16 %v1395, %v1393
    %v1984 = vpack.c.b16 %v1398, %v1396
    %v1985 = vpack.c.b16 %v1399, %v1397
    %v1986 = vpack.c.b16 %v1402, %v1400
    %v1987 = vpack.c.b16 %v1403, %v1401
    %v1988 = vpack.c.b16 %v1406, %v1404
    %v1989 = vpack.c.b16 %v1407, %v1405
    %v1990 = vpack.c.b16 %v1410, %v1408
    %v1991 = vpack.c.b16 %v1411, %v1409
    %v1992 = vpack.c.b16 %v1414, %v1412
    %v1993 = vpack.c.b16 %v1415, %v1413
    %v1994 = vpack.c.b16 %v1418, %v1416
    %v1995 = vpack.c.b16 %v1419, %v1417
    %v1996 = vpack.c.b16 %v1422, %v1420
    %v1997 = vpack.c.b16 %v1423, %v1421
    %v1998 = vpack.c.b16 %v1426, %v1424
    %v1999 = vpack.c.b16 %v1427, %v1425
    %v2000 = vpack.c.b16 %v1430, %v1428
    %v2001 = vpack.c.b16 %v1431, %v1429
    %v2002 = vpack.c.b16 %v1434, %v1432
    %v2003 = vpack.c.b16 %v1435, %v1433
    %v2004 = vpack.c.b16 %v1438, %v1436
    %v2005 = vpack.c.b16 %v1439, %v1437
    %v2006 = vpack.c.b16 %v1442, %v1440
    %v2007 = vpack.c.b16 %v1443, %v1441
    %v2008 = vpack.c.b16 %v1446, %v1444
    %v2009 = vpack.c.b16 %v1447, %v1445
    %v2010 = vpack.c.b16 %v1450, %v1448
    %v2011 = vpack.c.b16 %v1451, %v1449
    %v2012 = vpack.c.b16 %v1454, %v1452
    %v2013 = vpack.c.b16 %v1455, %v1453
    %v2014 = vpack.c.b16 %v1458, %v1456
    %v2015 = vpack.c.b16 %v1459, %v1457
    %v2016 = vpack.c.b16 %v1462, %v1460
    %v2017 = vpack.c.b16 %v1463, %v1461
    %v2018 = vpack.c.b16 %v1466, %v1464
    %v2019 = vpack.c.b16 %v1467, %v1465
    %v2020 = vpack.c.b16 %v1470, %v1468
    %v2021 = vpack.c.b16 %v1471, %v1469
    %v2022 = vpack.c.b16 %v1474, %v1472
    %v2023 = vpack.c.b16 %v1475, %v1473
    %v2024 = vpack.c.b16 %v1478, %v1476
    %v2025 = vpack.c.b16 %v1479, %v1477
    %v2026 = vpack.c.b16 %v1482, %v1480
    %v2027 = vpack.c.b16 %v1483, %v1481
    %v2028 = vpack.c.b16 %v1486, %v1484
    %v2029 = vpack.c.b16 %v1487, %v1485
    %v2030 = vpack.c.b16 %v1490, %v1488
    %v2031 = vpack.c.b16 %v1491, %v1489
    %v2032 = vpack.c.b16 %v1494, %v1492
    %v2033 = vpack.c.b16 %v1495, %v1493
    %v2034 = vpack.c.b16 %v1498, %v1496
    %v2035 = vpack.c.b16 %v1499, %v1497
    %v2036 = vpack.c.b16 %v1502, %v1500
    %v2037 = vpack.c.b16 %v1503, %v1501
    %v2038 = vpack.c.b16 %v1506, %v1504
    %v2039 = vpack.c.b16 %v1507, %v1505
    %v2040 = vpack.c.b16 %v1510, %v1508
    %v2041 = vpack.c.b16 %v1511, %v1509
    %v2042 = vpack.c.b16 %v1514, %v1512
    %v2043 = vpack.c.b16 %v1515, %v1513
    %v2044 = vpack.c.b16 %v1518, %v1516
    %v2045 = vpack.c.b16 %v1519, %v1517
    %v2046 = vpack.c.b16 %v1522, %v1520
    %v2047 = vpack.c.b16 %v1523, %v1521
    %v2048 = vpack.c.b16 %v1526, %v1524
    %v2049 = vpack.c.b16 %v1527, %v1525
    %v2050 = vpack.c.b16 %v1530, %v1528
    %v2051 = vpack.c.b16 %v1531, %v1529
    %v2052 = vpack.c.b16 %v1534, %v1532
    %v2053 = vpack.c.b16 %v1535, %v1533
    %v2054 = vpack.c.b16 %v1538, %v1536
    %v2055 = vpack.c.b16 %v1539, %v1537
    %v2056 = vpack.c.b16 %v1542, %v1540
    %v2057 = vpack.c.b16 %v1543, %v1541
    %v2058 = vpack.c.b16 %v1546, %v1544
    %v2059 = vpack.c.b16 %v1547, %v1545
    %v2060 = vpack.c.b16 %v1550, %v1548
    %v2061 = vpack.c.b16 %v1551, %v1549
    %v2062 = vpack.c.b16 %v1554, %v1552
    %v2063 = vpack.c.b16 %v1555, %v1553
    %v2064 = vpack.c.b16 %v1558, %v1556
    %v2065 = vpack.c.b16 %v1559, %v1557
    %v2066 = vpack.c.b16 %v1562, %v1560
    %v2067 = vpack.c.b16 %v1563, %v1561
    %v2068 = vpack.c.b16 %v1566, %v1564
    %v2069 = vpack.c.b16 %v1567, %v1565
    %v2070 = vpack.c.b16 %v1570, %v1568
    %v2071 = vpack.c.b16 %v1571, %v1569
    %v2072 = vpack.c.b16 %v1574, %v1572
    %v2073 = vpack.c.b16 %v1575, %v1573
    %v2074 = vpack.c.b16 %v1578, %v1576
    %v2075 = vpack.c.b16 %v1579, %v1577
    %v2076 = vpack.c.b16 %v1582, %v1580
    %v2077 = vpack.c.b16 %v1583, %v1581
    %v2078 = vpack.c.b16 %v1586, %v1584
    %v2079 = vpack.c.b16 %v1587, %v1585
    %v2080 = vpack.c.b16 %v1590, %v1588
    %v2081 = vpack.c.b16 %v1591, %v1589
    %v2082 = vpack.c.b16 %v1594, %v1592
    %v2083 = vpack.c.b16 %v1595, %v1593
    %v2084 = vpack.c.b16 %v1598, %v1596
    %v2085 = vpack.c.b16 %v1599, %v1597
    %v2086 = vpack.c.b16 %v1602, %v1600
    %v2087 = vpack.c.b16 %v1603, %v1601
    %v2088 = vpack.c.b16 %v1606, %v1604
    %v2089 = vpack.c.b16 %v1607, %v1605
    %v2090 = vpack.c.b16 %v1610, %v1608
    %v2091 = vpack.c.b16 %v1611, %v1609
    %v2092 = vpack.c.b16 %v1614, %v1612
    %v2093 = vpack.c.b16 %v1615, %v1613
    %v2094 = vpack.c.b16 %v1618, %v1616
    %v2095 = vpack.c.b16 %v1619, %v1617
    %v2096 = vpack.c.b16 %v1622, %v1620
    %v2097 = vpack.c.b16 %v1623, %v1621
    %v2098 = vpack.c.b16 %v1626, %v1624
    %v2099 = vpack.c.b16 %v1627, %v1625
    %v2100 = vpack.c.b16 %v1630, %v1628
    %v2101 = vpack.c.b16 %v1631, %v1629
    %v2102 = vpack.c.b16 %v1634, %v1632
    %v2103 = vpack.c.b16 %v1635, %v1633
    %v2104 = vpack.c.b16 %v1638, %v1636
    %v2105 = vpack.c.b16 %v1639, %v1637
    %v2106 = vpack.c.b16 %v1642, %v1640
    %v2107 = vpack.c.b16 %v1643, %v1641
    %v2108 = vpack.c.b16 %v1646, %v1644
    %v2109 = vpack.c.b16 %v1647, %v1645
    %v2110 = vpack.c.b16 %v1650, %v1648
    %v2111 = vpack.c.b16 %v1651, %v1649
    %v2112 = vpack.c.b16 %v1654, %v1652
    %v2113 = vpack.c.b16 %v1655, %v1653
    %v2114 = vpack.c.b16 %v1658, %v1656
    %v2115 = vpack.c.b16 %v1659, %v1657
    %v2116 = vpack.c.b16 %v1662, %v1660
    %v2117 = vpack.c.b16 %v1663, %v1661
    %v2118 = vpack.c.b16 %v1666, %v1664
    %v2119 = vpack.c.b16 %v1667, %v1665
    %v2120 = vpack.c.b16 %v1670, %v1668
    %v2121 = vpack.c.b16 %v1671, %v1669
    %v2122 = vpack.c.b16 %v1674, %v1672
    %v2123 = vpack.c.b16 %v1675, %v1673
    %v2124 = vpack.c.b16 %v1678, %v1676
    %v2125 = vpack.c.b16 %v1679, %v1677
    %v2126 = vpack.c.b16 %v1682, %v1680
    %v2127 = vpack.c.b16 %v1683, %v1681
    %v2128 = vpack.c.b16 %v1686, %v1684
    %v2129 = vpack.c.b16 %v1687, %v1685
    %v2130 = vpack.c.b16 %v1690, %v1688
    %v2131 = vpack.c.b16 %v1691, %v1689
    %v2132 = vpack.c.b16 %v1694, %v1692
    %v2133 = vpack.c.b16 %v1695, %v1693
    %v2134 = vpack.c.b16 %v1698, %v1696
    %v2135 = vpack.c.b16 %v1699, %v1697
    %v2136 = vpack.c.b16 %v1702, %v1700
    %v2137 = vpack.c.b16 %v1703, %v1701
    %v2138 = vpack.c.b16 %v1706, %v1704
    %v2139 = vpack.c.b16 %v1707, %v1705
    %v2140 = vpack.c.b16 %v1710, %v1708
    %v2141 = vpack.c.b16 %v1711, %v1709
    %v2142 = vpack.c.b16 %v1714, %v1712
    %v2143 = vpack.c.b16 %v1715, %v1713
    %v2144 = vpack.c.b16 %v1718, %v1716
    %v2145 = vpack.c.b16 %v1719, %v1717
    %v2146 = vpack.c.b16 %v1722, %v1720
    %v2147 = vpack.c.b16 %v1723, %v1721
    %v2148 = vpack.c.b16 %v1726, %v1724
    %v2149 = vpack.c.b16 %v1727, %v1725
    %v2150 = vpack.c.b16 %v1730, %v1728
    %v2151 = vpack.c.b16 %v1731, %v1729
    %v2152 = vpack.c.b16 %v1734, %v1732
    %v2153 = vpack.c.b16 %v1735, %v1733
    %v2154 = vpack.c.b16 %v1738, %v1736
    %v2155 = vpack.c.b16 %v1739, %v1737
    %v2156 = vpack.c.b16 %v1742, %v1740
    %v2157 = vpack.c.b16 %v1743, %v1741
    %v2158 = vpack.c.b16 %v1746, %v1744
    %v2159 = vpack.c.b16 %v1747, %v1745
    %v2160 = vpack.c.b16 %v1750, %v1748
    %v2161 = vpack.c.b16 %v1751, %v1749
    %v2162 = vpack.c.b16 %v1754, %v1752
    %v2163 = vpack.c.b16 %v1755, %v1753
    %v2164 = vpack.c.b16 %v1758, %v1756
    %v2165 = vpack.c.b16 %v1759, %v1757
    %v2166 = vpack.c.b16 %v1762, %v1760
    %v2167 = vpack.c.b16 %v1763, %v1761
    %v2168 = vpack.c.b16 %v1766, %v1764
    %v2169 = vpack.c.b16 %v1767, %v1765
    %v2170 = vpack.c.b16 %v1770, %v1768
    %v2171 = vpack.c.b16 %v1771, %v1769
    %v2172 = vpack.c.b16 %v1774, %v1772
    %v2173 = vpack.c.b16 %v1775, %v1773
    %v2174 = vpack.c.b16 %v1778, %v1776
    %v2175 = vpack.c.b16 %v1779, %v1777
    %v2176 = vpack.c.b16 %v1782, %v1780
    %v2177 = vpack.c.b16 %v1783, %v1781
    %v2178 = vpack.c.b16 %v1786, %v1784
    %v2179 = vpack.c.b16 %v1787, %v1785
    %v2180 = vpack.c.b16 %v1790, %v1788
    %v2181 = vpack.c.b16 %v1791, %v1789
    %v2182 = vpack.c.b16 %v1794, %v1792
    %v2183 = vpack.c.b16 %v1795, %v1793
    %v2184 = vpack.c.b16 %v1798, %v1796
    %v2185 = vpack.c.b16 %v1799, %v1797
    %v2186 = vpack.c.b16 %v1802, %v1800
    %v2187 = vpack.c.b16 %v1803, %v1801
    %2572 = vmatprep.subr.bf16.mxu0 %v1805
    %2573 = vmatpush1.bf16.msra.mxu0 %v1804
    %2574 = vmatprep.subr.bf16.mxu0 %v1807
    %2575 = vmatpush1.bf16.msra.mxu0 %v1806
    %2576 = vmatprep.subr.bf16.mxu0 %v1809
    %2577 = vmatpush1.bf16.msra.mxu0 %v1808
    %2578 = vmatprep.subr.bf16.mxu0 %v1811
    %2579 = vmatpush1.bf16.msra.mxu0 %v1810
    %2580 = vmatprep.subr.bf16.mxu0 %v1813
    %2581 = vmatpush1.bf16.msra.mxu0 %v1812
    %2582 = vmatprep.subr.bf16.mxu0 %v1815
    %2583 = vmatpush1.bf16.msra.mxu0 %v1814
    %2584 = vmatprep.subr.bf16.mxu0 %v1817
    %2585 = vmatpush1.bf16.msra.mxu0 %v1816
    %2586 = vmatprep.subr.bf16.mxu0 %v1819
    %2587 = vmatpush1.bf16.msra.mxu0 %v1818
    %2588 = vmatprep.subr.bf16.mxu0 %v1821
    %2589 = vmatpush1.bf16.msra.mxu0 %v1820
    %2590 = vmatprep.subr.bf16.mxu0 %v1823
    %2591 = vmatpush1.bf16.msra.mxu0 %v1822
    %2592 = vmatprep.subr.bf16.mxu0 %v1825
    %2593 = vmatpush1.bf16.msra.mxu0 %v1824
    %2594 = vmatprep.subr.bf16.mxu0 %v1827
    %2595 = vmatpush1.bf16.msra.mxu0 %v1826
    %2596 = vmatprep.subr.bf16.mxu0 %v1829
    %2597 = vmatpush1.bf16.msra.mxu0 %v1828
    %2598 = vmatprep.subr.bf16.mxu0 %v1831
    %2599 = vmatpush1.bf16.msra.mxu0 %v1830
    %2600 = vmatprep.subr.bf16.mxu0 %v1833
    %2601 = vmatpush1.bf16.msra.mxu0 %v1832
    %2602 = vmatprep.subr.bf16.mxu0 %v1835
    %2603 = vmatpush1.bf16.msra.mxu0 %v1834
    %2604 = vmatprep.mubr.bf16.mxu0 %v233
    %2605 = vmatmul.mubr.bf16.gmra.mrb[0].mxu0 %v232
    %v2606 = vpop.f32.mrb[0].mxu0
    %v2607 = vadd.f32 %v645, %v2606
    %v2608 = vpop.f32.mrb[0].mxu0
    %v2609 = vadd.f32 %v649, %v2608
    %v2610 = vpop.f32.mrb[0].mxu0
    %v2611 = vpop.f32.mrb[0].mxu0
    %2612 = vdwg.mxu0
    %2613 = vmatprep.subr.bf16.mxu0 %v1837
    %2614 = vmatpush1.bf16.msra.mxu0 %v1836
    %2615 = vmatprep.subr.bf16.mxu0 %v1839
    %2616 = vmatpush1.bf16.msra.mxu0 %v1838
    %2617 = vmatprep.subr.bf16.mxu0 %v1841
    %2618 = vmatpush1.bf16.msra.mxu0 %v1840
    %2619 = vmatprep.subr.bf16.mxu0 %v1843
    %2620 = vmatpush1.bf16.msra.mxu0 %v1842
    %2621 = vmatprep.subr.bf16.mxu0 %v1845
    %2622 = vmatpush1.bf16.msra.mxu0 %v1844
    %2623 = vmatprep.subr.bf16.mxu0 %v1847
    %2624 = vmatpush1.bf16.msra.mxu0 %v1846
    %2625 = vmatprep.subr.bf16.mxu0 %v1849
    %2626 = vmatpush1.bf16.msra.mxu0 %v1848
    %2627 = vmatprep.subr.bf16.mxu0 %v1851
    %2628 = vmatpush1.bf16.msra.mxu0 %v1850
    %2629 = vmatprep.subr.bf16.mxu0 %v1853
    %2630 = vmatpush1.bf16.msra.mxu0 %v1852
    %2631 = vmatprep.subr.bf16.mxu0 %v1855
    %2632 = vmatpush1.bf16.msra.mxu0 %v1854
    %2633 = vmatprep.subr.bf16.mxu0 %v1857
    %2634 = vmatpush1.bf16.msra.mxu0 %v1856
    %2635 = vmatprep.subr.bf16.mxu0 %v1859
    %2636 = vmatpush1.bf16.msra.mxu0 %v1858
    %2637 = vmatprep.subr.bf16.mxu0 %v1861
    %2638 = vmatpush1.bf16.msra.mxu0 %v1860
    %2639 = vmatprep.subr.bf16.mxu0 %v1863
    %2640 = vmatpush1.bf16.msra.mxu0 %v1862
    %2641 = vmatprep.subr.bf16.mxu0 %v1865
    %2642 = vmatpush1.bf16.msra.mxu0 %v1864
    %2643 = vmatprep.subr.bf16.mxu0 %v1867
    %2644 = vmatpush1.bf16.msra.mxu0 %v1866
    %2645 = vmatprep.mubr.bf16.mxu0 %v235
    %2646 = vmatmul.mubr.bf16.gmra.mrb[0].mxu0 %v234
    %v2647 = vpop.f32.mrb[0].mxu0
    %v2648 = vadd.f32 %v2607, %v2647
    %v2649 = vpop.f32.mrb[0].mxu0
    %v2650 = vadd.f32 %v2609, %v2649
    %v2651 = vpop.f32.mrb[0].mxu0
    %v2652 = vpop.f32.mrb[0].mxu0
    %2653 = vdwg.mxu0
    %2654 = vmatprep.subr.bf16.mxu0 %v1869
    %2655 = vmatpush1.bf16.msra.mxu0 %v1868
    %2656 = vmatprep.subr.bf16.mxu0 %v1871
    %2657 = vmatpush1.bf16.msra.mxu0 %v1870
    %2658 = vmatprep.subr.bf16.mxu0 %v1873
    %2659 = vmatpush1.bf16.msra.mxu0 %v1872
    %2660 = vmatprep.subr.bf16.mxu0 %v1875
    %2661 = vmatpush1.bf16.msra.mxu0 %v1874
    %2662 = vmatprep.subr.bf16.mxu0 %v1877
    %2663 = vmatpush1.bf16.msra.mxu0 %v1876
    %2664 = vmatprep.subr.bf16.mxu0 %v1879
    %2665 = vmatpush1.bf16.msra.mxu0 %v1878
    %2666 = vmatprep.subr.bf16.mxu0 %v1881
    %2667 = vmatpush1.bf16.msra.mxu0 %v1880
    %2668 = vmatprep.subr.bf16.mxu0 %v1883
    %2669 = vmatpush1.bf16.msra.mxu0 %v1882
    %2670 = vmatprep.subr.bf16.mxu0 %v1885
    %2671 = vmatpush1.bf16.msra.mxu0 %v1884
    %2672 = vmatprep.subr.bf16.mxu0 %v1887
    %2673 = vmatpush1.bf16.msra.mxu0 %v1886
    %2674 = vmatprep.subr.bf16.mxu0 %v1889
    %2675 = vmatpush1.bf16.msra.mxu0 %v1888
    %2676 = vmatprep.subr.bf16.mxu0 %v1891
    %2677 = vmatpush1.bf16.msra.mxu0 %v1890
    %2678 = vmatprep.subr.bf16.mxu0 %v1893
    %2679 = vmatpush1.bf16.msra.mxu0 %v1892
    %2680 = vmatprep.subr.bf16.mxu0 %v1895
    %2681 = vmatpush1.bf16.msra.mxu0 %v1894
    %2682 = vmatprep.subr.bf16.mxu0 %v1897
    %2683 = vmatpush1.bf16.msra.mxu0 %v1896
    %2684 = vmatprep.subr.bf16.mxu0 %v1899
    %2685 = vmatpush1.bf16.msra.mxu0 %v1898
    %2686 = vmatprep.mubr.bf16.mxu0 %v237
    %2687 = vmatmul.mubr.bf16.gmra.mrb[0].mxu0 %v236
    %v2688 = vpop.f32.mrb[0].mxu0
    %v2689 = vadd.f32 %v2648, %v2688
    %v2690 = vpop.f32.mrb[0].mxu0
    %v2691 = vadd.f32 %v2650, %v2690
    %v2692 = vpop.f32.mrb[0].mxu0
    %v2693 = vpop.f32.mrb[0].mxu0
    %2694 = vdwg.mxu0
    %2695 = vmatprep.subr.bf16.mxu0 %v1901
    %2696 = vmatpush1.bf16.msra.mxu0 %v1900
    %2697 = vmatprep.subr.bf16.mxu0 %v1903
    %2698 = vmatpush1.bf16.msra.mxu0 %v1902
    %2699 = vmatprep.subr.bf16.mxu0 %v1905
    %2700 = vmatpush1.bf16.msra.mxu0 %v1904
    %2701 = vmatprep.subr.bf16.mxu0 %v1907
    %2702 = vmatpush1.bf16.msra.mxu0 %v1906
    %2703 = vmatprep.subr.bf16.mxu0 %v1909
    %2704 = vmatpush1.bf16.msra.mxu0 %v1908
    %2705 = vmatprep.subr.bf16.mxu0 %v1911
    %2706 = vmatpush1.bf16.msra.mxu0 %v1910
    %2707 = vmatprep.subr.bf16.mxu0 %v1913
    %2708 = vmatpush1.bf16.msra.mxu0 %v1912
    %2709 = vmatprep.subr.bf16.mxu0 %v1915
    %2710 = vmatpush1.bf16.msra.mxu0 %v1914
    %2711 = vmatprep.subr.bf16.mxu0 %v1917
    %2712 = vmatpush1.bf16.msra.mxu0 %v1916
    %2713 = vmatprep.subr.bf16.mxu0 %v1919
    %2714 = vmatpush1.bf16.msra.mxu0 %v1918
    %2715 = vmatprep.subr.bf16.mxu0 %v1921
    %2716 = vmatpush1.bf16.msra.mxu0 %v1920
    %2717 = vmatprep.subr.bf16.mxu0 %v1923
    %2718 = vmatpush1.bf16.msra.mxu0 %v1922
    %2719 = vmatprep.subr.bf16.mxu0 %v1925
    %2720 = vmatpush1.bf16.msra.mxu0 %v1924
    %2721 = vmatprep.subr.bf16.mxu0 %v1927
    %2722 = vmatpush1.bf16.msra.mxu0 %v1926
    %2723 = vmatprep.subr.bf16.mxu0 %v1929
    %2724 = vmatpush1.bf16.msra.mxu0 %v1928
    %2725 = vmatprep.subr.bf16.mxu0 %v1931
    %2726 = vmatpush1.bf16.msra.mxu0 %v1930
    %2727 = vmatprep.mubr.bf16.mxu0 %v239
    %2728 = vmatmul.mubr.bf16.gmra.mrb[0].mxu0 %v238
    %v2729 = vpop.f32.mrb[0].mxu0
    %v2730 = vadd.f32 %v2689, %v2729
    %v2731 = vpop.f32.mrb[0].mxu0
    %v2732 = vadd.f32 %v2691, %v2731
    %v2733 = vpop.f32.mrb[0].mxu0
    %v2734 = vpop.f32.mrb[0].mxu0
    %2735 = vdwg.mxu0
    %2736 = vmatprep.subr.bf16.mxu0 %v1933
    %2737 = vmatpush1.bf16.msra.mxu0 %v1932
    %2738 = vmatprep.subr.bf16.mxu0 %v1935
    %2739 = vmatpush1.bf16.msra.mxu0 %v1934
    %2740 = vmatprep.subr.bf16.mxu0 %v1937
    %2741 = vmatpush1.bf16.msra.mxu0 %v1936
    %2742 = vmatprep.subr.bf16.mxu0 %v1939
    %2743 = vmatpush1.bf16.msra.mxu0 %v1938
    %2744 = vmatprep.subr.bf16.mxu0 %v1941
    %2745 = vmatpush1.bf16.msra.mxu0 %v1940
    %2746 = vmatprep.subr.bf16.mxu0 %v1943
    %2747 = vmatpush1.bf16.msra.mxu0 %v1942
    %2748 = vmatprep.subr.bf16.mxu0 %v1945
    %2749 = vmatpush1.bf16.msra.mxu0 %v1944
    %2750 = vmatprep.subr.bf16.mxu0 %v1947
    %2751 = vmatpush1.bf16.msra.mxu0 %v1946
    %2752 = vmatprep.subr.bf16.mxu0 %v1949
    %2753 = vmatpush1.bf16.msra.mxu0 %v1948
    %2754 = vmatprep.subr.bf16.mxu0 %v1951
    %2755 = vmatpush1.bf16.msra.mxu0 %v1950
    %2756 = vmatprep.subr.bf16.mxu0 %v1953
    %2757 = vmatpush1.bf16.msra.mxu0 %v1952
    %2758 = vmatprep.subr.bf16.mxu0 %v1955
    %2759 = vmatpush1.bf16.msra.mxu0 %v1954
    %2760 = vmatprep.subr.bf16.mxu0 %v1957
    %2761 = vmatpush1.bf16.msra.mxu0 %v1956
    %2762 = vmatprep.subr.bf16.mxu0 %v1959
    %2763 = vmatpush1.bf16.msra.mxu0 %v1958
    %2764 = vmatprep.subr.bf16.mxu0 %v1961
    %2765 = vmatpush1.bf16.msra.mxu0 %v1960
    %2766 = vmatprep.subr.bf16.mxu0 %v1963
    %2767 = vmatpush1.bf16.msra.mxu0 %v1962
    %2768 = vmatprep.mubr.bf16.mxu0 %v241
    %2769 = vmatmul.mubr.bf16.gmra.mrb[0].mxu0 %v240
    %v2770 = vpop.f32.mrb[0].mxu0
    %v2771 = vadd.f32 %v2730, %v2770
    %v2772 = vpop.f32.mrb[0].mxu0
    %v2773 = vadd.f32 %v2732, %v2772
    %v2774 = vpop.f32.mrb[0].mxu0
    %v2775 = vpop.f32.mrb[0].mxu0
    %2776 = vdwg.mxu0
    %2777 = vmatprep.subr.bf16.mxu0 %v1965
    %2778 = vmatpush1.bf16.msra.mxu0 %v1964
    %2779 = vmatprep.subr.bf16.mxu0 %v1967
    %2780 = vmatpush1.bf16.msra.mxu0 %v1966
    %2781 = vmatprep.subr.bf16.mxu0 %v1969
    %2782 = vmatpush1.bf16.msra.mxu0 %v1968
    %2783 = vmatprep.subr.bf16.mxu0 %v1971
    %2784 = vmatpush1.bf16.msra.mxu0 %v1970
    %2785 = vmatprep.subr.bf16.mxu0 %v1973
    %2786 = vmatpush1.bf16.msra.mxu0 %v1972
    %2787 = vmatprep.subr.bf16.mxu0 %v1975
    %2788 = vmatpush1.bf16.msra.mxu0 %v1974
    %2789 = vmatprep.subr.bf16.mxu0 %v1977
    %2790 = vmatpush1.bf16.msra.mxu0 %v1976
    %2791 = vmatprep.subr.bf16.mxu0 %v1979
    %2792 = vmatpush1.bf16.msra.mxu0 %v1978
    %2793 = vmatprep.subr.bf16.mxu0 %v1981
    %2794 = vmatpush1.bf16.msra.mxu0 %v1980
    %2795 = vmatprep.subr.bf16.mxu0 %v1983
    %2796 = vmatpush1.bf16.msra.mxu0 %v1982
    %2797 = vmatprep.subr.bf16.mxu0 %v1985
    %2798 = vmatpush1.bf16.msra.mxu0 %v1984
    %2799 = vmatprep.subr.bf16.mxu0 %v1987
    %2800 = vmatpush1.bf16.msra.mxu0 %v1986
    %2801 = vmatprep.subr.bf16.mxu0 %v1989
    %2802 = vmatpush1.bf16.msra.mxu0 %v1988
    %2803 = vmatprep.subr.bf16.mxu0 %v1991
    %2804 = vmatpush1.bf16.msra.mxu0 %v1990
    %2805 = vmatprep.subr.bf16.mxu0 %v1993
    %2806 = vmatpush1.bf16.msra.mxu0 %v1992
    %2807 = vmatprep.subr.bf16.mxu0 %v1995
    %2808 = vmatpush1.bf16.msra.mxu0 %v1994
    %2809 = vmatprep.mubr.bf16.mxu0 %v243
    %2810 = vmatmul.mubr.bf16.gmra.mrb[0].mxu0 %v242
    %v2811 = vpop.f32.mrb[0].mxu0
    %v2812 = vadd.f32 %v2771, %v2811
    %v2813 = vpop.f32.mrb[0].mxu0
    %v2814 = vadd.f32 %v2773, %v2813
    %v2815 = vpop.f32.mrb[0].mxu0
    %v2816 = vpop.f32.mrb[0].mxu0
    %2817 = vdwg.mxu0
    %2818 = vmatprep.subr.bf16.mxu0 %v1997
    %2819 = vmatpush1.bf16.msra.mxu0 %v1996
    %2820 = vmatprep.subr.bf16.mxu0 %v1999
    %2821 = vmatpush1.bf16.msra.mxu0 %v1998
    %2822 = vmatprep.subr.bf16.mxu0 %v2001
    %2823 = vmatpush1.bf16.msra.mxu0 %v2000
    %2824 = vmatprep.subr.bf16.mxu0 %v2003
    %2825 = vmatpush1.bf16.msra.mxu0 %v2002
    %2826 = vmatprep.subr.bf16.mxu0 %v2005
    %2827 = vmatpush1.bf16.msra.mxu0 %v2004
    %2828 = vmatprep.subr.bf16.mxu0 %v2007
    %2829 = vmatpush1.bf16.msra.mxu0 %v2006
    %2830 = vmatprep.subr.bf16.mxu0 %v2009
    %2831 = vmatpush1.bf16.msra.mxu0 %v2008
    %2832 = vmatprep.subr.bf16.mxu0 %v2011
    %2833 = vmatpush1.bf16.msra.mxu0 %v2010
    %2834 = vmatprep.subr.bf16.mxu0 %v2013
    %2835 = vmatpush1.bf16.msra.mxu0 %v2012
    %2836 = vmatprep.subr.bf16.mxu0 %v2015
    %2837 = vmatpush1.bf16.msra.mxu0 %v2014
    %2838 = vmatprep.subr.bf16.mxu0 %v2017
    %2839 = vmatpush1.bf16.msra.mxu0 %v2016
    %2840 = vmatprep.subr.bf16.mxu0 %v2019
    %2841 = vmatpush1.bf16.msra.mxu0 %v2018
    %2842 = vmatprep.subr.bf16.mxu0 %v2021
    %2843 = vmatpush1.bf16.msra.mxu0 %v2020
    %2844 = vmatprep.subr.bf16.mxu0 %v2023
    %2845 = vmatpush1.bf16.msra.mxu0 %v2022
    %2846 = vmatprep.subr.bf16.mxu0 %v2025
    %2847 = vmatpush1.bf16.msra.mxu0 %v2024
    %2848 = vmatprep.subr.bf16.mxu0 %v2027
    %2849 = vmatpush1.bf16.msra.mxu0 %v2026
    %2850 = vmatprep.mubr.bf16.mxu0 %v245
    %2851 = vmatmul.mubr.bf16.gmra.mrb[0].mxu0 %v244
    %v2852 = vpop.f32.mrb[0].mxu0
    %v2853 = vadd.f32 %v2812, %v2852
    %v2854 = vpop.f32.mrb[0].mxu0
    %v2855 = vadd.f32 %v2814, %v2854
    %v2856 = vpop.f32.mrb[0].mxu0
    %v2857 = vpop.f32.mrb[0].mxu0
    %2858 = vdwg.mxu0
    %2859 = vmatprep.subr.bf16.mxu0 %v2029
    %2860 = vmatpush1.bf16.msra.mxu0 %v2028
    %2861 = vmatprep.subr.bf16.mxu0 %v2031
    %2862 = vmatpush1.bf16.msra.mxu0 %v2030
    %2863 = vmatprep.subr.bf16.mxu0 %v2033
    %2864 = vmatpush1.bf16.msra.mxu0 %v2032
    %2865 = vmatprep.subr.bf16.mxu0 %v2035
    %2866 = vmatpush1.bf16.msra.mxu0 %v2034
    %2867 = vmatprep.subr.bf16.mxu0 %v2037
    %2868 = vmatpush1.bf16.msra.mxu0 %v2036
    %2869 = vmatprep.subr.bf16.mxu0 %v2039
    %2870 = vmatpush1.bf16.msra.mxu0 %v2038
    %2871 = vmatprep.subr.bf16.mxu0 %v2041
    %2872 = vmatpush1.bf16.msra.mxu0 %v2040
    %2873 = vmatprep.subr.bf16.mxu0 %v2043
    %2874 = vmatpush1.bf16.msra.mxu0 %v2042
    %2875 = vmatprep.subr.bf16.mxu0 %v2045
    %2876 = vmatpush1.bf16.msra.mxu0 %v2044
    %2877 = vmatprep.subr.bf16.mxu0 %v2047
    %2878 = vmatpush1.bf16.msra.mxu0 %v2046
    %2879 = vmatprep.subr.bf16.mxu0 %v2049
    %2880 = vmatpush1.bf16.msra.mxu0 %v2048
    %2881 = vmatprep.subr.bf16.mxu0 %v2051
    %2882 = vmatpush1.bf16.msra.mxu0 %v2050
    %2883 = vmatprep.subr.bf16.mxu0 %v2053
    %2884 = vmatpush1.bf16.msra.mxu0 %v2052
    %2885 = vmatprep.subr.bf16.mxu0 %v2055
    %2886 = vmatpush1.bf16.msra.mxu0 %v2054
    %2887 = vmatprep.subr.bf16.mxu0 %v2057
    %2888 = vmatpush1.bf16.msra.mxu0 %v2056
    %2889 = vmatprep.subr.bf16.mxu0 %v2059
    %2890 = vmatpush1.bf16.msra.mxu0 %v2058
    %2891 = vmatprep.mubr.bf16.mxu0 %v247
    %2892 = vmatmul.mubr.bf16.gmra.mrb[0].mxu0 %v246
    %v2893 = vpop.f32.mrb[0].mxu0
    %v2894 = vadd.f32 %v2853, %v2893
    %v2895 = vpop.f32.mrb[0].mxu0
    %v2896 = vadd.f32 %v2855, %v2895
    %v2897 = vpop.f32.mrb[0].mxu0
    %v2898 = vpop.f32.mrb[0].mxu0
    %2899 = vdwg.mxu0
    %2900 = vmatprep.subr.bf16.mxu0 %v2061
    %2901 = vmatpush1.bf16.msra.mxu0 %v2060
    %2902 = vmatprep.subr.bf16.mxu0 %v2063
    %2903 = vmatpush1.bf16.msra.mxu0 %v2062
    %2904 = vmatprep.subr.bf16.mxu0 %v2065
    %2905 = vmatpush1.bf16.msra.mxu0 %v2064
    %2906 = vmatprep.subr.bf16.mxu0 %v2067
    %2907 = vmatpush1.bf16.msra.mxu0 %v2066
    %2908 = vmatprep.subr.bf16.mxu0 %v2069
    %2909 = vmatpush1.bf16.msra.mxu0 %v2068
    %2910 = vmatprep.subr.bf16.mxu0 %v2071
    %2911 = vmatpush1.bf16.msra.mxu0 %v2070
    %2912 = vmatprep.subr.bf16.mxu0 %v2073
    %2913 = vmatpush1.bf16.msra.mxu0 %v2072
    %2914 = vmatprep.subr.bf16.mxu0 %v2075
    %2915 = vmatpush1.bf16.msra.mxu0 %v2074
    %2916 = vmatprep.subr.bf16.mxu0 %v2077
    %2917 = vmatpush1.bf16.msra.mxu0 %v2076
    %2918 = vmatprep.subr.bf16.mxu0 %v2079
    %2919 = vmatpush1.bf16.msra.mxu0 %v2078
    %2920 = vmatprep.subr.bf16.mxu0 %v2081
    %2921 = vmatpush1.bf16.msra.mxu0 %v2080
    %2922 = vmatprep.subr.bf16.mxu0 %v2083
    %2923 = vmatpush1.bf16.msra.mxu0 %v2082
    %2924 = vmatprep.subr.bf16.mxu0 %v2085
    %2925 = vmatpush1.bf16.msra.mxu0 %v2084
    %2926 = vmatprep.subr.bf16.mxu0 %v2087
    %2927 = vmatpush1.bf16.msra.mxu0 %v2086
    %2928 = vmatprep.subr.bf16.mxu0 %v2089
    %2929 = vmatpush1.bf16.msra.mxu0 %v2088
    %2930 = vmatprep.subr.bf16.mxu0 %v2091
    %2931 = vmatpush1.bf16.msra.mxu0 %v2090
    %2932 = vmatprep.mubr.bf16.mxu0 %v249
    %2933 = vmatmul.mubr.bf16.gmra.mrb[0].mxu0 %v248
    %v2934 = vpop.f32.mrb[0].mxu0
    %v2935 = vadd.f32 %v2894, %v2934
    %v2936 = vpop.f32.mrb[0].mxu0
    %v2937 = vadd.f32 %v2896, %v2936
    %v2938 = vpop.f32.mrb[0].mxu0
    %v2939 = vpop.f32.mrb[0].mxu0
    %2940 = vdwg.mxu0
    %2941 = vmatprep.subr.bf16.mxu0 %v2093
    %2942 = vmatpush1.bf16.msra.mxu0 %v2092
    %2943 = vmatprep.subr.bf16.mxu0 %v2095
    %2944 = vmatpush1.bf16.msra.mxu0 %v2094
    %2945 = vmatprep.subr.bf16.mxu0 %v2097
    %2946 = vmatpush1.bf16.msra.mxu0 %v2096
    %2947 = vmatprep.subr.bf16.mxu0 %v2099
    %2948 = vmatpush1.bf16.msra.mxu0 %v2098
    %2949 = vmatprep.subr.bf16.mxu0 %v2101
    %2950 = vmatpush1.bf16.msra.mxu0 %v2100
    %2951 = vmatprep.subr.bf16.mxu0 %v2103
    %2952 = vmatpush1.bf16.msra.mxu0 %v2102
    %2953 = vmatprep.subr.bf16.mxu0 %v2105
    %2954 = vmatpush1.bf16.msra.mxu0 %v2104
    %2955 = vmatprep.subr.bf16.mxu0 %v2107
    %2956 = vmatpush1.bf16.msra.mxu0 %v2106
    %2957 = vmatprep.subr.bf16.mxu0 %v2109
    %2958 = vmatpush1.bf16.msra.mxu0 %v2108
    %2959 = vmatprep.subr.bf16.mxu0 %v2111
    %2960 = vmatpush1.bf16.msra.mxu0 %v2110
    %2961 = vmatprep.subr.bf16.mxu0 %v2113
    %2962 = vmatpush1.bf16.msra.mxu0 %v2112
    %2963 = vmatprep.subr.bf16.mxu0 %v2115
    %2964 = vmatpush1.bf16.msra.mxu0 %v2114
    %2965 = vmatprep.subr.bf16.mxu0 %v2117
    %2966 = vmatpush1.bf16.msra.mxu0 %v2116
    %2967 = vmatprep.subr.bf16.mxu0 %v2119
    %2968 = vmatpush1.bf16.msra.mxu0 %v2118
    %2969 = vmatprep.subr.bf16.mxu0 %v2121
    %2970 = vmatpush1.bf16.msra.mxu0 %v2120
    %2971 = vmatprep.subr.bf16.mxu0 %v2123
    %2972 = vmatpush1.bf16.msra.mxu0 %v2122
    %2973 = vmatprep.mubr.bf16.mxu0 %v251
    %2974 = vmatmul.mubr.bf16.gmra.mrb[0].mxu0 %v250
    %v2975 = vpop.f32.mrb[0].mxu0
    %v2976 = vadd.f32 %v2935, %v2975
    %v2977 = vpop.f32.mrb[0].mxu0
    %v2978 = vadd.f32 %v2937, %v2977
    %v2979 = vpop.f32.mrb[0].mxu0
    %v2980 = vpop.f32.mrb[0].mxu0
    %2981 = vdwg.mxu0
    %2982 = vmatprep.subr.bf16.mxu0 %v2125
    %2983 = vmatpush1.bf16.msra.mxu0 %v2124
    %2984 = vmatprep.subr.bf16.mxu0 %v2127
    %2985 = vmatpush1.bf16.msra.mxu0 %v2126
    %2986 = vmatprep.subr.bf16.mxu0 %v2129
    %2987 = vmatpush1.bf16.msra.mxu0 %v2128
    %2988 = vmatprep.subr.bf16.mxu0 %v2131
    %2989 = vmatpush1.bf16.msra.mxu0 %v2130
    %2990 = vmatprep.subr.bf16.mxu0 %v2133
    %2991 = vmatpush1.bf16.msra.mxu0 %v2132
    %2992 = vmatprep.subr.bf16.mxu0 %v2135
    %2993 = vmatpush1.bf16.msra.mxu0 %v2134
    %2994 = vmatprep.subr.bf16.mxu0 %v2137
    %2995 = vmatpush1.bf16.msra.mxu0 %v2136
    %2996 = vmatprep.subr.bf16.mxu0 %v2139
    %2997 = vmatpush1.bf16.msra.mxu0 %v2138
    %2998 = vmatprep.subr.bf16.mxu0 %v2141
    %2999 = vmatpush1.bf16.msra.mxu0 %v2140
    %3000 = vmatprep.subr.bf16.mxu0 %v2143
    %3001 = vmatpush1.bf16.msra.mxu0 %v2142
    %3002 = vmatprep.subr.bf16.mxu0 %v2145
    %3003 = vmatpush1.bf16.msra.mxu0 %v2144
    %3004 = vmatprep.subr.bf16.mxu0 %v2147
    %3005 = vmatpush1.bf16.msra.mxu0 %v2146
    %3006 = vmatprep.subr.bf16.mxu0 %v2149
    %3007 = vmatpush1.bf16.msra.mxu0 %v2148
    %3008 = vmatprep.subr.bf16.mxu0 %v2151
    %3009 = vmatpush1.bf16.msra.mxu0 %v2150
    %3010 = vmatprep.subr.bf16.mxu0 %v2153
    %3011 = vmatpush1.bf16.msra.mxu0 %v2152
    %3012 = vmatprep.subr.bf16.mxu0 %v2155
    %3013 = vmatpush1.bf16.msra.mxu0 %v2154
    %3014 = vmatprep.mubr.bf16.mxu0 %v253
    %3015 = vmatmul.mubr.bf16.gmra.mrb[0].mxu0 %v252
    %v3016 = vpop.f32.mrb[0].mxu0
    %v3017 = vadd.f32 %v2976, %v3016
    %v3018 = vpop.f32.mrb[0].mxu0
    %v3019 = vadd.f32 %v2978, %v3018
    %v3020 = vpop.f32.mrb[0].mxu0
    %v3021 = vpop.f32.mrb[0].mxu0
    %3022 = vdwg.mxu0
    %3023 = vmatprep.subr.bf16.mxu0 %v2157
    %3024 = vmatpush1.bf16.msra.mxu0 %v2156
    %3025 = vmatprep.subr.bf16.mxu0 %v2159
    %3026 = vmatpush1.bf16.msra.mxu0 %v2158
    %3027 = vmatprep.subr.bf16.mxu0 %v2161
    %3028 = vmatpush1.bf16.msra.mxu0 %v2160
    %3029 = vmatprep.subr.bf16.mxu0 %v2163
    %3030 = vmatpush1.bf16.msra.mxu0 %v2162
    %3031 = vmatprep.subr.bf16.mxu0 %v2165
    %3032 = vmatpush1.bf16.msra.mxu0 %v2164
    %3033 = vmatprep.subr.bf16.mxu0 %v2167
    %3034 = vmatpush1.bf16.msra.mxu0 %v2166
    %3035 = vmatprep.subr.bf16.mxu0 %v2169
    %3036 = vmatpush1.bf16.msra.mxu0 %v2168
    %3037 = vmatprep.subr.bf16.mxu0 %v2171
    %3038 = vmatpush1.bf16.msra.mxu0 %v2170
    %3039 = vmatprep.subr.bf16.mxu0 %v2173
    %3040 = vmatpush1.bf16.msra.mxu0 %v2172
    %3041 = vmatprep.subr.bf16.mxu0 %v2175
    %3042 = vmatpush1.bf16.msra.mxu0 %v2174
    %3043 = vmatprep.subr.bf16.mxu0 %v2177
    %3044 = vmatpush1.bf16.msra.mxu0 %v2176
    %3045 = vmatprep.subr.bf16.mxu0 %v2179
    %3046 = vmatpush1.bf16.msra.mxu0 %v2178
    %3047 = vmatprep.subr.bf16.mxu0 %v2181
    %3048 = vmatpush1.bf16.msra.mxu0 %v2180
    %3049 = vmatprep.subr.bf16.mxu0 %v2183
    %3050 = vmatpush1.bf16.msra.mxu0 %v2182
    %3051 = vmatprep.subr.bf16.mxu0 %v2185
    %3052 = vmatpush1.bf16.msra.mxu0 %v2184
    %3053 = vmatprep.subr.bf16.mxu0 %v2187
    %3054 = vmatpush1.bf16.msra.mxu0 %v2186
    %3055 = vmatprep.mubr.bf16.mxu0 %v255
    %3056 = vmatmul.mubr.bf16.gmra.mrb[0].mxu0 %v254
    %v3057 = vpop.f32.mrb[0].mxu0
    %v3058 = vadd.f32 %v3017, %v3057
    %v3059 = vpop.f32.mrb[0].mxu0
    %v3060 = vadd.f32 %v3019, %v3059
    %v3061 = vpop.f32.mrb[0].mxu0
    %v3062 = vpop.f32.mrb[0].mxu0
    %3063 = vdwg.mxu0
    %v3064 = vmax.f32 %v3058, 0.0
    %v3065 = vmax.f32 %v3060, 0.0
    %v3066 = vpack.c.bf16 %v3064, %v3064
    %v3067 = vpack.c.bf16 %v3065, %v3065
    %v3068 = vld [vmem:[#allocation8] sm:$0xff]
    %v3069 = vld [vmem:[#allocation8 + $0x8] sm:$0xff]
    %v3070 = vld [vmem:[#allocation8 + $0x10] sm:$0xff]
    %v3071 = vld [vmem:[#allocation8 + $0x18] sm:$0xff]
    %v3072 = vld [vmem:[#allocation8 + $0x20] sm:$0xff]
    %v3073 = vld [vmem:[#allocation8 + $0x28] sm:$0xff]
    %v3074 = vld [vmem:[#allocation8 + $0x30] sm:$0xff]
    %v3075 = vld [vmem:[#allocation8 + $0x38] sm:$0xff]
    %v3076 = vld [vmem:[#allocation8 + $0x40] sm:$0xff]
    %v3077 = vld [vmem:[#allocation8 + $0x48] sm:$0xff]
    %v3078 = vld [vmem:[#allocation8 + $0x50] sm:$0xff]
    %v3079 = vld [vmem:[#allocation8 + $0x58] sm:$0xff]
    %v3080 = vld [vmem:[#allocation8 + $0x60] sm:$0xff]
    %v3081 = vld [vmem:[#allocation8 + $0x68] sm:$0xff]
    %v3082 = vld [vmem:[#allocation8 + $0x70] sm:$0xff]
    %v3083 = vld [vmem:[#allocation8 + $0x78] sm:$0xff]
    %v3084 = vld [vmem:[#allocation8 + $0x80] sm:$0xff]
    %v3085 = vld [vmem:[#allocation8 + $0x88] sm:$0xff]
    %v3086 = vld [vmem:[#allocation8 + $0x90] sm:$0xff]
    %v3087 = vld [vmem:[#allocation8 + $0x98] sm:$0xff]
    %v3088 = vld [vmem:[#allocation8 + $0xa0] sm:$0xff]
    %v3089 = vld [vmem:[#allocation8 + $0xa8] sm:$0xff]
    %v3090 = vld [vmem:[#allocation8 + $0xb0] sm:$0xff]
    %v3091 = vld [vmem:[#allocation8 + $0xb8] sm:$0xff]
    %v3092 = vld [vmem:[#allocation8 + $0xc0] sm:$0xff]
    %v3093 = vld [vmem:[#allocation8 + $0xc8] sm:$0xff]
    %v3094 = vld [vmem:[#allocation8 + $0xd0] sm:$0xff]
    %v3095 = vld [vmem:[#allocation8 + $0xd8] sm:$0xff]
    %v3096 = vld [vmem:[#allocation8 + $0xe0] sm:$0xff]
    %v3097 = vld [vmem:[#allocation8 + $0xe8] sm:$0xff]
    %v3098 = vld [vmem:[#allocation8 + $0xf0] sm:$0xff]
    %v3099 = vld [vmem:[#allocation8 + $0xf8] sm:$0xff]
    %v3100 = vld [vmem:[#allocation10] sm:$0x3]
    %v3102 = vlaneseq
    %v3103 = vshrl.u32 %v3102, 7
    %v3104 = vsub.s32 0, %v3103
    %v3105 = vrot.slane %v3100, %v3104
    %v3106 = vlaneseq
    %v3107 = vshrl.u32 %v3106, 7
    %v3108 = vsub.s32 1, %v3107
    %v3109 = vrot.slane %v3100, %v3108
    %v3144 = vunpack.c.l.b16 %v3068
    %v3145 = vunpack.c.h.b16 %v3068
    %v3146 = vunpack.c.l.b16 %v3069
    %v3147 = vunpack.c.h.b16 %v3069
    %v3148 = vunpack.c.l.b16 %v3070
    %v3149 = vunpack.c.h.b16 %v3070
    %v3150 = vunpack.c.l.b16 %v3071
    %v3151 = vunpack.c.h.b16 %v3071
    %v3152 = vunpack.c.l.b16 %v3072
    %v3153 = vunpack.c.h.b16 %v3072
    %v3154 = vunpack.c.l.b16 %v3073
    %v3155 = vunpack.c.h.b16 %v3073
    %v3156 = vunpack.c.l.b16 %v3074
    %v3157 = vunpack.c.h.b16 %v3074
    %v3158 = vunpack.c.l.b16 %v3075
    %v3159 = vunpack.c.h.b16 %v3075
    %v3160 = vunpack.c.l.b16 %v3076
    %v3161 = vunpack.c.h.b16 %v3076
    %v3162 = vunpack.c.l.b16 %v3077
    %v3163 = vunpack.c.h.b16 %v3077
    %v3164 = vunpack.c.l.b16 %v3078
    %v3165 = vunpack.c.h.b16 %v3078
    %v3166 = vunpack.c.l.b16 %v3079
    %v3167 = vunpack.c.h.b16 %v3079
    %v3168 = vunpack.c.l.b16 %v3080
    %v3169 = vunpack.c.h.b16 %v3080
    %v3170 = vunpack.c.l.b16 %v3081
    %v3171 = vunpack.c.h.b16 %v3081
    %v3172 = vunpack.c.l.b16 %v3082
    %v3173 = vunpack.c.h.b16 %v3082
    %v3174 = vunpack.c.l.b16 %v3083
    %v3175 = vunpack.c.h.b16 %v3083
    %v3176 = vunpack.c.l.b16 %v3084
    %v3177 = vunpack.c.h.b16 %v3084
    %v3178 = vunpack.c.l.b16 %v3085
    %v3179 = vunpack.c.h.b16 %v3085
    %v3180 = vunpack.c.l.b16 %v3086
    %v3181 = vunpack.c.h.b16 %v3086
    %v3182 = vunpack.c.l.b16 %v3087
    %v3183 = vunpack.c.h.b16 %v3087
    %v3184 = vunpack.c.l.b16 %v3088
    %v3185 = vunpack.c.h.b16 %v3088
    %v3186 = vunpack.c.l.b16 %v3089
    %v3187 = vunpack.c.h.b16 %v3089
    %v3188 = vunpack.c.l.b16 %v3090
    %v3189 = vunpack.c.h.b16 %v3090
    %v3190 = vunpack.c.l.b16 %v3091
    %v3191 = vunpack.c.h.b16 %v3091
    %v3192 = vunpack.c.l.b16 %v3092
    %v3193 = vunpack.c.h.b16 %v3092
    %v3194 = vunpack.c.l.b16 %v3093
    %v3195 = vunpack.c.h.b16 %v3093
    %v3196 = vunpack.c.l.b16 %v3094
    %v3197 = vunpack.c.h.b16 %v3094
    %v3198 = vunpack.c.l.b16 %v3095
    %v3199 = vunpack.c.h.b16 %v3095
    %v3200 = vunpack.c.l.b16 %v3096
    %v3201 = vunpack.c.h.b16 %v3096
    %v3202 = vunpack.c.l.b16 %v3097
    %v3203 = vunpack.c.h.b16 %v3097
    %v3204 = vunpack.c.l.b16 %v3098
    %v3205 = vunpack.c.h.b16 %v3098
    %v3206 = vunpack.c.l.b16 %v3099
    %v3207 = vunpack.c.h.b16 %v3099
    %v3208 = vpack.c.b16 %v3146, %v3144
    %v3209 = vpack.c.b16 %v3147, %v3145
    %v3210 = vpack.c.b16 %v3150, %v3148
    %v3211 = vpack.c.b16 %v3151, %v3149
    %v3212 = vpack.c.b16 %v3154, %v3152
    %v3213 = vpack.c.b16 %v3155, %v3153
    %v3214 = vpack.c.b16 %v3158, %v3156
    %v3215 = vpack.c.b16 %v3159, %v3157
    %v3216 = vpack.c.b16 %v3162, %v3160
    %v3217 = vpack.c.b16 %v3163, %v3161
    %v3218 = vpack.c.b16 %v3166, %v3164
    %v3219 = vpack.c.b16 %v3167, %v3165
    %v3220 = vpack.c.b16 %v3170, %v3168
    %v3221 = vpack.c.b16 %v3171, %v3169
    %v3222 = vpack.c.b16 %v3174, %v3172
    %v3223 = vpack.c.b16 %v3175, %v3173
    %v3224 = vpack.c.b16 %v3178, %v3176
    %v3225 = vpack.c.b16 %v3179, %v3177
    %v3226 = vpack.c.b16 %v3182, %v3180
    %v3227 = vpack.c.b16 %v3183, %v3181
    %v3228 = vpack.c.b16 %v3186, %v3184
    %v3229 = vpack.c.b16 %v3187, %v3185
    %v3230 = vpack.c.b16 %v3190, %v3188
    %v3231 = vpack.c.b16 %v3191, %v3189
    %v3232 = vpack.c.b16 %v3194, %v3192
    %v3233 = vpack.c.b16 %v3195, %v3193
    %v3234 = vpack.c.b16 %v3198, %v3196
    %v3235 = vpack.c.b16 %v3199, %v3197
    %v3236 = vpack.c.b16 %v3202, %v3200
    %v3237 = vpack.c.b16 %v3203, %v3201
    %v3238 = vpack.c.b16 %v3206, %v3204
    %v3239 = vpack.c.b16 %v3207, %v3205
    %3272 = vmatprep.subr.bf16.mxu0 %v3209
    %3273 = vmatpush1.bf16.msra.mxu0 %v3208
    %3274 = vmatprep.subr.bf16.mxu0 %v3211
    %3275 = vmatpush1.bf16.msra.mxu0 %v3210
    %3276 = vmatprep.subr.bf16.mxu0 %v3213
    %3277 = vmatpush1.bf16.msra.mxu0 %v3212
    %3278 = vmatprep.subr.bf16.mxu0 %v3215
    %3279 = vmatpush1.bf16.msra.mxu0 %v3214
    %3280 = vmatprep.subr.bf16.mxu0 %v3217
    %3281 = vmatpush1.bf16.msra.mxu0 %v3216
    %3282 = vmatprep.subr.bf16.mxu0 %v3219
    %3283 = vmatpush1.bf16.msra.mxu0 %v3218
    %3284 = vmatprep.subr.bf16.mxu0 %v3221
    %3285 = vmatpush1.bf16.msra.mxu0 %v3220
    %3286 = vmatprep.subr.bf16.mxu0 %v3223
    %3287 = vmatpush1.bf16.msra.mxu0 %v3222
    %3288 = vmatprep.subr.bf16.mxu0 %v3225
    %3289 = vmatpush1.bf16.msra.mxu0 %v3224
    %3290 = vmatprep.subr.bf16.mxu0 %v3227
    %3291 = vmatpush1.bf16.msra.mxu0 %v3226
    %3292 = vmatprep.subr.bf16.mxu0 %v3229
    %3293 = vmatpush1.bf16.msra.mxu0 %v3228
    %3294 = vmatprep.subr.bf16.mxu0 %v3231
    %3295 = vmatpush1.bf16.msra.mxu0 %v3230
    %3296 = vmatprep.subr.bf16.mxu0 %v3233
    %3297 = vmatpush1.bf16.msra.mxu0 %v3232
    %3298 = vmatprep.subr.bf16.mxu0 %v3235
    %3299 = vmatpush1.bf16.msra.mxu0 %v3234
    %3300 = vmatprep.subr.bf16.mxu0 %v3237
    %3301 = vmatpush1.bf16.msra.mxu0 %v3236
    %3302 = vmatprep.subr.bf16.mxu0 %v3239
    %3303 = vmatpush1.bf16.msra.mxu0 %v3238
    %3304 = vmatprep.mubr.bf16.mxu0 %v3067
    %3305 = vmatmul.mubr.bf16.gmra.mrb[0].mxu0 %v3066
    %v3306 = vpop.f32.mrb[0].mxu0
    %v3307 = vadd.f32 %v3105, %v3306
    %v3308 = vpop.f32.mrb[0].mxu0
    %v3309 = vadd.f32 %v3109, %v3308
    %v3310 = vpop.f32.mrb[0].mxu0
    %v3311 = vpop.f32.mrb[0].mxu0
    %3312 = vdwg.mxu0
    %v3313 = vmax.f32 %v3307, 0.0
    %v3314 = vmax.f32 %v3309, 0.0
    %v3315 = vpack.c.bf16 %v3313, %v3313
    %v3316 = vpack.c.bf16 %v3314, %v3314
    %v3317 = vld [vmem:[#allocation11] sm:$0xff]
    %v3318 = vld [vmem:[#allocation11 + $0x8] sm:$0xff]
    %v3319 = vld [vmem:[#allocation11 + $0x10] sm:$0xff]
    %v3320 = vld [vmem:[#allocation11 + $0x18] sm:$0xff]
    %v3321 = vld [vmem:[#allocation11 + $0x20] sm:$0xff]
    %v3322 = vld [vmem:[#allocation11 + $0x28] sm:$0xff]
    %v3323 = vld [vmem:[#allocation11 + $0x30] sm:$0xff]
    %v3324 = vld [vmem:[#allocation11 + $0x38] sm:$0xff]
    %v3325 = vld [vmem:[#allocation11 + $0x40] sm:$0xff]
    %v3326 = vld [vmem:[#allocation11 + $0x48] sm:$0xff]
    %v3327 = vld [vmem:[#allocation11 + $0x50] sm:$0xff]
    %v3328 = vld [vmem:[#allocation11 + $0x58] sm:$0xff]
    %v3329 = vld [vmem:[#allocation11 + $0x60] sm:$0xff]
    %v3330 = vld [vmem:[#allocation11 + $0x68] sm:$0xff]
    %v3331 = vld [vmem:[#allocation11 + $0x70] sm:$0xff]
    %v3332 = vld [vmem:[#allocation11 + $0x78] sm:$0xff]
    %v3333 = vld [vmem:[#allocation11 + $0x80] sm:$0xff]
    %v3334 = vld [vmem:[#allocation11 + $0x88] sm:$0xff]
    %v3335 = vld [vmem:[#allocation11 + $0x90] sm:$0xff]
    %v3336 = vld [vmem:[#allocation11 + $0x98] sm:$0xff]
    %v3337 = vld [vmem:[#allocation11 + $0xa0] sm:$0xff]
    %v3338 = vld [vmem:[#allocation11 + $0xa8] sm:$0xff]
    %v3339 = vld [vmem:[#allocation11 + $0xb0] sm:$0xff]
    %v3340 = vld [vmem:[#allocation11 + $0xb8] sm:$0xff]
    %v3341 = vld [vmem:[#allocation11 + $0xc0] sm:$0xff]
    %v3342 = vld [vmem:[#allocation11 + $0xc8] sm:$0xff]
    %v3343 = vld [vmem:[#allocation11 + $0xd0] sm:$0xff]
    %v3344 = vld [vmem:[#allocation11 + $0xd8] sm:$0xff]
    %v3345 = vld [vmem:[#allocation11 + $0xe0] sm:$0xff]
    %v3346 = vld [vmem:[#allocation11 + $0xe8] sm:$0xff]
    %v3347 = vld [vmem:[#allocation11 + $0xf0] sm:$0xff]
    %v3348 = vld [vmem:[#allocation11 + $0xf8] sm:$0xff]
    %v3349 = vld [vmem:[#allocation13] sm:$0x3]
    %v3351 = vlaneseq
    %v3352 = vshrl.u32 %v3351, 7
    %v3353 = vsub.s32 0, %v3352
    %v3354 = vrot.slane %v3349, %v3353
    %v3355 = vlaneseq
    %v3356 = vshrl.u32 %v3355, 7
    %v3357 = vsub.s32 1, %v3356
    %v3358 = vrot.slane %v3349, %v3357
    %v3393 = vunpack.c.l.b16 %v3317
    %v3394 = vunpack.c.h.b16 %v3317
    %v3395 = vunpack.c.l.b16 %v3318
    %v3396 = vunpack.c.h.b16 %v3318
    %v3397 = vunpack.c.l.b16 %v3319
    %v3398 = vunpack.c.h.b16 %v3319
    %v3399 = vunpack.c.l.b16 %v3320
    %v3400 = vunpack.c.h.b16 %v3320
    %v3401 = vunpack.c.l.b16 %v3321
    %v3402 = vunpack.c.h.b16 %v3321
    %v3403 = vunpack.c.l.b16 %v3322
    %v3404 = vunpack.c.h.b16 %v3322
    %v3405 = vunpack.c.l.b16 %v3323
    %v3406 = vunpack.c.h.b16 %v3323
    %v3407 = vunpack.c.l.b16 %v3324
    %v3408 = vunpack.c.h.b16 %v3324
    %v3409 = vunpack.c.l.b16 %v3325
    %v3410 = vunpack.c.h.b16 %v3325
    %v3411 = vunpack.c.l.b16 %v3326
    %v3412 = vunpack.c.h.b16 %v3326
    %v3413 = vunpack.c.l.b16 %v3327
    %v3414 = vunpack.c.h.b16 %v3327
    %v3415 = vunpack.c.l.b16 %v3328
    %v3416 = vunpack.c.h.b16 %v3328
    %v3417 = vunpack.c.l.b16 %v3329
    %v3418 = vunpack.c.h.b16 %v3329
    %v3419 = vunpack.c.l.b16 %v3330
    %v3420 = vunpack.c.h.b16 %v3330
    %v3421 = vunpack.c.l.b16 %v3331
    %v3422 = vunpack.c.h.b16 %v3331
    %v3423 = vunpack.c.l.b16 %v3332
    %v3424 = vunpack.c.h.b16 %v3332
    %v3425 = vunpack.c.l.b16 %v3333
    %v3426 = vunpack.c.h.b16 %v3333
    %v3427 = vunpack.c.l.b16 %v3334
    %v3428 = vunpack.c.h.b16 %v3334
    %v3429 = vunpack.c.l.b16 %v3335
    %v3430 = vunpack.c.h.b16 %v3335
    %v3431 = vunpack.c.l.b16 %v3336
    %v3432 = vunpack.c.h.b16 %v3336
    %v3433 = vunpack.c.l.b16 %v3337
    %v3434 = vunpack.c.h.b16 %v3337
    %v3435 = vunpack.c.l.b16 %v3338
    %v3436 = vunpack.c.h.b16 %v3338
    %v3437 = vunpack.c.l.b16 %v3339
    %v3438 = vunpack.c.h.b16 %v3339
    %v3439 = vunpack.c.l.b16 %v3340
    %v3440 = vunpack.c.h.b16 %v3340
    %v3441 = vunpack.c.l.b16 %v3341
    %v3442 = vunpack.c.h.b16 %v3341
    %v3443 = vunpack.c.l.b16 %v3342
    %v3444 = vunpack.c.h.b16 %v3342
    %v3445 = vunpack.c.l.b16 %v3343
    %v3446 = vunpack.c.h.b16 %v3343
    %v3447 = vunpack.c.l.b16 %v3344
    %v3448 = vunpack.c.h.b16 %v3344
    %v3449 = vunpack.c.l.b16 %v3345
    %v3450 = vunpack.c.h.b16 %v3345
    %v3451 = vunpack.c.l.b16 %v3346
    %v3452 = vunpack.c.h.b16 %v3346
    %v3453 = vunpack.c.l.b16 %v3347
    %v3454 = vunpack.c.h.b16 %v3347
    %v3455 = vunpack.c.l.b16 %v3348
    %v3456 = vunpack.c.h.b16 %v3348
    %v3457 = vpack.c.b16 %v3395, %v3393
    %v3458 = vpack.c.b16 %v3396, %v3394
    %v3459 = vpack.c.b16 %v3399, %v3397
    %v3460 = vpack.c.b16 %v3400, %v3398
    %v3461 = vpack.c.b16 %v3403, %v3401
    %v3462 = vpack.c.b16 %v3404, %v3402
    %v3463 = vpack.c.b16 %v3407, %v3405
    %v3464 = vpack.c.b16 %v3408, %v3406
    %v3465 = vpack.c.b16 %v3411, %v3409
    %v3466 = vpack.c.b16 %v3412, %v3410
    %v3467 = vpack.c.b16 %v3415, %v3413
    %v3468 = vpack.c.b16 %v3416, %v3414
    %v3469 = vpack.c.b16 %v3419, %v3417
    %v3470 = vpack.c.b16 %v3420, %v3418
    %v3471 = vpack.c.b16 %v3423, %v3421
    %v3472 = vpack.c.b16 %v3424, %v3422
    %v3473 = vpack.c.b16 %v3427, %v3425
    %v3474 = vpack.c.b16 %v3428, %v3426
    %v3475 = vpack.c.b16 %v3431, %v3429
    %v3476 = vpack.c.b16 %v3432, %v3430
    %v3477 = vpack.c.b16 %v3435, %v3433
    %v3478 = vpack.c.b16 %v3436, %v3434
    %v3479 = vpack.c.b16 %v3439, %v3437
    %v3480 = vpack.c.b16 %v3440, %v3438
    %v3481 = vpack.c.b16 %v3443, %v3441
    %v3482 = vpack.c.b16 %v3444, %v3442
    %v3483 = vpack.c.b16 %v3447, %v3445
    %v3484 = vpack.c.b16 %v3448, %v3446
    %v3485 = vpack.c.b16 %v3451, %v3449
    %v3486 = vpack.c.b16 %v3452, %v3450
    %v3487 = vpack.c.b16 %v3455, %v3453
    %v3488 = vpack.c.b16 %v3456, %v3454
    %3521 = vmatprep.subr.bf16.mxu0 %v3458
    %3522 = vmatpush1.bf16.msra.mxu0 %v3457
    %3523 = vmatprep.subr.bf16.mxu0 %v3460
    %3524 = vmatpush1.bf16.msra.mxu0 %v3459
    %3525 = vmatprep.subr.bf16.mxu0 %v3462
    %3526 = vmatpush1.bf16.msra.mxu0 %v3461
    %3527 = vmatprep.subr.bf16.mxu0 %v3464
    %3528 = vmatpush1.bf16.msra.mxu0 %v3463
    %3529 = vmatprep.subr.bf16.mxu0 %v3466
    %3530 = vmatpush1.bf16.msra.mxu0 %v3465
    %3531 = vmatprep.subr.bf16.mxu0 %v3468
    %3532 = vmatpush1.bf16.msra.mxu0 %v3467
    %3533 = vmatprep.subr.bf16.mxu0 %v3470
    %3534 = vmatpush1.bf16.msra.mxu0 %v3469
    %3535 = vmatprep.subr.bf16.mxu0 %v3472
    %3536 = vmatpush1.bf16.msra.mxu0 %v3471
    %3537 = vmatprep.subr.bf16.mxu0 %v3474
    %3538 = vmatpush1.bf16.msra.mxu0 %v3473
    %3539 = vmatprep.subr.bf16.mxu0 %v3476
    %3540 = vmatpush1.bf16.msra.mxu0 %v3475
    %3541 = vmatprep.subr.bf16.mxu0 %v3478
    %3542 = vmatpush1.bf16.msra.mxu0 %v3477
    %3543 = vmatprep.subr.bf16.mxu0 %v3480
    %3544 = vmatpush1.bf16.msra.mxu0 %v3479
    %3545 = vmatprep.subr.bf16.mxu0 %v3482
    %3546 = vmatpush1.bf16.msra.mxu0 %v3481
    %3547 = vmatprep.subr.bf16.mxu0 %v3484
    %3548 = vmatpush1.bf16.msra.mxu0 %v3483
    %3549 = vmatprep.subr.bf16.mxu0 %v3486
    %3550 = vmatpush1.bf16.msra.mxu0 %v3485
    %3551 = vmatprep.subr.bf16.mxu0 %v3488
    %3552 = vmatpush1.bf16.msra.mxu0 %v3487
    %3553 = vmatprep.mubr.bf16.mxu0 %v3316
    %3554 = vmatmul.mubr.bf16.gmra.mrb[0].mxu0 %v3315
    %v3555 = vpop.f32.mrb[0].mxu0
    %v3556 = vadd.f32 %v3354, %v3555
    %v3557 = vpop.f32.mrb[0].mxu0
    %v3558 = vadd.f32 %v3358, %v3557
    %v3559 = vpop.f32.mrb[0].mxu0
    %v3560 = vpop.f32.mrb[0].mxu0
    %3561 = vdwg.mxu0
    %v3562 = vmax.f32 %v3556, 0.0
    %v3563 = vmax.f32 %v3558, 0.0
    %v3564 = vpack.c.bf16 %v3562, %v3562
    %v3565 = vpack.c.bf16 %v3563, %v3563
    %v3566 = vld [vmem:[#allocation14] sm:$0xff]
    %v3567 = vld [vmem:[#allocation14 + $0x8] sm:$0xff]
    %v3568 = vld [vmem:[#allocation14 + $0x10] sm:$0xff]
    %v3569 = vld [vmem:[#allocation14 + $0x18] sm:$0xff]
    %v3570 = vld [vmem:[#allocation14 + $0x20] sm:$0xff]
    %v3571 = vld [vmem:[#allocation14 + $0x28] sm:$0xff]
    %v3572 = vld [vmem:[#allocation14 + $0x30] sm:$0xff]
    %v3573 = vld [vmem:[#allocation14 + $0x38] sm:$0xff]
    %v3574 = vld [vmem:[#allocation14 + $0x40] sm:$0xff]
    %v3575 = vld [vmem:[#allocation14 + $0x48] sm:$0xff]
    %v3576 = vld [vmem:[#allocation14 + $0x50] sm:$0xff]
    %v3577 = vld [vmem:[#allocation14 + $0x58] sm:$0xff]
    %v3578 = vld [vmem:[#allocation14 + $0x60] sm:$0xff]
    %v3579 = vld [vmem:[#allocation14 + $0x68] sm:$0xff]
    %v3580 = vld [vmem:[#allocation14 + $0x70] sm:$0xff]
    %v3581 = vld [vmem:[#allocation14 + $0x78] sm:$0xff]
    %v3582 = vld [vmem:[#allocation14 + $0x80] sm:$0xff]
    %v3583 = vld [vmem:[#allocation14 + $0x88] sm:$0xff]
    %v3584 = vld [vmem:[#allocation14 + $0x90] sm:$0xff]
    %v3585 = vld [vmem:[#allocation14 + $0x98] sm:$0xff]
    %v3586 = vld [vmem:[#allocation14 + $0xa0] sm:$0xff]
    %v3587 = vld [vmem:[#allocation14 + $0xa8] sm:$0xff]
    %v3588 = vld [vmem:[#allocation14 + $0xb0] sm:$0xff]
    %v3589 = vld [vmem:[#allocation14 + $0xb8] sm:$0xff]
    %v3590 = vld [vmem:[#allocation14 + $0xc0] sm:$0xff]
    %v3591 = vld [vmem:[#allocation14 + $0xc8] sm:$0xff]
    %v3592 = vld [vmem:[#allocation14 + $0xd0] sm:$0xff]
    %v3593 = vld [vmem:[#allocation14 + $0xd8] sm:$0xff]
    %v3594 = vld [vmem:[#allocation14 + $0xe0] sm:$0xff]
    %v3595 = vld [vmem:[#allocation14 + $0xe8] sm:$0xff]
    %v3596 = vld [vmem:[#allocation14 + $0xf0] sm:$0xff]
    %v3597 = vld [vmem:[#allocation14 + $0xf8] sm:$0xff]
    %v3598 = vld [vmem:[#allocation16] sm:$0x3]
    %v3600 = vlaneseq
    %v3601 = vshrl.u32 %v3600, 7
    %v3602 = vsub.s32 0, %v3601
    %v3603 = vrot.slane %v3598, %v3602
    %v3604 = vlaneseq
    %v3605 = vshrl.u32 %v3604, 7
    %v3606 = vsub.s32 1, %v3605
    %v3607 = vrot.slane %v3598, %v3606
    %v3642 = vunpack.c.l.b16 %v3566
    %v3643 = vunpack.c.h.b16 %v3566
    %v3644 = vunpack.c.l.b16 %v3567
    %v3645 = vunpack.c.h.b16 %v3567
    %v3646 = vunpack.c.l.b16 %v3568
    %v3647 = vunpack.c.h.b16 %v3568
    %v3648 = vunpack.c.l.b16 %v3569
    %v3649 = vunpack.c.h.b16 %v3569
    %v3650 = vunpack.c.l.b16 %v3570
    %v3651 = vunpack.c.h.b16 %v3570
    %v3652 = vunpack.c.l.b16 %v3571
    %v3653 = vunpack.c.h.b16 %v3571
    %v3654 = vunpack.c.l.b16 %v3572
    %v3655 = vunpack.c.h.b16 %v3572
    %v3656 = vunpack.c.l.b16 %v3573
    %v3657 = vunpack.c.h.b16 %v3573
    %v3658 = vunpack.c.l.b16 %v3574
    %v3659 = vunpack.c.h.b16 %v3574
    %v3660 = vunpack.c.l.b16 %v3575
    %v3661 = vunpack.c.h.b16 %v3575
    %v3662 = vunpack.c.l.b16 %v3576
    %v3663 = vunpack.c.h.b16 %v3576
    %v3664 = vunpack.c.l.b16 %v3577
    %v3665 = vunpack.c.h.b16 %v3577
    %v3666 = vunpack.c.l.b16 %v3578
    %v3667 = vunpack.c.h.b16 %v3578
    %v3668 = vunpack.c.l.b16 %v3579
    %v3669 = vunpack.c.h.b16 %v3579
    %v3670 = vunpack.c.l.b16 %v3580
    %v3671 = vunpack.c.h.b16 %v3580
    %v3672 = vunpack.c.l.b16 %v3581
    %v3673 = vunpack.c.h.b16 %v3581
    %v3674 = vunpack.c.l.b16 %v3582
    %v3675 = vunpack.c.h.b16 %v3582
    %v3676 = vunpack.c.l.b16 %v3583
    %v3677 = vunpack.c.h.b16 %v3583
    %v3678 = vunpack.c.l.b16 %v3584
    %v3679 = vunpack.c.h.b16 %v3584
    %v3680 = vunpack.c.l.b16 %v3585
    %v3681 = vunpack.c.h.b16 %v3585
    %v3682 = vunpack.c.l.b16 %v3586
    %v3683 = vunpack.c.h.b16 %v3586
    %v3684 = vunpack.c.l.b16 %v3587
    %v3685 = vunpack.c.h.b16 %v3587
    %v3686 = vunpack.c.l.b16 %v3588
    %v3687 = vunpack.c.h.b16 %v3588
    %v3688 = vunpack.c.l.b16 %v3589
    %v3689 = vunpack.c.h.b16 %v3589
    %v3690 = vunpack.c.l.b16 %v3590
    %v3691 = vunpack.c.h.b16 %v3590
    %v3692 = vunpack.c.l.b16 %v3591
    %v3693 = vunpack.c.h.b16 %v3591
    %v3694 = vunpack.c.l.b16 %v3592
    %v3695 = vunpack.c.h.b16 %v3592
    %v3696 = vunpack.c.l.b16 %v3593
    %v3697 = vunpack.c.h.b16 %v3593
    %v3698 = vunpack.c.l.b16 %v3594
    %v3699 = vunpack.c.h.b16 %v3594
    %v3700 = vunpack.c.l.b16 %v3595
    %v3701 = vunpack.c.h.b16 %v3595
    %v3702 = vunpack.c.l.b16 %v3596
    %v3703 = vunpack.c.h.b16 %v3596
    %v3704 = vunpack.c.l.b16 %v3597
    %v3705 = vunpack.c.h.b16 %v3597
    %v3706 = vpack.c.b16 %v3644, %v3642
    %v3707 = vpack.c.b16 %v3645, %v3643
    %v3708 = vpack.c.b16 %v3648, %v3646
    %v3709 = vpack.c.b16 %v3649, %v3647
    %v3710 = vpack.c.b16 %v3652, %v3650
    %v3711 = vpack.c.b16 %v3653, %v3651
    %v3712 = vpack.c.b16 %v3656, %v3654
    %v3713 = vpack.c.b16 %v3657, %v3655
    %v3714 = vpack.c.b16 %v3660, %v3658
    %v3715 = vpack.c.b16 %v3661, %v3659
    %v3716 = vpack.c.b16 %v3664, %v3662
    %v3717 = vpack.c.b16 %v3665, %v3663
    %v3718 = vpack.c.b16 %v3668, %v3666
    %v3719 = vpack.c.b16 %v3669, %v3667
    %v3720 = vpack.c.b16 %v3672, %v3670
    %v3721 = vpack.c.b16 %v3673, %v3671
    %v3722 = vpack.c.b16 %v3676, %v3674
    %v3723 = vpack.c.b16 %v3677, %v3675
    %v3724 = vpack.c.b16 %v3680, %v3678
    %v3725 = vpack.c.b16 %v3681, %v3679
    %v3726 = vpack.c.b16 %v3684, %v3682
    %v3727 = vpack.c.b16 %v3685, %v3683
    %v3728 = vpack.c.b16 %v3688, %v3686
    %v3729 = vpack.c.b16 %v3689, %v3687
    %v3730 = vpack.c.b16 %v3692, %v3690
    %v3731 = vpack.c.b16 %v3693, %v3691
    %v3732 = vpack.c.b16 %v3696, %v3694
    %v3733 = vpack.c.b16 %v3697, %v3695
    %v3734 = vpack.c.b16 %v3700, %v3698
    %v3735 = vpack.c.b16 %v3701, %v3699
    %v3736 = vpack.c.b16 %v3704, %v3702
    %v3737 = vpack.c.b16 %v3705, %v3703
    %3770 = vmatprep.subr.bf16.mxu0 %v3707
    %3771 = vmatpush1.bf16.msra.mxu0 %v3706
    %3772 = vmatprep.subr.bf16.mxu0 %v3709
    %3773 = vmatpush1.bf16.msra.mxu0 %v3708
    %3774 = vmatprep.subr.bf16.mxu0 %v3711
    %3775 = vmatpush1.bf16.msra.mxu0 %v3710
    %3776 = vmatprep.subr.bf16.mxu0 %v3713
    %3777 = vmatpush1.bf16.msra.mxu0 %v3712
    %3778 = vmatprep.subr.bf16.mxu0 %v3715
    %3779 = vmatpush1.bf16.msra.mxu0 %v3714
    %3780 = vmatprep.subr.bf16.mxu0 %v3717
    %3781 = vmatpush1.bf16.msra.mxu0 %v3716
    %3782 = vmatprep.subr.bf16.mxu0 %v3719
    %3783 = vmatpush1.bf16.msra.mxu0 %v3718
    %3784 = vmatprep.subr.bf16.mxu0 %v3721
    %3785 = vmatpush1.bf16.msra.mxu0 %v3720
    %3786 = vmatprep.subr.bf16.mxu0 %v3723
    %3787 = vmatpush1.bf16.msra.mxu0 %v3722
    %3788 = vmatprep.subr.bf16.mxu0 %v3725
    %3789 = vmatpush1.bf16.msra.mxu0 %v3724
    %3790 = vmatprep.subr.bf16.mxu0 %v3727
    %3791 = vmatpush1.bf16.msra.mxu0 %v3726
    %3792 = vmatprep.subr.bf16.mxu0 %v3729
    %3793 = vmatpush1.bf16.msra.mxu0 %v3728
    %3794 = vmatprep.subr.bf16.mxu0 %v3731
    %3795 = vmatpush1.bf16.msra.mxu0 %v3730
    %3796 = vmatprep.subr.bf16.mxu0 %v3733
    %3797 = vmatpush1.bf16.msra.mxu0 %v3732
    %3798 = vmatprep.subr.bf16.mxu0 %v3735
    %3799 = vmatpush1.bf16.msra.mxu0 %v3734
    %3800 = vmatprep.subr.bf16.mxu0 %v3737
    %3801 = vmatpush1.bf16.msra.mxu0 %v3736
    %3802 = vmatprep.mubr.bf16.mxu0 %v3565
    %3803 = vmatmul.mubr.bf16.gmra.mrb[0].mxu0 %v3564
    %v3804 = vpop.f32.mrb[0].mxu0
    %v3805 = vadd.f32 %v3603, %v3804
    %v3806 = vpop.f32.mrb[0].mxu0
    %v3807 = vadd.f32 %v3607, %v3806
    %v3808 = vpop.f32.mrb[0].mxu0
    %v3809 = vpop.f32.mrb[0].mxu0
    %3810 = vdwg.mxu0
    %v3811 = vmax.f32 %v3805, 0.0
    %v3812 = vmax.f32 %v3807, 0.0
    %v3813 = vpack.c.bf16 %v3811, %v3811
    %v3814 = vpack.c.bf16 %v3812, %v3812
    %v3815 = vld [vmem:[#allocation17] sm:$0xff]
    %v3816 = vld [vmem:[#allocation17 + $0x8] sm:$0xff]
    %v3817 = vld [vmem:[#allocation17 + $0x10] sm:$0xff]
    %v3818 = vld [vmem:[#allocation17 + $0x18] sm:$0xff]
    %v3819 = vld [vmem:[#allocation17 + $0x20] sm:$0xff]
    %v3820 = vld [vmem:[#allocation17 + $0x28] sm:$0xff]
    %v3821 = vld [vmem:[#allocation17 + $0x30] sm:$0xff]
    %v3822 = vld [vmem:[#allocation17 + $0x38] sm:$0xff]
    %v3823 = vld [vmem:[#allocation17 + $0x40] sm:$0xff]
    %v3824 = vld [vmem:[#allocation17 + $0x48] sm:$0xff]
    %v3825 = vld [vmem:[#allocation17 + $0x50] sm:$0xff]
    %v3826 = vld [vmem:[#allocation17 + $0x58] sm:$0xff]
    %v3827 = vld [vmem:[#allocation17 + $0x60] sm:$0xff]
    %v3828 = vld [vmem:[#allocation17 + $0x68] sm:$0xff]
    %v3829 = vld [vmem:[#allocation17 + $0x70] sm:$0xff]
    %v3830 = vld [vmem:[#allocation17 + $0x78] sm:$0xff]
    %v3831 = vld [vmem:[#allocation17 + $0x80] sm:$0xff]
    %v3832 = vld [vmem:[#allocation17 + $0x88] sm:$0xff]
    %v3833 = vld [vmem:[#allocation17 + $0x90] sm:$0xff]
    %v3834 = vld [vmem:[#allocation17 + $0x98] sm:$0xff]
    %v3835 = vld [vmem:[#allocation17 + $0xa0] sm:$0xff]
    %v3836 = vld [vmem:[#allocation17 + $0xa8] sm:$0xff]
    %v3837 = vld [vmem:[#allocation17 + $0xb0] sm:$0xff]
    %v3838 = vld [vmem:[#allocation17 + $0xb8] sm:$0xff]
    %v3839 = vld [vmem:[#allocation17 + $0xc0] sm:$0xff]
    %v3840 = vld [vmem:[#allocation17 + $0xc8] sm:$0xff]
    %v3841 = vld [vmem:[#allocation17 + $0xd0] sm:$0xff]
    %v3842 = vld [vmem:[#allocation17 + $0xd8] sm:$0xff]
    %v3843 = vld [vmem:[#allocation17 + $0xe0] sm:$0xff]
    %v3844 = vld [vmem:[#allocation17 + $0xe8] sm:$0xff]
    %v3845 = vld [vmem:[#allocation17 + $0xf0] sm:$0xff]
    %v3846 = vld [vmem:[#allocation17 + $0xf8] sm:$0xff]
    %v3847 = vld [vmem:[#allocation19] sm:$0x3]
    %v3849 = vlaneseq
    %v3850 = vshrl.u32 %v3849, 7
    %v3851 = vsub.s32 0, %v3850
    %v3852 = vrot.slane %v3847, %v3851
    %v3853 = vlaneseq
    %v3854 = vshrl.u32 %v3853, 7
    %v3855 = vsub.s32 1, %v3854
    %v3856 = vrot.slane %v3847, %v3855
    %v3891 = vunpack.c.l.b16 %v3815
    %v3892 = vunpack.c.h.b16 %v3815
    %v3893 = vunpack.c.l.b16 %v3816
    %v3894 = vunpack.c.h.b16 %v3816
    %v3895 = vunpack.c.l.b16 %v3817
    %v3896 = vunpack.c.h.b16 %v3817
    %v3897 = vunpack.c.l.b16 %v3818
    %v3898 = vunpack.c.h.b16 %v3818
    %v3899 = vunpack.c.l.b16 %v3819
    %v3900 = vunpack.c.h.b16 %v3819
    %v3901 = vunpack.c.l.b16 %v3820
    %v3902 = vunpack.c.h.b16 %v3820
    %v3903 = vunpack.c.l.b16 %v3821
    %v3904 = vunpack.c.h.b16 %v3821
    %v3905 = vunpack.c.l.b16 %v3822
    %v3906 = vunpack.c.h.b16 %v3822
    %v3907 = vunpack.c.l.b16 %v3823
    %v3908 = vunpack.c.h.b16 %v3823
    %v3909 = vunpack.c.l.b16 %v3824
    %v3910 = vunpack.c.h.b16 %v3824
    %v3911 = vunpack.c.l.b16 %v3825
    %v3912 = vunpack.c.h.b16 %v3825
    %v3913 = vunpack.c.l.b16 %v3826
    %v3914 = vunpack.c.h.b16 %v3826
    %v3915 = vunpack.c.l.b16 %v3827
    %v3916 = vunpack.c.h.b16 %v3827
    %v3917 = vunpack.c.l.b16 %v3828
    %v3918 = vunpack.c.h.b16 %v3828
    %v3919 = vunpack.c.l.b16 %v3829
    %v3920 = vunpack.c.h.b16 %v3829
    %v3921 = vunpack.c.l.b16 %v3830
    %v3922 = vunpack.c.h.b16 %v3830
    %v3923 = vunpack.c.l.b16 %v3831
    %v3924 = vunpack.c.h.b16 %v3831
    %v3925 = vunpack.c.l.b16 %v3832
    %v3926 = vunpack.c.h.b16 %v3832
    %v3927 = vunpack.c.l.b16 %v3833
    %v3928 = vunpack.c.h.b16 %v3833
    %v3929 = vunpack.c.l.b16 %v3834
    %v3930 = vunpack.c.h.b16 %v3834
    %v3931 = vunpack.c.l.b16 %v3835
    %v3932 = vunpack.c.h.b16 %v3835
    %v3933 = vunpack.c.l.b16 %v3836
    %v3934 = vunpack.c.h.b16 %v3836
    %v3935 = vunpack.c.l.b16 %v3837
    %v3936 = vunpack.c.h.b16 %v3837
    %v3937 = vunpack.c.l.b16 %v3838
    %v3938 = vunpack.c.h.b16 %v3838
    %v3939 = vunpack.c.l.b16 %v3839
    %v3940 = vunpack.c.h.b16 %v3839
    %v3941 = vunpack.c.l.b16 %v3840
    %v3942 = vunpack.c.h.b16 %v3840
    %v3943 = vunpack.c.l.b16 %v3841
    %v3944 = vunpack.c.h.b16 %v3841
    %v3945 = vunpack.c.l.b16 %v3842
    %v3946 = vunpack.c.h.b16 %v3842
    %v3947 = vunpack.c.l.b16 %v3843
    %v3948 = vunpack.c.h.b16 %v3843
    %v3949 = vunpack.c.l.b16 %v3844
    %v3950 = vunpack.c.h.b16 %v3844
    %v3951 = vunpack.c.l.b16 %v3845
    %v3952 = vunpack.c.h.b16 %v3845
    %v3953 = vunpack.c.l.b16 %v3846
    %v3954 = vunpack.c.h.b16 %v3846
    %v3955 = vpack.c.b16 %v3893, %v3891
    %v3956 = vpack.c.b16 %v3894, %v3892
    %v3957 = vpack.c.b16 %v3897, %v3895
    %v3958 = vpack.c.b16 %v3898, %v3896
    %v3959 = vpack.c.b16 %v3901, %v3899
    %v3960 = vpack.c.b16 %v3902, %v3900
    %v3961 = vpack.c.b16 %v3905, %v3903
    %v3962 = vpack.c.b16 %v3906, %v3904
    %v3963 = vpack.c.b16 %v3909, %v3907
    %v3964 = vpack.c.b16 %v3910, %v3908
    %v3965 = vpack.c.b16 %v3913, %v3911
    %v3966 = vpack.c.b16 %v3914, %v3912
    %v3967 = vpack.c.b16 %v3917, %v3915
    %v3968 = vpack.c.b16 %v3918, %v3916
    %v3969 = vpack.c.b16 %v3921, %v3919
    %v3970 = vpack.c.b16 %v3922, %v3920
    %v3971 = vpack.c.b16 %v3925, %v3923
    %v3972 = vpack.c.b16 %v3926, %v3924
    %v3973 = vpack.c.b16 %v3929, %v3927
    %v3974 = vpack.c.b16 %v3930, %v3928
    %v3975 = vpack.c.b16 %v3933, %v3931
    %v3976 = vpack.c.b16 %v3934, %v3932
    %v3977 = vpack.c.b16 %v3937, %v3935
    %v3978 = vpack.c.b16 %v3938, %v3936
    %v3979 = vpack.c.b16 %v3941, %v3939
    %v3980 = vpack.c.b16 %v3942, %v3940
    %v3981 = vpack.c.b16 %v3945, %v3943
    %v3982 = vpack.c.b16 %v3946, %v3944
    %v3983 = vpack.c.b16 %v3949, %v3947
    %v3984 = vpack.c.b16 %v3950, %v3948
    %v3985 = vpack.c.b16 %v3953, %v3951
    %v3986 = vpack.c.b16 %v3954, %v3952
    %4019 = vmatprep.subr.bf16.mxu0 %v3956
    %4020 = vmatpush1.bf16.msra.mxu0 %v3955
    %4021 = vmatprep.subr.bf16.mxu0 %v3958
    %4022 = vmatpush1.bf16.msra.mxu0 %v3957
    %4023 = vmatprep.subr.bf16.mxu0 %v3960
    %4024 = vmatpush1.bf16.msra.mxu0 %v3959
    %4025 = vmatprep.subr.bf16.mxu0 %v3962
    %4026 = vmatpush1.bf16.msra.mxu0 %v3961
    %4027 = vmatprep.subr.bf16.mxu0 %v3964
    %4028 = vmatpush1.bf16.msra.mxu0 %v3963
    %4029 = vmatprep.subr.bf16.mxu0 %v3966
    %4030 = vmatpush1.bf16.msra.mxu0 %v3965
    %4031 = vmatprep.subr.bf16.mxu0 %v3968
    %4032 = vmatpush1.bf16.msra.mxu0 %v3967
    %4033 = vmatprep.subr.bf16.mxu0 %v3970
    %4034 = vmatpush1.bf16.msra.mxu0 %v3969
    %4035 = vmatprep.subr.bf16.mxu0 %v3972
    %4036 = vmatpush1.bf16.msra.mxu0 %v3971
    %4037 = vmatprep.subr.bf16.mxu0 %v3974
    %4038 = vmatpush1.bf16.msra.mxu0 %v3973
    %4039 = vmatprep.subr.bf16.mxu0 %v3976
    %4040 = vmatpush1.bf16.msra.mxu0 %v3975
    %4041 = vmatprep.subr.bf16.mxu0 %v3978
    %4042 = vmatpush1.bf16.msra.mxu0 %v3977
    %4043 = vmatprep.subr.bf16.mxu0 %v3980
    %4044 = vmatpush1.bf16.msra.mxu0 %v3979
    %4045 = vmatprep.subr.bf16.mxu0 %v3982
    %4046 = vmatpush1.bf16.msra.mxu0 %v3981
    %4047 = vmatprep.subr.bf16.mxu0 %v3984
    %4048 = vmatpush1.bf16.msra.mxu0 %v3983
    %4049 = vmatprep.subr.bf16.mxu0 %v3986
    %4050 = vmatpush1.bf16.msra.mxu0 %v3985
    %4051 = vmatprep.mubr.bf16.mxu0 %v3814
    %4052 = vmatmul.mubr.bf16.gmra.mrb[0].mxu0 %v3813
    %v4053 = vpop.f32.mrb[0].mxu0
    %v4054 = vadd.f32 %v3852, %v4053
    %v4055 = vpop.f32.mrb[0].mxu0
    %v4056 = vadd.f32 %v3856, %v4055
    %v4057 = vpop.f32.mrb[0].mxu0
    %v4058 = vpop.f32.mrb[0].mxu0
    %4059 = vdwg.mxu0
    %v4060 = vmax.f32 %v4054, 0.0
    %v4061 = vmax.f32 %v4056, 0.0
    %v4062 = vpack.c.bf16 %v4060, %v4060
    %v4063 = vpack.c.bf16 %v4061, %v4061
    %v4064 = vld [vmem:[#allocation20] sm:$0xf]
    %v4065 = vld [vmem:[#allocation20 + $0x4] sm:$0xf]
    %v4066 = vld [vmem:[#allocation20 + $0x8] sm:$0xf]
    %v4067 = vld [vmem:[#allocation20 + $0xc] sm:$0xf]
    %v4068 = vld [vmem:[#allocation20 + $0x10] sm:$0xf]
    %v4069 = vld [vmem:[#allocation20 + $0x14] sm:$0xf]
    %v4070 = vld [vmem:[#allocation20 + $0x18] sm:$0xf]
    %v4071 = vld [vmem:[#allocation20 + $0x1c] sm:$0xf]
    %v4072 = vld [vmem:[#allocation20 + $0x20] sm:$0xf]
    %v4073 = vld [vmem:[#allocation20 + $0x24] sm:$0xf]
    %v4074 = vld [vmem:[#allocation20 + $0x28] sm:$0xf]
    %v4075 = vld [vmem:[#allocation20 + $0x2c] sm:$0xf]
    %v4076 = vld [vmem:[#allocation20 + $0x30] sm:$0xf]
    %v4077 = vld [vmem:[#allocation20 + $0x34] sm:$0xf]
    %v4078 = vld [vmem:[#allocation20 + $0x38] sm:$0xf]
    %v4079 = vld [vmem:[#allocation20 + $0x3c] sm:$0xf]
    %v4080 = vld [vmem:[#allocation20 + $0x40] sm:$0xf]
    %v4081 = vld [vmem:[#allocation20 + $0x44] sm:$0xf]
    %v4082 = vld [vmem:[#allocation20 + $0x48] sm:$0xf]
    %v4083 = vld [vmem:[#allocation20 + $0x4c] sm:$0xf]
    %v4084 = vld [vmem:[#allocation20 + $0x50] sm:$0xf]
    %v4085 = vld [vmem:[#allocation20 + $0x54] sm:$0xf]
    %v4086 = vld [vmem:[#allocation20 + $0x58] sm:$0xf]
    %v4087 = vld [vmem:[#allocation20 + $0x5c] sm:$0xf]
    %v4088 = vld [vmem:[#allocation20 + $0x60] sm:$0xf]
    %v4089 = vld [vmem:[#allocation20 + $0x64] sm:$0xf]
    %v4090 = vld [vmem:[#allocation20 + $0x68] sm:$0xf]
    %v4091 = vld [vmem:[#allocation20 + $0x6c] sm:$0xf]
    %v4092 = vld [vmem:[#allocation20 + $0x70] sm:$0xf]
    %v4093 = vld [vmem:[#allocation20 + $0x74] sm:$0xf]
    %v4094 = vld [vmem:[#allocation20 + $0x78] sm:$0xf]
    %v4095 = vld [vmem:[#allocation20 + $0x7c] sm:$0xf]
    %v4096 = vld [vmem:[#allocation22] sm:$0x1]
    %v4098 = vlaneseq
    %v4099 = vshrl.u32 %v4098, 7
    %v4100 = vsub.s32 0, %v4099
    %v4101 = vrot.slane %v4096, %v4100
    %v4135 = vunpack.c.l.b16 %v4064
    %v4136 = vunpack.c.l.b16 %v4065
    %v4137 = vunpack.c.l.b16 %v4066
    %v4138 = vunpack.c.l.b16 %v4067
    %v4139 = vunpack.c.l.b16 %v4068
    %v4140 = vunpack.c.l.b16 %v4069
    %v4141 = vunpack.c.l.b16 %v4070
    %v4142 = vunpack.c.l.b16 %v4071
    %v4143 = vunpack.c.l.b16 %v4072
    %v4144 = vunpack.c.l.b16 %v4073
    %v4145 = vunpack.c.l.b16 %v4074
    %v4146 = vunpack.c.l.b16 %v4075
    %v4147 = vunpack.c.l.b16 %v4076
    %v4148 = vunpack.c.l.b16 %v4077
    %v4149 = vunpack.c.l.b16 %v4078
    %v4150 = vunpack.c.l.b16 %v4079
    %v4151 = vunpack.c.l.b16 %v4080
    %v4152 = vunpack.c.l.b16 %v4081
    %v4153 = vunpack.c.l.b16 %v4082
    %v4154 = vunpack.c.l.b16 %v4083
    %v4155 = vunpack.c.l.b16 %v4084
    %v4156 = vunpack.c.l.b16 %v4085
    %v4157 = vunpack.c.l.b16 %v4086
    %v4158 = vunpack.c.l.b16 %v4087
    %v4159 = vunpack.c.l.b16 %v4088
    %v4160 = vunpack.c.l.b16 %v4089
    %v4161 = vunpack.c.l.b16 %v4090
    %v4162 = vunpack.c.l.b16 %v4091
    %v4163 = vunpack.c.l.b16 %v4092
    %v4164 = vunpack.c.l.b16 %v4093
    %v4165 = vunpack.c.l.b16 %v4094
    %v4166 = vunpack.c.l.b16 %v4095
    %v4167 = vpack.c.b16 %v4136, %v4135
    %v4168 = vpack.c.b16 %v4138, %v4137
    %v4169 = vpack.c.b16 %v4140, %v4139
    %v4170 = vpack.c.b16 %v4142, %v4141
    %v4171 = vpack.c.b16 %v4144, %v4143
    %v4172 = vpack.c.b16 %v4146, %v4145
    %v4173 = vpack.c.b16 %v4148, %v4147
    %v4174 = vpack.c.b16 %v4150, %v4149
    %v4175 = vpack.c.b16 %v4152, %v4151
    %v4176 = vpack.c.b16 %v4154, %v4153
    %v4177 = vpack.c.b16 %v4156, %v4155
    %v4178 = vpack.c.b16 %v4158, %v4157
    %v4179 = vpack.c.b16 %v4160, %v4159
    %v4180 = vpack.c.b16 %v4162, %v4161
    %v4181 = vpack.c.b16 %v4164, %v4163
    %v4182 = vpack.c.b16 %v4166, %v4165
    %4199 = vmatprep.subr.bf16.mxu0 0
    %4200 = vmatpush1.bf16.msra.mxu0 %v4167
    %4201 = vmatprep.subr.bf16.mxu0 0
    %4202 = vmatpush1.bf16.msra.mxu0 %v4168
    %4203 = vmatprep.subr.bf16.mxu0 0
    %4204 = vmatpush1.bf16.msra.mxu0 %v4169
    %4205 = vmatprep.subr.bf16.mxu0 0
    %4206 = vmatpush1.bf16.msra.mxu0 %v4170
    %4207 = vmatprep.subr.bf16.mxu0 0
    %4208 = vmatpush1.bf16.msra.mxu0 %v4171
    %4209 = vmatprep.subr.bf16.mxu0 0
    %4210 = vmatpush1.bf16.msra.mxu0 %v4172
    %4211 = vmatprep.subr.bf16.mxu0 0
    %4212 = vmatpush1.bf16.msra.mxu0 %v4173
    %4213 = vmatprep.subr.bf16.mxu0 0
    %4214 = vmatpush1.bf16.msra.mxu0 %v4174
    %4215 = vmatprep.subr.bf16.mxu0 0
    %4216 = vmatpush1.bf16.msra.mxu0 %v4175
    %4217 = vmatprep.subr.bf16.mxu0 0
    %4218 = vmatpush1.bf16.msra.mxu0 %v4176
    %4219 = vmatprep.subr.bf16.mxu0 0
    %4220 = vmatpush1.bf16.msra.mxu0 %v4177
    %4221 = vmatprep.subr.bf16.mxu0 0
    %4222 = vmatpush1.bf16.msra.mxu0 %v4178
    %4223 = vmatprep.subr.bf16.mxu0 0
    %4224 = vmatpush1.bf16.msra.mxu0 %v4179
    %4225 = vmatprep.subr.bf16.mxu0 0
    %4226 = vmatpush1.bf16.msra.mxu0 %v4180
    %4227 = vmatprep.subr.bf16.mxu0 0
    %4228 = vmatpush1.bf16.msra.mxu0 %v4181
    %4229 = vmatprep.subr.bf16.mxu0 0
    %4230 = vmatpush1.bf16.msra.mxu0 %v4182
    %4231 = vmatprep.mubr.bf16.mxu0 %v4063
    %4232 = vmatmul.mubr.bf16.gmra.mrb[0].mxu0 %v4062
    %v4233 = vpop.f32.mrb[0].mxu0
    %v4234 = vadd.f32 %v4101, %v4233
    %v4235 = vpop.f32.mrb[0].mxu0
    %v4236 = vpop.f32.mrb[0].mxu0
    %v4237 = vpop.f32.mrb[0].mxu0
    %4238 = vdwg.mxu0
    %4239 = vst [vmem:[#allocation23] sm:$0xff] %v4234
    // Predicated region
    $region106: #{tpu_custom_call.1} parent=1 // pred_check
      _
    $region107: #{tpu_custom_call.1} parent=1 // pred_check_branch
      %4241 = sbr.rel (0) target = $region109
    $region108: #{tpu_custom_call.1} parent=1 // pred_region
      %s4243 = ssub.s32 128, 128
      %4244 = vsyncadd [#allocation4], %s4243
      %s4246 = sshll.u32 [#allocation23], 4
      %s4247 = int_to_ptr.vmem [resolvable:$true] %s4246
      %4249 = dma.vmem_to_hbm [thread:$0]  %s4247, 128, %s13, [#allocation4]
    $region109: #{tpu_custom_call.1} parent=1 // pred_fallthru
      _
    // Predicated region
    $region110: #{tpu_custom_call.1} parent=1 // pred_check
      _
    $region111: #{tpu_custom_call.1} parent=1 // pred_check_branch
      %4251 = sbr.rel (0) target = $region113
    $region112: #{tpu_custom_call.1} parent=1 // pred_region
      %4252 = dma.done [#allocation4], 128
    $region113: #{tpu_custom_call.1} parent=1 // pred_fallthru
      _
    %4253 = vsyncpa [#allocation3], 1
    %4254 = vsyncpa [#allocation6], 1
    %4255 = vsyncpa [#allocation9], 1
    %4256 = vsyncpa [#allocation12], 1
    %4257 = vsyncpa [#allocation15], 1
    %4258 = vsyncpa [#allocation18], 1
    %4259 = vsyncpa [#allocation21], 1
    %4260 = vsyncpa [#allocation4], 1

</llo_original>
